<compile_context>
chip_gen: v6e
topology: v6e:2x2x1
jax: 0.10.0
libtpu: 0.0.40
codegen_flags: <defaults>
</compile_context>

<pallas_src>
import math

import numpy as np
import jax
import jax.numpy as jnp
from jax import lax
from jax.experimental import pallas as pl
from jax.experimental.pallas import tpu as pltpu


def _round_up(x, m):
    return ((x + m - 1) // m) * m


# ----------------------- static geometry & constants ----------------------- #

def build_geometry(batch, im_size, net_depth):
    """Per-block static geometry + numpy constants for the fused kernel.

    Block 0 consumes a wrapper-built im2col matrix (N*H*W, 9*Cin); its conv
    output lives on the compact interior layout (rows ordered (n, i, j)).

    Blocks d >= 1 consume a zero-padded 'slab' held in VMEM scratch:
      per image: Hp = H+2 rows x Wp = round_up(W+2, 8) columns, flattened
      row-major; data pixel (i, j) sits at slab row (i+1)*Wp + j.  Rows 0 and
      Hp-1 and columns W..Wp-1 are zero, so every 3x3 pad read resolves to a
      zero row / zero column.  The slab is prefixed by L = round_up(Wp+1, 8)
      zero rows (sublane-aligned scatter stores, in-bounds shifted reads) and
      followed by >= Wp+1 trailing zero rows.
    """
    assert net_depth >= 2
    N = batch
    H, W = im_size
    blocks, rowidx_list = [], []
    for d in range(net_depth):
        assert H % 2 == 0 and W % 2 == 0, "spatial dims must halve cleanly"
        if d == 0:
            R = N * H * W
            rowidx = np.arange(R).reshape(N, H, W)
            blk = dict(H=H, W=W, R=R, count=N * H * W)
        else:
            Hp, Wp = H + 2, _round_up(W + 2, 8)
            L = _round_up(Wp + 1, 8)
            R = N * Hp * Wp
            total = _round_up(L + R + Wp + 1, 8)
            rowidx = (np.arange(N)[:, None, None] * Hp * Wp
                      + (np.arange(H)[None, :, None] + 1) * Wp
                      + np.arange(W)[None, None, :])
            mask = np.zeros((1, R), np.float32)
            mask[0, rowidx.reshape(-1)] = 1.0
            blk = dict(H=H, W=W, Hp=Hp, Wp=Wp, L=L, R=R, total=total,
                       count=N * H * W, mask=mask)
        blocks.append(blk)
        rowidx_list.append(rowidx)
        H, W = H // 2, W // 2

    for d in range(net_depth):
        blk = blocks[d]
        Hd, Wd = blk["H"], blk["W"]
        Ho, Wo = Hd // 2, Wd // 2
        last = d == net_depth - 1
        # Compact 2x2 average-pool matrix over this block's conv-output rows.
        #   non-final: output rows ordered (n, ho, wo)  == next block's pixels
        #   final:     output rows ordered (pool-pos p, batch n) for the classifier
        P = np.zeros((N * Ho * Wo, blk["R"]), np.float32)
        for n in range(N):
            for ho in range(Ho):
                for wo in range(Wo):
                    out_row = ((ho * Wo + wo) * N + n) if last else (
                        n * Ho * Wo + ho * Wo + wo)
                    for di in range(2):
                        for dj in range(2):
                            P[out_row,
                              rowidx_list[d][n, 2 * ho + di, 2 * wo + dj]] = 0.25
        blk["pool"] = P
        if not last:
            # Aligned row-range copies: pooled rows -> next block's slab positions.
            nxt = blocks[d + 1]
            blk["scatter"] = [
                (nxt["L"] + n * nxt["Hp"] * nxt["Wp"] + (i + 1) * nxt["Wp"],
                 (n * Ho + i) * Wo, Wo)
                for n in range(N) for i in range(Ho)]
    final_hw = (blocks[-1]["H"] // 2, blocks[-1]["W"] // 2)
    return blocks, final_hw


# ------------------------------ parameters ---------------------------------- #

def init_params(key, channel, net_width, net_depth, final_hw, n_features):
    """Deterministic init matching Conv2d_gaussian / BatchNorm2d / GaussianLinear."""
    keys = jax.random.split(key, 2 * net_depth + 2)
    conv, in_c = [], channel
    for d in range(net_depth):
        kw, kb = keys[2 * d], keys[2 * d + 1]
        std = math.sqrt(2.0) / math.sqrt(in_c * 9)
        w = std * jax.random.normal(kw, (net_width, in_c, 3, 3), jnp.float32)
        b = 0.1 * jax.random.normal(kb, (net_width,), jnp.float32)
        # (Cout, Cin, kh, kw) -> (kh, kw, Cin, Cout); tap index t = ki*3 + kj
        wt = jnp.transpose(w, (2, 3, 1, 0))
        if d == 0:
            wk = wt.reshape(9 * in_c, net_width)   # K-merged for the im2col dot
        else:
            wk = wt.reshape(9, in_c, net_width)    # per-tap for the slab dots
        gamma = jnp.ones((1, net_width), jnp.float32)   # BatchNorm2d affine defaults
        beta = jnp.zeros((1, net_width), jnp.float32)
        conv.append((wk, b.reshape(1, net_width), gamma, beta))
        in_c = net_width

    ho, wo = final_hw
    pf = ho * wo
    num_feat = net_width * pf
    std_c = math.sqrt(2.0) / math.sqrt(num_feat)
    wc = std_c * jax.random.normal(keys[-2], (n_features, num_feat), jnp.float32)
    bc = 0.1 * jax.random.normal(keys[-1], (n_features,), jnp.float32)
    # PyTorch flatten index of (N, C, Ho, Wo) is c*pf + p.  Pre-permute the weight
    # to (pf, C, F) so the fused epilogue needs no transpose / gather at runtime.
    wc_stack = jnp.transpose(wc.reshape(n_features, net_width, pf), (2, 1, 0))
    return conv, wc_stack, bc.reshape(1, n_features)


# ------------------------------- fused kernel ------------------------------- #

def _bn_relu(acc, mask, inv_cnt, gamma, beta):
    """Train-mode BatchNorm2d + ReLU over the mask-selected rows of acc.

    Both reductions ride the MXU (mask-vector matmuls) and are independent, so
    there is no mean -> (x-mean) -> var serialization.  Biased variance,
    eps = 1e-5, matching torch.nn.BatchNorm2d in training mode.
    """
    s1 = jnp.dot(mask, acc, preferred_element_type=jnp.float32)
    s2 = jnp.dot(mask, acc * acc, preferred_element_type=jnp.float32)
    mean = s1 * inv_cnt
    var = jnp.maximum(s2 * inv_cnt - mean * mean, 0.0)
    y = (acc - mean) * lax.rsqrt(var + 1e-5) * gamma + beta
    return jnp.maximum(y, 0.0)


def make_forward(blocks, batch, channel, net_width, n_features):
    depth = len(blocks)
    N = batch
    H0, W0 = blocks[0]["H"], blocks[0]["W"]
    n_in = 6 + 6 * (depth - 1) + 2

    # Device-resident constants.  The block-0 pooling matrix is by far the largest;
    # its values are only {0, 0.25} (exact in bf16), so store it bf16, leave it in
    # HBM (pl.ANY) and prefetch it inside the kernel.
    pool0_bf16 = jnp.asarray(blocks[0]["pool"], jnp.bfloat16)
    mask_pool = [(jnp.asarray(blocks[d]["mask"]), jnp.asarray(blocks[d]["pool"]))
                 for d in range(1, depth)]

    def kernel(*refs):
        in_refs, out_ref, scratch = refs[:n_in], refs[n_in], refs[n_in + 1:]
        p0_buf, slabs, sem = scratch[0], scratch[1:depth], scratch[depth]
        im2col0, w0, b0, g0, bt0, p0_hbm = in_refs[:6]
        pos = 6

        # Prefetch the largest constant: its DMA overlaps block-0 conv/BN compute.
        cp = pltpu.make_async_copy(p0_hbm, p0_buf, sem.at[0])
        cp.start()

        # Pad rows / columns of the slabs must read as exact zeros.
        for s in slabs:
            s[...] = jnp.zeros(s.shape, jnp.float32)

        # ---------------- block 0: ONE K=9*Cin dot on the wrapper im2col --------
        blk = blocks[0]
        acc = jnp.dot(im2col0[...], w0[...],
                      preferred_element_type=jnp.float32) + b0[...]
        ones = jnp.ones((1, blk["R"]), jnp.float32)   # every im2col row is interior
        y = _bn_relu(acc, ones, 1.0 / blk["count"], g0[...], bt0[...])

        cp.wait()
        pool0 = p0_buf[...].astype(jnp.float32)       # {0, 0.25}: exact decode
        pooled = jnp.dot(pool0, y, preferred_element_type=jnp.float32)
        for dst, src, length in blk["scatter"]:       # aligned row-range stores
            slabs[0][pl.ds(dst, length), :] = pooled[src:src + length, :]

        # ---------------- blocks 1..D-1: shifted-slab conv + BN + ReLU + pool ---
        for d in range(1, depth):
            blk = blocks[d]
            wt, b, g, bt, m, p = in_refs[pos:pos + 6]
            pos += 6
            slab = slabs[d - 1]
            L, Wp, R = blk["L"], blk["Wp"], blk["R"]
            acc = None
            for t in range(9):                        # in-VMEM im2col: 9 shifted dots
                ki, kj = divmod(t, 3)
                start = L + (ki - 1) * Wp + (kj - 1)  # static, ki-shifts 8-aligned
                part = jnp.dot(slab[pl.ds(start, R), :], wt[t],
                               preferred_element_type=jnp.float32)
                acc = part if acc is None else acc + part
            acc = acc + b[...]
            y = _bn_relu(acc, m[...], 1.0 / blk["count"], g[...], bt[...])
            pooled = jnp.dot(p[...], y, preferred_element_type=jnp.float32)
            if d < depth - 1:
                for dst, src, length in blk["scatter"]:
                    slabs[d][pl.ds(dst, length), :] = pooled[src:src + length, :]
            else:
                # pooled rows ordered (pool-position, batch): fused flatten + linear
                wc, bcls = in_refs[pos:pos + 2]
                cls = bcls[...]
                for pp in range(wc.shape[0]):
                    cls = cls + jnp.dot(pooled[pp * N:(pp + 1) * N, :], wc[pp],
                                        preferred_element_type=jnp.float32)
                out_ref[...] = cls

    vmem = pl.BlockSpec(memory_space=pltpu.MemorySpace.VMEM)
    any_ = pl.BlockSpec(memory_space=pl.ANY)
    in_specs = [vmem] * 5 + [any_] + [vmem] * (6 * (depth - 1) + 2)
    scratch_shapes = ([pltpu.VMEM(tuple(pool0_bf16.shape), jnp.bfloat16)]
                      + [pltpu.VMEM((blocks[d]["total"], net_width), jnp.float32)
                         for d in range(1, depth)]
                      + [pltpu.SemaphoreType.DMA((1,))])

    call = pl.pallas_call(
        kernel,
        out_shape=jax.ShapeDtypeStruct((N, n_features), jnp.float32),
        in_specs=in_specs,
        out_specs=vmem,
        scratch_shapes=scratch_shapes,
    )

    def forward(x_nchw, conv_params, wc_stack, b_cls):
        # One-time XLA layout prep: NCHW -> NHWC, pad, 9 shifted crops -> im2col.
        x = jnp.transpose(x_nchw, (0, 2, 3, 1)).astype(jnp.float32)
        xp = jnp.pad(x, ((0, 0), (1, 1), (1, 1), (0, 0)))
        cols = [xp[:, ki:ki + H0, kj:kj + W0, :]
                for ki in range(3) for kj in range(3)]
        im2col0 = jnp.concatenate(cols, axis=-1).reshape(N * H0 * W0, 9 * channel)

        w0, b0, g0, bt0 = conv_params[0]
        args = [im2col0, w0, b0, g0, bt0, pool0_bf16]
        for d in range(1, depth):
            wt, b, g, bt = conv_params[d]
            m, p = mask_pool[d - 1]
            args += [wt, b, g, bt, m, p]
        args += [wc_stack, b_cls]
        return call(*args)

    return forward


# --------------------------------- main -------------------------------------- #

if __name__ == "__main__":
    # Small shapes consistent with the module: batch=2, channel=4, im_size=(16,16),
    # net_width=32, net_depth=3, n_random_features=16.
    batch, channel = 2, 4
    im_size = (16, 16)
    net_width, net_depth = 32, 3
    n_random_features = 16

    blocks, final_hw = build_geometry(batch, im_size, net_depth)
    forward = make_forward(blocks, batch, channel, net_width, n_random_features)

    key = jax.random.PRNGKey(0)
    k_x, k_p = jax.random.split(key)
    x = jax.random.normal(k_x, (batch, channel) + im_size, jnp.float32)
    conv_params, wc_stack, b_cls = init_params(
        k_p, channel, net_width, net_depth, final_hw, n_random_features)

    fwd = jax.jit(lambda xx: forward(xx, conv_params, wc_stack, b_cls))
    out = jax.block_until_ready(fwd(x))

    assert out.shape == (batch, n_random_features), out.shape
    assert bool(jnp.all(jnp.isfinite(out)))
    print("KERNEL_OK")
</pallas_src>

<mosaic_0001>
module attributes {stable_mosaic.version = 11 : i64} {
  func.func @kernel(%arg0: memref<512x36xf32, #tpu.memory_space<vmem>>, %arg1: memref<36x32xf32, #tpu.memory_space<vmem>>, %arg2: memref<1x32xf32, #tpu.memory_space<vmem>>, %arg3: memref<1x32xf32, #tpu.memory_space<vmem>>, %arg4: memref<1x32xf32, #tpu.memory_space<vmem>>, %arg5: memref<128x512xbf16, #tpu.memory_space<any>>, %arg6: memref<9x32x32xf32, #tpu.memory_space<vmem>>, %arg7: memref<1x32xf32, #tpu.memory_space<vmem>>, %arg8: memref<1x32xf32, #tpu.memory_space<vmem>>, %arg9: memref<1x32xf32, #tpu.memory_space<vmem>>, %arg10: memref<1x320xf32, #tpu.memory_space<vmem>>, %arg11: memref<32x320xf32, #tpu.memory_space<vmem>>, %arg12: memref<9x32x32xf32, #tpu.memory_space<vmem>>, %arg13: memref<1x32xf32, #tpu.memory_space<vmem>>, %arg14: memref<1x32xf32, #tpu.memory_space<vmem>>, %arg15: memref<1x32xf32, #tpu.memory_space<vmem>>, %arg16: memref<1x96xf32, #tpu.memory_space<vmem>>, %arg17: memref<8x96xf32, #tpu.memory_space<vmem>>, %arg18: memref<4x32x16xf32, #tpu.memory_space<vmem>>, %arg19: memref<1x16xf32, #tpu.memory_space<vmem>>, %arg20: memref<2x16xf32, #tpu.memory_space<vmem>>, %arg21: memref<128x512xbf16, #tpu.memory_space<vmem>>, %arg22: memref<368x32xf32, #tpu.memory_space<vmem>>, %arg23: memref<128x32xf32, #tpu.memory_space<vmem>>, %arg24: memref<1x!tpu.dma_semaphore, #tpu.memory_space<semaphore_mem>>) attributes {dimension_semantics = [], scalar_prefetch = 0 : i64, scratch_operands = 4 : i64, tpu.core_type = #tpu.core_type<tc>} {
    %c0_i32 = arith.constant 0 : i32
    %0 = tpu.memref_slice %arg24[%c0_i32] : memref<1x!tpu.dma_semaphore, #tpu.memory_space<semaphore_mem>> -> memref<1x!tpu.dma_semaphore, #tpu.memory_space<semaphore_mem>>
    %1 = tpu.memref_squeeze %0 : memref<1x!tpu.dma_semaphore, #tpu.memory_space<semaphore_mem>> -> memref<!tpu.dma_semaphore, #tpu.memory_space<semaphore_mem>>
    tpu.enqueue_dma source(%arg5 : memref<128x512xbf16, #tpu.memory_space<any>>) target(%arg21 : memref<128x512xbf16, #tpu.memory_space<vmem>>) target_semaphore(%1 : memref<!tpu.dma_semaphore, #tpu.memory_space<semaphore_mem>>)
    %cst = arith.constant 0.000000e+00 : f32
    %2 = vector.broadcast %cst : f32 to vector<368x32xf32>
    %c0 = arith.constant 0 : index
    %c0_0 = arith.constant 0 : index
    %3 = vector.load %arg22[%c0, %c0_0] : memref<368x32xf32, #tpu.memory_space<vmem>>, vector<368x32xf32>
    tpu.vector_store %arg22[%c0, %c0_0], %2 {strides = array<i32>} : memref<368x32xf32, #tpu.memory_space<vmem>>, vector<368x32xf32>,
    %cst_1 = arith.constant 0.000000e+00 : f32
    %4 = vector.broadcast %cst_1 : f32 to vector<128x32xf32>
    %c0_2 = arith.constant 0 : index
    %c0_3 = arith.constant 0 : index
    %5 = vector.load %arg23[%c0_2, %c0_3] : memref<128x32xf32, #tpu.memory_space<vmem>>, vector<128x32xf32>
    tpu.vector_store %arg23[%c0_2, %c0_3], %4 {strides = array<i32>} : memref<128x32xf32, #tpu.memory_space<vmem>>, vector<128x32xf32>,
    %c0_4 = arith.constant 0 : index
    %c0_5 = arith.constant 0 : index
    %6 = vector.load %arg0[%c0_4, %c0_5] : memref<512x36xf32, #tpu.memory_space<vmem>>, vector<512x36xf32>
    %c0_6 = arith.constant 0 : index
    %c0_7 = arith.constant 0 : index
    %7 = vector.load %arg1[%c0_6, %c0_7] : memref<36x32xf32, #tpu.memory_space<vmem>>, vector<36x32xf32>
    %cst_8 = arith.constant dense<0.000000e+00> : vector<512x32xf32>
    %8 = tpu.matmul %6, %7, %cst_8 {dimension_numbers = #tpu.dot_dimension_numbers<[1], [0], [0], [1], [0, 0, 1, 1], [], []>} : vector<512x36xf32>, vector<36x32xf32>, vector<512x32xf32> -> vector<512x32xf32>
    %c0_9 = arith.constant 0 : index
    %c0_10 = arith.constant 0 : index
    %9 = vector.load %arg2[%c0_9, %c0_10] : memref<1x32xf32, #tpu.memory_space<vmem>>, vector<1x32xf32>
    %10 = vector.broadcast %9 : vector<1x32xf32> to vector<512x32xf32>
    %11 = arith.addf %8, %10 : vector<512x32xf32>
    %cst_11 = arith.constant 1.000000e+00 : f32
    %12 = vector.broadcast %cst_11 : f32 to vector<1x512xf32>
    %c0_12 = arith.constant 0 : index
    %c0_13 = arith.constant 0 : index
    %13 = vector.load %arg3[%c0_12, %c0_13] : memref<1x32xf32, #tpu.memory_space<vmem>>, vector<1x32xf32>
    %c0_14 = arith.constant 0 : index
    %c0_15 = arith.constant 0 : index
    %14 = vector.load %arg4[%c0_14, %c0_15] : memref<1x32xf32, #tpu.memory_space<vmem>>, vector<1x32xf32>
    %cst_16 = arith.constant dense<0.000000e+00> : vector<1x32xf32>
    %15 = tpu.matmul %12, %11, %cst_16 {dimension_numbers = #tpu.dot_dimension_numbers<[1], [0], [0], [1], [0, 0, 1, 1], [], []>} : vector<1x512xf32>, vector<512x32xf32>, vector<1x32xf32> -> vector<1x32xf32>
    %16 = arith.mulf %11, %11 : vector<512x32xf32>
    %cst_17 = arith.constant dense<0.000000e+00> : vector<1x32xf32>
    %17 = tpu.matmul %12, %16, %cst_17 {dimension_numbers = #tpu.dot_dimension_numbers<[1], [0], [0], [1], [0, 0, 1, 1], [], []>} : vector<1x512xf32>, vector<512x32xf32>, vector<1x32xf32> -> vector<1x32xf32>
    %cst_18 = arith.constant 0.001953125 : f32
    %18 = vector.broadcast %cst_18 : f32 to vector<1x32xf32>
    %19 = arith.mulf %15, %18 : vector<1x32xf32>
    %cst_19 = arith.constant 0.001953125 : f32
    %20 = vector.broadcast %cst_19 : f32 to vector<1x32xf32>
    %21 = arith.mulf %17, %20 : vector<1x32xf32>
    %22 = arith.mulf %19, %19 : vector<1x32xf32>
    %23 = arith.subf %21, %22 : vector<1x32xf32>
    %cst_20 = arith.constant 0.000000e+00 : f32
    %24 = vector.broadcast %cst_20 : f32 to vector<1x32xf32>
    %25 = arith.maximumf %23, %24 : vector<1x32xf32>
    %26 = vector.broadcast %19 : vector<1x32xf32> to vector<512x32xf32>
    %27 = arith.subf %11, %26 : vector<512x32xf32>
    %cst_21 = arith.constant 9.99999974E-6 : f32
    %28 = vector.broadcast %cst_21 : f32 to vector<1x32xf32>
    %29 = arith.addf %25, %28 : vector<1x32xf32>
    %30 = math.rsqrt %29 : vector<1x32xf32>
    %31 = vector.broadcast %30 : vector<1x32xf32> to vector<512x32xf32>
    %32 = arith.mulf %27, %31 : vector<512x32xf32>
    %33 = vector.broadcast %13 : vector<1x32xf32> to vector<512x32xf32>
    %34 = arith.mulf %32, %33 : vector<512x32xf32>
    %35 = vector.broadcast %14 : vector<1x32xf32> to vector<512x32xf32>
    %36 = arith.addf %34, %35 : vector<512x32xf32>
    %cst_22 = arith.constant 0.000000e+00 : f32
    %37 = vector.broadcast %cst_22 : f32 to vector<512x32xf32>
    %38 = arith.maximumf %36, %37 : vector<512x32xf32>
    %c0_i32_23 = arith.constant 0 : i32
    %39 = tpu.memref_slice %arg24[%c0_i32_23] : memref<1x!tpu.dma_semaphore, #tpu.memory_space<semaphore_mem>> -> memref<1x!tpu.dma_semaphore, #tpu.memory_space<semaphore_mem>>
    %40 = tpu.memref_squeeze %39 : memref<1x!tpu.dma_semaphore, #tpu.memory_space<semaphore_mem>> -> memref<!tpu.dma_semaphore, #tpu.memory_space<semaphore_mem>>
    tpu.wait_dma2 semaphore(%40 : memref<!tpu.dma_semaphore, #tpu.memory_space<semaphore_mem>>) src(%arg5 : memref<128x512xbf16, #tpu.memory_space<any>>) dst(%arg21 : memref<128x512xbf16, #tpu.memory_space<vmem>>)
    %c0_24 = arith.constant 0 : index
    %c0_25 = arith.constant 0 : index
    %41 = vector.load %arg21[%c0_24, %c0_25] : memref<128x512xbf16, #tpu.memory_space<vmem>>, vector<128x512xbf16>
    %42 = arith.extf %41 : vector<128x512xbf16> to vector<128x512xf32>
    %cst_26 = arith.constant dense<0.000000e+00> : vector<128x32xf32>
    %43 = tpu.matmul %42, %38, %cst_26 {dimension_numbers = #tpu.dot_dimension_numbers<[1], [0], [0], [1], [0, 0, 1, 1], [], []>} : vector<128x512xf32>, vector<512x32xf32>, vector<128x32xf32> -> vector<128x32xf32>
    %44 = vector.extract_strided_slice %43 {offsets = [0, 0], sizes = [8, 32], strides = [1, 1]} : vector<128x32xf32> to vector<8x32xf32>
    %c40 = arith.constant 40 : index
    %c0_27 = arith.constant 0 : index
    %45 = vector.load %arg22[%c40, %c0_27] : memref<368x32xf32, #tpu.memory_space<vmem>>, vector<8x32xf32>
    tpu.vector_store %arg22[%c40, %c0_27], %44 {strides = array<i32>} : memref<368x32xf32, #tpu.memory_space<vmem>>, vector<8x32xf32>,
    %46 = vector.extract_strided_slice %43 {offsets = [8, 0], sizes = [8, 32], strides = [1, 1]} : vector<128x32xf32> to vector<8x32xf32>
    %c56 = arith.constant 56 : index
    %c0_28 = arith.constant 0 : index
    %47 = vector.load %arg22[%c56, %c0_28] : memref<368x32xf32, #tpu.memory_space<vmem>>, vector<8x32xf32>
    tpu.vector_store %arg22[%c56, %c0_28], %46 {strides = array<i32>} : memref<368x32xf32, #tpu.memory_space<vmem>>, vector<8x32xf32>,
    %48 = vector.extract_strided_slice %43 {offsets = [16, 0], sizes = [8, 32], strides = [1, 1]} : vector<128x32xf32> to vector<8x32xf32>
    %c72 = arith.constant 72 : index
    %c0_29 = arith.constant 0 : index
    %49 = vector.load %arg22[%c72, %c0_29] : memref<368x32xf32, #tpu.memory_space<vmem>>, vector<8x32xf32>
    tpu.vector_store %arg22[%c72, %c0_29], %48 {strides = array<i32>} : memref<368x32xf32, #tpu.memory_space<vmem>>, vector<8x32xf32>,
    %50 = vector.extract_strided_slice %43 {offsets = [24, 0], sizes = [8, 32], strides = [1, 1]} : vector<128x32xf32> to vector<8x32xf32>
    %c88 = arith.constant 88 : index
    %c0_30 = arith.constant 0 : index
    %51 = vector.load %arg22[%c88, %c0_30] : memref<368x32xf32, #tpu.memory_space<vmem>>, vector<8x32xf32>
    tpu.vector_store %arg22[%c88, %c0_30], %50 {strides = array<i32>} : memref<368x32xf32, #tpu.memory_space<vmem>>, vector<8x32xf32>,
    %52 = vector.extract_strided_slice %43 {offsets = [32, 0], sizes = [8, 32], strides = [1, 1]} : vector<128x32xf32> to vector<8x32xf32>
    %c104 = arith.constant 104 : index
    %c0_31 = arith.constant 0 : index
    %53 = vector.load %arg22[%c104, %c0_31] : memref<368x32xf32, #tpu.memory_space<vmem>>, vector<8x32xf32>
    tpu.vector_store %arg22[%c104, %c0_31], %52 {strides = array<i32>} : memref<368x32xf32, #tpu.memory_space<vmem>>, vector<8x32xf32>,
    %54 = vector.extract_strided_slice %43 {offsets = [40, 0], sizes = [8, 32], strides = [1, 1]} : vector<128x32xf32> to vector<8x32xf32>
    %c120 = arith.constant 120 : index
    %c0_32 = arith.constant 0 : index
    %55 = vector.load %arg22[%c120, %c0_32] : memref<368x32xf32, #tpu.memory_space<vmem>>, vector<8x32xf32>
    tpu.vector_store %arg22[%c120, %c0_32], %54 {strides = array<i32>} : memref<368x32xf32, #tpu.memory_space<vmem>>, vector<8x32xf32>,
    %56 = vector.extract_strided_slice %43 {offsets = [48, 0], sizes = [8, 32], strides = [1, 1]} : vector<128x32xf32> to vector<8x32xf32>
    %c136 = arith.constant 136 : index
    %c0_33 = arith.constant 0 : index
    %57 = vector.load %arg22[%c136, %c0_33] : memref<368x32xf32, #tpu.memory_space<vmem>>, vector<8x32xf32>
    tpu.vector_store %arg22[%c136, %c0_33], %56 {strides = array<i32>} : memref<368x32xf32, #tpu.memory_space<vmem>>, vector<8x32xf32>,
    %58 = vector.extract_strided_slice %43 {offsets = [56, 0], sizes = [8, 32], strides = [1, 1]} : vector<128x32xf32> to vector<8x32xf32>
    %c152 = arith.constant 152 : index
    %c0_34 = arith.constant 0 : index
    %59 = vector.load %arg22[%c152, %c0_34] : memref<368x32xf32, #tpu.memory_space<vmem>>, vector<8x32xf32>
    tpu.vector_store %arg22[%c152, %c0_34], %58 {strides = array<i32>} : memref<368x32xf32, #tpu.memory_space<vmem>>, vector<8x32xf32>,
    %60 = vector.extract_strided_slice %43 {offsets = [64, 0], sizes = [8, 32], strides = [1, 1]} : vector<128x32xf32> to vector<8x32xf32>
    %c200 = arith.constant 200 : index
    %c0_35 = arith.constant 0 : index
    %61 = vector.load %arg22[%c200, %c0_35] : memref<368x32xf32, #tpu.memory_space<vmem>>, vector<8x32xf32>
    tpu.vector_store %arg22[%c200, %c0_35], %60 {strides = array<i32>} : memref<368x32xf32, #tpu.memory_space<vmem>>, vector<8x32xf32>,
    %62 = vector.extract_strided_slice %43 {offsets = [72, 0], sizes = [8, 32], strides = [1, 1]} : vector<128x32xf32> to vector<8x32xf32>
    %c216 = arith.constant 216 : index
    %c0_36 = arith.constant 0 : index
    %63 = vector.load %arg22[%c216, %c0_36] : memref<368x32xf32, #tpu.memory_space<vmem>>, vector<8x32xf32>
    tpu.vector_store %arg22[%c216, %c0_36], %62 {strides = array<i32>} : memref<368x32xf32, #tpu.memory_space<vmem>>, vector<8x32xf32>,
    %64 = vector.extract_strided_slice %43 {offsets = [80, 0], sizes = [8, 32], strides = [1, 1]} : vector<128x32xf32> to vector<8x32xf32>
    %c232 = arith.constant 232 : index
    %c0_37 = arith.constant 0 : index
    %65 = vector.load %arg22[%c232, %c0_37] : memref<368x32xf32, #tpu.memory_space<vmem>>, vector<8x32xf32>
    tpu.vector_store %arg22[%c232, %c0_37], %64 {strides = array<i32>} : memref<368x32xf32, #tpu.memory_space<vmem>>, vector<8x32xf32>,
    %66 = vector.extract_strided_slice %43 {offsets = [88, 0], sizes = [8, 32], strides = [1, 1]} : vector<128x32xf32> to vector<8x32xf32>
    %c248 = arith.constant 248 : index
    %c0_38 = arith.constant 0 : index
    %67 = vector.load %arg22[%c248, %c0_38] : memref<368x32xf32, #tpu.memory_space<vmem>>, vector<8x32xf32>
    tpu.vector_store %arg22[%c248, %c0_38], %66 {strides = array<i32>} : memref<368x32xf32, #tpu.memory_space<vmem>>, vector<8x32xf32>,
    %68 = vector.extract_strided_slice %43 {offsets = [96, 0], sizes = [8, 32], strides = [1, 1]} : vector<128x32xf32> to vector<8x32xf32>
    %c264 = arith.constant 264 : index
    %c0_39 = arith.constant 0 : index
    %69 = vector.load %arg22[%c264, %c0_39] : memref<368x32xf32, #tpu.memory_space<vmem>>, vector<8x32xf32>
    tpu.vector_store %arg22[%c264, %c0_39], %68 {strides = array<i32>} : memref<368x32xf32, #tpu.memory_space<vmem>>, vector<8x32xf32>,
    %70 = vector.extract_strided_slice %43 {offsets = [104, 0], sizes = [8, 32], strides = [1, 1]} : vector<128x32xf32> to vector<8x32xf32>
    %c280 = arith.constant 280 : index
    %c0_40 = arith.constant 0 : index
    %71 = vector.load %arg22[%c280, %c0_40] : memref<368x32xf32, #tpu.memory_space<vmem>>, vector<8x32xf32>
    tpu.vector_store %arg22[%c280, %c0_40], %70 {strides = array<i32>} : memref<368x32xf32, #tpu.memory_space<vmem>>, vector<8x32xf32>,
    %72 = vector.extract_strided_slice %43 {offsets = [112, 0], sizes = [8, 32], strides = [1, 1]} : vector<128x32xf32> to vector<8x32xf32>
    %c296 = arith.constant 296 : index
    %c0_41 = arith.constant 0 : index
    %73 = vector.load %arg22[%c296, %c0_41] : memref<368x32xf32, #tpu.memory_space<vmem>>, vector<8x32xf32>
    tpu.vector_store %arg22[%c296, %c0_41], %72 {strides = array<i32>} : memref<368x32xf32, #tpu.memory_space<vmem>>, vector<8x32xf32>,
    %74 = vector.extract_strided_slice %43 {offsets = [120, 0], sizes = [8, 32], strides = [1, 1]} : vector<128x32xf32> to vector<8x32xf32>
    %c312 = arith.constant 312 : index
    %c0_42 = arith.constant 0 : index
    %75 = vector.load %arg22[%c312, %c0_42] : memref<368x32xf32, #tpu.memory_space<vmem>>, vector<8x32xf32>
    tpu.vector_store %arg22[%c312, %c0_42], %74 {strides = array<i32>} : memref<368x32xf32, #tpu.memory_space<vmem>>, vector<8x32xf32>,
    %c7 = arith.constant 7 : index
    %c0_43 = arith.constant 0 : index
    %76 = vector.load %arg22[%c7, %c0_43] : memref<368x32xf32, #tpu.memory_space<vmem>>, vector<320x32xf32>
    %c0_44 = arith.constant 0 : index
    %c0_45 = arith.constant 0 : index
    %c0_46 = arith.constant 0 : index
    %77 = vector.load %arg6[%c0_44, %c0_45, %c0_46] : memref<9x32x32xf32, #tpu.memory_space<vmem>>, vector<1x32x32xf32>
    %78 = vector.shape_cast %77 : vector<1x32x32xf32> to vector<32x32xf32>
    %cst_47 = arith.constant dense<0.000000e+00> : vector<320x32xf32>
    %79 = tpu.matmul %76, %78, %cst_47 {dimension_numbers = #tpu.dot_dimension_numbers<[1], [0], [0], [1], [0, 0, 1, 1], [], []>} : vector<320x32xf32>, vector<32x32xf32>, vector<320x32xf32> -> vector<320x32xf32>
    %c8 = arith.constant 8 : index
    %c0_48 = arith.constant 0 : index
    %80 = vector.load %arg22[%c8, %c0_48] : memref<368x32xf32, #tpu.memory_space<vmem>>, vector<320x32xf32>
    %c1 = arith.constant 1 : index
    %c0_49 = arith.constant 0 : index
    %c0_50 = arith.constant 0 : index
    %81 = vector.load %arg6[%c1, %c0_49, %c0_50] : memref<9x32x32xf32, #tpu.memory_space<vmem>>, vector<1x32x32xf32>
    %82 = vector.shape_cast %81 : vector<1x32x32xf32> to vector<32x32xf32>
    %cst_51 = arith.constant dense<0.000000e+00> : vector<320x32xf32>
    %83 = tpu.matmul %80, %82, %cst_51 {dimension_numbers = #tpu.dot_dimension_numbers<[1], [0], [0], [1], [0, 0, 1, 1], [], []>} : vector<320x32xf32>, vector<32x32xf32>, vector<320x32xf32> -> vector<320x32xf32>
    %84 = arith.addf %79, %83 : vector<320x32xf32>
    %c9 = arith.constant 9 : index
    %c0_52 = arith.constant 0 : index
    %85 = vector.load %arg22[%c9, %c0_52] : memref<368x32xf32, #tpu.memory_space<vmem>>, vector<320x32xf32>
    %c2 = arith.constant 2 : index
    %c0_53 = arith.constant 0 : index
    %c0_54 = arith.constant 0 : index
    %86 = vector.load %arg6[%c2, %c0_53, %c0_54] : memref<9x32x32xf32, #tpu.memory_space<vmem>>, vector<1x32x32xf32>
    %87 = vector.shape_cast %86 : vector<1x32x32xf32> to vector<32x32xf32>
    %cst_55 = arith.constant dense<0.000000e+00> : vector<320x32xf32>
    %88 = tpu.matmul %85, %87, %cst_55 {dimension_numbers = #tpu.dot_dimension_numbers<[1], [0], [0], [1], [0, 0, 1, 1], [], []>} : vector<320x32xf32>, vector<32x32xf32>, vector<320x32xf32> -> vector<320x32xf32>
    %89 = arith.addf %84, %88 : vector<320x32xf32>
    %c23 = arith.constant 23 : index
    %c0_56 = arith.constant 0 : index
    %90 = vector.load %arg22[%c23, %c0_56] : memref<368x32xf32, #tpu.memory_space<vmem>>, vector<320x32xf32>
    %c3 = arith.constant 3 : index
    %c0_57 = arith.constant 0 : index
    %c0_58 = arith.constant 0 : index
    %91 = vector.load %arg6[%c3, %c0_57, %c0_58] : memref<9x32x32xf32, #tpu.memory_space<vmem>>, vector<1x32x32xf32>
    %92 = vector.shape_cast %91 : vector<1x32x32xf32> to vector<32x32xf32>
    %cst_59 = arith.constant dense<0.000000e+00> : vector<320x32xf32>
    %93 = tpu.matmul %90, %92, %cst_59 {dimension_numbers = #tpu.dot_dimension_numbers<[1], [0], [0], [1], [0, 0, 1, 1], [], []>} : vector<320x32xf32>, vector<32x32xf32>, vector<320x32xf32> -> vector<320x32xf32>
    %94 = arith.addf %89, %93 : vector<320x32xf32>
    %c24 = arith.constant 24 : index
    %c0_60 = arith.constant 0 : index
    %95 = vector.load %arg22[%c24, %c0_60] : memref<368x32xf32, #tpu.memory_space<vmem>>, vector<320x32xf32>
    %c4 = arith.constant 4 : index
    %c0_61 = arith.constant 0 : index
    %c0_62 = arith.constant 0 : index
    %96 = vector.load %arg6[%c4, %c0_61, %c0_62] : memref<9x32x32xf32, #tpu.memory_space<vmem>>, vector<1x32x32xf32>
    %97 = vector.shape_cast %96 : vector<1x32x32xf32> to vector<32x32xf32>
    %cst_63 = arith.constant dense<0.000000e+00> : vector<320x32xf32>
    %98 = tpu.matmul %95, %97, %cst_63 {dimension_numbers = #tpu.dot_dimension_numbers<[1], [0], [0], [1], [0, 0, 1, 1], [], []>} : vector<320x32xf32>, vector<32x32xf32>, vector<320x32xf32> -> vector<320x32xf32>
    %99 = arith.addf %94, %98 : vector<320x32xf32>
    %c25 = arith.constant 25 : index
    %c0_64 = arith.constant 0 : index
    %100 = vector.load %arg22[%c25, %c0_64] : memref<368x32xf32, #tpu.memory_space<vmem>>, vector<320x32xf32>
    %c5 = arith.constant 5 : index
    %c0_65 = arith.constant 0 : index
    %c0_66 = arith.constant 0 : index
    %101 = vector.load %arg6[%c5, %c0_65, %c0_66] : memref<9x32x32xf32, #tpu.memory_space<vmem>>, vector<1x32x32xf32>
    %102 = vector.shape_cast %101 : vector<1x32x32xf32> to vector<32x32xf32>
    %cst_67 = arith.constant dense<0.000000e+00> : vector<320x32xf32>
    %103 = tpu.matmul %100, %102, %cst_67 {dimension_numbers = #tpu.dot_dimension_numbers<[1], [0], [0], [1], [0, 0, 1, 1], [], []>} : vector<320x32xf32>, vector<32x32xf32>, vector<320x32xf32> -> vector<320x32xf32>
    %104 = arith.addf %99, %103 : vector<320x32xf32>
    %c39 = arith.constant 39 : index
    %c0_68 = arith.constant 0 : index
    %105 = vector.load %arg22[%c39, %c0_68] : memref<368x32xf32, #tpu.memory_space<vmem>>, vector<320x32xf32>
    %c6 = arith.constant 6 : index
    %c0_69 = arith.constant 0 : index
    %c0_70 = arith.constant 0 : index
    %106 = vector.load %arg6[%c6, %c0_69, %c0_70] : memref<9x32x32xf32, #tpu.memory_space<vmem>>, vector<1x32x32xf32>
    %107 = vector.shape_cast %106 : vector<1x32x32xf32> to vector<32x32xf32>
    %cst_71 = arith.constant dense<0.000000e+00> : vector<320x32xf32>
    %108 = tpu.matmul %105, %107, %cst_71 {dimension_numbers = #tpu.dot_dimension_numbers<[1], [0], [0], [1], [0, 0, 1, 1], [], []>} : vector<320x32xf32>, vector<32x32xf32>, vector<320x32xf32> -> vector<320x32xf32>
    %109 = arith.addf %104, %108 : vector<320x32xf32>
    %c40_72 = arith.constant 40 : index
    %c0_73 = arith.constant 0 : index
    %110 = vector.load %arg22[%c40_72, %c0_73] : memref<368x32xf32, #tpu.memory_space<vmem>>, vector<320x32xf32>
    %c7_74 = arith.constant 7 : index
    %c0_75 = arith.constant 0 : index
    %c0_76 = arith.constant 0 : index
    %111 = vector.load %arg6[%c7_74, %c0_75, %c0_76] : memref<9x32x32xf32, #tpu.memory_space<vmem>>, vector<1x32x32xf32>
    %112 = vector.shape_cast %111 : vector<1x32x32xf32> to vector<32x32xf32>
    %cst_77 = arith.constant dense<0.000000e+00> : vector<320x32xf32>
    %113 = tpu.matmul %110, %112, %cst_77 {dimension_numbers = #tpu.dot_dimension_numbers<[1], [0], [0], [1], [0, 0, 1, 1], [], []>} : vector<320x32xf32>, vector<32x32xf32>, vector<320x32xf32> -> vector<320x32xf32>
    %114 = arith.addf %109, %113 : vector<320x32xf32>
    %c41 = arith.constant 41 : index
    %c0_78 = arith.constant 0 : index
    %115 = vector.load %arg22[%c41, %c0_78] : memref<368x32xf32, #tpu.memory_space<vmem>>, vector<320x32xf32>
    %c8_79 = arith.constant 8 : index
    %c0_80 = arith.constant 0 : index
    %c0_81 = arith.constant 0 : index
    %116 = vector.load %arg6[%c8_79, %c0_80, %c0_81] : memref<9x32x32xf32, #tpu.memory_space<vmem>>, vector<1x32x32xf32>
    %117 = vector.shape_cast %116 : vector<1x32x32xf32> to vector<32x32xf32>
    %cst_82 = arith.constant dense<0.000000e+00> : vector<320x32xf32>
    %118 = tpu.matmul %115, %117, %cst_82 {dimension_numbers = #tpu.dot_dimension_numbers<[1], [0], [0], [1], [0, 0, 1, 1], [], []>} : vector<320x32xf32>, vector<32x32xf32>, vector<320x32xf32> -> vector<320x32xf32>
    %119 = arith.addf %114, %118 : vector<320x32xf32>
    %c0_83 = arith.constant 0 : index
    %c0_84 = arith.constant 0 : index
    %120 = vector.load %arg7[%c0_83, %c0_84] : memref<1x32xf32, #tpu.memory_space<vmem>>, vector<1x32xf32>
    %121 = vector.broadcast %120 : vector<1x32xf32> to vector<320x32xf32>
    %122 = arith.addf %119, %121 : vector<320x32xf32>
    %c0_85 = arith.constant 0 : index
    %c0_86 = arith.constant 0 : index
    %123 = vector.load %arg10[%c0_85, %c0_86] : memref<1x320xf32, #tpu.memory_space<vmem>>, vector<1x320xf32>
    %c0_87 = arith.constant 0 : index
    %c0_88 = arith.constant 0 : index
    %124 = vector.load %arg8[%c0_87, %c0_88] : memref<1x32xf32, #tpu.memory_space<vmem>>, vector<1x32xf32>
    %c0_89 = arith.constant 0 : index
    %c0_90 = arith.constant 0 : index
    %125 = vector.load %arg9[%c0_89, %c0_90] : memref<1x32xf32, #tpu.memory_space<vmem>>, vector<1x32xf32>
    %cst_91 = arith.constant dense<0.000000e+00> : vector<1x32xf32>
    %126 = tpu.matmul %123, %122, %cst_91 {dimension_numbers = #tpu.dot_dimension_numbers<[1], [0], [0], [1], [0, 0, 1, 1], [], []>} : vector<1x320xf32>, vector<320x32xf32>, vector<1x32xf32> -> vector<1x32xf32>
    %127 = arith.mulf %122, %122 : vector<320x32xf32>
    %cst_92 = arith.constant dense<0.000000e+00> : vector<1x32xf32>
    %128 = tpu.matmul %123, %127, %cst_92 {dimension_numbers = #tpu.dot_dimension_numbers<[1], [0], [0], [1], [0, 0, 1, 1], [], []>} : vector<1x320xf32>, vector<320x32xf32>, vector<1x32xf32> -> vector<1x32xf32>
    %cst_93 = arith.constant 7.812500e-03 : f32
    %129 = vector.broadcast %cst_93 : f32 to vector<1x32xf32>
    %130 = arith.mulf %126, %129 : vector<1x32xf32>
    %cst_94 = arith.constant 7.812500e-03 : f32
    %131 = vector.broadcast %cst_94 : f32 to vector<1x32xf32>
    %132 = arith.mulf %128, %131 : vector<1x32xf32>
    %133 = arith.mulf %130, %130 : vector<1x32xf32>
    %134 = arith.subf %132, %133 : vector<1x32xf32>
    %cst_95 = arith.constant 0.000000e+00 : f32
    %135 = vector.broadcast %cst_95 : f32 to vector<1x32xf32>
    %136 = arith.maximumf %134, %135 : vector<1x32xf32>
    %137 = vector.broadcast %130 : vector<1x32xf32> to vector<320x32xf32>
    %138 = arith.subf %122, %137 : vector<320x32xf32>
    %cst_96 = arith.constant 9.99999974E-6 : f32
    %139 = vector.broadcast %cst_96 : f32 to vector<1x32xf32>
    %140 = arith.addf %136, %139 : vector<1x32xf32>
    %141 = math.rsqrt %140 : vector<1x32xf32>
    %142 = vector.broadcast %141 : vector<1x32xf32> to vector<320x32xf32>
    %143 = arith.mulf %138, %142 : vector<320x32xf32>
    %144 = vector.broadcast %124 : vector<1x32xf32> to vector<320x32xf32>
    %145 = arith.mulf %143, %144 : vector<320x32xf32>
    %146 = vector.broadcast %125 : vector<1x32xf32> to vector<320x32xf32>
    %147 = arith.addf %145, %146 : vector<320x32xf32>
    %cst_97 = arith.constant 0.000000e+00 : f32
    %148 = vector.broadcast %cst_97 : f32 to vector<320x32xf32>
    %149 = arith.maximumf %147, %148 : vector<320x32xf32>
    %c0_98 = arith.constant 0 : index
    %c0_99 = arith.constant 0 : index
    %150 = vector.load %arg11[%c0_98, %c0_99] : memref<32x320xf32, #tpu.memory_space<vmem>>, vector<32x320xf32>
    %cst_100 = arith.constant dense<0.000000e+00> : vector<32x32xf32>
    %151 = tpu.matmul %150, %149, %cst_100 {dimension_numbers = #tpu.dot_dimension_numbers<[1], [0], [0], [1], [0, 0, 1, 1], [], []>} : vector<32x320xf32>, vector<320x32xf32>, vector<32x32xf32> -> vector<32x32xf32>
    %152 = vector.extract_strided_slice %151 {offsets = [0, 0], sizes = [4, 32], strides = [1, 1]} : vector<32x32xf32> to vector<4x32xf32>
    %c24_101 = arith.constant 24 : index
    %c0_102 = arith.constant 0 : index
    %153 = vector.load %arg23[%c24_101, %c0_102] : memref<128x32xf32, #tpu.memory_space<vmem>>, vector<4x32xf32>
    tpu.vector_store %arg23[%c24_101, %c0_102], %152 {strides = array<i32>} : memref<128x32xf32, #tpu.memory_space<vmem>>, vector<4x32xf32>,
    %154 = vector.extract_strided_slice %151 {offsets = [4, 0], sizes = [4, 32], strides = [1, 1]} : vector<32x32xf32> to vector<4x32xf32>
    %c32 = arith.constant 32 : index
    %c0_103 = arith.constant 0 : index
    %155 = vector.load %arg23[%c32, %c0_103] : memref<128x32xf32, #tpu.memory_space<vmem>>, vector<4x32xf32>
    tpu.vector_store %arg23[%c32, %c0_103], %154 {strides = array<i32>} : memref<128x32xf32, #tpu.memory_space<vmem>>, vector<4x32xf32>,
    %156 = vector.extract_strided_slice %151 {offsets = [8, 0], sizes = [4, 32], strides = [1, 1]} : vector<32x32xf32> to vector<4x32xf32>
    %c40_104 = arith.constant 40 : index
    %c0_105 = arith.constant 0 : index
    %157 = vector.load %arg23[%c40_104, %c0_105] : memref<128x32xf32, #tpu.memory_space<vmem>>, vector<4x32xf32>
    tpu.vector_store %arg23[%c40_104, %c0_105], %156 {strides = array<i32>} : memref<128x32xf32, #tpu.memory_space<vmem>>, vector<4x32xf32>,
    %158 = vector.extract_strided_slice %151 {offsets = [12, 0], sizes = [4, 32], strides = [1, 1]} : vector<32x32xf32> to vector<4x32xf32>
    %c48 = arith.constant 48 : index
    %c0_106 = arith.constant 0 : index
    %159 = vector.load %arg23[%c48, %c0_106] : memref<128x32xf32, #tpu.memory_space<vmem>>, vector<4x32xf32>
    tpu.vector_store %arg23[%c48, %c0_106], %158 {strides = array<i32>} : memref<128x32xf32, #tpu.memory_space<vmem>>, vector<4x32xf32>,
    %160 = vector.extract_strided_slice %151 {offsets = [16, 0], sizes = [4, 32], strides = [1, 1]} : vector<32x32xf32> to vector<4x32xf32>
    %c72_107 = arith.constant 72 : index
    %c0_108 = arith.constant 0 : index
    %161 = vector.load %arg23[%c72_107, %c0_108] : memref<128x32xf32, #tpu.memory_space<vmem>>, vector<4x32xf32>
    tpu.vector_store %arg23[%c72_107, %c0_108], %160 {strides = array<i32>} : memref<128x32xf32, #tpu.memory_space<vmem>>, vector<4x32xf32>,
    %162 = vector.extract_strided_slice %151 {offsets = [20, 0], sizes = [4, 32], strides = [1, 1]} : vector<32x32xf32> to vector<4x32xf32>
    %c80 = arith.constant 80 : index
    %c0_109 = arith.constant 0 : index
    %163 = vector.load %arg23[%c80, %c0_109] : memref<128x32xf32, #tpu.memory_space<vmem>>, vector<4x32xf32>
    tpu.vector_store %arg23[%c80, %c0_109], %162 {strides = array<i32>} : memref<128x32xf32, #tpu.memory_space<vmem>>, vector<4x32xf32>,
    %164 = vector.extract_strided_slice %151 {offsets = [24, 0], sizes = [4, 32], strides = [1, 1]} : vector<32x32xf32> to vector<4x32xf32>
    %c88_110 = arith.constant 88 : index
    %c0_111 = arith.constant 0 : index
    %165 = vector.load %arg23[%c88_110, %c0_111] : memref<128x32xf32, #tpu.memory_space<vmem>>, vector<4x32xf32>
    tpu.vector_store %arg23[%c88_110, %c0_111], %164 {strides = array<i32>} : memref<128x32xf32, #tpu.memory_space<vmem>>, vector<4x32xf32>,
    %166 = vector.extract_strided_slice %151 {offsets = [28, 0], sizes = [4, 32], strides = [1, 1]} : vector<32x32xf32> to vector<4x32xf32>
    %c96 = arith.constant 96 : index
    %c0_112 = arith.constant 0 : index
    %167 = vector.load %arg23[%c96, %c0_112] : memref<128x32xf32, #tpu.memory_space<vmem>>, vector<4x32xf32>
    tpu.vector_store %arg23[%c96, %c0_112], %166 {strides = array<i32>} : memref<128x32xf32, #tpu.memory_space<vmem>>, vector<4x32xf32>,
    %c7_113 = arith.constant 7 : index
    %c0_114 = arith.constant 0 : index
    %168 = vector.load %arg23[%c7_113, %c0_114] : memref<128x32xf32, #tpu.memory_space<vmem>>, vector<96x32xf32>
    %c0_115 = arith.constant 0 : index
    %c0_116 = arith.constant 0 : index
    %c0_117 = arith.constant 0 : index
    %169 = vector.load %arg12[%c0_115, %c0_116, %c0_117] : memref<9x32x32xf32, #tpu.memory_space<vmem>>, vector<1x32x32xf32>
    %170 = vector.shape_cast %169 : vector<1x32x32xf32> to vector<32x32xf32>
    %cst_118 = arith.constant dense<0.000000e+00> : vector<96x32xf32>
    %171 = tpu.matmul %168, %170, %cst_118 {dimension_numbers = #tpu.dot_dimension_numbers<[1], [0], [0], [1], [0, 0, 1, 1], [], []>} : vector<96x32xf32>, vector<32x32xf32>, vector<96x32xf32> -> vector<96x32xf32>
    %c8_119 = arith.constant 8 : index
    %c0_120 = arith.constant 0 : index
    %172 = vector.load %arg23[%c8_119, %c0_120] : memref<128x32xf32, #tpu.memory_space<vmem>>, vector<96x32xf32>
    %c1_121 = arith.constant 1 : index
    %c0_122 = arith.constant 0 : index
    %c0_123 = arith.constant 0 : index
    %173 = vector.load %arg12[%c1_121, %c0_122, %c0_123] : memref<9x32x32xf32, #tpu.memory_space<vmem>>, vector<1x32x32xf32>
    %174 = vector.shape_cast %173 : vector<1x32x32xf32> to vector<32x32xf32>
    %cst_124 = arith.constant dense<0.000000e+00> : vector<96x32xf32>
    %175 = tpu.matmul %172, %174, %cst_124 {dimension_numbers = #tpu.dot_dimension_numbers<[1], [0], [0], [1], [0, 0, 1, 1], [], []>} : vector<96x32xf32>, vector<32x32xf32>, vector<96x32xf32> -> vector<96x32xf32>
    %176 = arith.addf %171, %175 : vector<96x32xf32>
    %c9_125 = arith.constant 9 : index
    %c0_126 = arith.constant 0 : index
    %177 = vector.load %arg23[%c9_125, %c0_126] : memref<128x32xf32, #tpu.memory_space<vmem>>, vector<96x32xf32>
    %c2_127 = arith.constant 2 : index
    %c0_128 = arith.constant 0 : index
    %c0_129 = arith.constant 0 : index
    %178 = vector.load %arg12[%c2_127, %c0_128, %c0_129] : memref<9x32x32xf32, #tpu.memory_space<vmem>>, vector<1x32x32xf32>
    %179 = vector.shape_cast %178 : vector<1x32x32xf32> to vector<32x32xf32>
    %cst_130 = arith.constant dense<0.000000e+00> : vector<96x32xf32>
    %180 = tpu.matmul %177, %179, %cst_130 {dimension_numbers = #tpu.dot_dimension_numbers<[1], [0], [0], [1], [0, 0, 1, 1], [], []>} : vector<96x32xf32>, vector<32x32xf32>, vector<96x32xf32> -> vector<96x32xf32>
    %181 = arith.addf %176, %180 : vector<96x32xf32>
    %c15 = arith.constant 15 : index
    %c0_131 = arith.constant 0 : index
    %182 = vector.load %arg23[%c15, %c0_131] : memref<128x32xf32, #tpu.memory_space<vmem>>, vector<96x32xf32>
    %c3_132 = arith.constant 3 : index
    %c0_133 = arith.constant 0 : index
    %c0_134 = arith.constant 0 : index
    %183 = vector.load %arg12[%c3_132, %c0_133, %c0_134] : memref<9x32x32xf32, #tpu.memory_space<vmem>>, vector<1x32x32xf32>
    %184 = vector.shape_cast %183 : vector<1x32x32xf32> to vector<32x32xf32>
    %cst_135 = arith.constant dense<0.000000e+00> : vector<96x32xf32>
    %185 = tpu.matmul %182, %184, %cst_135 {dimension_numbers = #tpu.dot_dimension_numbers<[1], [0], [0], [1], [0, 0, 1, 1], [], []>} : vector<96x32xf32>, vector<32x32xf32>, vector<96x32xf32> -> vector<96x32xf32>
    %186 = arith.addf %181, %185 : vector<96x32xf32>
    %c16 = arith.constant 16 : index
    %c0_136 = arith.constant 0 : index
    %187 = vector.load %arg23[%c16, %c0_136] : memref<128x32xf32, #tpu.memory_space<vmem>>, vector<96x32xf32>
    %c4_137 = arith.constant 4 : index
    %c0_138 = arith.constant 0 : index
    %c0_139 = arith.constant 0 : index
    %188 = vector.load %arg12[%c4_137, %c0_138, %c0_139] : memref<9x32x32xf32, #tpu.memory_space<vmem>>, vector<1x32x32xf32>
    %189 = vector.shape_cast %188 : vector<1x32x32xf32> to vector<32x32xf32>
    %cst_140 = arith.constant dense<0.000000e+00> : vector<96x32xf32>
    %190 = tpu.matmul %187, %189, %cst_140 {dimension_numbers = #tpu.dot_dimension_numbers<[1], [0], [0], [1], [0, 0, 1, 1], [], []>} : vector<96x32xf32>, vector<32x32xf32>, vector<96x32xf32> -> vector<96x32xf32>
    %191 = arith.addf %186, %190 : vector<96x32xf32>
    %c17 = arith.constant 17 : index
    %c0_141 = arith.constant 0 : index
    %192 = vector.load %arg23[%c17, %c0_141] : memref<128x32xf32, #tpu.memory_space<vmem>>, vector<96x32xf32>
    %c5_142 = arith.constant 5 : index
    %c0_143 = arith.constant 0 : index
    %c0_144 = arith.constant 0 : index
    %193 = vector.load %arg12[%c5_142, %c0_143, %c0_144] : memref<9x32x32xf32, #tpu.memory_space<vmem>>, vector<1x32x32xf32>
    %194 = vector.shape_cast %193 : vector<1x32x32xf32> to vector<32x32xf32>
    %cst_145 = arith.constant dense<0.000000e+00> : vector<96x32xf32>
    %195 = tpu.matmul %192, %194, %cst_145 {dimension_numbers = #tpu.dot_dimension_numbers<[1], [0], [0], [1], [0, 0, 1, 1], [], []>} : vector<96x32xf32>, vector<32x32xf32>, vector<96x32xf32> -> vector<96x32xf32>
    %196 = arith.addf %191, %195 : vector<96x32xf32>
    %c23_146 = arith.constant 23 : index
    %c0_147 = arith.constant 0 : index
    %197 = vector.load %arg23[%c23_146, %c0_147] : memref<128x32xf32, #tpu.memory_space<vmem>>, vector<96x32xf32>
    %c6_148 = arith.constant 6 : index
    %c0_149 = arith.constant 0 : index
    %c0_150 = arith.constant 0 : index
    %198 = vector.load %arg12[%c6_148, %c0_149, %c0_150] : memref<9x32x32xf32, #tpu.memory_space<vmem>>, vector<1x32x32xf32>
    %199 = vector.shape_cast %198 : vector<1x32x32xf32> to vector<32x32xf32>
    %cst_151 = arith.constant dense<0.000000e+00> : vector<96x32xf32>
    %200 = tpu.matmul %197, %199, %cst_151 {dimension_numbers = #tpu.dot_dimension_numbers<[1], [0], [0], [1], [0, 0, 1, 1], [], []>} : vector<96x32xf32>, vector<32x32xf32>, vector<96x32xf32> -> vector<96x32xf32>
    %201 = arith.addf %196, %200 : vector<96x32xf32>
    %c24_152 = arith.constant 24 : index
    %c0_153 = arith.constant 0 : index
    %202 = vector.load %arg23[%c24_152, %c0_153] : memref<128x32xf32, #tpu.memory_space<vmem>>, vector<96x32xf32>
    %c7_154 = arith.constant 7 : index
    %c0_155 = arith.constant 0 : index
    %c0_156 = arith.constant 0 : index
    %203 = vector.load %arg12[%c7_154, %c0_155, %c0_156] : memref<9x32x32xf32, #tpu.memory_space<vmem>>, vector<1x32x32xf32>
    %204 = vector.shape_cast %203 : vector<1x32x32xf32> to vector<32x32xf32>
    %cst_157 = arith.constant dense<0.000000e+00> : vector<96x32xf32>
    %205 = tpu.matmul %202, %204, %cst_157 {dimension_numbers = #tpu.dot_dimension_numbers<[1], [0], [0], [1], [0, 0, 1, 1], [], []>} : vector<96x32xf32>, vector<32x32xf32>, vector<96x32xf32> -> vector<96x32xf32>
    %206 = arith.addf %201, %205 : vector<96x32xf32>
    %c25_158 = arith.constant 25 : index
    %c0_159 = arith.constant 0 : index
    %207 = vector.load %arg23[%c25_158, %c0_159] : memref<128x32xf32, #tpu.memory_space<vmem>>, vector<96x32xf32>
    %c8_160 = arith.constant 8 : index
    %c0_161 = arith.constant 0 : index
    %c0_162 = arith.constant 0 : index
    %208 = vector.load %arg12[%c8_160, %c0_161, %c0_162] : memref<9x32x32xf32, #tpu.memory_space<vmem>>, vector<1x32x32xf32>
    %209 = vector.shape_cast %208 : vector<1x32x32xf32> to vector<32x32xf32>
    %cst_163 = arith.constant dense<0.000000e+00> : vector<96x32xf32>
    %210 = tpu.matmul %207, %209, %cst_163 {dimension_numbers = #tpu.dot_dimension_numbers<[1], [0], [0], [1], [0, 0, 1, 1], [], []>} : vector<96x32xf32>, vector<32x32xf32>, vector<96x32xf32> -> vector<96x32xf32>
    %211 = arith.addf %206, %210 : vector<96x32xf32>
    %c0_164 = arith.constant 0 : index
    %c0_165 = arith.constant 0 : index
    %212 = vector.load %arg13[%c0_164, %c0_165] : memref<1x32xf32, #tpu.memory_space<vmem>>, vector<1x32xf32>
    %213 = vector.broadcast %212 : vector<1x32xf32> to vector<96x32xf32>
    %214 = arith.addf %211, %213 : vector<96x32xf32>
    %c0_166 = arith.constant 0 : index
    %c0_167 = arith.constant 0 : index
    %215 = vector.load %arg16[%c0_166, %c0_167] : memref<1x96xf32, #tpu.memory_space<vmem>>, vector<1x96xf32>
    %c0_168 = arith.constant 0 : index
    %c0_169 = arith.constant 0 : index
    %216 = vector.load %arg14[%c0_168, %c0_169] : memref<1x32xf32, #tpu.memory_space<vmem>>, vector<1x32xf32>
    %c0_170 = arith.constant 0 : index
    %c0_171 = arith.constant 0 : index
    %217 = vector.load %arg15[%c0_170, %c0_171] : memref<1x32xf32, #tpu.memory_space<vmem>>, vector<1x32xf32>
    %cst_172 = arith.constant dense<0.000000e+00> : vector<1x32xf32>
    %218 = tpu.matmul %215, %214, %cst_172 {dimension_numbers = #tpu.dot_dimension_numbers<[1], [0], [0], [1], [0, 0, 1, 1], [], []>} : vector<1x96xf32>, vector<96x32xf32>, vector<1x32xf32> -> vector<1x32xf32>
    %219 = arith.mulf %214, %214 : vector<96x32xf32>
    %cst_173 = arith.constant dense<0.000000e+00> : vector<1x32xf32>
    %220 = tpu.matmul %215, %219, %cst_173 {dimension_numbers = #tpu.dot_dimension_numbers<[1], [0], [0], [1], [0, 0, 1, 1], [], []>} : vector<1x96xf32>, vector<96x32xf32>, vector<1x32xf32> -> vector<1x32xf32>
    %cst_174 = arith.constant 3.125000e-02 : f32
    %221 = vector.broadcast %cst_174 : f32 to vector<1x32xf32>
    %222 = arith.mulf %218, %221 : vector<1x32xf32>
    %cst_175 = arith.constant 3.125000e-02 : f32
    %223 = vector.broadcast %cst_175 : f32 to vector<1x32xf32>
    %224 = arith.mulf %220, %223 : vector<1x32xf32>
    %225 = arith.mulf %222, %222 : vector<1x32xf32>
    %226 = arith.subf %224, %225 : vector<1x32xf32>
    %cst_176 = arith.constant 0.000000e+00 : f32
    %227 = vector.broadcast %cst_176 : f32 to vector<1x32xf32>
    %228 = arith.maximumf %226, %227 : vector<1x32xf32>
    %229 = vector.broadcast %222 : vector<1x32xf32> to vector<96x32xf32>
    %230 = arith.subf %214, %229 : vector<96x32xf32>
    %cst_177 = arith.constant 9.99999974E-6 : f32
    %231 = vector.broadcast %cst_177 : f32 to vector<1x32xf32>
    %232 = arith.addf %228, %231 : vector<1x32xf32>
    %233 = math.rsqrt %232 : vector<1x32xf32>
    %234 = vector.broadcast %233 : vector<1x32xf32> to vector<96x32xf32>
    %235 = arith.mulf %230, %234 : vector<96x32xf32>
    %236 = vector.broadcast %216 : vector<1x32xf32> to vector<96x32xf32>
    %237 = arith.mulf %235, %236 : vector<96x32xf32>
    %238 = vector.broadcast %217 : vector<1x32xf32> to vector<96x32xf32>
    %239 = arith.addf %237, %238 : vector<96x32xf32>
    %cst_178 = arith.constant 0.000000e+00 : f32
    %240 = vector.broadcast %cst_178 : f32 to vector<96x32xf32>
    %241 = arith.maximumf %239, %240 : vector<96x32xf32>
    %c0_179 = arith.constant 0 : index
    %c0_180 = arith.constant 0 : index
    %242 = vector.load %arg17[%c0_179, %c0_180] : memref<8x96xf32, #tpu.memory_space<vmem>>, vector<8x96xf32>
    %cst_181 = arith.constant dense<0.000000e+00> : vector<8x32xf32>
    %243 = tpu.matmul %242, %241, %cst_181 {dimension_numbers = #tpu.dot_dimension_numbers<[1], [0], [0], [1], [0, 0, 1, 1], [], []>} : vector<8x96xf32>, vector<96x32xf32>, vector<8x32xf32> -> vector<8x32xf32>
    %c0_182 = arith.constant 0 : index
    %c0_183 = arith.constant 0 : index
    %244 = vector.load %arg19[%c0_182, %c0_183] : memref<1x16xf32, #tpu.memory_space<vmem>>, vector<1x16xf32>
    %245 = vector.extract_strided_slice %243 {offsets = [0, 0], sizes = [2, 32], strides = [1, 1]} : vector<8x32xf32> to vector<2x32xf32>
    %c0_184 = arith.constant 0 : index
    %c0_185 = arith.constant 0 : index
    %c0_186 = arith.constant 0 : index
    %246 = vector.load %arg18[%c0_184, %c0_185, %c0_186] : memref<4x32x16xf32, #tpu.memory_space<vmem>>, vector<1x32x16xf32>
    %247 = vector.shape_cast %246 : vector<1x32x16xf32> to vector<32x16xf32>
    %cst_187 = arith.constant dense<0.000000e+00> : vector<2x16xf32>
    %248 = tpu.matmul %245, %247, %cst_187 {dimension_numbers = #tpu.dot_dimension_numbers<[1], [0], [0], [1], [0, 0, 1, 1], [], []>} : vector<2x32xf32>, vector<32x16xf32>, vector<2x16xf32> -> vector<2x16xf32>
    %249 = vector.broadcast %244 : vector<1x16xf32> to vector<2x16xf32>
    %250 = arith.addf %249, %248 : vector<2x16xf32>
    %251 = vector.extract_strided_slice %243 {offsets = [2, 0], sizes = [2, 32], strides = [1, 1]} : vector<8x32xf32> to vector<2x32xf32>
    %c1_188 = arith.constant 1 : index
    %c0_189 = arith.constant 0 : index
    %c0_190 = arith.constant 0 : index
    %252 = vector.load %arg18[%c1_188, %c0_189, %c0_190] : memref<4x32x16xf32, #tpu.memory_space<vmem>>, vector<1x32x16xf32>
    %253 = vector.shape_cast %252 : vector<1x32x16xf32> to vector<32x16xf32>
    %cst_191 = arith.constant dense<0.000000e+00> : vector<2x16xf32>
    %254 = tpu.matmul %251, %253, %cst_191 {dimension_numbers = #tpu.dot_dimension_numbers<[1], [0], [0], [1], [0, 0, 1, 1], [], []>} : vector<2x32xf32>, vector<32x16xf32>, vector<2x16xf32> -> vector<2x16xf32>
    %255 = arith.addf %250, %254 : vector<2x16xf32>
    %256 = vector.extract_strided_slice %243 {offsets = [4, 0], sizes = [2, 32], strides = [1, 1]} : vector<8x32xf32> to vector<2x32xf32>
    %c2_192 = arith.constant 2 : index
    %c0_193 = arith.constant 0 : index
    %c0_194 = arith.constant 0 : index
    %257 = vector.load %arg18[%c2_192, %c0_193, %c0_194] : memref<4x32x16xf32, #tpu.memory_space<vmem>>, vector<1x32x16xf32>
    %258 = vector.shape_cast %257 : vector<1x32x16xf32> to vector<32x16xf32>
    %cst_195 = arith.constant dense<0.000000e+00> : vector<2x16xf32>
    %259 = tpu.matmul %256, %258, %cst_195 {dimension_numbers = #tpu.dot_dimension_numbers<[1], [0], [0], [1], [0, 0, 1, 1], [], []>} : vector<2x32xf32>, vector<32x16xf32>, vector<2x16xf32> -> vector<2x16xf32>
    %260 = arith.addf %255, %259 : vector<2x16xf32>
    %261 = vector.extract_strided_slice %243 {offsets = [6, 0], sizes = [2, 32], strides = [1, 1]} : vector<8x32xf32> to vector<2x32xf32>
    %c3_196 = arith.constant 3 : index
    %c0_197 = arith.constant 0 : index
    %c0_198 = arith.constant 0 : index
    %262 = vector.load %arg18[%c3_196, %c0_197, %c0_198] : memref<4x32x16xf32, #tpu.memory_space<vmem>>, vector<1x32x16xf32>
    %263 = vector.shape_cast %262 : vector<1x32x16xf32> to vector<32x16xf32>
    %cst_199 = arith.constant dense<0.000000e+00> : vector<2x16xf32>
    %264 = tpu.matmul %261, %263, %cst_199 {dimension_numbers = #tpu.dot_dimension_numbers<[1], [0], [0], [1], [0, 0, 1, 1], [], []>} : vector<2x32xf32>, vector<32x16xf32>, vector<2x16xf32> -> vector<2x16xf32>
    %265 = arith.addf %260, %264 : vector<2x16xf32>
    %c0_200 = arith.constant 0 : index
    %c0_201 = arith.constant 0 : index
    %266 = vector.load %arg20[%c0_200, %c0_201] : memref<2x16xf32, #tpu.memory_space<vmem>>, vector<2x16xf32>
    tpu.vector_store %arg20[%c0_200, %c0_201], %265 {strides = array<i32>} : memref<2x16xf32, #tpu.memory_space<vmem>>, vector<2x16xf32>,
    return
  }
}

</mosaic_0001>

<llo_original>
// kernel: _lambda_.1
$region0: #{_lambda_.1}
  #allocation0 [shape = 'u32[]', space=smem, size = 0x4, offset = 0x4, fixed_abs, tag = 'smem constant byte address 0x4 - core index']
  #allocation1 [shape = 'u32[144,128]{1,0:T(1,128)}', space=vmem, size = 0x12000, scoped, tag = 'internal scratch']
  #allocation2 [shape = 'bf16[128,512]{1,0:T(8,128)(2,1)}', space=vmem, size = 0x20000, scoped, tag = 'scratch operand']
  #allocation3 [shape = 'f32[368,32]{1,0:T(8,128)}', space=vmem, size = 0x2e000, scoped, tag = 'scratch operand']
  #allocation4 [shape = 'f32[128,32]{1,0:T(8,128)}', space=vmem, size = 0x10000, scoped, tag = 'scratch operand']
  #allocation5 [shape = 's32[1]{0}', space=sflag, size = 0x4, scoped, tag = 'scratch operand']
  #allocation8 [shape = 's32[]', space=sflag, size = 0x4, offset = 0, fixed_abs, tag = 'sflag constant byte address 0x0 - dummy sync flag']
  %s0 = inlined_call_operand.vmem [shape: f32[512,36], index: 0, kind: input, shape index: {}]
  %s1 = inlined_call_operand.vmem [shape: f32[36,32], index: 1, kind: input, shape index: {}]
  %s2 = inlined_call_operand.vmem [shape: f32[1,32], index: 2, kind: input, shape index: {}]
  %s3 = inlined_call_operand.vmem [shape: f32[1,32], index: 3, kind: input, shape index: {}, may-alias: {3,8,14}]
  %s4 = inlined_call_operand.vmem [shape: f32[1,32], index: 4, kind: input, shape index: {}, may-alias: {4,9,15}]
  %s5 = inlined_call_operand.vmem [shape: bf16[128,512], index: 5, kind: input, shape index: {}]
  %s6 = inlined_call_operand.vmem [shape: f32[9,32,32], index: 6, kind: input, shape index: {}]
  %s7 = inlined_call_operand.vmem [shape: f32[1,32], index: 7, kind: input, shape index: {}]
  %s8 = inlined_call_operand.vmem [shape: f32[1,32], index: 8, kind: input, shape index: {}, may-alias: {3,8,14}]
  %s9 = inlined_call_operand.vmem [shape: f32[1,32], index: 9, kind: input, shape index: {}, may-alias: {4,9,15}]
  %s10 = inlined_call_operand.vmem [shape: f32[1,320], index: 10, kind: input, shape index: {}]
  %s11 = inlined_call_operand.vmem [shape: f32[32,320], index: 11, kind: input, shape index: {}]
  %s12 = inlined_call_operand.vmem [shape: f32[9,32,32], index: 12, kind: input, shape index: {}]
  %s13 = inlined_call_operand.vmem [shape: f32[1,32], index: 13, kind: input, shape index: {}]
  %s14 = inlined_call_operand.vmem [shape: f32[1,32], index: 14, kind: input, shape index: {}, may-alias: {3,8,14}]
  %s15 = inlined_call_operand.vmem [shape: f32[1,32], index: 15, kind: input, shape index: {}, may-alias: {4,9,15}]
  %s16 = inlined_call_operand.vmem [shape: f32[1,96], index: 16, kind: input, shape index: {}]
  %s17 = inlined_call_operand.vmem [shape: f32[8,96], index: 17, kind: input, shape index: {}]
  %s18 = inlined_call_operand.vmem [shape: f32[4,32,16], index: 18, kind: input, shape index: {}]
  %s19 = inlined_call_operand.vmem [shape: f32[1,16], index: 19, kind: input, shape index: {}]
  %s20 = inlined_call_operand.hbm [shape: f32[2,16], index: 20, kind: output, shape index: {}]
  %s21 = sld [smem:[#allocation0]]
  $region120: #{_lambda_.1} parent=0
    _
  %s23 = ssub.s32 1, %s21
  %s24 = scalar_select 0, %s23, %s21
  $region1: #{_lambda_.1} parent=0
    #allocation6 [shape = 'u8[1024]{0}', space=vmem, size = 0x400, scoped, tag = 'output window, operand 0, single buffered']
    #allocation7 [shape = 's32[1]{0}', space=sflag, size = 0x4, scoped, tag = 'scoped memory for _lambda_.1']
    %25 = vsyncpa [#allocation7], 0
    // Predicated region
    $region2: #{_lambda_.1} parent=1 // pred_check
      _
    $region3: #{_lambda_.1} parent=1 // pred_check_branch
      %27 = sbr.rel (0) target = $region5
    $region4: #{_lambda_.1} parent=1 // pred_region
      _
    $region5: #{_lambda_.1} parent=1 // pred_fallthru
      _
    // Predicated region
    $region6: #{_lambda_.1} parent=1 // pred_check
      _
    $region7: #{_lambda_.1} parent=1 // pred_check_branch
      %29 = sbr.rel (0) target = $region9
    $region8: #{_lambda_.1} parent=1 // pred_region
      _
    $region9: #{_lambda_.1} parent=1 // pred_fallthru
      _
    // Predicated region
    $region10: #{_lambda_.1} parent=1 // pred_check
      _
    $region11: #{_lambda_.1} parent=1 // pred_check_branch
      %31 = sbr.rel (0) target = $region13
    $region12: #{_lambda_.1} parent=1 // pred_region
      _
    $region13: #{_lambda_.1} parent=1 // pred_fallthru
      _
    // Predicated region
    $region14: #{_lambda_.1} parent=1 // pred_check
      _
    $region15: #{_lambda_.1} parent=1 // pred_check_branch
      %33 = sbr.rel (0) target = $region17
    $region16: #{_lambda_.1} parent=1 // pred_region
      _
    $region17: #{_lambda_.1} parent=1 // pred_fallthru
      _
    // Predicated region
    $region18: #{_lambda_.1} parent=1 // pred_check
      _
    $region19: #{_lambda_.1} parent=1 // pred_check_branch
      %35 = sbr.rel (0) target = $region21
    $region20: #{_lambda_.1} parent=1 // pred_region
      _
    $region21: #{_lambda_.1} parent=1 // pred_fallthru
      _
    // Predicated region
    $region22: #{_lambda_.1} parent=1 // pred_check
      _
    $region23: #{_lambda_.1} parent=1 // pred_check_branch
      %37 = sbr.rel (0) target = $region25
    $region24: #{_lambda_.1} parent=1 // pred_region
      _
    $region25: #{_lambda_.1} parent=1 // pred_fallthru
      _
    // Predicated region
    $region26: #{_lambda_.1} parent=1 // pred_check
      _
    $region27: #{_lambda_.1} parent=1 // pred_check_branch
      %39 = sbr.rel (0) target = $region29
    $region28: #{_lambda_.1} parent=1 // pred_region
      _
    $region29: #{_lambda_.1} parent=1 // pred_fallthru
      _
    // Predicated region
    $region30: #{_lambda_.1} parent=1 // pred_check
      _
    $region31: #{_lambda_.1} parent=1 // pred_check_branch
      %41 = sbr.rel (0) target = $region33
    $region32: #{_lambda_.1} parent=1 // pred_region
      _
    $region33: #{_lambda_.1} parent=1 // pred_fallthru
      _
    // Predicated region
    $region34: #{_lambda_.1} parent=1 // pred_check
      _
    $region35: #{_lambda_.1} parent=1 // pred_check_branch
      %43 = sbr.rel (0) target = $region37
    $region36: #{_lambda_.1} parent=1 // pred_region
      _
    $region37: #{_lambda_.1} parent=1 // pred_fallthru
      _
    // Predicated region
    $region38: #{_lambda_.1} parent=1 // pred_check
      _
    $region39: #{_lambda_.1} parent=1 // pred_check_branch
      %45 = sbr.rel (0) target = $region41
    $region40: #{_lambda_.1} parent=1 // pred_region
      _
    $region41: #{_lambda_.1} parent=1 // pred_fallthru
      _
    // Predicated region
    $region42: #{_lambda_.1} parent=1 // pred_check
      _
    $region43: #{_lambda_.1} parent=1 // pred_check_branch
      %47 = sbr.rel (0) target = $region45
    $region44: #{_lambda_.1} parent=1 // pred_region
      _
    $region45: #{_lambda_.1} parent=1 // pred_fallthru
      _
    // Predicated region
    $region46: #{_lambda_.1} parent=1 // pred_check
      _
    $region47: #{_lambda_.1} parent=1 // pred_check_branch
      %49 = sbr.rel (0) target = $region49
    $region48: #{_lambda_.1} parent=1 // pred_region
      _
    $region49: #{_lambda_.1} parent=1 // pred_fallthru
      _
    // Predicated region
    $region50: #{_lambda_.1} parent=1 // pred_check
      _
    $region51: #{_lambda_.1} parent=1 // pred_check_branch
      %51 = sbr.rel (0) target = $region53
    $region52: #{_lambda_.1} parent=1 // pred_region
      _
    $region53: #{_lambda_.1} parent=1 // pred_fallthru
      _
    // Predicated region
    $region54: #{_lambda_.1} parent=1 // pred_check
      _
    $region55: #{_lambda_.1} parent=1 // pred_check_branch
      %53 = sbr.rel (0) target = $region57
    $region56: #{_lambda_.1} parent=1 // pred_region
      _
    $region57: #{_lambda_.1} parent=1 // pred_fallthru
      _
    // Predicated region
    $region58: #{_lambda_.1} parent=1 // pred_check
      _
    $region59: #{_lambda_.1} parent=1 // pred_check_branch
      %55 = sbr.rel (0) target = $region61
    $region60: #{_lambda_.1} parent=1 // pred_region
      _
    $region61: #{_lambda_.1} parent=1 // pred_fallthru
      _
    // Predicated region
    $region62: #{_lambda_.1} parent=1 // pred_check
      _
    $region63: #{_lambda_.1} parent=1 // pred_check_branch
      %57 = sbr.rel (0) target = $region65
    $region64: #{_lambda_.1} parent=1 // pred_region
      _
    $region65: #{_lambda_.1} parent=1 // pred_fallthru
      _
    // Predicated region
    $region66: #{_lambda_.1} parent=1 // pred_check
      _
    $region67: #{_lambda_.1} parent=1 // pred_check_branch
      %59 = sbr.rel (0) target = $region69
    $region68: #{_lambda_.1} parent=1 // pred_region
      _
    $region69: #{_lambda_.1} parent=1 // pred_fallthru
      _
    // Predicated region
    $region70: #{_lambda_.1} parent=1 // pred_check
      _
    $region71: #{_lambda_.1} parent=1 // pred_check_branch
      %61 = sbr.rel (0) target = $region73
    $region72: #{_lambda_.1} parent=1 // pred_region
      _
    $region73: #{_lambda_.1} parent=1 // pred_fallthru
      _
    // Predicated region
    $region74: #{_lambda_.1} parent=1 // pred_check
      _
    $region75: #{_lambda_.1} parent=1 // pred_check_branch
      %63 = sbr.rel (0) target = $region77
    $region76: #{_lambda_.1} parent=1 // pred_region
      _
    $region77: #{_lambda_.1} parent=1 // pred_fallthru
      _
    %p65 = scmp.lt.u32.totalorder 256, 8
    %p66 = pneg %p65
    // Predicated region
    $region78: #{_lambda_.1} parent=1 // pred_check
      _
    $region79: #{_lambda_.1} parent=1 // pred_check_branch
      %68 = sbr.rel (%p65) target = $region81
    $region80: #{_lambda_.1} parent=1 // pred_region
      %s84 = sand.u32 256, 7
      %p85 = scmp.eq.s32.totalorder %s84, 0
      // Predicated region
      $region93: #{_lambda_.1} parent=80 // pred_check
        %p86 = pneg %p85
      $region94: #{_lambda_.1} parent=80 // pred_check_branch
        %88 = sbr.rel (%p86) target = $region96
      $region95: #{_lambda_.1} parent=80 // pred_region
        loop: start=0, step=1, limit=1
        $region97: #{_lambda_.1} parent=95 // loop_pre_header
          _
        $region98: #{_lambda_.1} parent=95 // loop_header
          %s90 = sphi 0, %s94
          %p91 = scmp.ge.s32.totalorder %s90, 1
          %s95 = sphi %s5, %s5
          %s96 = sphi [#allocation2], [#allocation2]
        $region99: #{_lambda_.1} parent=95 // loop_header_branch
          %93 = sbr.rel (%p91) target = $region103
        $region100: #{_lambda_.1} parent=95 // loop_body
          %v97 = vld [vmem:[%s95] sm:$0xff]
          %98 = vst [vmem:[%s96] sm:$0xff] %v97
          %v99 = vld [vmem:[%s95 + $0x8] sm:$0xff]
          %100 = vst [vmem:[%s96 + $0x8] sm:$0xff] %v99
          %v101 = vld [vmem:[%s95 + $0x10] sm:$0xff]
          %102 = vst [vmem:[%s96 + $0x10] sm:$0xff] %v101
          %v103 = vld [vmem:[%s95 + $0x18] sm:$0xff]
          %104 = vst [vmem:[%s96 + $0x18] sm:$0xff] %v103
          %v105 = vld [vmem:[%s95 + $0x20] sm:$0xff]
          %106 = vst [vmem:[%s96 + $0x20] sm:$0xff] %v105
          %v107 = vld [vmem:[%s95 + $0x28] sm:$0xff]
          %108 = vst [vmem:[%s96 + $0x28] sm:$0xff] %v107
          %v109 = vld [vmem:[%s95 + $0x30] sm:$0xff]
          %110 = vst [vmem:[%s96 + $0x30] sm:$0xff] %v109
          %v111 = vld [vmem:[%s95 + $0x38] sm:$0xff]
          %112 = vst [vmem:[%s96 + $0x38] sm:$0xff] %v111
          %v113 = vld [vmem:[%s95 + $0x40] sm:$0xff]
          %114 = vst [vmem:[%s96 + $0x40] sm:$0xff] %v113
          %v115 = vld [vmem:[%s95 + $0x48] sm:$0xff]
          %116 = vst [vmem:[%s96 + $0x48] sm:$0xff] %v115
          %v117 = vld [vmem:[%s95 + $0x50] sm:$0xff]
          %118 = vst [vmem:[%s96 + $0x50] sm:$0xff] %v117
          %v119 = vld [vmem:[%s95 + $0x58] sm:$0xff]
          %120 = vst [vmem:[%s96 + $0x58] sm:$0xff] %v119
          %v121 = vld [vmem:[%s95 + $0x60] sm:$0xff]
          %122 = vst [vmem:[%s96 + $0x60] sm:$0xff] %v121
          %v123 = vld [vmem:[%s95 + $0x68] sm:$0xff]
          %124 = vst [vmem:[%s96 + $0x68] sm:$0xff] %v123
          %v125 = vld [vmem:[%s95 + $0x70] sm:$0xff]
          %126 = vst [vmem:[%s96 + $0x70] sm:$0xff] %v125
          %v127 = vld [vmem:[%s95 + $0x78] sm:$0xff]
          %128 = vst [vmem:[%s96 + $0x78] sm:$0xff] %v127
          %v129 = vld [vmem:[%s95 + $0x80] sm:$0xff]
          %130 = vst [vmem:[%s96 + $0x80] sm:$0xff] %v129
          %v131 = vld [vmem:[%s95 + $0x88] sm:$0xff]
          %132 = vst [vmem:[%s96 + $0x88] sm:$0xff] %v131
          %v133 = vld [vmem:[%s95 + $0x90] sm:$0xff]
          %134 = vst [vmem:[%s96 + $0x90] sm:$0xff] %v133
          %v135 = vld [vmem:[%s95 + $0x98] sm:$0xff]
          %136 = vst [vmem:[%s96 + $0x98] sm:$0xff] %v135
          %v137 = vld [vmem:[%s95 + $0xa0] sm:$0xff]
          %138 = vst [vmem:[%s96 + $0xa0] sm:$0xff] %v137
          %v139 = vld [vmem:[%s95 + $0xa8] sm:$0xff]
          %140 = vst [vmem:[%s96 + $0xa8] sm:$0xff] %v139
          %v141 = vld [vmem:[%s95 + $0xb0] sm:$0xff]
          %142 = vst [vmem:[%s96 + $0xb0] sm:$0xff] %v141
          %v143 = vld [vmem:[%s95 + $0xb8] sm:$0xff]
          %144 = vst [vmem:[%s96 + $0xb8] sm:$0xff] %v143
          %v145 = vld [vmem:[%s95 + $0xc0] sm:$0xff]
          %146 = vst [vmem:[%s96 + $0xc0] sm:$0xff] %v145
          %v147 = vld [vmem:[%s95 + $0xc8] sm:$0xff]
          %148 = vst [vmem:[%s96 + $0xc8] sm:$0xff] %v147
          %v149 = vld [vmem:[%s95 + $0xd0] sm:$0xff]
          %150 = vst [vmem:[%s96 + $0xd0] sm:$0xff] %v149
          %v151 = vld [vmem:[%s95 + $0xd8] sm:$0xff]
          %152 = vst [vmem:[%s96 + $0xd8] sm:$0xff] %v151
          %v153 = vld [vmem:[%s95 + $0xe0] sm:$0xff]
          %154 = vst [vmem:[%s96 + $0xe0] sm:$0xff] %v153
          %v155 = vld [vmem:[%s95 + $0xe8] sm:$0xff]
          %156 = vst [vmem:[%s96 + $0xe8] sm:$0xff] %v155
          %v157 = vld [vmem:[%s95 + $0xf0] sm:$0xff]
          %158 = vst [vmem:[%s96 + $0xf0] sm:$0xff] %v157
          %v159 = vld [vmem:[%s95 + $0xf8] sm:$0xff]
          %160 = vst [vmem:[%s96 + $0xf8] sm:$0xff] %v159
        $region101: #{_lambda_.1} parent=95 // loop_footer
          %s94 = sadd.s32 1, %s90
        $region102: #{_lambda_.1} parent=95 // loop_footer_branch
          %89 = sbr.rel target = $region98
        $region103: #{_lambda_.1} parent=95 // loop_exit
          _
      $region96: #{_lambda_.1} parent=80 // pred_fallthru
        _
      %p161 = pneg %p85
      // Predicated region
      $region104: #{_lambda_.1} parent=80 // pred_check
        _
      $region105: #{_lambda_.1} parent=80 // pred_check_branch
        %163 = sbr.rel (%p85) target = $region107
      $region106: #{_lambda_.1} parent=80 // pred_region
        %s164 = sand.u32 256, 7
      $region107: #{_lambda_.1} parent=80 // pred_fallthru
        _
    $region81: #{_lambda_.1} parent=1 // pred_fallthru
      _
    // Predicated region
    $region82: #{_lambda_.1} parent=1 // pred_check
      %p69 = pneg %p65
    $region83: #{_lambda_.1} parent=1 // pred_check_branch
      %71 = sbr.rel (%p69) target = $region85
    $region84: #{_lambda_.1} parent=1 // pred_region
      %s72 = sshll.u32 1, 256
      %s73 = ssub.s32 %s72, 1
      loop: start=0, step=1, limit=1
      $region86: #{_lambda_.1} parent=84 // loop_pre_header
        _
      $region87: #{_lambda_.1} parent=84 // loop_header
        %s75 = sphi 0, %s79
        %p76 = scmp.ge.s32.totalorder %s75, 1
        %s80 = sphi %s5, %s5
        %s81 = sphi [#allocation2], [#allocation2]
      $region88: #{_lambda_.1} parent=84 // loop_header_branch
        %78 = sbr.rel (%p76) target = $region92
      $region89: #{_lambda_.1} parent=84 // loop_body
        %v82 = vld [vmem:[%s80] sm:%s73]
        %83 = vst [vmem:[%s81] sm:%s73] %v82
      $region90: #{_lambda_.1} parent=84 // loop_footer
        %s79 = sadd.s32 1, %s75
      $region91: #{_lambda_.1} parent=84 // loop_footer_branch
        %74 = sbr.rel target = $region87
      $region92: #{_lambda_.1} parent=84 // loop_exit
        _
    $region85: #{_lambda_.1} parent=1 // pred_fallthru
      _
    // Predicated region
    $region108: #{_lambda_.1} parent=1 // pred_check
      _
    $region109: #{_lambda_.1} parent=1 // pred_check_branch
      %167 = sbr.rel (0) target = $region111
    $region110: #{_lambda_.1} parent=1 // pred_region
      %168 = vsyncadd [#allocation5], 4096
    $region111: #{_lambda_.1} parent=1 // pred_fallthru
      _
    %vm169 = vcmask 261120
    %170 = vst.msk [vmem:[#allocation3] sm:$0xff] %vm169, 0.0
    %171 = vst.msk [vmem:[#allocation3 + $0x8] sm:$0xff] %vm169, 0.0
    %172 = vst.msk [vmem:[#allocation3 + $0x10] sm:$0xff] %vm169, 0.0
    %173 = vst.msk [vmem:[#allocation3 + $0x18] sm:$0xff] %vm169, 0.0
    %174 = vst.msk [vmem:[#allocation3 + $0x20] sm:$0xff] %vm169, 0.0
    %175 = vst.msk [vmem:[#allocation3 + $0x28] sm:$0xff] %vm169, 0.0
    %176 = vst.msk [vmem:[#allocation3 + $0x30] sm:$0xff] %vm169, 0.0
    %177 = vst.msk [vmem:[#allocation3 + $0x38] sm:$0xff] %vm169, 0.0
    %178 = vst.msk [vmem:[#allocation3 + $0x40] sm:$0xff] %vm169, 0.0
    %179 = vst.msk [vmem:[#allocation3 + $0x48] sm:$0xff] %vm169, 0.0
    %180 = vst.msk [vmem:[#allocation3 + $0x50] sm:$0xff] %vm169, 0.0
    %181 = vst.msk [vmem:[#allocation3 + $0x58] sm:$0xff] %vm169, 0.0
    %182 = vst.msk [vmem:[#allocation3 + $0x60] sm:$0xff] %vm169, 0.0
    %183 = vst.msk [vmem:[#allocation3 + $0x68] sm:$0xff] %vm169, 0.0
    %184 = vst.msk [vmem:[#allocation3 + $0x70] sm:$0xff] %vm169, 0.0
    %185 = vst.msk [vmem:[#allocation3 + $0x78] sm:$0xff] %vm169, 0.0
    %186 = vst.msk [vmem:[#allocation3 + $0x80] sm:$0xff] %vm169, 0.0
    %187 = vst.msk [vmem:[#allocation3 + $0x88] sm:$0xff] %vm169, 0.0
    %188 = vst.msk [vmem:[#allocation3 + $0x90] sm:$0xff] %vm169, 0.0
    %189 = vst.msk [vmem:[#allocation3 + $0x98] sm:$0xff] %vm169, 0.0
    %190 = vst.msk [vmem:[#allocation3 + $0xa0] sm:$0xff] %vm169, 0.0
    %191 = vst.msk [vmem:[#allocation3 + $0xa8] sm:$0xff] %vm169, 0.0
    %192 = vst.msk [vmem:[#allocation3 + $0xb0] sm:$0xff] %vm169, 0.0
    %193 = vst.msk [vmem:[#allocation3 + $0xb8] sm:$0xff] %vm169, 0.0
    %194 = vst.msk [vmem:[#allocation3 + $0xc0] sm:$0xff] %vm169, 0.0
    %195 = vst.msk [vmem:[#allocation3 + $0xc8] sm:$0xff] %vm169, 0.0
    %196 = vst.msk [vmem:[#allocation3 + $0xd0] sm:$0xff] %vm169, 0.0
    %197 = vst.msk [vmem:[#allocation3 + $0xd8] sm:$0xff] %vm169, 0.0
    %198 = vst.msk [vmem:[#allocation3 + $0xe0] sm:$0xff] %vm169, 0.0
    %199 = vst.msk [vmem:[#allocation3 + $0xe8] sm:$0xff] %vm169, 0.0
    %200 = vst.msk [vmem:[#allocation3 + $0xf0] sm:$0xff] %vm169, 0.0
    %201 = vst.msk [vmem:[#allocation3 + $0xf8] sm:$0xff] %vm169, 0.0
    %202 = vst.msk [vmem:[#allocation3 + $0x100] sm:$0xff] %vm169, 0.0
    %203 = vst.msk [vmem:[#allocation3 + $0x108] sm:$0xff] %vm169, 0.0
    %204 = vst.msk [vmem:[#allocation3 + $0x110] sm:$0xff] %vm169, 0.0
    %205 = vst.msk [vmem:[#allocation3 + $0x118] sm:$0xff] %vm169, 0.0
    %206 = vst.msk [vmem:[#allocation3 + $0x120] sm:$0xff] %vm169, 0.0
    %207 = vst.msk [vmem:[#allocation3 + $0x128] sm:$0xff] %vm169, 0.0
    %208 = vst.msk [vmem:[#allocation3 + $0x130] sm:$0xff] %vm169, 0.0
    %209 = vst.msk [vmem:[#allocation3 + $0x138] sm:$0xff] %vm169, 0.0
    %210 = vst.msk [vmem:[#allocation3 + $0x140] sm:$0xff] %vm169, 0.0
    %211 = vst.msk [vmem:[#allocation3 + $0x148] sm:$0xff] %vm169, 0.0
    %212 = vst.msk [vmem:[#allocation3 + $0x150] sm:$0xff] %vm169, 0.0
    %213 = vst.msk [vmem:[#allocation3 + $0x158] sm:$0xff] %vm169, 0.0
    %214 = vst.msk [vmem:[#allocation3 + $0x160] sm:$0xff] %vm169, 0.0
    %215 = vst.msk [vmem:[#allocation3 + $0x168] sm:$0xff] %vm169, 0.0
    %216 = vst.msk [vmem:[#allocation4] sm:$0xff] %vm169, 0.0
    %217 = vst.msk [vmem:[#allocation4 + $0x8] sm:$0xff] %vm169, 0.0
    %218 = vst.msk [vmem:[#allocation4 + $0x10] sm:$0xff] %vm169, 0.0
    %219 = vst.msk [vmem:[#allocation4 + $0x18] sm:$0xff] %vm169, 0.0
    %220 = vst.msk [vmem:[#allocation4 + $0x20] sm:$0xff] %vm169, 0.0
    %221 = vst.msk [vmem:[#allocation4 + $0x28] sm:$0xff] %vm169, 0.0
    %222 = vst.msk [vmem:[#allocation4 + $0x30] sm:$0xff] %vm169, 0.0
    %223 = vst.msk [vmem:[#allocation4 + $0x38] sm:$0xff] %vm169, 0.0
    %224 = vst.msk [vmem:[#allocation4 + $0x40] sm:$0xff] %vm169, 0.0
    %225 = vst.msk [vmem:[#allocation4 + $0x48] sm:$0xff] %vm169, 0.0
    %226 = vst.msk [vmem:[#allocation4 + $0x50] sm:$0xff] %vm169, 0.0
    %227 = vst.msk [vmem:[#allocation4 + $0x58] sm:$0xff] %vm169, 0.0
    %228 = vst.msk [vmem:[#allocation4 + $0x60] sm:$0xff] %vm169, 0.0
    %229 = vst.msk [vmem:[#allocation4 + $0x68] sm:$0xff] %vm169, 0.0
    %230 = vst.msk [vmem:[#allocation4 + $0x70] sm:$0xff] %vm169, 0.0
    %231 = vst.msk [vmem:[#allocation4 + $0x78] sm:$0xff] %vm169, 0.0
    %v232 = vld [vmem:[%s0] sm:$0xff]
    %v233 = vld [vmem:[%s0 + $0x8] sm:$0xff]
    %v234 = vld [vmem:[%s0 + $0x10] sm:$0xff]
    %v235 = vld [vmem:[%s0 + $0x18] sm:$0xff]
    %v236 = vld [vmem:[%s0 + $0x20] sm:$0xff]
    %v237 = vld [vmem:[%s0 + $0x28] sm:$0xff]
    %v238 = vld [vmem:[%s0 + $0x30] sm:$0xff]
    %v239 = vld [vmem:[%s0 + $0x38] sm:$0xff]
    %v240 = vld [vmem:[%s0 + $0x40] sm:$0xff]
    %v241 = vld [vmem:[%s0 + $0x48] sm:$0xff]
    %v242 = vld [vmem:[%s0 + $0x50] sm:$0xff]
    %v243 = vld [vmem:[%s0 + $0x58] sm:$0xff]
    %v244 = vld [vmem:[%s0 + $0x60] sm:$0xff]
    %v245 = vld [vmem:[%s0 + $0x68] sm:$0xff]
    %v246 = vld [vmem:[%s0 + $0x70] sm:$0xff]
    %v247 = vld [vmem:[%s0 + $0x78] sm:$0xff]
    %v248 = vld [vmem:[%s0 + $0x80] sm:$0xff]
    %v249 = vld [vmem:[%s0 + $0x88] sm:$0xff]
    %v250 = vld [vmem:[%s0 + $0x90] sm:$0xff]
    %v251 = vld [vmem:[%s0 + $0x98] sm:$0xff]
    %v252 = vld [vmem:[%s0 + $0xa0] sm:$0xff]
    %v253 = vld [vmem:[%s0 + $0xa8] sm:$0xff]
    %v254 = vld [vmem:[%s0 + $0xb0] sm:$0xff]
    %v255 = vld [vmem:[%s0 + $0xb8] sm:$0xff]
    %v256 = vld [vmem:[%s0 + $0xc0] sm:$0xff]
    %v257 = vld [vmem:[%s0 + $0xc8] sm:$0xff]
    %v258 = vld [vmem:[%s0 + $0xd0] sm:$0xff]
    %v259 = vld [vmem:[%s0 + $0xd8] sm:$0xff]
    %v260 = vld [vmem:[%s0 + $0xe0] sm:$0xff]
    %v261 = vld [vmem:[%s0 + $0xe8] sm:$0xff]
    %v262 = vld [vmem:[%s0 + $0xf0] sm:$0xff]
    %v263 = vld [vmem:[%s0 + $0xf8] sm:$0xff]
    %v264 = vld [vmem:[%s0 + $0x100] sm:$0xff]
    %v265 = vld [vmem:[%s0 + $0x108] sm:$0xff]
    %v266 = vld [vmem:[%s0 + $0x110] sm:$0xff]
    %v267 = vld [vmem:[%s0 + $0x118] sm:$0xff]
    %v268 = vld [vmem:[%s0 + $0x120] sm:$0xff]
    %v269 = vld [vmem:[%s0 + $0x128] sm:$0xff]
    %v270 = vld [vmem:[%s0 + $0x130] sm:$0xff]
    %v271 = vld [vmem:[%s0 + $0x138] sm:$0xff]
    %v272 = vld [vmem:[%s0 + $0x140] sm:$0xff]
    %v273 = vld [vmem:[%s0 + $0x148] sm:$0xff]
    %v274 = vld [vmem:[%s0 + $0x150] sm:$0xff]
    %v275 = vld [vmem:[%s0 + $0x158] sm:$0xff]
    %v276 = vld [vmem:[%s0 + $0x160] sm:$0xff]
    %v277 = vld [vmem:[%s0 + $0x168] sm:$0xff]
    %v278 = vld [vmem:[%s0 + $0x170] sm:$0xff]
    %v279 = vld [vmem:[%s0 + $0x178] sm:$0xff]
    %v280 = vld [vmem:[%s0 + $0x180] sm:$0xff]
    %v281 = vld [vmem:[%s0 + $0x188] sm:$0xff]
    %v282 = vld [vmem:[%s0 + $0x190] sm:$0xff]
    %v283 = vld [vmem:[%s0 + $0x198] sm:$0xff]
    %v284 = vld [vmem:[%s0 + $0x1a0] sm:$0xff]
    %v285 = vld [vmem:[%s0 + $0x1a8] sm:$0xff]
    %v286 = vld [vmem:[%s0 + $0x1b0] sm:$0xff]
    %v287 = vld [vmem:[%s0 + $0x1b8] sm:$0xff]
    %v288 = vld [vmem:[%s0 + $0x1c0] sm:$0xff]
    %v289 = vld [vmem:[%s0 + $0x1c8] sm:$0xff]
    %v290 = vld [vmem:[%s0 + $0x1d0] sm:$0xff]
    %v291 = vld [vmem:[%s0 + $0x1d8] sm:$0xff]
    %v292 = vld [vmem:[%s0 + $0x1e0] sm:$0xff]
    %v293 = vld [vmem:[%s0 + $0x1e8] sm:$0xff]
    %v294 = vld [vmem:[%s0 + $0x1f0] sm:$0xff]
    %v295 = vld [vmem:[%s0 + $0x1f8] sm:$0xff]
    %v296 = vld [vmem:[%s1] sm:$0xff]
    %v297 = vld [vmem:[%s1 + $0x8] sm:$0xff]
    %v298 = vld [vmem:[%s1 + $0x10] sm:$0xff]
    %v299 = vld [vmem:[%s1 + $0x18] sm:$0xff]
    %v300 = vld [vmem:[%s1 + $0x20] sm:$0xf]
    %v301 = vld [vmem:[%s2] sm:$0x1]
    %v303 = vlaneseq
    %v304 = vshrl.u32 %v303, 7
    %v305 = vsub.s32 0, %v304
    %v306 = vrot.slane %v301, %v305
    %vm308 = vcmask 293888
    %v310 = vsel %vm308, %v232, 0
    %v313 = vsel %vm308, %v233, 0
    %v316 = vsel %vm308, %v234, 0
    %v319 = vsel %vm308, %v235, 0
    %v322 = vsel %vm308, %v236, 0
    %v325 = vsel %vm308, %v237, 0
    %v328 = vsel %vm308, %v238, 0
    %v331 = vsel %vm308, %v239, 0
    %v334 = vsel %vm308, %v240, 0
    %v337 = vsel %vm308, %v241, 0
    %v340 = vsel %vm308, %v242, 0
    %v343 = vsel %vm308, %v243, 0
    %v346 = vsel %vm308, %v244, 0
    %v349 = vsel %vm308, %v245, 0
    %v352 = vsel %vm308, %v246, 0
    %v355 = vsel %vm308, %v247, 0
    %v358 = vsel %vm308, %v248, 0
    %v361 = vsel %vm308, %v249, 0
    %v364 = vsel %vm308, %v250, 0
    %v367 = vsel %vm308, %v251, 0
    %v370 = vsel %vm308, %v252, 0
    %v373 = vsel %vm308, %v253, 0
    %v376 = vsel %vm308, %v254, 0
    %v379 = vsel %vm308, %v255, 0
    %v382 = vsel %vm308, %v256, 0
    %v385 = vsel %vm308, %v257, 0
    %v388 = vsel %vm308, %v258, 0
    %v391 = vsel %vm308, %v259, 0
    %v394 = vsel %vm308, %v260, 0
    %v397 = vsel %vm308, %v261, 0
    %v400 = vsel %vm308, %v262, 0
    %v403 = vsel %vm308, %v263, 0
    %v406 = vsel %vm308, %v264, 0
    %v409 = vsel %vm308, %v265, 0
    %v412 = vsel %vm308, %v266, 0
    %v415 = vsel %vm308, %v267, 0
    %v418 = vsel %vm308, %v268, 0
    %v421 = vsel %vm308, %v269, 0
    %v424 = vsel %vm308, %v270, 0
    %v427 = vsel %vm308, %v271, 0
    %v430 = vsel %vm308, %v272, 0
    %v433 = vsel %vm308, %v273, 0
    %v436 = vsel %vm308, %v274, 0
    %v439 = vsel %vm308, %v275, 0
    %v442 = vsel %vm308, %v276, 0
    %v445 = vsel %vm308, %v277, 0
    %v448 = vsel %vm308, %v278, 0
    %v451 = vsel %vm308, %v279, 0
    %v454 = vsel %vm308, %v280, 0
    %v457 = vsel %vm308, %v281, 0
    %v460 = vsel %vm308, %v282, 0
    %v463 = vsel %vm308, %v283, 0
    %v466 = vsel %vm308, %v284, 0
    %v469 = vsel %vm308, %v285, 0
    %v472 = vsel %vm308, %v286, 0
    %v475 = vsel %vm308, %v287, 0
    %v478 = vsel %vm308, %v288, 0
    %v481 = vsel %vm308, %v289, 0
    %v484 = vsel %vm308, %v290, 0
    %v487 = vsel %vm308, %v291, 0
    %v490 = vsel %vm308, %v292, 0
    %v493 = vsel %vm308, %v293, 0
    %v496 = vsel %vm308, %v294, 0
    %v499 = vsel %vm308, %v295, 0
    %vm501 = vcmask 1043456
    %v503 = vsel %vm501, %v300, 0
    %505 = vmatprep.subr.mxu0 0.0
    %506 = vmatpush1.msra.mxu0 0.0
    %507 = vmatprep.subr.mxu0 0.0
    %508 = vmatpush1.msra.mxu0 0.0
    %509 = vmatprep.subr.mxu0 0.0
    %510 = vmatpush1.msra.mxu0 0.0
    %511 = vmatprep.subr.mxu0 0.0
    %512 = vmatpush1.msra.mxu0 0.0
    %513 = vmatprep.subr.mxu0 0.0
    %514 = vmatpush1.msra.mxu0 0.0
    %515 = vmatprep.subr.mxu0 0.0
    %516 = vmatpush1.msra.mxu0 0.0
    %517 = vmatprep.subr.mxu0 0.0
    %518 = vmatpush1.msra.mxu0 0.0
    %519 = vmatprep.subr.mxu0 0.0
    %520 = vmatpush1.msra.mxu0 0.0
    %521 = vmatprep.subr.mxu0 0.0
    %522 = vmatpush1.msra.mxu0 0.0
    %523 = vmatprep.subr.mxu0 0.0
    %524 = vmatpush1.msra.mxu0 0.0
    %525 = vmatprep.subr.mxu0 0.0
    %526 = vmatpush1.msra.mxu0 0.0
    %527 = vmatprep.subr.mxu0 0.0
    %528 = vmatpush1.msra.mxu0 %v503
    %529 = vmatprep.subr.mxu0 0.0
    %530 = vmatpush1.msra.mxu0 %v299
    %531 = vmatprep.subr.mxu0 0.0
    %532 = vmatpush1.msra.mxu0 %v298
    %533 = vmatprep.subr.mxu0 0.0
    %534 = vmatpush1.msra.mxu0 %v297
    %535 = vmatprep.subr.mxu0 0.0
    %536 = vmatpush1.msra.mxu0 %v296
    %537 = vmatprep.subr.mxu0 0.0
    %538 = vmatpush2.msra.mxu0 0.0
    %539 = vmatprep.subr.mxu0 0.0
    %540 = vmatpush2.msra.mxu0 0.0
    %541 = vmatprep.subr.mxu0 0.0
    %542 = vmatpush2.msra.mxu0 0.0
    %543 = vmatprep.subr.mxu0 0.0
    %544 = vmatpush2.msra.mxu0 0.0
    %545 = vmatprep.subr.mxu0 0.0
    %546 = vmatpush2.msra.mxu0 0.0
    %547 = vmatprep.subr.mxu0 0.0
    %548 = vmatpush2.msra.mxu0 0.0
    %549 = vmatprep.subr.mxu0 0.0
    %550 = vmatpush2.msra.mxu0 0.0
    %551 = vmatprep.subr.mxu0 0.0
    %552 = vmatpush2.msra.mxu0 0.0
    %553 = vmatprep.subr.mxu0 0.0
    %554 = vmatpush2.msra.mxu0 0.0
    %555 = vmatprep.subr.mxu0 0.0
    %556 = vmatpush2.msra.mxu0 0.0
    %557 = vmatprep.subr.mxu0 0.0
    %558 = vmatpush2.msra.mxu0 0.0
    %559 = vmatprep.subr.mxu0 0.0
    %560 = vmatpush2.msra.mxu0 0.0
    %561 = vmatprep.subr.mxu0 0.0
    %562 = vmatpush2.msra.mxu0 0.0
    %563 = vmatprep.subr.mxu0 0.0
    %564 = vmatpush2.msra.mxu0 0.0
    %565 = vmatprep.subr.mxu0 0.0
    %566 = vmatpush2.msra.mxu0 0.0
    %567 = vmatprep.subr.mxu0 0.0
    %568 = vmatpush2.msra.mxu0 0.0
    %569 = vmatprep.mubr.f32.mxu0 0.0
    %570 = vmatmul.mubr.f32.gmra.mxu0 %v310
    %v571 = vpop.f32.mrf.mxu0
    %v572 = vadd.f32 %v306, %v571
    %v573 = vpop.f32.mrf.mxu0
    %574 = vmatprep.mubr.f32.mxu0 0.0
    %575 = vmatmul.mubr.f32.gmra.mxu0 %v313
    %v576 = vpop.f32.mrf.mxu0
    %v577 = vadd.f32 %v306, %v576
    %v578 = vpop.f32.mrf.mxu0
    %579 = vmatprep.mubr.f32.mxu0 0.0
    %580 = vmatmul.mubr.f32.gmra.mxu0 %v316
    %v581 = vpop.f32.mrf.mxu0
    %v582 = vadd.f32 %v306, %v581
    %v583 = vpop.f32.mrf.mxu0
    %584 = vmatprep.mubr.f32.mxu0 0.0
    %585 = vmatmul.mubr.f32.gmra.mxu0 %v319
    %v586 = vpop.f32.mrf.mxu0
    %v587 = vadd.f32 %v306, %v586
    %v588 = vpop.f32.mrf.mxu0
    %589 = vmatprep.mubr.f32.mxu0 0.0
    %590 = vmatmul.mubr.f32.gmra.mxu0 %v322
    %v591 = vpop.f32.mrf.mxu0
    %v592 = vadd.f32 %v306, %v591
    %v593 = vpop.f32.mrf.mxu0
    %594 = vmatprep.mubr.f32.mxu0 0.0
    %595 = vmatmul.mubr.f32.gmra.mxu0 %v325
    %v596 = vpop.f32.mrf.mxu0
    %v597 = vadd.f32 %v306, %v596
    %v598 = vpop.f32.mrf.mxu0
    %599 = vmatprep.mubr.f32.mxu0 0.0
    %600 = vmatmul.mubr.f32.gmra.mxu0 %v328
    %v601 = vpop.f32.mrf.mxu0
    %v602 = vadd.f32 %v306, %v601
    %v603 = vpop.f32.mrf.mxu0
    %604 = vmatprep.mubr.f32.mxu0 0.0
    %605 = vmatmul.mubr.f32.gmra.mxu0 %v331
    %v606 = vpop.f32.mrf.mxu0
    %v607 = vadd.f32 %v306, %v606
    %v608 = vpop.f32.mrf.mxu0
    %609 = vmatprep.mubr.f32.mxu0 0.0
    %610 = vmatmul.mubr.f32.gmra.mxu0 %v334
    %v611 = vpop.f32.mrf.mxu0
    %v612 = vadd.f32 %v306, %v611
    %v613 = vpop.f32.mrf.mxu0
    %614 = vmatprep.mubr.f32.mxu0 0.0
    %615 = vmatmul.mubr.f32.gmra.mxu0 %v337
    %v616 = vpop.f32.mrf.mxu0
    %v617 = vadd.f32 %v306, %v616
    %v618 = vpop.f32.mrf.mxu0
    %619 = vmatprep.mubr.f32.mxu0 0.0
    %620 = vmatmul.mubr.f32.gmra.mxu0 %v340
    %v621 = vpop.f32.mrf.mxu0
    %v622 = vadd.f32 %v306, %v621
    %v623 = vpop.f32.mrf.mxu0
    %624 = vmatprep.mubr.f32.mxu0 0.0
    %625 = vmatmul.mubr.f32.gmra.mxu0 %v343
    %v626 = vpop.f32.mrf.mxu0
    %v627 = vadd.f32 %v306, %v626
    %v628 = vpop.f32.mrf.mxu0
    %629 = vmatprep.mubr.f32.mxu0 0.0
    %630 = vmatmul.mubr.f32.gmra.mxu0 %v346
    %v631 = vpop.f32.mrf.mxu0
    %v632 = vadd.f32 %v306, %v631
    %v633 = vpop.f32.mrf.mxu0
    %634 = vmatprep.mubr.f32.mxu0 0.0
    %635 = vmatmul.mubr.f32.gmra.mxu0 %v349
    %v636 = vpop.f32.mrf.mxu0
    %v637 = vadd.f32 %v306, %v636
    %v638 = vpop.f32.mrf.mxu0
    %639 = vmatprep.mubr.f32.mxu0 0.0
    %640 = vmatmul.mubr.f32.gmra.mxu0 %v352
    %v641 = vpop.f32.mrf.mxu0
    %v642 = vadd.f32 %v306, %v641
    %v643 = vpop.f32.mrf.mxu0
    %644 = vmatprep.mubr.f32.mxu0 0.0
    %645 = vmatmul.mubr.f32.gmra.mxu0 %v355
    %v646 = vpop.f32.mrf.mxu0
    %v647 = vadd.f32 %v306, %v646
    %v648 = vpop.f32.mrf.mxu0
    %649 = vmatprep.mubr.f32.mxu0 0.0
    %650 = vmatmul.mubr.f32.gmra.mxu0 %v358
    %v651 = vpop.f32.mrf.mxu0
    %v652 = vadd.f32 %v306, %v651
    %v653 = vpop.f32.mrf.mxu0
    %654 = vmatprep.mubr.f32.mxu0 0.0
    %655 = vmatmul.mubr.f32.gmra.mxu0 %v361
    %v656 = vpop.f32.mrf.mxu0
    %v657 = vadd.f32 %v306, %v656
    %v658 = vpop.f32.mrf.mxu0
    %659 = vmatprep.mubr.f32.mxu0 0.0
    %660 = vmatmul.mubr.f32.gmra.mxu0 %v364
    %v661 = vpop.f32.mrf.mxu0
    %v662 = vadd.f32 %v306, %v661
    %v663 = vpop.f32.mrf.mxu0
    %664 = vmatprep.mubr.f32.mxu0 0.0
    %665 = vmatmul.mubr.f32.gmra.mxu0 %v367
    %v666 = vpop.f32.mrf.mxu0
    %v667 = vadd.f32 %v306, %v666
    %v668 = vpop.f32.mrf.mxu0
    %669 = vmatprep.mubr.f32.mxu0 0.0
    %670 = vmatmul.mubr.f32.gmra.mxu0 %v370
    %v671 = vpop.f32.mrf.mxu0
    %v672 = vadd.f32 %v306, %v671
    %v673 = vpop.f32.mrf.mxu0
    %674 = vmatprep.mubr.f32.mxu0 0.0
    %675 = vmatmul.mubr.f32.gmra.mxu0 %v373
    %v676 = vpop.f32.mrf.mxu0
    %v677 = vadd.f32 %v306, %v676
    %v678 = vpop.f32.mrf.mxu0
    %679 = vmatprep.mubr.f32.mxu0 0.0
    %680 = vmatmul.mubr.f32.gmra.mxu0 %v376
    %v681 = vpop.f32.mrf.mxu0
    %v682 = vadd.f32 %v306, %v681
    %v683 = vpop.f32.mrf.mxu0
    %684 = vmatprep.mubr.f32.mxu0 0.0
    %685 = vmatmul.mubr.f32.gmra.mxu0 %v379
    %v686 = vpop.f32.mrf.mxu0
    %v687 = vadd.f32 %v306, %v686
    %v688 = vpop.f32.mrf.mxu0
    %689 = vmatprep.mubr.f32.mxu0 0.0
    %690 = vmatmul.mubr.f32.gmra.mxu0 %v382
    %v691 = vpop.f32.mrf.mxu0
    %v692 = vadd.f32 %v306, %v691
    %v693 = vpop.f32.mrf.mxu0
    %694 = vmatprep.mubr.f32.mxu0 0.0
    %695 = vmatmul.mubr.f32.gmra.mxu0 %v385
    %v696 = vpop.f32.mrf.mxu0
    %v697 = vadd.f32 %v306, %v696
    %v698 = vpop.f32.mrf.mxu0
    %699 = vmatprep.mubr.f32.mxu0 0.0
    %700 = vmatmul.mubr.f32.gmra.mxu0 %v388
    %v701 = vpop.f32.mrf.mxu0
    %v702 = vadd.f32 %v306, %v701
    %v703 = vpop.f32.mrf.mxu0
    %704 = vmatprep.mubr.f32.mxu0 0.0
    %705 = vmatmul.mubr.f32.gmra.mxu0 %v391
    %v706 = vpop.f32.mrf.mxu0
    %v707 = vadd.f32 %v306, %v706
    %v708 = vpop.f32.mrf.mxu0
    %709 = vmatprep.mubr.f32.mxu0 0.0
    %710 = vmatmul.mubr.f32.gmra.mxu0 %v394
    %v711 = vpop.f32.mrf.mxu0
    %v712 = vadd.f32 %v306, %v711
    %v713 = vpop.f32.mrf.mxu0
    %714 = vmatprep.mubr.f32.mxu0 0.0
    %715 = vmatmul.mubr.f32.gmra.mxu0 %v397
    %v716 = vpop.f32.mrf.mxu0
    %v717 = vadd.f32 %v306, %v716
    %v718 = vpop.f32.mrf.mxu0
    %719 = vmatprep.mubr.f32.mxu0 0.0
    %720 = vmatmul.mubr.f32.gmra.mxu0 %v400
    %v721 = vpop.f32.mrf.mxu0
    %v722 = vadd.f32 %v306, %v721
    %v723 = vpop.f32.mrf.mxu0
    %724 = vmatprep.mubr.f32.mxu0 0.0
    %725 = vmatmul.mubr.f32.gmra.mxu0 %v403
    %v726 = vpop.f32.mrf.mxu0
    %v727 = vadd.f32 %v306, %v726
    %v728 = vpop.f32.mrf.mxu0
    %729 = vmatprep.mubr.f32.mxu0 0.0
    %730 = vmatmul.mubr.f32.gmra.mxu0 %v406
    %v731 = vpop.f32.mrf.mxu0
    %v732 = vadd.f32 %v306, %v731
    %v733 = vpop.f32.mrf.mxu0
    %734 = vmatprep.mubr.f32.mxu0 0.0
    %735 = vmatmul.mubr.f32.gmra.mxu0 %v409
    %v736 = vpop.f32.mrf.mxu0
    %v737 = vadd.f32 %v306, %v736
    %v738 = vpop.f32.mrf.mxu0
    %739 = vmatprep.mubr.f32.mxu0 0.0
    %740 = vmatmul.mubr.f32.gmra.mxu0 %v412
    %v741 = vpop.f32.mrf.mxu0
    %v742 = vadd.f32 %v306, %v741
    %v743 = vpop.f32.mrf.mxu0
    %744 = vmatprep.mubr.f32.mxu0 0.0
    %745 = vmatmul.mubr.f32.gmra.mxu0 %v415
    %v746 = vpop.f32.mrf.mxu0
    %v747 = vadd.f32 %v306, %v746
    %v748 = vpop.f32.mrf.mxu0
    %749 = vmatprep.mubr.f32.mxu0 0.0
    %750 = vmatmul.mubr.f32.gmra.mxu0 %v418
    %v751 = vpop.f32.mrf.mxu0
    %v752 = vadd.f32 %v306, %v751
    %v753 = vpop.f32.mrf.mxu0
    %754 = vmatprep.mubr.f32.mxu0 0.0
    %755 = vmatmul.mubr.f32.gmra.mxu0 %v421
    %v756 = vpop.f32.mrf.mxu0
    %v757 = vadd.f32 %v306, %v756
    %v758 = vpop.f32.mrf.mxu0
    %759 = vmatprep.mubr.f32.mxu0 0.0
    %760 = vmatmul.mubr.f32.gmra.mxu0 %v424
    %v761 = vpop.f32.mrf.mxu0
    %v762 = vadd.f32 %v306, %v761
    %v763 = vpop.f32.mrf.mxu0
    %764 = vmatprep.mubr.f32.mxu0 0.0
    %765 = vmatmul.mubr.f32.gmra.mxu0 %v427
    %v766 = vpop.f32.mrf.mxu0
    %v767 = vadd.f32 %v306, %v766
    %v768 = vpop.f32.mrf.mxu0
    %769 = vmatprep.mubr.f32.mxu0 0.0
    %770 = vmatmul.mubr.f32.gmra.mxu0 %v430
    %v771 = vpop.f32.mrf.mxu0
    %v772 = vadd.f32 %v306, %v771
    %v773 = vpop.f32.mrf.mxu0
    %774 = vmatprep.mubr.f32.mxu0 0.0
    %775 = vmatmul.mubr.f32.gmra.mxu0 %v433
    %v776 = vpop.f32.mrf.mxu0
    %v777 = vadd.f32 %v306, %v776
    %v778 = vpop.f32.mrf.mxu0
    %779 = vmatprep.mubr.f32.mxu0 0.0
    %780 = vmatmul.mubr.f32.gmra.mxu0 %v436
    %v781 = vpop.f32.mrf.mxu0
    %v782 = vadd.f32 %v306, %v781
    %v783 = vpop.f32.mrf.mxu0
    %784 = vmatprep.mubr.f32.mxu0 0.0
    %785 = vmatmul.mubr.f32.gmra.mxu0 %v439
    %v786 = vpop.f32.mrf.mxu0
    %v787 = vadd.f32 %v306, %v786
    %v788 = vpop.f32.mrf.mxu0
    %789 = vmatprep.mubr.f32.mxu0 0.0
    %790 = vmatmul.mubr.f32.gmra.mxu0 %v442
    %v791 = vpop.f32.mrf.mxu0
    %v792 = vadd.f32 %v306, %v791
    %v793 = vpop.f32.mrf.mxu0
    %794 = vmatprep.mubr.f32.mxu0 0.0
    %795 = vmatmul.mubr.f32.gmra.mxu0 %v445
    %v796 = vpop.f32.mrf.mxu0
    %v797 = vadd.f32 %v306, %v796
    %v798 = vpop.f32.mrf.mxu0
    %799 = vmatprep.mubr.f32.mxu0 0.0
    %800 = vmatmul.mubr.f32.gmra.mxu0 %v448
    %v801 = vpop.f32.mrf.mxu0
    %v802 = vadd.f32 %v306, %v801
    %v803 = vpop.f32.mrf.mxu0
    %804 = vmatprep.mubr.f32.mxu0 0.0
    %805 = vmatmul.mubr.f32.gmra.mxu0 %v451
    %v806 = vpop.f32.mrf.mxu0
    %v807 = vadd.f32 %v306, %v806
    %v808 = vpop.f32.mrf.mxu0
    %809 = vmatprep.mubr.f32.mxu0 0.0
    %810 = vmatmul.mubr.f32.gmra.mxu0 %v454
    %v811 = vpop.f32.mrf.mxu0
    %v812 = vadd.f32 %v306, %v811
    %v813 = vpop.f32.mrf.mxu0
    %814 = vmatprep.mubr.f32.mxu0 0.0
    %815 = vmatmul.mubr.f32.gmra.mxu0 %v457
    %v816 = vpop.f32.mrf.mxu0
    %v817 = vadd.f32 %v306, %v816
    %v818 = vpop.f32.mrf.mxu0
    %819 = vmatprep.mubr.f32.mxu0 0.0
    %820 = vmatmul.mubr.f32.gmra.mxu0 %v460
    %v821 = vpop.f32.mrf.mxu0
    %v822 = vadd.f32 %v306, %v821
    %v823 = vpop.f32.mrf.mxu0
    %824 = vmatprep.mubr.f32.mxu0 0.0
    %825 = vmatmul.mubr.f32.gmra.mxu0 %v463
    %v826 = vpop.f32.mrf.mxu0
    %v827 = vadd.f32 %v306, %v826
    %v828 = vpop.f32.mrf.mxu0
    %829 = vmatprep.mubr.f32.mxu0 0.0
    %830 = vmatmul.mubr.f32.gmra.mxu0 %v466
    %v831 = vpop.f32.mrf.mxu0
    %v832 = vadd.f32 %v306, %v831
    %v833 = vpop.f32.mrf.mxu0
    %834 = vmatprep.mubr.f32.mxu0 0.0
    %835 = vmatmul.mubr.f32.gmra.mxu0 %v469
    %v836 = vpop.f32.mrf.mxu0
    %v837 = vadd.f32 %v306, %v836
    %v838 = vpop.f32.mrf.mxu0
    %839 = vmatprep.mubr.f32.mxu0 0.0
    %840 = vmatmul.mubr.f32.gmra.mxu0 %v472
    %v841 = vpop.f32.mrf.mxu0
    %v842 = vadd.f32 %v306, %v841
    %v843 = vpop.f32.mrf.mxu0
    %844 = vmatprep.mubr.f32.mxu0 0.0
    %845 = vmatmul.mubr.f32.gmra.mxu0 %v475
    %v846 = vpop.f32.mrf.mxu0
    %v847 = vadd.f32 %v306, %v846
    %v848 = vpop.f32.mrf.mxu0
    %849 = vmatprep.mubr.f32.mxu0 0.0
    %850 = vmatmul.mubr.f32.gmra.mxu0 %v478
    %v851 = vpop.f32.mrf.mxu0
    %v852 = vadd.f32 %v306, %v851
    %v853 = vpop.f32.mrf.mxu0
    %854 = vmatprep.mubr.f32.mxu0 0.0
    %855 = vmatmul.mubr.f32.gmra.mxu0 %v481
    %v856 = vpop.f32.mrf.mxu0
    %v857 = vadd.f32 %v306, %v856
    %v858 = vpop.f32.mrf.mxu0
    %859 = vmatprep.mubr.f32.mxu0 0.0
    %860 = vmatmul.mubr.f32.gmra.mxu0 %v484
    %v861 = vpop.f32.mrf.mxu0
    %v862 = vadd.f32 %v306, %v861
    %v863 = vpop.f32.mrf.mxu0
    %864 = vmatprep.mubr.f32.mxu0 0.0
    %865 = vmatmul.mubr.f32.gmra.mxu0 %v487
    %v866 = vpop.f32.mrf.mxu0
    %v867 = vadd.f32 %v306, %v866
    %v868 = vpop.f32.mrf.mxu0
    %869 = vmatprep.mubr.f32.mxu0 0.0
    %870 = vmatmul.mubr.f32.gmra.mxu0 %v490
    %v871 = vpop.f32.mrf.mxu0
    %v872 = vadd.f32 %v306, %v871
    %v873 = vpop.f32.mrf.mxu0
    %874 = vmatprep.mubr.f32.mxu0 0.0
    %875 = vmatmul.mubr.f32.gmra.mxu0 %v493
    %v876 = vpop.f32.mrf.mxu0
    %v877 = vadd.f32 %v306, %v876
    %v878 = vpop.f32.mrf.mxu0
    %879 = vmatprep.mubr.f32.mxu0 0.0
    %880 = vmatmul.mubr.f32.gmra.mxu0 %v496
    %v881 = vpop.f32.mrf.mxu0
    %v882 = vadd.f32 %v306, %v881
    %v883 = vpop.f32.mrf.mxu0
    %884 = vmatprep.mubr.f32.mxu0 0.0
    %885 = vmatmul.mubr.f32.gmra.mxu0 %v499
    %v886 = vpop.f32.mrf.mxu0
    %v887 = vadd.f32 %v306, %v886
    %v888 = vpop.f32.mrf.mxu0
    %889 = vdwg.mxu0
    %v890 = vld [vmem:[%s3] sm:$0x1]
    %v891 = vld [vmem:[%s4] sm:$0x1]
    %892 = vmatprep.subr.mxu0 0.0
    %893 = vmatpush1.msra.mxu0 %v647
    %894 = vmatprep.subr.mxu0 0.0
    %895 = vmatpush1.msra.mxu0 %v642
    %896 = vmatprep.subr.mxu0 0.0
    %897 = vmatpush1.msra.mxu0 %v637
    %898 = vmatprep.subr.mxu0 0.0
    %899 = vmatpush1.msra.mxu0 %v632
    %900 = vmatprep.subr.mxu0 0.0
    %901 = vmatpush1.msra.mxu0 %v627
    %902 = vmatprep.subr.mxu0 0.0
    %903 = vmatpush1.msra.mxu0 %v622
    %904 = vmatprep.subr.mxu0 0.0
    %905 = vmatpush1.msra.mxu0 %v617
    %906 = vmatprep.subr.mxu0 0.0
    %907 = vmatpush1.msra.mxu0 %v612
    %908 = vmatprep.subr.mxu0 0.0
    %909 = vmatpush1.msra.mxu0 %v607
    %910 = vmatprep.subr.mxu0 0.0
    %911 = vmatpush1.msra.mxu0 %v602
    %912 = vmatprep.subr.mxu0 0.0
    %913 = vmatpush1.msra.mxu0 %v597
    %914 = vmatprep.subr.mxu0 0.0
    %915 = vmatpush1.msra.mxu0 %v592
    %916 = vmatprep.subr.mxu0 0.0
    %917 = vmatpush1.msra.mxu0 %v587
    %918 = vmatprep.subr.mxu0 0.0
    %919 = vmatpush1.msra.mxu0 %v582
    %920 = vmatprep.subr.mxu0 0.0
    %921 = vmatpush1.msra.mxu0 %v577
    %922 = vmatprep.subr.mxu0 0.0
    %923 = vmatpush1.msra.mxu0 %v572
    %924 = vmatprep.subr.mxu0 0.0
    %925 = vmatpush2.msra.mxu0 %v727
    %926 = vmatprep.subr.mxu0 0.0
    %927 = vmatpush2.msra.mxu0 %v722
    %928 = vmatprep.subr.mxu0 0.0
    %929 = vmatpush2.msra.mxu0 %v717
    %930 = vmatprep.subr.mxu0 0.0
    %931 = vmatpush2.msra.mxu0 %v712
    %932 = vmatprep.subr.mxu0 0.0
    %933 = vmatpush2.msra.mxu0 %v707
    %934 = vmatprep.subr.mxu0 0.0
    %935 = vmatpush2.msra.mxu0 %v702
    %936 = vmatprep.subr.mxu0 0.0
    %937 = vmatpush2.msra.mxu0 %v697
    %938 = vmatprep.subr.mxu0 0.0
    %939 = vmatpush2.msra.mxu0 %v692
    %940 = vmatprep.subr.mxu0 0.0
    %941 = vmatpush2.msra.mxu0 %v687
    %942 = vmatprep.subr.mxu0 0.0
    %943 = vmatpush2.msra.mxu0 %v682
    %944 = vmatprep.subr.mxu0 0.0
    %945 = vmatpush2.msra.mxu0 %v677
    %946 = vmatprep.subr.mxu0 0.0
    %947 = vmatpush2.msra.mxu0 %v672
    %948 = vmatprep.subr.mxu0 0.0
    %949 = vmatpush2.msra.mxu0 %v667
    %950 = vmatprep.subr.mxu0 0.0
    %951 = vmatpush2.msra.mxu0 %v662
    %952 = vmatprep.subr.mxu0 0.0
    %953 = vmatpush2.msra.mxu0 %v657
    %954 = vmatprep.subr.mxu0 0.0
    %955 = vmatpush2.msra.mxu0 %v652
    %956 = vmatprep.mubr.f32.mxu0 1.0
    %957 = vmatmul.mubr.f32.gmra.mxu0 1.0
    %v958 = vpop.f32.mrf.mxu0
    %v959 = vadd.f32 0.0, %v958
    %v960 = vpop.f32.mrf.mxu0
    %961 = vdwg.mxu0
    %962 = vmatprep.subr.mxu0 0.0
    %963 = vmatpush1.msra.mxu0 %v807
    %964 = vmatprep.subr.mxu0 0.0
    %965 = vmatpush1.msra.mxu0 %v802
    %966 = vmatprep.subr.mxu0 0.0
    %967 = vmatpush1.msra.mxu0 %v797
    %968 = vmatprep.subr.mxu0 0.0
    %969 = vmatpush1.msra.mxu0 %v792
    %970 = vmatprep.subr.mxu0 0.0
    %971 = vmatpush1.msra.mxu0 %v787
    %972 = vmatprep.subr.mxu0 0.0
    %973 = vmatpush1.msra.mxu0 %v782
    %974 = vmatprep.subr.mxu0 0.0
    %975 = vmatpush1.msra.mxu0 %v777
    %976 = vmatprep.subr.mxu0 0.0
    %977 = vmatpush1.msra.mxu0 %v772
    %978 = vmatprep.subr.mxu0 0.0
    %979 = vmatpush1.msra.mxu0 %v767
    %980 = vmatprep.subr.mxu0 0.0
    %981 = vmatpush1.msra.mxu0 %v762
    %982 = vmatprep.subr.mxu0 0.0
    %983 = vmatpush1.msra.mxu0 %v757
    %984 = vmatprep.subr.mxu0 0.0
    %985 = vmatpush1.msra.mxu0 %v752
    %986 = vmatprep.subr.mxu0 0.0
    %987 = vmatpush1.msra.mxu0 %v747
    %988 = vmatprep.subr.mxu0 0.0
    %989 = vmatpush1.msra.mxu0 %v742
    %990 = vmatprep.subr.mxu0 0.0
    %991 = vmatpush1.msra.mxu0 %v737
    %992 = vmatprep.subr.mxu0 0.0
    %993 = vmatpush1.msra.mxu0 %v732
    %994 = vmatprep.subr.mxu0 0.0
    %995 = vmatpush2.msra.mxu0 %v887
    %996 = vmatprep.subr.mxu0 0.0
    %997 = vmatpush2.msra.mxu0 %v882
    %998 = vmatprep.subr.mxu0 0.0
    %999 = vmatpush2.msra.mxu0 %v877
    %1000 = vmatprep.subr.mxu0 0.0
    %1001 = vmatpush2.msra.mxu0 %v872
    %1002 = vmatprep.subr.mxu0 0.0
    %1003 = vmatpush2.msra.mxu0 %v867
    %1004 = vmatprep.subr.mxu0 0.0
    %1005 = vmatpush2.msra.mxu0 %v862
    %1006 = vmatprep.subr.mxu0 0.0
    %1007 = vmatpush2.msra.mxu0 %v857
    %1008 = vmatprep.subr.mxu0 0.0
    %1009 = vmatpush2.msra.mxu0 %v852
    %1010 = vmatprep.subr.mxu0 0.0
    %1011 = vmatpush2.msra.mxu0 %v847
    %1012 = vmatprep.subr.mxu0 0.0
    %1013 = vmatpush2.msra.mxu0 %v842
    %1014 = vmatprep.subr.mxu0 0.0
    %1015 = vmatpush2.msra.mxu0 %v837
    %1016 = vmatprep.subr.mxu0 0.0
    %1017 = vmatpush2.msra.mxu0 %v832
    %1018 = vmatprep.subr.mxu0 0.0
    %1019 = vmatpush2.msra.mxu0 %v827
    %1020 = vmatprep.subr.mxu0 0.0
    %1021 = vmatpush2.msra.mxu0 %v822
    %1022 = vmatprep.subr.mxu0 0.0
    %1023 = vmatpush2.msra.mxu0 %v817
    %1024 = vmatprep.subr.mxu0 0.0
    %1025 = vmatpush2.msra.mxu0 %v812
    %1026 = vmatprep.mubr.f32.mxu0 1.0
    %1027 = vmatmul.mubr.f32.gmra.mxu0 1.0
    %v1028 = vpop.f32.mrf.mxu0
    %v1029 = vadd.f32 %v959, %v1028
    %v1030 = vpop.f32.mrf.mxu0
    %1031 = vdwg.mxu0
    %v1032 = vmul.f32 %v572, %v572
    %v1033 = vmul.f32 %v577, %v577
    %v1034 = vmul.f32 %v582, %v582
    %v1035 = vmul.f32 %v587, %v587
    %v1036 = vmul.f32 %v592, %v592
    %v1037 = vmul.f32 %v597, %v597
    %v1038 = vmul.f32 %v602, %v602
    %v1039 = vmul.f32 %v607, %v607
    %v1040 = vmul.f32 %v612, %v612
    %v1041 = vmul.f32 %v617, %v617
    %v1042 = vmul.f32 %v622, %v622
    %v1043 = vmul.f32 %v627, %v627
    %v1044 = vmul.f32 %v632, %v632
    %v1045 = vmul.f32 %v637, %v637
    %v1046 = vmul.f32 %v642, %v642
    %v1047 = vmul.f32 %v647, %v647
    %v1048 = vmul.f32 %v652, %v652
    %v1049 = vmul.f32 %v657, %v657
    %v1050 = vmul.f32 %v662, %v662
    %v1051 = vmul.f32 %v667, %v667
    %v1052 = vmul.f32 %v672, %v672
    %v1053 = vmul.f32 %v677, %v677
    %v1054 = vmul.f32 %v682, %v682
    %v1055 = vmul.f32 %v687, %v687
    %v1056 = vmul.f32 %v692, %v692
    %v1057 = vmul.f32 %v697, %v697
    %v1058 = vmul.f32 %v702, %v702
    %v1059 = vmul.f32 %v707, %v707
    %v1060 = vmul.f32 %v712, %v712
    %v1061 = vmul.f32 %v717, %v717
    %v1062 = vmul.f32 %v722, %v722
    %v1063 = vmul.f32 %v727, %v727
    %v1064 = vmul.f32 %v732, %v732
    %v1065 = vmul.f32 %v737, %v737
    %v1066 = vmul.f32 %v742, %v742
    %v1067 = vmul.f32 %v747, %v747
    %v1068 = vmul.f32 %v752, %v752
    %v1069 = vmul.f32 %v757, %v757
    %v1070 = vmul.f32 %v762, %v762
    %v1071 = vmul.f32 %v767, %v767
    %v1072 = vmul.f32 %v772, %v772
    %v1073 = vmul.f32 %v777, %v777
    %v1074 = vmul.f32 %v782, %v782
    %v1075 = vmul.f32 %v787, %v787
    %v1076 = vmul.f32 %v792, %v792
    %v1077 = vmul.f32 %v797, %v797
    %v1078 = vmul.f32 %v802, %v802
    %v1079 = vmul.f32 %v807, %v807
    %v1080 = vmul.f32 %v812, %v812
    %v1081 = vmul.f32 %v817, %v817
    %v1082 = vmul.f32 %v822, %v822
    %v1083 = vmul.f32 %v827, %v827
    %v1084 = vmul.f32 %v832, %v832
    %v1085 = vmul.f32 %v837, %v837
    %v1086 = vmul.f32 %v842, %v842
    %v1087 = vmul.f32 %v847, %v847
    %v1088 = vmul.f32 %v852, %v852
    %v1089 = vmul.f32 %v857, %v857
    %v1090 = vmul.f32 %v862, %v862
    %v1091 = vmul.f32 %v867, %v867
    %v1092 = vmul.f32 %v872, %v872
    %v1093 = vmul.f32 %v877, %v877
    %v1094 = vmul.f32 %v882, %v882
    %v1095 = vmul.f32 %v887, %v887
    %1096 = vmatprep.subr.mxu0 0.0
    %1097 = vmatpush1.msra.mxu0 %v1047
    %1098 = vmatprep.subr.mxu0 0.0
    %1099 = vmatpush1.msra.mxu0 %v1046
    %1100 = vmatprep.subr.mxu0 0.0
    %1101 = vmatpush1.msra.mxu0 %v1045
    %1102 = vmatprep.subr.mxu0 0.0
    %1103 = vmatpush1.msra.mxu0 %v1044
    %1104 = vmatprep.subr.mxu0 0.0
    %1105 = vmatpush1.msra.mxu0 %v1043
    %1106 = vmatprep.subr.mxu0 0.0
    %1107 = vmatpush1.msra.mxu0 %v1042
    %1108 = vmatprep.subr.mxu0 0.0
    %1109 = vmatpush1.msra.mxu0 %v1041
    %1110 = vmatprep.subr.mxu0 0.0
    %1111 = vmatpush1.msra.mxu0 %v1040
    %1112 = vmatprep.subr.mxu0 0.0
    %1113 = vmatpush1.msra.mxu0 %v1039
    %1114 = vmatprep.subr.mxu0 0.0
    %1115 = vmatpush1.msra.mxu0 %v1038
    %1116 = vmatprep.subr.mxu0 0.0
    %1117 = vmatpush1.msra.mxu0 %v1037
    %1118 = vmatprep.subr.mxu0 0.0
    %1119 = vmatpush1.msra.mxu0 %v1036
    %1120 = vmatprep.subr.mxu0 0.0
    %1121 = vmatpush1.msra.mxu0 %v1035
    %1122 = vmatprep.subr.mxu0 0.0
    %1123 = vmatpush1.msra.mxu0 %v1034
    %1124 = vmatprep.subr.mxu0 0.0
    %1125 = vmatpush1.msra.mxu0 %v1033
    %1126 = vmatprep.subr.mxu0 0.0
    %1127 = vmatpush1.msra.mxu0 %v1032
    %1128 = vmatprep.subr.mxu0 0.0
    %1129 = vmatpush2.msra.mxu0 %v1063
    %1130 = vmatprep.subr.mxu0 0.0
    %1131 = vmatpush2.msra.mxu0 %v1062
    %1132 = vmatprep.subr.mxu0 0.0
    %1133 = vmatpush2.msra.mxu0 %v1061
    %1134 = vmatprep.subr.mxu0 0.0
    %1135 = vmatpush2.msra.mxu0 %v1060
    %1136 = vmatprep.subr.mxu0 0.0
    %1137 = vmatpush2.msra.mxu0 %v1059
    %1138 = vmatprep.subr.mxu0 0.0
    %1139 = vmatpush2.msra.mxu0 %v1058
    %1140 = vmatprep.subr.mxu0 0.0
    %1141 = vmatpush2.msra.mxu0 %v1057
    %1142 = vmatprep.subr.mxu0 0.0
    %1143 = vmatpush2.msra.mxu0 %v1056
    %1144 = vmatprep.subr.mxu0 0.0
    %1145 = vmatpush2.msra.mxu0 %v1055
    %1146 = vmatprep.subr.mxu0 0.0
    %1147 = vmatpush2.msra.mxu0 %v1054
    %1148 = vmatprep.subr.mxu0 0.0
    %1149 = vmatpush2.msra.mxu0 %v1053
    %1150 = vmatprep.subr.mxu0 0.0
    %1151 = vmatpush2.msra.mxu0 %v1052
    %1152 = vmatprep.subr.mxu0 0.0
    %1153 = vmatpush2.msra.mxu0 %v1051
    %1154 = vmatprep.subr.mxu0 0.0
    %1155 = vmatpush2.msra.mxu0 %v1050
    %1156 = vmatprep.subr.mxu0 0.0
    %1157 = vmatpush2.msra.mxu0 %v1049
    %1158 = vmatprep.subr.mxu0 0.0
    %1159 = vmatpush2.msra.mxu0 %v1048
    %1160 = vmatprep.mubr.f32.mxu0 1.0
    %1161 = vmatmul.mubr.f32.gmra.mxu0 1.0
    %v1162 = vpop.f32.mrf.mxu0
    %v1163 = vadd.f32 0.0, %v1162
    %v1164 = vpop.f32.mrf.mxu0
    %1165 = vdwg.mxu0
    %1166 = vmatprep.subr.mxu0 0.0
    %1167 = vmatpush1.msra.mxu0 %v1079
    %1168 = vmatprep.subr.mxu0 0.0
    %1169 = vmatpush1.msra.mxu0 %v1078
    %1170 = vmatprep.subr.mxu0 0.0
    %1171 = vmatpush1.msra.mxu0 %v1077
    %1172 = vmatprep.subr.mxu0 0.0
    %1173 = vmatpush1.msra.mxu0 %v1076
    %1174 = vmatprep.subr.mxu0 0.0
    %1175 = vmatpush1.msra.mxu0 %v1075
    %1176 = vmatprep.subr.mxu0 0.0
    %1177 = vmatpush1.msra.mxu0 %v1074
    %1178 = vmatprep.subr.mxu0 0.0
    %1179 = vmatpush1.msra.mxu0 %v1073
    %1180 = vmatprep.subr.mxu0 0.0
    %1181 = vmatpush1.msra.mxu0 %v1072
    %1182 = vmatprep.subr.mxu0 0.0
    %1183 = vmatpush1.msra.mxu0 %v1071
    %1184 = vmatprep.subr.mxu0 0.0
    %1185 = vmatpush1.msra.mxu0 %v1070
    %1186 = vmatprep.subr.mxu0 0.0
    %1187 = vmatpush1.msra.mxu0 %v1069
    %1188 = vmatprep.subr.mxu0 0.0
    %1189 = vmatpush1.msra.mxu0 %v1068
    %1190 = vmatprep.subr.mxu0 0.0
    %1191 = vmatpush1.msra.mxu0 %v1067
    %1192 = vmatprep.subr.mxu0 0.0
    %1193 = vmatpush1.msra.mxu0 %v1066
    %1194 = vmatprep.subr.mxu0 0.0
    %1195 = vmatpush1.msra.mxu0 %v1065
    %1196 = vmatprep.subr.mxu0 0.0
    %1197 = vmatpush1.msra.mxu0 %v1064
    %1198 = vmatprep.subr.mxu0 0.0
    %1199 = vmatpush2.msra.mxu0 %v1095
    %1200 = vmatprep.subr.mxu0 0.0
    %1201 = vmatpush2.msra.mxu0 %v1094
    %1202 = vmatprep.subr.mxu0 0.0
    %1203 = vmatpush2.msra.mxu0 %v1093
    %1204 = vmatprep.subr.mxu0 0.0
    %1205 = vmatpush2.msra.mxu0 %v1092
    %1206 = vmatprep.subr.mxu0 0.0
    %1207 = vmatpush2.msra.mxu0 %v1091
    %1208 = vmatprep.subr.mxu0 0.0
    %1209 = vmatpush2.msra.mxu0 %v1090
    %1210 = vmatprep.subr.mxu0 0.0
    %1211 = vmatpush2.msra.mxu0 %v1089
    %1212 = vmatprep.subr.mxu0 0.0
    %1213 = vmatpush2.msra.mxu0 %v1088
    %1214 = vmatprep.subr.mxu0 0.0
    %1215 = vmatpush2.msra.mxu0 %v1087
    %1216 = vmatprep.subr.mxu0 0.0
    %1217 = vmatpush2.msra.mxu0 %v1086
    %1218 = vmatprep.subr.mxu0 0.0
    %1219 = vmatpush2.msra.mxu0 %v1085
    %1220 = vmatprep.subr.mxu0 0.0
    %1221 = vmatpush2.msra.mxu0 %v1084
    %1222 = vmatprep.subr.mxu0 0.0
    %1223 = vmatpush2.msra.mxu0 %v1083
    %1224 = vmatprep.subr.mxu0 0.0
    %1225 = vmatpush2.msra.mxu0 %v1082
    %1226 = vmatprep.subr.mxu0 0.0
    %1227 = vmatpush2.msra.mxu0 %v1081
    %1228 = vmatprep.subr.mxu0 0.0
    %1229 = vmatpush2.msra.mxu0 %v1080
    %1230 = vmatprep.mubr.f32.mxu0 1.0
    %1231 = vmatmul.mubr.f32.gmra.mxu0 1.0
    %v1232 = vpop.f32.mrf.mxu0
    %v1233 = vadd.f32 %v1163, %v1232
    %v1234 = vpop.f32.mrf.mxu0
    %1235 = vdwg.mxu0
    %v1236 = vmul.f32 %v1029, 0.001953125
    %v1237 = vmul.f32 %v1233, 0.001953125
    %v1238 = vmul.f32 %v1236, %v1236
    %v1239 = vsub.f32 %v1237, %v1238
    %v1240 = vmax.f32 %v1239, 0.0
    %v1241 = vlaneseq
    %v1242 = vshrl.u32 %v1241, 7
    %v1243 = vsub.s32 0, %v1242
    %v1244 = vrot.slane %v1236, %v1243
    %v1245 = vsub.f32 %v572, %v1244
    %v1246 = vsub.f32 %v577, %v1244
    %v1247 = vsub.f32 %v582, %v1244
    %v1248 = vsub.f32 %v587, %v1244
    %v1249 = vsub.f32 %v592, %v1244
    %v1250 = vsub.f32 %v597, %v1244
    %v1251 = vsub.f32 %v602, %v1244
    %v1252 = vsub.f32 %v607, %v1244
    %v1253 = vsub.f32 %v612, %v1244
    %v1254 = vsub.f32 %v617, %v1244
    %v1255 = vsub.f32 %v622, %v1244
    %v1256 = vsub.f32 %v627, %v1244
    %v1257 = vsub.f32 %v632, %v1244
    %v1258 = vsub.f32 %v637, %v1244
    %v1259 = vsub.f32 %v642, %v1244
    %v1260 = vsub.f32 %v647, %v1244
    %v1261 = vsub.f32 %v652, %v1244
    %v1262 = vsub.f32 %v657, %v1244
    %v1263 = vsub.f32 %v662, %v1244
    %v1264 = vsub.f32 %v667, %v1244
    %v1265 = vsub.f32 %v672, %v1244
    %v1266 = vsub.f32 %v677, %v1244
    %v1267 = vsub.f32 %v682, %v1244
    %v1268 = vsub.f32 %v687, %v1244
    %v1269 = vsub.f32 %v692, %v1244
    %v1270 = vsub.f32 %v697, %v1244
    %v1271 = vsub.f32 %v702, %v1244
    %v1272 = vsub.f32 %v707, %v1244
    %v1273 = vsub.f32 %v712, %v1244
    %v1274 = vsub.f32 %v717, %v1244
    %v1275 = vsub.f32 %v722, %v1244
    %v1276 = vsub.f32 %v727, %v1244
    %v1277 = vsub.f32 %v732, %v1244
    %v1278 = vsub.f32 %v737, %v1244
    %v1279 = vsub.f32 %v742, %v1244
    %v1280 = vsub.f32 %v747, %v1244
    %v1281 = vsub.f32 %v752, %v1244
    %v1282 = vsub.f32 %v757, %v1244
    %v1283 = vsub.f32 %v762, %v1244
    %v1284 = vsub.f32 %v767, %v1244
    %v1285 = vsub.f32 %v772, %v1244
    %v1286 = vsub.f32 %v777, %v1244
    %v1287 = vsub.f32 %v782, %v1244
    %v1288 = vsub.f32 %v787, %v1244
    %v1289 = vsub.f32 %v792, %v1244
    %v1290 = vsub.f32 %v797, %v1244
    %v1291 = vsub.f32 %v802, %v1244
    %v1292 = vsub.f32 %v807, %v1244
    %v1293 = vsub.f32 %v812, %v1244
    %v1294 = vsub.f32 %v817, %v1244
    %v1295 = vsub.f32 %v822, %v1244
    %v1296 = vsub.f32 %v827, %v1244
    %v1297 = vsub.f32 %v832, %v1244
    %v1298 = vsub.f32 %v837, %v1244
    %v1299 = vsub.f32 %v842, %v1244
    %v1300 = vsub.f32 %v847, %v1244
    %v1301 = vsub.f32 %v852, %v1244
    %v1302 = vsub.f32 %v857, %v1244
    %v1303 = vsub.f32 %v862, %v1244
    %v1304 = vsub.f32 %v867, %v1244
    %v1305 = vsub.f32 %v872, %v1244
    %v1306 = vsub.f32 %v877, %v1244
    %v1307 = vsub.f32 %v882, %v1244
    %v1308 = vsub.f32 %v887, %v1244
    %v1309 = vadd.f32 %v1240, 1e-05
    %v1310 = vrsqrt.pop %v1309
    %v1311 = vlaneseq
    %v1312 = vshrl.u32 %v1311, 7
    %v1313 = vsub.s32 0, %v1312
    %v1314 = vrot.slane %v1310, %v1313
    %v1315 = vmul.f32 %v1245, %v1314
    %v1316 = vmul.f32 %v1246, %v1314
    %v1317 = vmul.f32 %v1247, %v1314
    %v1318 = vmul.f32 %v1248, %v1314
    %v1319 = vmul.f32 %v1249, %v1314
    %v1320 = vmul.f32 %v1250, %v1314
    %v1321 = vmul.f32 %v1251, %v1314
    %v1322 = vmul.f32 %v1252, %v1314
    %v1323 = vmul.f32 %v1253, %v1314
    %v1324 = vmul.f32 %v1254, %v1314
    %v1325 = vmul.f32 %v1255, %v1314
    %v1326 = vmul.f32 %v1256, %v1314
    %v1327 = vmul.f32 %v1257, %v1314
    %v1328 = vmul.f32 %v1258, %v1314
    %v1329 = vmul.f32 %v1259, %v1314
    %v1330 = vmul.f32 %v1260, %v1314
    %v1331 = vmul.f32 %v1261, %v1314
    %v1332 = vmul.f32 %v1262, %v1314
    %v1333 = vmul.f32 %v1263, %v1314
    %v1334 = vmul.f32 %v1264, %v1314
    %v1335 = vmul.f32 %v1265, %v1314
    %v1336 = vmul.f32 %v1266, %v1314
    %v1337 = vmul.f32 %v1267, %v1314
    %v1338 = vmul.f32 %v1268, %v1314
    %v1339 = vmul.f32 %v1269, %v1314
    %v1340 = vmul.f32 %v1270, %v1314
    %v1341 = vmul.f32 %v1271, %v1314
    %v1342 = vmul.f32 %v1272, %v1314
    %v1343 = vmul.f32 %v1273, %v1314
    %v1344 = vmul.f32 %v1274, %v1314
    %v1345 = vmul.f32 %v1275, %v1314
    %v1346 = vmul.f32 %v1276, %v1314
    %v1347 = vmul.f32 %v1277, %v1314
    %v1348 = vmul.f32 %v1278, %v1314
    %v1349 = vmul.f32 %v1279, %v1314
    %v1350 = vmul.f32 %v1280, %v1314
    %v1351 = vmul.f32 %v1281, %v1314
    %v1352 = vmul.f32 %v1282, %v1314
    %v1353 = vmul.f32 %v1283, %v1314
    %v1354 = vmul.f32 %v1284, %v1314
    %v1355 = vmul.f32 %v1285, %v1314
    %v1356 = vmul.f32 %v1286, %v1314
    %v1357 = vmul.f32 %v1287, %v1314
    %v1358 = vmul.f32 %v1288, %v1314
    %v1359 = vmul.f32 %v1289, %v1314
    %v1360 = vmul.f32 %v1290, %v1314
    %v1361 = vmul.f32 %v1291, %v1314
    %v1362 = vmul.f32 %v1292, %v1314
    %v1363 = vmul.f32 %v1293, %v1314
    %v1364 = vmul.f32 %v1294, %v1314
    %v1365 = vmul.f32 %v1295, %v1314
    %v1366 = vmul.f32 %v1296, %v1314
    %v1367 = vmul.f32 %v1297, %v1314
    %v1368 = vmul.f32 %v1298, %v1314
    %v1369 = vmul.f32 %v1299, %v1314
    %v1370 = vmul.f32 %v1300, %v1314
    %v1371 = vmul.f32 %v1301, %v1314
    %v1372 = vmul.f32 %v1302, %v1314
    %v1373 = vmul.f32 %v1303, %v1314
    %v1374 = vmul.f32 %v1304, %v1314
    %v1375 = vmul.f32 %v1305, %v1314
    %v1376 = vmul.f32 %v1306, %v1314
    %v1377 = vmul.f32 %v1307, %v1314
    %v1378 = vmul.f32 %v1308, %v1314
    %v1380 = vlaneseq
    %v1381 = vshrl.u32 %v1380, 7
    %v1382 = vsub.s32 0, %v1381
    %v1383 = vrot.slane %v890, %v1382
    %v1385 = vmul.f32 %v1315, %v1383
    %v1386 = vmul.f32 %v1316, %v1383
    %v1387 = vmul.f32 %v1317, %v1383
    %v1388 = vmul.f32 %v1318, %v1383
    %v1389 = vmul.f32 %v1319, %v1383
    %v1390 = vmul.f32 %v1320, %v1383
    %v1391 = vmul.f32 %v1321, %v1383
    %v1392 = vmul.f32 %v1322, %v1383
    %v1393 = vmul.f32 %v1323, %v1383
    %v1394 = vmul.f32 %v1324, %v1383
    %v1395 = vmul.f32 %v1325, %v1383
    %v1396 = vmul.f32 %v1326, %v1383
    %v1397 = vmul.f32 %v1327, %v1383
    %v1398 = vmul.f32 %v1328, %v1383
    %v1399 = vmul.f32 %v1329, %v1383
    %v1400 = vmul.f32 %v1330, %v1383
    %v1401 = vmul.f32 %v1331, %v1383
    %v1402 = vmul.f32 %v1332, %v1383
    %v1403 = vmul.f32 %v1333, %v1383
    %v1404 = vmul.f32 %v1334, %v1383
    %v1405 = vmul.f32 %v1335, %v1383
    %v1406 = vmul.f32 %v1336, %v1383
    %v1407 = vmul.f32 %v1337, %v1383
    %v1408 = vmul.f32 %v1338, %v1383
    %v1409 = vmul.f32 %v1339, %v1383
    %v1410 = vmul.f32 %v1340, %v1383
    %v1411 = vmul.f32 %v1341, %v1383
    %v1412 = vmul.f32 %v1342, %v1383
    %v1413 = vmul.f32 %v1343, %v1383
    %v1414 = vmul.f32 %v1344, %v1383
    %v1415 = vmul.f32 %v1345, %v1383
    %v1416 = vmul.f32 %v1346, %v1383
    %v1417 = vmul.f32 %v1347, %v1383
    %v1418 = vmul.f32 %v1348, %v1383
    %v1419 = vmul.f32 %v1349, %v1383
    %v1420 = vmul.f32 %v1350, %v1383
    %v1421 = vmul.f32 %v1351, %v1383
    %v1422 = vmul.f32 %v1352, %v1383
    %v1423 = vmul.f32 %v1353, %v1383
    %v1424 = vmul.f32 %v1354, %v1383
    %v1425 = vmul.f32 %v1355, %v1383
    %v1426 = vmul.f32 %v1356, %v1383
    %v1427 = vmul.f32 %v1357, %v1383
    %v1428 = vmul.f32 %v1358, %v1383
    %v1429 = vmul.f32 %v1359, %v1383
    %v1430 = vmul.f32 %v1360, %v1383
    %v1431 = vmul.f32 %v1361, %v1383
    %v1432 = vmul.f32 %v1362, %v1383
    %v1433 = vmul.f32 %v1363, %v1383
    %v1434 = vmul.f32 %v1364, %v1383
    %v1435 = vmul.f32 %v1365, %v1383
    %v1436 = vmul.f32 %v1366, %v1383
    %v1437 = vmul.f32 %v1367, %v1383
    %v1438 = vmul.f32 %v1368, %v1383
    %v1439 = vmul.f32 %v1369, %v1383
    %v1440 = vmul.f32 %v1370, %v1383
    %v1441 = vmul.f32 %v1371, %v1383
    %v1442 = vmul.f32 %v1372, %v1383
    %v1443 = vmul.f32 %v1373, %v1383
    %v1444 = vmul.f32 %v1374, %v1383
    %v1445 = vmul.f32 %v1375, %v1383
    %v1446 = vmul.f32 %v1376, %v1383
    %v1447 = vmul.f32 %v1377, %v1383
    %v1448 = vmul.f32 %v1378, %v1383
    %v1450 = vlaneseq
    %v1451 = vshrl.u32 %v1450, 7
    %v1452 = vsub.s32 0, %v1451
    %v1453 = vrot.slane %v891, %v1452
    %v1455 = vadd.f32 %v1385, %v1453
    %v1456 = vadd.f32 %v1386, %v1453
    %v1457 = vadd.f32 %v1387, %v1453
    %v1458 = vadd.f32 %v1388, %v1453
    %v1459 = vadd.f32 %v1389, %v1453
    %v1460 = vadd.f32 %v1390, %v1453
    %v1461 = vadd.f32 %v1391, %v1453
    %v1462 = vadd.f32 %v1392, %v1453
    %v1463 = vadd.f32 %v1393, %v1453
    %v1464 = vadd.f32 %v1394, %v1453
    %v1465 = vadd.f32 %v1395, %v1453
    %v1466 = vadd.f32 %v1396, %v1453
    %v1467 = vadd.f32 %v1397, %v1453
    %v1468 = vadd.f32 %v1398, %v1453
    %v1469 = vadd.f32 %v1399, %v1453
    %v1470 = vadd.f32 %v1400, %v1453
    %v1471 = vadd.f32 %v1401, %v1453
    %v1472 = vadd.f32 %v1402, %v1453
    %v1473 = vadd.f32 %v1403, %v1453
    %v1474 = vadd.f32 %v1404, %v1453
    %v1475 = vadd.f32 %v1405, %v1453
    %v1476 = vadd.f32 %v1406, %v1453
    %v1477 = vadd.f32 %v1407, %v1453
    %v1478 = vadd.f32 %v1408, %v1453
    %v1479 = vadd.f32 %v1409, %v1453
    %v1480 = vadd.f32 %v1410, %v1453
    %v1481 = vadd.f32 %v1411, %v1453
    %v1482 = vadd.f32 %v1412, %v1453
    %v1483 = vadd.f32 %v1413, %v1453
    %v1484 = vadd.f32 %v1414, %v1453
    %v1485 = vadd.f32 %v1415, %v1453
    %v1486 = vadd.f32 %v1416, %v1453
    %v1487 = vadd.f32 %v1417, %v1453
    %v1488 = vadd.f32 %v1418, %v1453
    %v1489 = vadd.f32 %v1419, %v1453
    %v1490 = vadd.f32 %v1420, %v1453
    %v1491 = vadd.f32 %v1421, %v1453
    %v1492 = vadd.f32 %v1422, %v1453
    %v1493 = vadd.f32 %v1423, %v1453
    %v1494 = vadd.f32 %v1424, %v1453
    %v1495 = vadd.f32 %v1425, %v1453
    %v1496 = vadd.f32 %v1426, %v1453
    %v1497 = vadd.f32 %v1427, %v1453
    %v1498 = vadd.f32 %v1428, %v1453
    %v1499 = vadd.f32 %v1429, %v1453
    %v1500 = vadd.f32 %v1430, %v1453
    %v1501 = vadd.f32 %v1431, %v1453
    %v1502 = vadd.f32 %v1432, %v1453
    %v1503 = vadd.f32 %v1433, %v1453
    %v1504 = vadd.f32 %v1434, %v1453
    %v1505 = vadd.f32 %v1435, %v1453
    %v1506 = vadd.f32 %v1436, %v1453
    %v1507 = vadd.f32 %v1437, %v1453
    %v1508 = vadd.f32 %v1438, %v1453
    %v1509 = vadd.f32 %v1439, %v1453
    %v1510 = vadd.f32 %v1440, %v1453
    %v1511 = vadd.f32 %v1441, %v1453
    %v1512 = vadd.f32 %v1442, %v1453
    %v1513 = vadd.f32 %v1443, %v1453
    %v1514 = vadd.f32 %v1444, %v1453
    %v1515 = vadd.f32 %v1445, %v1453
    %v1516 = vadd.f32 %v1446, %v1453
    %v1517 = vadd.f32 %v1447, %v1453
    %v1518 = vadd.f32 %v1448, %v1453
    %v1519 = vmax.f32 %v1455, 0.0
    %v1520 = vmax.f32 %v1456, 0.0
    %v1521 = vmax.f32 %v1457, 0.0
    %v1522 = vmax.f32 %v1458, 0.0
    %v1523 = vmax.f32 %v1459, 0.0
    %v1524 = vmax.f32 %v1460, 0.0
    %v1525 = vmax.f32 %v1461, 0.0
    %v1526 = vmax.f32 %v1462, 0.0
    %v1527 = vmax.f32 %v1463, 0.0
    %v1528 = vmax.f32 %v1464, 0.0
    %v1529 = vmax.f32 %v1465, 0.0
    %v1530 = vmax.f32 %v1466, 0.0
    %v1531 = vmax.f32 %v1467, 0.0
    %v1532 = vmax.f32 %v1468, 0.0
    %v1533 = vmax.f32 %v1469, 0.0
    %v1534 = vmax.f32 %v1470, 0.0
    %v1535 = vmax.f32 %v1471, 0.0
    %v1536 = vmax.f32 %v1472, 0.0
    %v1537 = vmax.f32 %v1473, 0.0
    %v1538 = vmax.f32 %v1474, 0.0
    %v1539 = vmax.f32 %v1475, 0.0
    %v1540 = vmax.f32 %v1476, 0.0
    %v1541 = vmax.f32 %v1477, 0.0
    %v1542 = vmax.f32 %v1478, 0.0
    %v1543 = vmax.f32 %v1479, 0.0
    %v1544 = vmax.f32 %v1480, 0.0
    %v1545 = vmax.f32 %v1481, 0.0
    %v1546 = vmax.f32 %v1482, 0.0
    %v1547 = vmax.f32 %v1483, 0.0
    %v1548 = vmax.f32 %v1484, 0.0
    %v1549 = vmax.f32 %v1485, 0.0
    %v1550 = vmax.f32 %v1486, 0.0
    %v1551 = vmax.f32 %v1487, 0.0
    %v1552 = vmax.f32 %v1488, 0.0
    %v1553 = vmax.f32 %v1489, 0.0
    %v1554 = vmax.f32 %v1490, 0.0
    %v1555 = vmax.f32 %v1491, 0.0
    %v1556 = vmax.f32 %v1492, 0.0
    %v1557 = vmax.f32 %v1493, 0.0
    %v1558 = vmax.f32 %v1494, 0.0
    %v1559 = vmax.f32 %v1495, 0.0
    %v1560 = vmax.f32 %v1496, 0.0
    %v1561 = vmax.f32 %v1497, 0.0
    %v1562 = vmax.f32 %v1498, 0.0
    %v1563 = vmax.f32 %v1499, 0.0
    %v1564 = vmax.f32 %v1500, 0.0
    %v1565 = vmax.f32 %v1501, 0.0
    %v1566 = vmax.f32 %v1502, 0.0
    %v1567 = vmax.f32 %v1503, 0.0
    %v1568 = vmax.f32 %v1504, 0.0
    %v1569 = vmax.f32 %v1505, 0.0
    %v1570 = vmax.f32 %v1506, 0.0
    %v1571 = vmax.f32 %v1507, 0.0
    %v1572 = vmax.f32 %v1508, 0.0
    %v1573 = vmax.f32 %v1509, 0.0
    %v1574 = vmax.f32 %v1510, 0.0
    %v1575 = vmax.f32 %v1511, 0.0
    %v1576 = vmax.f32 %v1512, 0.0
    %v1577 = vmax.f32 %v1513, 0.0
    %v1578 = vmax.f32 %v1514, 0.0
    %v1579 = vmax.f32 %v1515, 0.0
    %v1580 = vmax.f32 %v1516, 0.0
    %v1581 = vmax.f32 %v1517, 0.0
    %v1582 = vmax.f32 %v1518, 0.0
    %s1583 = smul.u32 4, 16
    %s1584 = smul.u32 %s1583, 4
    %s1585 = sshll.u32 %s1584, 4
    %1586 = dma.done [#allocation5], %s1585
    %v1587 = vld [vmem:[#allocation2] sm:$0xff]
    %v1588 = vld [vmem:[#allocation2 + $0x8] sm:$0xff]
    %v1589 = vld [vmem:[#allocation2 + $0x10] sm:$0xff]
    %v1590 = vld [vmem:[#allocation2 + $0x18] sm:$0xff]
    %v1591 = vld [vmem:[#allocation2 + $0x20] sm:$0xff]
    %v1592 = vld [vmem:[#allocation2 + $0x28] sm:$0xff]
    %v1593 = vld [vmem:[#allocation2 + $0x30] sm:$0xff]
    %v1594 = vld [vmem:[#allocation2 + $0x38] sm:$0xff]
    %v1595 = vld [vmem:[#allocation2 + $0x40] sm:$0xff]
    %v1596 = vld [vmem:[#allocation2 + $0x48] sm:$0xff]
    %v1597 = vld [vmem:[#allocation2 + $0x50] sm:$0xff]
    %v1598 = vld [vmem:[#allocation2 + $0x58] sm:$0xff]
    %v1599 = vld [vmem:[#allocation2 + $0x60] sm:$0xff]
    %v1600 = vld [vmem:[#allocation2 + $0x68] sm:$0xff]
    %v1601 = vld [vmem:[#allocation2 + $0x70] sm:$0xff]
    %v1602 = vld [vmem:[#allocation2 + $0x78] sm:$0xff]
    %v1603 = vld [vmem:[#allocation2 + $0x80] sm:$0xff]
    %v1604 = vld [vmem:[#allocation2 + $0x88] sm:$0xff]
    %v1605 = vld [vmem:[#allocation2 + $0x90] sm:$0xff]
    %v1606 = vld [vmem:[#allocation2 + $0x98] sm:$0xff]
    %v1607 = vld [vmem:[#allocation2 + $0xa0] sm:$0xff]
    %v1608 = vld [vmem:[#allocation2 + $0xa8] sm:$0xff]
    %v1609 = vld [vmem:[#allocation2 + $0xb0] sm:$0xff]
    %v1610 = vld [vmem:[#allocation2 + $0xb8] sm:$0xff]
    %v1611 = vld [vmem:[#allocation2 + $0xc0] sm:$0xff]
    %v1612 = vld [vmem:[#allocation2 + $0xc8] sm:$0xff]
    %v1613 = vld [vmem:[#allocation2 + $0xd0] sm:$0xff]
    %v1614 = vld [vmem:[#allocation2 + $0xd8] sm:$0xff]
    %v1615 = vld [vmem:[#allocation2 + $0xe0] sm:$0xff]
    %v1616 = vld [vmem:[#allocation2 + $0xe8] sm:$0xff]
    %v1617 = vld [vmem:[#allocation2 + $0xf0] sm:$0xff]
    %v1618 = vld [vmem:[#allocation2 + $0xf8] sm:$0xff]
    %v1619 = vunpack.c.l.bf16 %v1587
    %v1620 = vunpack.c.h.bf16 %v1587
    %v1621 = vunpack.c.l.bf16 %v1588
    %v1622 = vunpack.c.h.bf16 %v1588
    %v1623 = vunpack.c.l.bf16 %v1589
    %v1624 = vunpack.c.h.bf16 %v1589
    %v1625 = vunpack.c.l.bf16 %v1590
    %v1626 = vunpack.c.h.bf16 %v1590
    %v1627 = vunpack.c.l.bf16 %v1591
    %v1628 = vunpack.c.h.bf16 %v1591
    %v1629 = vunpack.c.l.bf16 %v1592
    %v1630 = vunpack.c.h.bf16 %v1592
    %v1631 = vunpack.c.l.bf16 %v1593
    %v1632 = vunpack.c.h.bf16 %v1593
    %v1633 = vunpack.c.l.bf16 %v1594
    %v1634 = vunpack.c.h.bf16 %v1594
    %v1635 = vunpack.c.l.bf16 %v1595
    %v1636 = vunpack.c.h.bf16 %v1595
    %v1637 = vunpack.c.l.bf16 %v1596
    %v1638 = vunpack.c.h.bf16 %v1596
    %v1639 = vunpack.c.l.bf16 %v1597
    %v1640 = vunpack.c.h.bf16 %v1597
    %v1641 = vunpack.c.l.bf16 %v1598
    %v1642 = vunpack.c.h.bf16 %v1598
    %v1643 = vunpack.c.l.bf16 %v1599
    %v1644 = vunpack.c.h.bf16 %v1599
    %v1645 = vunpack.c.l.bf16 %v1600
    %v1646 = vunpack.c.h.bf16 %v1600
    %v1647 = vunpack.c.l.bf16 %v1601
    %v1648 = vunpack.c.h.bf16 %v1601
    %v1649 = vunpack.c.l.bf16 %v1602
    %v1650 = vunpack.c.h.bf16 %v1602
    %v1651 = vunpack.c.l.bf16 %v1603
    %v1652 = vunpack.c.h.bf16 %v1603
    %v1653 = vunpack.c.l.bf16 %v1604
    %v1654 = vunpack.c.h.bf16 %v1604
    %v1655 = vunpack.c.l.bf16 %v1605
    %v1656 = vunpack.c.h.bf16 %v1605
    %v1657 = vunpack.c.l.bf16 %v1606
    %v1658 = vunpack.c.h.bf16 %v1606
    %v1659 = vunpack.c.l.bf16 %v1607
    %v1660 = vunpack.c.h.bf16 %v1607
    %v1661 = vunpack.c.l.bf16 %v1608
    %v1662 = vunpack.c.h.bf16 %v1608
    %v1663 = vunpack.c.l.bf16 %v1609
    %v1664 = vunpack.c.h.bf16 %v1609
    %v1665 = vunpack.c.l.bf16 %v1610
    %v1666 = vunpack.c.h.bf16 %v1610
    %v1667 = vunpack.c.l.bf16 %v1611
    %v1668 = vunpack.c.h.bf16 %v1611
    %v1669 = vunpack.c.l.bf16 %v1612
    %v1670 = vunpack.c.h.bf16 %v1612
    %v1671 = vunpack.c.l.bf16 %v1613
    %v1672 = vunpack.c.h.bf16 %v1613
    %v1673 = vunpack.c.l.bf16 %v1614
    %v1674 = vunpack.c.h.bf16 %v1614
    %v1675 = vunpack.c.l.bf16 %v1615
    %v1676 = vunpack.c.h.bf16 %v1615
    %v1677 = vunpack.c.l.bf16 %v1616
    %v1678 = vunpack.c.h.bf16 %v1616
    %v1679 = vunpack.c.l.bf16 %v1617
    %v1680 = vunpack.c.h.bf16 %v1617
    %v1681 = vunpack.c.l.bf16 %v1618
    %v1682 = vunpack.c.h.bf16 %v1618
    %1683 = vmatprep.subr.mxu0 0.0
    %1684 = vmatpush1.msra.mxu0 %v1534
    %1685 = vmatprep.subr.mxu0 0.0
    %1686 = vmatpush1.msra.mxu0 %v1533
    %1687 = vmatprep.subr.mxu0 0.0
    %1688 = vmatpush1.msra.mxu0 %v1532
    %1689 = vmatprep.subr.mxu0 0.0
    %1690 = vmatpush1.msra.mxu0 %v1531
    %1691 = vmatprep.subr.mxu0 0.0
    %1692 = vmatpush1.msra.mxu0 %v1530
    %1693 = vmatprep.subr.mxu0 0.0
    %1694 = vmatpush1.msra.mxu0 %v1529
    %1695 = vmatprep.subr.mxu0 0.0
    %1696 = vmatpush1.msra.mxu0 %v1528
    %1697 = vmatprep.subr.mxu0 0.0
    %1698 = vmatpush1.msra.mxu0 %v1527
    %1699 = vmatprep.subr.mxu0 0.0
    %1700 = vmatpush1.msra.mxu0 %v1526
    %1701 = vmatprep.subr.mxu0 0.0
    %1702 = vmatpush1.msra.mxu0 %v1525
    %1703 = vmatprep.subr.mxu0 0.0
    %1704 = vmatpush1.msra.mxu0 %v1524
    %1705 = vmatprep.subr.mxu0 0.0
    %1706 = vmatpush1.msra.mxu0 %v1523
    %1707 = vmatprep.subr.mxu0 0.0
    %1708 = vmatpush1.msra.mxu0 %v1522
    %1709 = vmatprep.subr.mxu0 0.0
    %1710 = vmatpush1.msra.mxu0 %v1521
    %1711 = vmatprep.subr.mxu0 0.0
    %1712 = vmatpush1.msra.mxu0 %v1520
    %1713 = vmatprep.subr.mxu0 0.0
    %1714 = vmatpush1.msra.mxu0 %v1519
    %1715 = vmatprep.subr.mxu0 0.0
    %1716 = vmatpush2.msra.mxu0 %v1550
    %1717 = vmatprep.subr.mxu0 0.0
    %1718 = vmatpush2.msra.mxu0 %v1549
    %1719 = vmatprep.subr.mxu0 0.0
    %1720 = vmatpush2.msra.mxu0 %v1548
    %1721 = vmatprep.subr.mxu0 0.0
    %1722 = vmatpush2.msra.mxu0 %v1547
    %1723 = vmatprep.subr.mxu0 0.0
    %1724 = vmatpush2.msra.mxu0 %v1546
    %1725 = vmatprep.subr.mxu0 0.0
    %1726 = vmatpush2.msra.mxu0 %v1545
    %1727 = vmatprep.subr.mxu0 0.0
    %1728 = vmatpush2.msra.mxu0 %v1544
    %1729 = vmatprep.subr.mxu0 0.0
    %1730 = vmatpush2.msra.mxu0 %v1543
    %1731 = vmatprep.subr.mxu0 0.0
    %1732 = vmatpush2.msra.mxu0 %v1542
    %1733 = vmatprep.subr.mxu0 0.0
    %1734 = vmatpush2.msra.mxu0 %v1541
    %1735 = vmatprep.subr.mxu0 0.0
    %1736 = vmatpush2.msra.mxu0 %v1540
    %1737 = vmatprep.subr.mxu0 0.0
    %1738 = vmatpush2.msra.mxu0 %v1539
    %1739 = vmatprep.subr.mxu0 0.0
    %1740 = vmatpush2.msra.mxu0 %v1538
    %1741 = vmatprep.subr.mxu0 0.0
    %1742 = vmatpush2.msra.mxu0 %v1537
    %1743 = vmatprep.subr.mxu0 0.0
    %1744 = vmatpush2.msra.mxu0 %v1536
    %1745 = vmatprep.subr.mxu0 0.0
    %1746 = vmatpush2.msra.mxu0 %v1535
    %1747 = vmatprep.mubr.f32.mxu0 %v1620
    %1748 = vmatmul.mubr.f32.gmra.mxu0 %v1619
    %v1749 = vpop.f32.mrf.mxu0
    %v1750 = vadd.f32 0.0, %v1749
    %v1751 = vpop.f32.mrf.mxu0
    %1752 = vmatprep.mubr.f32.mxu0 %v1624
    %1753 = vmatmul.mubr.f32.gmra.mxu0 %v1623
    %v1754 = vpop.f32.mrf.mxu0
    %v1755 = vadd.f32 0.0, %v1754
    %v1756 = vpop.f32.mrf.mxu0
    %1757 = vmatprep.mubr.f32.mxu0 %v1628
    %1758 = vmatmul.mubr.f32.gmra.mxu0 %v1627
    %v1759 = vpop.f32.mrf.mxu0
    %v1760 = vadd.f32 0.0, %v1759
    %v1761 = vpop.f32.mrf.mxu0
    %1762 = vmatprep.mubr.f32.mxu0 %v1632
    %1763 = vmatmul.mubr.f32.gmra.mxu0 %v1631
    %v1764 = vpop.f32.mrf.mxu0
    %v1765 = vadd.f32 0.0, %v1764
    %v1766 = vpop.f32.mrf.mxu0
    %1767 = vmatprep.mubr.f32.mxu0 %v1636
    %1768 = vmatmul.mubr.f32.gmra.mxu0 %v1635
    %v1769 = vpop.f32.mrf.mxu0
    %v1770 = vadd.f32 0.0, %v1769
    %v1771 = vpop.f32.mrf.mxu0
    %1772 = vmatprep.mubr.f32.mxu0 %v1640
    %1773 = vmatmul.mubr.f32.gmra.mxu0 %v1639
    %v1774 = vpop.f32.mrf.mxu0
    %v1775 = vadd.f32 0.0, %v1774
    %v1776 = vpop.f32.mrf.mxu0
    %1777 = vmatprep.mubr.f32.mxu0 %v1644
    %1778 = vmatmul.mubr.f32.gmra.mxu0 %v1643
    %v1779 = vpop.f32.mrf.mxu0
    %v1780 = vadd.f32 0.0, %v1779
    %v1781 = vpop.f32.mrf.mxu0
    %1782 = vmatprep.mubr.f32.mxu0 %v1648
    %1783 = vmatmul.mubr.f32.gmra.mxu0 %v1647
    %v1784 = vpop.f32.mrf.mxu0
    %v1785 = vadd.f32 0.0, %v1784
    %v1786 = vpop.f32.mrf.mxu0
    %1787 = vmatprep.mubr.f32.mxu0 %v1652
    %1788 = vmatmul.mubr.f32.gmra.mxu0 %v1651
    %v1789 = vpop.f32.mrf.mxu0
    %v1790 = vadd.f32 0.0, %v1789
    %v1791 = vpop.f32.mrf.mxu0
    %1792 = vmatprep.mubr.f32.mxu0 %v1656
    %1793 = vmatmul.mubr.f32.gmra.mxu0 %v1655
    %v1794 = vpop.f32.mrf.mxu0
    %v1795 = vadd.f32 0.0, %v1794
    %v1796 = vpop.f32.mrf.mxu0
    %1797 = vmatprep.mubr.f32.mxu0 %v1660
    %1798 = vmatmul.mubr.f32.gmra.mxu0 %v1659
    %v1799 = vpop.f32.mrf.mxu0
    %v1800 = vadd.f32 0.0, %v1799
    %v1801 = vpop.f32.mrf.mxu0
    %1802 = vmatprep.mubr.f32.mxu0 %v1664
    %1803 = vmatmul.mubr.f32.gmra.mxu0 %v1663
    %v1804 = vpop.f32.mrf.mxu0
    %v1805 = vadd.f32 0.0, %v1804
    %v1806 = vpop.f32.mrf.mxu0
    %1807 = vmatprep.mubr.f32.mxu0 %v1668
    %1808 = vmatmul.mubr.f32.gmra.mxu0 %v1667
    %v1809 = vpop.f32.mrf.mxu0
    %v1810 = vadd.f32 0.0, %v1809
    %v1811 = vpop.f32.mrf.mxu0
    %1812 = vmatprep.mubr.f32.mxu0 %v1672
    %1813 = vmatmul.mubr.f32.gmra.mxu0 %v1671
    %v1814 = vpop.f32.mrf.mxu0
    %v1815 = vadd.f32 0.0, %v1814
    %v1816 = vpop.f32.mrf.mxu0
    %1817 = vmatprep.mubr.f32.mxu0 %v1676
    %1818 = vmatmul.mubr.f32.gmra.mxu0 %v1675
    %v1819 = vpop.f32.mrf.mxu0
    %v1820 = vadd.f32 0.0, %v1819
    %v1821 = vpop.f32.mrf.mxu0
    %1822 = vmatprep.mubr.f32.mxu0 %v1680
    %1823 = vmatmul.mubr.f32.gmra.mxu0 %v1679
    %v1824 = vpop.f32.mrf.mxu0
    %v1825 = vadd.f32 0.0, %v1824
    %v1826 = vpop.f32.mrf.mxu0
    %1827 = vdwg.mxu0
    %1828 = vmatprep.subr.mxu0 0.0
    %1829 = vmatpush1.msra.mxu0 %v1566
    %1830 = vmatprep.subr.mxu0 0.0
    %1831 = vmatpush1.msra.mxu0 %v1565
    %1832 = vmatprep.subr.mxu0 0.0
    %1833 = vmatpush1.msra.mxu0 %v1564
    %1834 = vmatprep.subr.mxu0 0.0
    %1835 = vmatpush1.msra.mxu0 %v1563
    %1836 = vmatprep.subr.mxu0 0.0
    %1837 = vmatpush1.msra.mxu0 %v1562
    %1838 = vmatprep.subr.mxu0 0.0
    %1839 = vmatpush1.msra.mxu0 %v1561
    %1840 = vmatprep.subr.mxu0 0.0
    %1841 = vmatpush1.msra.mxu0 %v1560
    %1842 = vmatprep.subr.mxu0 0.0
    %1843 = vmatpush1.msra.mxu0 %v1559
    %1844 = vmatprep.subr.mxu0 0.0
    %1845 = vmatpush1.msra.mxu0 %v1558
    %1846 = vmatprep.subr.mxu0 0.0
    %1847 = vmatpush1.msra.mxu0 %v1557
    %1848 = vmatprep.subr.mxu0 0.0
    %1849 = vmatpush1.msra.mxu0 %v1556
    %1850 = vmatprep.subr.mxu0 0.0
    %1851 = vmatpush1.msra.mxu0 %v1555
    %1852 = vmatprep.subr.mxu0 0.0
    %1853 = vmatpush1.msra.mxu0 %v1554
    %1854 = vmatprep.subr.mxu0 0.0
    %1855 = vmatpush1.msra.mxu0 %v1553
    %1856 = vmatprep.subr.mxu0 0.0
    %1857 = vmatpush1.msra.mxu0 %v1552
    %1858 = vmatprep.subr.mxu0 0.0
    %1859 = vmatpush1.msra.mxu0 %v1551
    %1860 = vmatprep.subr.mxu0 0.0
    %1861 = vmatpush2.msra.mxu0 %v1582
    %1862 = vmatprep.subr.mxu0 0.0
    %1863 = vmatpush2.msra.mxu0 %v1581
    %1864 = vmatprep.subr.mxu0 0.0
    %1865 = vmatpush2.msra.mxu0 %v1580
    %1866 = vmatprep.subr.mxu0 0.0
    %1867 = vmatpush2.msra.mxu0 %v1579
    %1868 = vmatprep.subr.mxu0 0.0
    %1869 = vmatpush2.msra.mxu0 %v1578
    %1870 = vmatprep.subr.mxu0 0.0
    %1871 = vmatpush2.msra.mxu0 %v1577
    %1872 = vmatprep.subr.mxu0 0.0
    %1873 = vmatpush2.msra.mxu0 %v1576
    %1874 = vmatprep.subr.mxu0 0.0
    %1875 = vmatpush2.msra.mxu0 %v1575
    %1876 = vmatprep.subr.mxu0 0.0
    %1877 = vmatpush2.msra.mxu0 %v1574
    %1878 = vmatprep.subr.mxu0 0.0
    %1879 = vmatpush2.msra.mxu0 %v1573
    %1880 = vmatprep.subr.mxu0 0.0
    %1881 = vmatpush2.msra.mxu0 %v1572
    %1882 = vmatprep.subr.mxu0 0.0
    %1883 = vmatpush2.msra.mxu0 %v1571
    %1884 = vmatprep.subr.mxu0 0.0
    %1885 = vmatpush2.msra.mxu0 %v1570
    %1886 = vmatprep.subr.mxu0 0.0
    %1887 = vmatpush2.msra.mxu0 %v1569
    %1888 = vmatprep.subr.mxu0 0.0
    %1889 = vmatpush2.msra.mxu0 %v1568
    %1890 = vmatprep.subr.mxu0 0.0
    %1891 = vmatpush2.msra.mxu0 %v1567
    %1892 = vmatprep.mubr.f32.mxu0 %v1622
    %1893 = vmatmul.mubr.f32.gmra.mxu0 %v1621
    %v1894 = vpop.f32.mrf.mxu0
    %v1895 = vadd.f32 %v1750, %v1894
    %v1896 = vpop.f32.mrf.mxu0
    %1897 = vmatprep.mubr.f32.mxu0 %v1626
    %1898 = vmatmul.mubr.f32.gmra.mxu0 %v1625
    %v1899 = vpop.f32.mrf.mxu0
    %v1900 = vadd.f32 %v1755, %v1899
    %v1901 = vpop.f32.mrf.mxu0
    %1902 = vmatprep.mubr.f32.mxu0 %v1630
    %1903 = vmatmul.mubr.f32.gmra.mxu0 %v1629
    %v1904 = vpop.f32.mrf.mxu0
    %v1905 = vadd.f32 %v1760, %v1904
    %v1906 = vpop.f32.mrf.mxu0
    %1907 = vmatprep.mubr.f32.mxu0 %v1634
    %1908 = vmatmul.mubr.f32.gmra.mxu0 %v1633
    %v1909 = vpop.f32.mrf.mxu0
    %v1910 = vadd.f32 %v1765, %v1909
    %v1911 = vpop.f32.mrf.mxu0
    %1912 = vmatprep.mubr.f32.mxu0 %v1638
    %1913 = vmatmul.mubr.f32.gmra.mxu0 %v1637
    %v1914 = vpop.f32.mrf.mxu0
    %v1915 = vadd.f32 %v1770, %v1914
    %v1916 = vpop.f32.mrf.mxu0
    %1917 = vmatprep.mubr.f32.mxu0 %v1642
    %1918 = vmatmul.mubr.f32.gmra.mxu0 %v1641
    %v1919 = vpop.f32.mrf.mxu0
    %v1920 = vadd.f32 %v1775, %v1919
    %v1921 = vpop.f32.mrf.mxu0
    %1922 = vmatprep.mubr.f32.mxu0 %v1646
    %1923 = vmatmul.mubr.f32.gmra.mxu0 %v1645
    %v1924 = vpop.f32.mrf.mxu0
    %v1925 = vadd.f32 %v1780, %v1924
    %v1926 = vpop.f32.mrf.mxu0
    %1927 = vmatprep.mubr.f32.mxu0 %v1650
    %1928 = vmatmul.mubr.f32.gmra.mxu0 %v1649
    %v1929 = vpop.f32.mrf.mxu0
    %v1930 = vadd.f32 %v1785, %v1929
    %v1931 = vpop.f32.mrf.mxu0
    %1932 = vmatprep.mubr.f32.mxu0 %v1654
    %1933 = vmatmul.mubr.f32.gmra.mxu0 %v1653
    %v1934 = vpop.f32.mrf.mxu0
    %v1935 = vadd.f32 %v1790, %v1934
    %v1936 = vpop.f32.mrf.mxu0
    %1937 = vmatprep.mubr.f32.mxu0 %v1658
    %1938 = vmatmul.mubr.f32.gmra.mxu0 %v1657
    %v1939 = vpop.f32.mrf.mxu0
    %v1940 = vadd.f32 %v1795, %v1939
    %v1941 = vpop.f32.mrf.mxu0
    %1942 = vmatprep.mubr.f32.mxu0 %v1662
    %1943 = vmatmul.mubr.f32.gmra.mxu0 %v1661
    %v1944 = vpop.f32.mrf.mxu0
    %v1945 = vadd.f32 %v1800, %v1944
    %v1946 = vpop.f32.mrf.mxu0
    %1947 = vmatprep.mubr.f32.mxu0 %v1666
    %1948 = vmatmul.mubr.f32.gmra.mxu0 %v1665
    %v1949 = vpop.f32.mrf.mxu0
    %v1950 = vadd.f32 %v1805, %v1949
    %v1951 = vpop.f32.mrf.mxu0
    %1952 = vmatprep.mubr.f32.mxu0 %v1670
    %1953 = vmatmul.mubr.f32.gmra.mxu0 %v1669
    %v1954 = vpop.f32.mrf.mxu0
    %v1955 = vadd.f32 %v1810, %v1954
    %v1956 = vpop.f32.mrf.mxu0
    %1957 = vmatprep.mubr.f32.mxu0 %v1674
    %1958 = vmatmul.mubr.f32.gmra.mxu0 %v1673
    %v1959 = vpop.f32.mrf.mxu0
    %v1960 = vadd.f32 %v1815, %v1959
    %v1961 = vpop.f32.mrf.mxu0
    %1962 = vmatprep.mubr.f32.mxu0 %v1678
    %1963 = vmatmul.mubr.f32.gmra.mxu0 %v1677
    %v1964 = vpop.f32.mrf.mxu0
    %v1965 = vadd.f32 %v1820, %v1964
    %v1966 = vpop.f32.mrf.mxu0
    %1967 = vmatprep.mubr.f32.mxu0 %v1682
    %1968 = vmatmul.mubr.f32.gmra.mxu0 %v1681
    %v1969 = vpop.f32.mrf.mxu0
    %v1970 = vadd.f32 %v1825, %v1969
    %v1971 = vpop.f32.mrf.mxu0
    %1972 = vdwg.mxu0
    %1973 = vst.msk [vmem:[#allocation3 + $0x28] sm:$0xff] %vm169, %v1895
    %1974 = vst.msk [vmem:[#allocation3 + $0x38] sm:$0xff] %vm169, %v1900
    %1975 = vst.msk [vmem:[#allocation3 + $0x48] sm:$0xff] %vm169, %v1905
    %1976 = vst.msk [vmem:[#allocation3 + $0x58] sm:$0xff] %vm169, %v1910
    %1977 = vst.msk [vmem:[#allocation3 + $0x68] sm:$0xff] %vm169, %v1915
    %1978 = vst.msk [vmem:[#allocation3 + $0x78] sm:$0xff] %vm169, %v1920
    %1979 = vst.msk [vmem:[#allocation3 + $0x88] sm:$0xff] %vm169, %v1925
    %1980 = vst.msk [vmem:[#allocation3 + $0x98] sm:$0xff] %vm169, %v1930
    %1981 = vst.msk [vmem:[#allocation3 + $0xc8] sm:$0xff] %vm169, %v1935
    %1982 = vst.msk [vmem:[#allocation3 + $0xd8] sm:$0xff] %vm169, %v1940
    %1983 = vst.msk [vmem:[#allocation3 + $0xe8] sm:$0xff] %vm169, %v1945
    %1984 = vst.msk [vmem:[#allocation3 + $0xf8] sm:$0xff] %vm169, %v1950
    %1985 = vst.msk [vmem:[#allocation3 + $0x108] sm:$0xff] %vm169, %v1955
    %1986 = vst.msk [vmem:[#allocation3 + $0x118] sm:$0xff] %vm169, %v1960
    %1987 = vst.msk [vmem:[#allocation3 + $0x128] sm:$0xff] %vm169, %v1965
    %1988 = vst.msk [vmem:[#allocation3 + $0x138] sm:$0xff] %vm169, %v1970
    %v1989 = vld [vmem:[#allocation3 + $0x7] sm:$0xff]
    %v1990 = vld [vmem:[#allocation3 + $0xf] sm:$0xff]
    %v1991 = vld [vmem:[#allocation3 + $0x17] sm:$0xff]
    %v1992 = vld [vmem:[#allocation3 + $0x1f] sm:$0xff]
    %v1993 = vld [vmem:[#allocation3 + $0x27] sm:$0xff]
    %v1994 = vld [vmem:[#allocation3 + $0x2f] sm:$0xff]
    %v1995 = vld [vmem:[#allocation3 + $0x37] sm:$0xff]
    %v1996 = vld [vmem:[#allocation3 + $0x3f] sm:$0xff]
    %v1997 = vld [vmem:[#allocation3 + $0x47] sm:$0xff]
    %v1998 = vld [vmem:[#allocation3 + $0x4f] sm:$0xff]
    %v1999 = vld [vmem:[#allocation3 + $0x57] sm:$0xff]
    %v2000 = vld [vmem:[#allocation3 + $0x5f] sm:$0xff]
    %v2001 = vld [vmem:[#allocation3 + $0x67] sm:$0xff]
    %v2002 = vld [vmem:[#allocation3 + $0x6f] sm:$0xff]
    %v2003 = vld [vmem:[#allocation3 + $0x77] sm:$0xff]
    %v2004 = vld [vmem:[#allocation3 + $0x7f] sm:$0xff]
    %v2005 = vld [vmem:[#allocation3 + $0x87] sm:$0xff]
    %v2006 = vld [vmem:[#allocation3 + $0x8f] sm:$0xff]
    %v2007 = vld [vmem:[#allocation3 + $0x97] sm:$0xff]
    %v2008 = vld [vmem:[#allocation3 + $0x9f] sm:$0xff]
    %v2009 = vld [vmem:[#allocation3 + $0xa7] sm:$0xff]
    %v2010 = vld [vmem:[#allocation3 + $0xaf] sm:$0xff]
    %v2011 = vld [vmem:[#allocation3 + $0xb7] sm:$0xff]
    %v2012 = vld [vmem:[#allocation3 + $0xbf] sm:$0xff]
    %v2013 = vld [vmem:[#allocation3 + $0xc7] sm:$0xff]
    %v2014 = vld [vmem:[#allocation3 + $0xcf] sm:$0xff]
    %v2015 = vld [vmem:[#allocation3 + $0xd7] sm:$0xff]
    %v2016 = vld [vmem:[#allocation3 + $0xdf] sm:$0xff]
    %v2017 = vld [vmem:[#allocation3 + $0xe7] sm:$0xff]
    %v2018 = vld [vmem:[#allocation3 + $0xef] sm:$0xff]
    %v2019 = vld [vmem:[#allocation3 + $0xf7] sm:$0xff]
    %v2020 = vld [vmem:[#allocation3 + $0xff] sm:$0xff]
    %v2021 = vld [vmem:[#allocation3 + $0x107] sm:$0xff]
    %v2022 = vld [vmem:[#allocation3 + $0x10f] sm:$0xff]
    %v2023 = vld [vmem:[#allocation3 + $0x117] sm:$0xff]
    %v2024 = vld [vmem:[#allocation3 + $0x11f] sm:$0xff]
    %v2025 = vld [vmem:[#allocation3 + $0x127] sm:$0xff]
    %v2026 = vld [vmem:[#allocation3 + $0x12f] sm:$0xff]
    %v2027 = vld [vmem:[#allocation3 + $0x137] sm:$0xff]
    %v2028 = vld [vmem:[#allocation3 + $0x13f] sm:$0xff]
    %v2029 = vld [vmem:[%s6] sm:$0xff]
    %v2030 = vld [vmem:[%s6 + $0x8] sm:$0xff]
    %v2031 = vld [vmem:[%s6 + $0x10] sm:$0xff]
    %v2032 = vld [vmem:[%s6 + $0x18] sm:$0xff]
    %v2033 = vld [vmem:[#allocation3 + $0x8] sm:$0xff]
    %v2034 = vld [vmem:[#allocation3 + $0x10] sm:$0xff]
    %v2035 = vld [vmem:[#allocation3 + $0x18] sm:$0xff]
    %v2036 = vld [vmem:[#allocation3 + $0x20] sm:$0xff]
    %v2037 = vld [vmem:[#allocation3 + $0x28] sm:$0xff]
    %v2038 = vld [vmem:[#allocation3 + $0x30] sm:$0xff]
    %v2039 = vld [vmem:[#allocation3 + $0x38] sm:$0xff]
    %v2040 = vld [vmem:[#allocation3 + $0x40] sm:$0xff]
    %v2041 = vld [vmem:[#allocation3 + $0x48] sm:$0xff]
    %v2042 = vld [vmem:[#allocation3 + $0x50] sm:$0xff]
    %v2043 = vld [vmem:[#allocation3 + $0x58] sm:$0xff]
    %v2044 = vld [vmem:[#allocation3 + $0x60] sm:$0xff]
    %v2045 = vld [vmem:[#allocation3 + $0x68] sm:$0xff]
    %v2046 = vld [vmem:[#allocation3 + $0x70] sm:$0xff]
    %v2047 = vld [vmem:[#allocation3 + $0x78] sm:$0xff]
    %v2048 = vld [vmem:[#allocation3 + $0x80] sm:$0xff]
    %v2049 = vld [vmem:[#allocation3 + $0x88] sm:$0xff]
    %v2050 = vld [vmem:[#allocation3 + $0x90] sm:$0xff]
    %v2051 = vld [vmem:[#allocation3 + $0x98] sm:$0xff]
    %v2052 = vld [vmem:[#allocation3 + $0xa0] sm:$0xff]
    %v2053 = vld [vmem:[#allocation3 + $0xa8] sm:$0xff]
    %v2054 = vld [vmem:[#allocation3 + $0xb0] sm:$0xff]
    %v2055 = vld [vmem:[#allocation3 + $0xb8] sm:$0xff]
    %v2056 = vld [vmem:[#allocation3 + $0xc0] sm:$0xff]
    %v2057 = vld [vmem:[#allocation3 + $0xc8] sm:$0xff]
    %v2058 = vld [vmem:[#allocation3 + $0xd0] sm:$0xff]
    %v2059 = vld [vmem:[#allocation3 + $0xd8] sm:$0xff]
    %v2060 = vld [vmem:[#allocation3 + $0xe0] sm:$0xff]
    %v2061 = vld [vmem:[#allocation3 + $0xe8] sm:$0xff]
    %v2062 = vld [vmem:[#allocation3 + $0xf0] sm:$0xff]
    %v2063 = vld [vmem:[#allocation3 + $0xf8] sm:$0xff]
    %v2064 = vld [vmem:[#allocation3 + $0x100] sm:$0xff]
    %v2065 = vld [vmem:[#allocation3 + $0x108] sm:$0xff]
    %v2066 = vld [vmem:[#allocation3 + $0x110] sm:$0xff]
    %v2067 = vld [vmem:[#allocation3 + $0x118] sm:$0xff]
    %v2068 = vld [vmem:[#allocation3 + $0x120] sm:$0xff]
    %v2069 = vld [vmem:[#allocation3 + $0x128] sm:$0xff]
    %v2070 = vld [vmem:[#allocation3 + $0x130] sm:$0xff]
    %v2071 = vld [vmem:[#allocation3 + $0x138] sm:$0xff]
    %v2072 = vld [vmem:[#allocation3 + $0x140] sm:$0xff]
    %s2073 = scalar_lea.vmem %s6, 32
    %v2074 = vld [vmem:[%s2073] sm:$0xff]
    %v2075 = vld [vmem:[%s2073 + $0x8] sm:$0xff]
    %v2076 = vld [vmem:[%s2073 + $0x10] sm:$0xff]
    %v2077 = vld [vmem:[%s2073 + $0x18] sm:$0xff]
    %v2079 = vsel %vm169, %v2033, 0
    %v2082 = vsel %vm169, %v2034, 0
    %v2085 = vsel %vm169, %v2035, 0
    %v2088 = vsel %vm169, %v2036, 0
    %v2091 = vsel %vm169, %v2037, 0
    %v2094 = vsel %vm169, %v2038, 0
    %v2097 = vsel %vm169, %v2039, 0
    %v2100 = vsel %vm169, %v2040, 0
    %v2103 = vsel %vm169, %v2041, 0
    %v2106 = vsel %vm169, %v2042, 0
    %v2109 = vsel %vm169, %v2043, 0
    %v2112 = vsel %vm169, %v2044, 0
    %v2115 = vsel %vm169, %v2045, 0
    %v2118 = vsel %vm169, %v2046, 0
    %v2121 = vsel %vm169, %v2047, 0
    %v2124 = vsel %vm169, %v2048, 0
    %v2127 = vsel %vm169, %v2049, 0
    %v2130 = vsel %vm169, %v2050, 0
    %v2133 = vsel %vm169, %v2051, 0
    %v2136 = vsel %vm169, %v2052, 0
    %v2139 = vsel %vm169, %v2053, 0
    %v2142 = vsel %vm169, %v2054, 0
    %v2145 = vsel %vm169, %v2055, 0
    %v2148 = vsel %vm169, %v2056, 0
    %v2151 = vsel %vm169, %v2057, 0
    %v2154 = vsel %vm169, %v2058, 0
    %v2157 = vsel %vm169, %v2059, 0
    %v2160 = vsel %vm169, %v2060, 0
    %v2163 = vsel %vm169, %v2061, 0
    %v2166 = vsel %vm169, %v2062, 0
    %v2169 = vsel %vm169, %v2063, 0
    %v2172 = vsel %vm169, %v2064, 0
    %v2175 = vsel %vm169, %v2065, 0
    %v2178 = vsel %vm169, %v2066, 0
    %v2181 = vsel %vm169, %v2067, 0
    %v2184 = vsel %vm169, %v2068, 0
    %v2187 = vsel %vm169, %v2069, 0
    %v2190 = vsel %vm169, %v2070, 0
    %v2193 = vsel %vm169, %v2071, 0
    %v2196 = vsel %vm169, %v2072, 0
    %2198 = vmatprep.subr.mxu0 0.0
    %2199 = vmatpush1.msra.mxu0 0.0
    %2200 = vmatprep.subr.mxu0 0.0
    %2201 = vmatpush1.msra.mxu0 0.0
    %2202 = vmatprep.subr.mxu0 0.0
    %2203 = vmatpush1.msra.mxu0 0.0
    %2204 = vmatprep.subr.mxu0 0.0
    %2205 = vmatpush1.msra.mxu0 0.0
    %2206 = vmatprep.subr.mxu0 0.0
    %2207 = vmatpush1.msra.mxu0 0.0
    %2208 = vmatprep.subr.mxu0 0.0
    %2209 = vmatpush1.msra.mxu0 0.0
    %2210 = vmatprep.subr.mxu0 0.0
    %2211 = vmatpush1.msra.mxu0 0.0
    %2212 = vmatprep.subr.mxu0 0.0
    %2213 = vmatpush1.msra.mxu0 0.0
    %2214 = vmatprep.subr.mxu0 0.0
    %2215 = vmatpush1.msra.mxu0 0.0
    %2216 = vmatprep.subr.mxu0 0.0
    %2217 = vmatpush1.msra.mxu0 0.0
    %2218 = vmatprep.subr.mxu0 0.0
    %2219 = vmatpush1.msra.mxu0 0.0
    %2220 = vmatprep.subr.mxu0 0.0
    %2221 = vmatpush1.msra.mxu0 0.0
    %2222 = vmatprep.subr.mxu0 0.0
    %2223 = vmatpush1.msra.mxu0 %v2077
    %2224 = vmatprep.subr.mxu0 0.0
    %2225 = vmatpush1.msra.mxu0 %v2076
    %2226 = vmatprep.subr.mxu0 0.0
    %2227 = vmatpush1.msra.mxu0 %v2075
    %2228 = vmatprep.subr.mxu0 0.0
    %2229 = vmatpush1.msra.mxu0 %v2074
    %2230 = vmatprep.subr.mxu0 0.0
    %2231 = vmatpush2.msra.mxu0 0.0
    %2232 = vmatprep.subr.mxu0 0.0
    %2233 = vmatpush2.msra.mxu0 0.0
    %2234 = vmatprep.subr.mxu0 0.0
    %2235 = vmatpush2.msra.mxu0 0.0
    %2236 = vmatprep.subr.mxu0 0.0
    %2237 = vmatpush2.msra.mxu0 0.0
    %2238 = vmatprep.subr.mxu0 0.0
    %2239 = vmatpush2.msra.mxu0 0.0
    %2240 = vmatprep.subr.mxu0 0.0
    %2241 = vmatpush2.msra.mxu0 0.0
    %2242 = vmatprep.subr.mxu0 0.0
    %2243 = vmatpush2.msra.mxu0 0.0
    %2244 = vmatprep.subr.mxu0 0.0
    %2245 = vmatpush2.msra.mxu0 0.0
    %2246 = vmatprep.subr.mxu0 0.0
    %2247 = vmatpush2.msra.mxu0 0.0
    %2248 = vmatprep.subr.mxu0 0.0
    %2249 = vmatpush2.msra.mxu0 0.0
    %2250 = vmatprep.subr.mxu0 0.0
    %2251 = vmatpush2.msra.mxu0 0.0
    %2252 = vmatprep.subr.mxu0 0.0
    %2253 = vmatpush2.msra.mxu0 0.0
    %2254 = vmatprep.subr.mxu0 0.0
    %2255 = vmatpush2.msra.mxu0 0.0
    %2256 = vmatprep.subr.mxu0 0.0
    %2257 = vmatpush2.msra.mxu0 0.0
    %2258 = vmatprep.subr.mxu0 0.0
    %2259 = vmatpush2.msra.mxu0 0.0
    %2260 = vmatprep.subr.mxu0 0.0
    %2261 = vmatpush2.msra.mxu0 0.0
    %2262 = vmatprep.mubr.f32.mxu0 0.0
    %2263 = vmatmul.mubr.f32.gmra.mxu0 %v2079
    %v2264 = vpop.f32.mrf.mxu0
    %v2265 = vadd.f32 0.0, %v2264
    %v2266 = vpop.f32.mrf.mxu0
    %2267 = vmatprep.mubr.f32.mxu0 0.0
    %2268 = vmatmul.mubr.f32.gmra.mxu0 %v2082
    %v2269 = vpop.f32.mrf.mxu0
    %v2270 = vadd.f32 0.0, %v2269
    %v2271 = vpop.f32.mrf.mxu0
    %2272 = vmatprep.mubr.f32.mxu0 0.0
    %2273 = vmatmul.mubr.f32.gmra.mxu0 %v2085
    %v2274 = vpop.f32.mrf.mxu0
    %v2275 = vadd.f32 0.0, %v2274
    %v2276 = vpop.f32.mrf.mxu0
    %2277 = vmatprep.mubr.f32.mxu0 0.0
    %2278 = vmatmul.mubr.f32.gmra.mxu0 %v2088
    %v2279 = vpop.f32.mrf.mxu0
    %v2280 = vadd.f32 0.0, %v2279
    %v2281 = vpop.f32.mrf.mxu0
    %2282 = vmatprep.mubr.f32.mxu0 0.0
    %2283 = vmatmul.mubr.f32.gmra.mxu0 %v2091
    %v2284 = vpop.f32.mrf.mxu0
    %v2285 = vadd.f32 0.0, %v2284
    %v2286 = vpop.f32.mrf.mxu0
    %2287 = vmatprep.mubr.f32.mxu0 0.0
    %2288 = vmatmul.mubr.f32.gmra.mxu0 %v2094
    %v2289 = vpop.f32.mrf.mxu0
    %v2290 = vadd.f32 0.0, %v2289
    %v2291 = vpop.f32.mrf.mxu0
    %2292 = vmatprep.mubr.f32.mxu0 0.0
    %2293 = vmatmul.mubr.f32.gmra.mxu0 %v2097
    %v2294 = vpop.f32.mrf.mxu0
    %v2295 = vadd.f32 0.0, %v2294
    %v2296 = vpop.f32.mrf.mxu0
    %2297 = vmatprep.mubr.f32.mxu0 0.0
    %2298 = vmatmul.mubr.f32.gmra.mxu0 %v2100
    %v2299 = vpop.f32.mrf.mxu0
    %v2300 = vadd.f32 0.0, %v2299
    %v2301 = vpop.f32.mrf.mxu0
    %2302 = vmatprep.mubr.f32.mxu0 0.0
    %2303 = vmatmul.mubr.f32.gmra.mxu0 %v2103
    %v2304 = vpop.f32.mrf.mxu0
    %v2305 = vadd.f32 0.0, %v2304
    %v2306 = vpop.f32.mrf.mxu0
    %2307 = vmatprep.mubr.f32.mxu0 0.0
    %2308 = vmatmul.mubr.f32.gmra.mxu0 %v2106
    %v2309 = vpop.f32.mrf.mxu0
    %v2310 = vadd.f32 0.0, %v2309
    %v2311 = vpop.f32.mrf.mxu0
    %2312 = vmatprep.mubr.f32.mxu0 0.0
    %2313 = vmatmul.mubr.f32.gmra.mxu0 %v2109
    %v2314 = vpop.f32.mrf.mxu0
    %v2315 = vadd.f32 0.0, %v2314
    %v2316 = vpop.f32.mrf.mxu0
    %2317 = vmatprep.mubr.f32.mxu0 0.0
    %2318 = vmatmul.mubr.f32.gmra.mxu0 %v2112
    %v2319 = vpop.f32.mrf.mxu0
    %v2320 = vadd.f32 0.0, %v2319
    %v2321 = vpop.f32.mrf.mxu0
    %2322 = vmatprep.mubr.f32.mxu0 0.0
    %2323 = vmatmul.mubr.f32.gmra.mxu0 %v2115
    %v2324 = vpop.f32.mrf.mxu0
    %v2325 = vadd.f32 0.0, %v2324
    %v2326 = vpop.f32.mrf.mxu0
    %2327 = vmatprep.mubr.f32.mxu0 0.0
    %2328 = vmatmul.mubr.f32.gmra.mxu0 %v2118
    %v2329 = vpop.f32.mrf.mxu0
    %v2330 = vadd.f32 0.0, %v2329
    %v2331 = vpop.f32.mrf.mxu0
    %2332 = vmatprep.mubr.f32.mxu0 0.0
    %2333 = vmatmul.mubr.f32.gmra.mxu0 %v2121
    %v2334 = vpop.f32.mrf.mxu0
    %v2335 = vadd.f32 0.0, %v2334
    %v2336 = vpop.f32.mrf.mxu0
    %2337 = vmatprep.mubr.f32.mxu0 0.0
    %2338 = vmatmul.mubr.f32.gmra.mxu0 %v2124
    %v2339 = vpop.f32.mrf.mxu0
    %v2340 = vadd.f32 0.0, %v2339
    %v2341 = vpop.f32.mrf.mxu0
    %2342 = vmatprep.mubr.f32.mxu0 0.0
    %2343 = vmatmul.mubr.f32.gmra.mxu0 %v2127
    %v2344 = vpop.f32.mrf.mxu0
    %v2345 = vadd.f32 0.0, %v2344
    %v2346 = vpop.f32.mrf.mxu0
    %2347 = vmatprep.mubr.f32.mxu0 0.0
    %2348 = vmatmul.mubr.f32.gmra.mxu0 %v2130
    %v2349 = vpop.f32.mrf.mxu0
    %v2350 = vadd.f32 0.0, %v2349
    %v2351 = vpop.f32.mrf.mxu0
    %2352 = vmatprep.mubr.f32.mxu0 0.0
    %2353 = vmatmul.mubr.f32.gmra.mxu0 %v2133
    %v2354 = vpop.f32.mrf.mxu0
    %v2355 = vadd.f32 0.0, %v2354
    %v2356 = vpop.f32.mrf.mxu0
    %2357 = vmatprep.mubr.f32.mxu0 0.0
    %2358 = vmatmul.mubr.f32.gmra.mxu0 %v2136
    %v2359 = vpop.f32.mrf.mxu0
    %v2360 = vadd.f32 0.0, %v2359
    %v2361 = vpop.f32.mrf.mxu0
    %2362 = vmatprep.mubr.f32.mxu0 0.0
    %2363 = vmatmul.mubr.f32.gmra.mxu0 %v2139
    %v2364 = vpop.f32.mrf.mxu0
    %v2365 = vadd.f32 0.0, %v2364
    %v2366 = vpop.f32.mrf.mxu0
    %2367 = vmatprep.mubr.f32.mxu0 0.0
    %2368 = vmatmul.mubr.f32.gmra.mxu0 %v2142
    %v2369 = vpop.f32.mrf.mxu0
    %v2370 = vadd.f32 0.0, %v2369
    %v2371 = vpop.f32.mrf.mxu0
    %2372 = vmatprep.mubr.f32.mxu0 0.0
    %2373 = vmatmul.mubr.f32.gmra.mxu0 %v2145
    %v2374 = vpop.f32.mrf.mxu0
    %v2375 = vadd.f32 0.0, %v2374
    %v2376 = vpop.f32.mrf.mxu0
    %2377 = vmatprep.mubr.f32.mxu0 0.0
    %2378 = vmatmul.mubr.f32.gmra.mxu0 %v2148
    %v2379 = vpop.f32.mrf.mxu0
    %v2380 = vadd.f32 0.0, %v2379
    %v2381 = vpop.f32.mrf.mxu0
    %2382 = vmatprep.mubr.f32.mxu0 0.0
    %2383 = vmatmul.mubr.f32.gmra.mxu0 %v2151
    %v2384 = vpop.f32.mrf.mxu0
    %v2385 = vadd.f32 0.0, %v2384
    %v2386 = vpop.f32.mrf.mxu0
    %2387 = vmatprep.mubr.f32.mxu0 0.0
    %2388 = vmatmul.mubr.f32.gmra.mxu0 %v2154
    %v2389 = vpop.f32.mrf.mxu0
    %v2390 = vadd.f32 0.0, %v2389
    %v2391 = vpop.f32.mrf.mxu0
    %2392 = vmatprep.mubr.f32.mxu0 0.0
    %2393 = vmatmul.mubr.f32.gmra.mxu0 %v2157
    %v2394 = vpop.f32.mrf.mxu0
    %v2395 = vadd.f32 0.0, %v2394
    %v2396 = vpop.f32.mrf.mxu0
    %2397 = vmatprep.mubr.f32.mxu0 0.0
    %2398 = vmatmul.mubr.f32.gmra.mxu0 %v2160
    %v2399 = vpop.f32.mrf.mxu0
    %v2400 = vadd.f32 0.0, %v2399
    %v2401 = vpop.f32.mrf.mxu0
    %2402 = vmatprep.mubr.f32.mxu0 0.0
    %2403 = vmatmul.mubr.f32.gmra.mxu0 %v2163
    %v2404 = vpop.f32.mrf.mxu0
    %v2405 = vadd.f32 0.0, %v2404
    %v2406 = vpop.f32.mrf.mxu0
    %2407 = vmatprep.mubr.f32.mxu0 0.0
    %2408 = vmatmul.mubr.f32.gmra.mxu0 %v2166
    %v2409 = vpop.f32.mrf.mxu0
    %v2410 = vadd.f32 0.0, %v2409
    %v2411 = vpop.f32.mrf.mxu0
    %2412 = vmatprep.mubr.f32.mxu0 0.0
    %2413 = vmatmul.mubr.f32.gmra.mxu0 %v2169
    %v2414 = vpop.f32.mrf.mxu0
    %v2415 = vadd.f32 0.0, %v2414
    %v2416 = vpop.f32.mrf.mxu0
    %2417 = vmatprep.mubr.f32.mxu0 0.0
    %2418 = vmatmul.mubr.f32.gmra.mxu0 %v2172
    %v2419 = vpop.f32.mrf.mxu0
    %v2420 = vadd.f32 0.0, %v2419
    %v2421 = vpop.f32.mrf.mxu0
    %2422 = vmatprep.mubr.f32.mxu0 0.0
    %2423 = vmatmul.mubr.f32.gmra.mxu0 %v2175
    %v2424 = vpop.f32.mrf.mxu0
    %v2425 = vadd.f32 0.0, %v2424
    %v2426 = vpop.f32.mrf.mxu0
    %2427 = vmatprep.mubr.f32.mxu0 0.0
    %2428 = vmatmul.mubr.f32.gmra.mxu0 %v2178
    %v2429 = vpop.f32.mrf.mxu0
    %v2430 = vadd.f32 0.0, %v2429
    %v2431 = vpop.f32.mrf.mxu0
    %2432 = vmatprep.mubr.f32.mxu0 0.0
    %2433 = vmatmul.mubr.f32.gmra.mxu0 %v2181
    %v2434 = vpop.f32.mrf.mxu0
    %v2435 = vadd.f32 0.0, %v2434
    %v2436 = vpop.f32.mrf.mxu0
    %2437 = vmatprep.mubr.f32.mxu0 0.0
    %2438 = vmatmul.mubr.f32.gmra.mxu0 %v2184
    %v2439 = vpop.f32.mrf.mxu0
    %v2440 = vadd.f32 0.0, %v2439
    %v2441 = vpop.f32.mrf.mxu0
    %2442 = vmatprep.mubr.f32.mxu0 0.0
    %2443 = vmatmul.mubr.f32.gmra.mxu0 %v2187
    %v2444 = vpop.f32.mrf.mxu0
    %v2445 = vadd.f32 0.0, %v2444
    %v2446 = vpop.f32.mrf.mxu0
    %2447 = vmatprep.mubr.f32.mxu0 0.0
    %2448 = vmatmul.mubr.f32.gmra.mxu0 %v2190
    %v2449 = vpop.f32.mrf.mxu0
    %v2450 = vadd.f32 0.0, %v2449
    %v2451 = vpop.f32.mrf.mxu0
    %2452 = vmatprep.mubr.f32.mxu0 0.0
    %2453 = vmatmul.mubr.f32.gmra.mxu0 %v2193
    %v2454 = vpop.f32.mrf.mxu0
    %v2455 = vadd.f32 0.0, %v2454
    %v2456 = vpop.f32.mrf.mxu0
    %2457 = vmatprep.mubr.f32.mxu0 0.0
    %2458 = vmatmul.mubr.f32.gmra.mxu0 %v2196
    %v2459 = vpop.f32.mrf.mxu0
    %v2460 = vadd.f32 0.0, %v2459
    %v2461 = vpop.f32.mrf.mxu0
    %2462 = vdwg.mxu0
    %v2464 = vsel %vm169, %v1989, 0
    %v2467 = vsel %vm169, %v1990, 0
    %v2470 = vsel %vm169, %v1991, 0
    %v2473 = vsel %vm169, %v1992, 0
    %v2476 = vsel %vm169, %v1993, 0
    %v2479 = vsel %vm169, %v1994, 0
    %v2482 = vsel %vm169, %v1995, 0
    %v2485 = vsel %vm169, %v1996, 0
    %v2488 = vsel %vm169, %v1997, 0
    %v2491 = vsel %vm169, %v1998, 0
    %v2494 = vsel %vm169, %v1999, 0
    %v2497 = vsel %vm169, %v2000, 0
    %v2500 = vsel %vm169, %v2001, 0
    %v2503 = vsel %vm169, %v2002, 0
    %v2506 = vsel %vm169, %v2003, 0
    %v2509 = vsel %vm169, %v2004, 0
    %v2512 = vsel %vm169, %v2005, 0
    %v2515 = vsel %vm169, %v2006, 0
    %v2518 = vsel %vm169, %v2007, 0
    %v2521 = vsel %vm169, %v2008, 0
    %v2524 = vsel %vm169, %v2009, 0
    %v2527 = vsel %vm169, %v2010, 0
    %v2530 = vsel %vm169, %v2011, 0
    %v2533 = vsel %vm169, %v2012, 0
    %v2536 = vsel %vm169, %v2013, 0
    %v2539 = vsel %vm169, %v2014, 0
    %v2542 = vsel %vm169, %v2015, 0
    %v2545 = vsel %vm169, %v2016, 0
    %v2548 = vsel %vm169, %v2017, 0
    %v2551 = vsel %vm169, %v2018, 0
    %v2554 = vsel %vm169, %v2019, 0
    %v2557 = vsel %vm169, %v2020, 0
    %v2560 = vsel %vm169, %v2021, 0
    %v2563 = vsel %vm169, %v2022, 0
    %v2566 = vsel %vm169, %v2023, 0
    %v2569 = vsel %vm169, %v2024, 0
    %v2572 = vsel %vm169, %v2025, 0
    %v2575 = vsel %vm169, %v2026, 0
    %v2578 = vsel %vm169, %v2027, 0
    %v2581 = vsel %vm169, %v2028, 0
    %2583 = vmatprep.subr.mxu0 0.0
    %2584 = vmatpush1.msra.mxu0 0.0
    %2585 = vmatprep.subr.mxu0 0.0
    %2586 = vmatpush1.msra.mxu0 0.0
    %2587 = vmatprep.subr.mxu0 0.0
    %2588 = vmatpush1.msra.mxu0 0.0
    %2589 = vmatprep.subr.mxu0 0.0
    %2590 = vmatpush1.msra.mxu0 0.0
    %2591 = vmatprep.subr.mxu0 0.0
    %2592 = vmatpush1.msra.mxu0 0.0
    %2593 = vmatprep.subr.mxu0 0.0
    %2594 = vmatpush1.msra.mxu0 0.0
    %2595 = vmatprep.subr.mxu0 0.0
    %2596 = vmatpush1.msra.mxu0 0.0
    %2597 = vmatprep.subr.mxu0 0.0
    %2598 = vmatpush1.msra.mxu0 0.0
    %2599 = vmatprep.subr.mxu0 0.0
    %2600 = vmatpush1.msra.mxu0 0.0
    %2601 = vmatprep.subr.mxu0 0.0
    %2602 = vmatpush1.msra.mxu0 0.0
    %2603 = vmatprep.subr.mxu0 0.0
    %2604 = vmatpush1.msra.mxu0 0.0
    %2605 = vmatprep.subr.mxu0 0.0
    %2606 = vmatpush1.msra.mxu0 0.0
    %2607 = vmatprep.subr.mxu0 0.0
    %2608 = vmatpush1.msra.mxu0 %v2032
    %2609 = vmatprep.subr.mxu0 0.0
    %2610 = vmatpush1.msra.mxu0 %v2031
    %2611 = vmatprep.subr.mxu0 0.0
    %2612 = vmatpush1.msra.mxu0 %v2030
    %2613 = vmatprep.subr.mxu0 0.0
    %2614 = vmatpush1.msra.mxu0 %v2029
    %2615 = vmatprep.subr.mxu0 0.0
    %2616 = vmatpush2.msra.mxu0 0.0
    %2617 = vmatprep.subr.mxu0 0.0
    %2618 = vmatpush2.msra.mxu0 0.0
    %2619 = vmatprep.subr.mxu0 0.0
    %2620 = vmatpush2.msra.mxu0 0.0
    %2621 = vmatprep.subr.mxu0 0.0
    %2622 = vmatpush2.msra.mxu0 0.0
    %2623 = vmatprep.subr.mxu0 0.0
    %2624 = vmatpush2.msra.mxu0 0.0
    %2625 = vmatprep.subr.mxu0 0.0
    %2626 = vmatpush2.msra.mxu0 0.0
    %2627 = vmatprep.subr.mxu0 0.0
    %2628 = vmatpush2.msra.mxu0 0.0
    %2629 = vmatprep.subr.mxu0 0.0
    %2630 = vmatpush2.msra.mxu0 0.0
    %2631 = vmatprep.subr.mxu0 0.0
    %2632 = vmatpush2.msra.mxu0 0.0
    %2633 = vmatprep.subr.mxu0 0.0
    %2634 = vmatpush2.msra.mxu0 0.0
    %2635 = vmatprep.subr.mxu0 0.0
    %2636 = vmatpush2.msra.mxu0 0.0
    %2637 = vmatprep.subr.mxu0 0.0
    %2638 = vmatpush2.msra.mxu0 0.0
    %2639 = vmatprep.subr.mxu0 0.0
    %2640 = vmatpush2.msra.mxu0 0.0
    %2641 = vmatprep.subr.mxu0 0.0
    %2642 = vmatpush2.msra.mxu0 0.0
    %2643 = vmatprep.subr.mxu0 0.0
    %2644 = vmatpush2.msra.mxu0 0.0
    %2645 = vmatprep.subr.mxu0 0.0
    %2646 = vmatpush2.msra.mxu0 0.0
    %2647 = vmatprep.mubr.f32.mxu0 0.0
    %2648 = vmatmul.mubr.f32.gmra.mxu0 %v2464
    %v2649 = vpop.f32.mrf.mxu0
    %v2650 = vadd.f32 %v2265, %v2649
    %v2651 = vpop.f32.mrf.mxu0
    %2652 = vmatprep.mubr.f32.mxu0 0.0
    %2653 = vmatmul.mubr.f32.gmra.mxu0 %v2467
    %v2654 = vpop.f32.mrf.mxu0
    %v2655 = vadd.f32 %v2270, %v2654
    %v2656 = vpop.f32.mrf.mxu0
    %2657 = vmatprep.mubr.f32.mxu0 0.0
    %2658 = vmatmul.mubr.f32.gmra.mxu0 %v2470
    %v2659 = vpop.f32.mrf.mxu0
    %v2660 = vadd.f32 %v2275, %v2659
    %v2661 = vpop.f32.mrf.mxu0
    %2662 = vmatprep.mubr.f32.mxu0 0.0
    %2663 = vmatmul.mubr.f32.gmra.mxu0 %v2473
    %v2664 = vpop.f32.mrf.mxu0
    %v2665 = vadd.f32 %v2280, %v2664
    %v2666 = vpop.f32.mrf.mxu0
    %2667 = vmatprep.mubr.f32.mxu0 0.0
    %2668 = vmatmul.mubr.f32.gmra.mxu0 %v2476
    %v2669 = vpop.f32.mrf.mxu0
    %v2670 = vadd.f32 %v2285, %v2669
    %v2671 = vpop.f32.mrf.mxu0
    %2672 = vmatprep.mubr.f32.mxu0 0.0
    %2673 = vmatmul.mubr.f32.gmra.mxu0 %v2479
    %v2674 = vpop.f32.mrf.mxu0
    %v2675 = vadd.f32 %v2290, %v2674
    %v2676 = vpop.f32.mrf.mxu0
    %2677 = vmatprep.mubr.f32.mxu0 0.0
    %2678 = vmatmul.mubr.f32.gmra.mxu0 %v2482
    %v2679 = vpop.f32.mrf.mxu0
    %v2680 = vadd.f32 %v2295, %v2679
    %v2681 = vpop.f32.mrf.mxu0
    %2682 = vmatprep.mubr.f32.mxu0 0.0
    %2683 = vmatmul.mubr.f32.gmra.mxu0 %v2485
    %v2684 = vpop.f32.mrf.mxu0
    %v2685 = vadd.f32 %v2300, %v2684
    %v2686 = vpop.f32.mrf.mxu0
    %2687 = vmatprep.mubr.f32.mxu0 0.0
    %2688 = vmatmul.mubr.f32.gmra.mxu0 %v2488
    %v2689 = vpop.f32.mrf.mxu0
    %v2690 = vadd.f32 %v2305, %v2689
    %v2691 = vpop.f32.mrf.mxu0
    %2692 = vmatprep.mubr.f32.mxu0 0.0
    %2693 = vmatmul.mubr.f32.gmra.mxu0 %v2491
    %v2694 = vpop.f32.mrf.mxu0
    %v2695 = vadd.f32 %v2310, %v2694
    %v2696 = vpop.f32.mrf.mxu0
    %2697 = vmatprep.mubr.f32.mxu0 0.0
    %2698 = vmatmul.mubr.f32.gmra.mxu0 %v2494
    %v2699 = vpop.f32.mrf.mxu0
    %v2700 = vadd.f32 %v2315, %v2699
    %v2701 = vpop.f32.mrf.mxu0
    %2702 = vmatprep.mubr.f32.mxu0 0.0
    %2703 = vmatmul.mubr.f32.gmra.mxu0 %v2497
    %v2704 = vpop.f32.mrf.mxu0
    %v2705 = vadd.f32 %v2320, %v2704
    %v2706 = vpop.f32.mrf.mxu0
    %2707 = vmatprep.mubr.f32.mxu0 0.0
    %2708 = vmatmul.mubr.f32.gmra.mxu0 %v2500
    %v2709 = vpop.f32.mrf.mxu0
    %v2710 = vadd.f32 %v2325, %v2709
    %v2711 = vpop.f32.mrf.mxu0
    %2712 = vmatprep.mubr.f32.mxu0 0.0
    %2713 = vmatmul.mubr.f32.gmra.mxu0 %v2503
    %v2714 = vpop.f32.mrf.mxu0
    %v2715 = vadd.f32 %v2330, %v2714
    %v2716 = vpop.f32.mrf.mxu0
    %2717 = vmatprep.mubr.f32.mxu0 0.0
    %2718 = vmatmul.mubr.f32.gmra.mxu0 %v2506
    %v2719 = vpop.f32.mrf.mxu0
    %v2720 = vadd.f32 %v2335, %v2719
    %v2721 = vpop.f32.mrf.mxu0
    %2722 = vmatprep.mubr.f32.mxu0 0.0
    %2723 = vmatmul.mubr.f32.gmra.mxu0 %v2509
    %v2724 = vpop.f32.mrf.mxu0
    %v2725 = vadd.f32 %v2340, %v2724
    %v2726 = vpop.f32.mrf.mxu0
    %2727 = vmatprep.mubr.f32.mxu0 0.0
    %2728 = vmatmul.mubr.f32.gmra.mxu0 %v2512
    %v2729 = vpop.f32.mrf.mxu0
    %v2730 = vadd.f32 %v2345, %v2729
    %v2731 = vpop.f32.mrf.mxu0
    %2732 = vmatprep.mubr.f32.mxu0 0.0
    %2733 = vmatmul.mubr.f32.gmra.mxu0 %v2515
    %v2734 = vpop.f32.mrf.mxu0
    %v2735 = vadd.f32 %v2350, %v2734
    %v2736 = vpop.f32.mrf.mxu0
    %2737 = vmatprep.mubr.f32.mxu0 0.0
    %2738 = vmatmul.mubr.f32.gmra.mxu0 %v2518
    %v2739 = vpop.f32.mrf.mxu0
    %v2740 = vadd.f32 %v2355, %v2739
    %v2741 = vpop.f32.mrf.mxu0
    %2742 = vmatprep.mubr.f32.mxu0 0.0
    %2743 = vmatmul.mubr.f32.gmra.mxu0 %v2521
    %v2744 = vpop.f32.mrf.mxu0
    %v2745 = vadd.f32 %v2360, %v2744
    %v2746 = vpop.f32.mrf.mxu0
    %2747 = vmatprep.mubr.f32.mxu0 0.0
    %2748 = vmatmul.mubr.f32.gmra.mxu0 %v2524
    %v2749 = vpop.f32.mrf.mxu0
    %v2750 = vadd.f32 %v2365, %v2749
    %v2751 = vpop.f32.mrf.mxu0
    %2752 = vmatprep.mubr.f32.mxu0 0.0
    %2753 = vmatmul.mubr.f32.gmra.mxu0 %v2527
    %v2754 = vpop.f32.mrf.mxu0
    %v2755 = vadd.f32 %v2370, %v2754
    %v2756 = vpop.f32.mrf.mxu0
    %2757 = vmatprep.mubr.f32.mxu0 0.0
    %2758 = vmatmul.mubr.f32.gmra.mxu0 %v2530
    %v2759 = vpop.f32.mrf.mxu0
    %v2760 = vadd.f32 %v2375, %v2759
    %v2761 = vpop.f32.mrf.mxu0
    %2762 = vmatprep.mubr.f32.mxu0 0.0
    %2763 = vmatmul.mubr.f32.gmra.mxu0 %v2533
    %v2764 = vpop.f32.mrf.mxu0
    %v2765 = vadd.f32 %v2380, %v2764
    %v2766 = vpop.f32.mrf.mxu0
    %2767 = vmatprep.mubr.f32.mxu0 0.0
    %2768 = vmatmul.mubr.f32.gmra.mxu0 %v2536
    %v2769 = vpop.f32.mrf.mxu0
    %v2770 = vadd.f32 %v2385, %v2769
    %v2771 = vpop.f32.mrf.mxu0
    %2772 = vmatprep.mubr.f32.mxu0 0.0
    %2773 = vmatmul.mubr.f32.gmra.mxu0 %v2539
    %v2774 = vpop.f32.mrf.mxu0
    %v2775 = vadd.f32 %v2390, %v2774
    %v2776 = vpop.f32.mrf.mxu0
    %2777 = vmatprep.mubr.f32.mxu0 0.0
    %2778 = vmatmul.mubr.f32.gmra.mxu0 %v2542
    %v2779 = vpop.f32.mrf.mxu0
    %v2780 = vadd.f32 %v2395, %v2779
    %v2781 = vpop.f32.mrf.mxu0
    %2782 = vmatprep.mubr.f32.mxu0 0.0
    %2783 = vmatmul.mubr.f32.gmra.mxu0 %v2545
    %v2784 = vpop.f32.mrf.mxu0
    %v2785 = vadd.f32 %v2400, %v2784
    %v2786 = vpop.f32.mrf.mxu0
    %2787 = vmatprep.mubr.f32.mxu0 0.0
    %2788 = vmatmul.mubr.f32.gmra.mxu0 %v2548
    %v2789 = vpop.f32.mrf.mxu0
    %v2790 = vadd.f32 %v2405, %v2789
    %v2791 = vpop.f32.mrf.mxu0
    %2792 = vmatprep.mubr.f32.mxu0 0.0
    %2793 = vmatmul.mubr.f32.gmra.mxu0 %v2551
    %v2794 = vpop.f32.mrf.mxu0
    %v2795 = vadd.f32 %v2410, %v2794
    %v2796 = vpop.f32.mrf.mxu0
    %2797 = vmatprep.mubr.f32.mxu0 0.0
    %2798 = vmatmul.mubr.f32.gmra.mxu0 %v2554
    %v2799 = vpop.f32.mrf.mxu0
    %v2800 = vadd.f32 %v2415, %v2799
    %v2801 = vpop.f32.mrf.mxu0
    %2802 = vmatprep.mubr.f32.mxu0 0.0
    %2803 = vmatmul.mubr.f32.gmra.mxu0 %v2557
    %v2804 = vpop.f32.mrf.mxu0
    %v2805 = vadd.f32 %v2420, %v2804
    %v2806 = vpop.f32.mrf.mxu0
    %2807 = vmatprep.mubr.f32.mxu0 0.0
    %2808 = vmatmul.mubr.f32.gmra.mxu0 %v2560
    %v2809 = vpop.f32.mrf.mxu0
    %v2810 = vadd.f32 %v2425, %v2809
    %v2811 = vpop.f32.mrf.mxu0
    %2812 = vmatprep.mubr.f32.mxu0 0.0
    %2813 = vmatmul.mubr.f32.gmra.mxu0 %v2563
    %v2814 = vpop.f32.mrf.mxu0
    %v2815 = vadd.f32 %v2430, %v2814
    %v2816 = vpop.f32.mrf.mxu0
    %2817 = vmatprep.mubr.f32.mxu0 0.0
    %2818 = vmatmul.mubr.f32.gmra.mxu0 %v2566
    %v2819 = vpop.f32.mrf.mxu0
    %v2820 = vadd.f32 %v2435, %v2819
    %v2821 = vpop.f32.mrf.mxu0
    %2822 = vmatprep.mubr.f32.mxu0 0.0
    %2823 = vmatmul.mubr.f32.gmra.mxu0 %v2569
    %v2824 = vpop.f32.mrf.mxu0
    %v2825 = vadd.f32 %v2440, %v2824
    %v2826 = vpop.f32.mrf.mxu0
    %2827 = vmatprep.mubr.f32.mxu0 0.0
    %2828 = vmatmul.mubr.f32.gmra.mxu0 %v2572
    %v2829 = vpop.f32.mrf.mxu0
    %v2830 = vadd.f32 %v2445, %v2829
    %v2831 = vpop.f32.mrf.mxu0
    %2832 = vmatprep.mubr.f32.mxu0 0.0
    %2833 = vmatmul.mubr.f32.gmra.mxu0 %v2575
    %v2834 = vpop.f32.mrf.mxu0
    %v2835 = vadd.f32 %v2450, %v2834
    %v2836 = vpop.f32.mrf.mxu0
    %2837 = vmatprep.mubr.f32.mxu0 0.0
    %2838 = vmatmul.mubr.f32.gmra.mxu0 %v2578
    %v2839 = vpop.f32.mrf.mxu0
    %v2840 = vadd.f32 %v2455, %v2839
    %v2841 = vpop.f32.mrf.mxu0
    %2842 = vmatprep.mubr.f32.mxu0 0.0
    %2843 = vmatmul.mubr.f32.gmra.mxu0 %v2581
    %v2844 = vpop.f32.mrf.mxu0
    %v2845 = vadd.f32 %v2460, %v2844
    %v2846 = vpop.f32.mrf.mxu0
    %2847 = vdwg.mxu0
    %v2848 = vld [vmem:[#allocation3 + $0x9] sm:$0xff]
    %v2849 = vld [vmem:[#allocation3 + $0x11] sm:$0xff]
    %v2850 = vld [vmem:[#allocation3 + $0x19] sm:$0xff]
    %v2851 = vld [vmem:[#allocation3 + $0x21] sm:$0xff]
    %v2852 = vld [vmem:[#allocation3 + $0x29] sm:$0xff]
    %v2853 = vld [vmem:[#allocation3 + $0x31] sm:$0xff]
    %v2854 = vld [vmem:[#allocation3 + $0x39] sm:$0xff]
    %v2855 = vld [vmem:[#allocation3 + $0x41] sm:$0xff]
    %v2856 = vld [vmem:[#allocation3 + $0x49] sm:$0xff]
    %v2857 = vld [vmem:[#allocation3 + $0x51] sm:$0xff]
    %v2858 = vld [vmem:[#allocation3 + $0x59] sm:$0xff]
    %v2859 = vld [vmem:[#allocation3 + $0x61] sm:$0xff]
    %v2860 = vld [vmem:[#allocation3 + $0x69] sm:$0xff]
    %v2861 = vld [vmem:[#allocation3 + $0x71] sm:$0xff]
    %v2862 = vld [vmem:[#allocation3 + $0x79] sm:$0xff]
    %v2863 = vld [vmem:[#allocation3 + $0x81] sm:$0xff]
    %v2864 = vld [vmem:[#allocation3 + $0x89] sm:$0xff]
    %v2865 = vld [vmem:[#allocation3 + $0x91] sm:$0xff]
    %v2866 = vld [vmem:[#allocation3 + $0x99] sm:$0xff]
    %v2867 = vld [vmem:[#allocation3 + $0xa1] sm:$0xff]
    %v2868 = vld [vmem:[#allocation3 + $0xa9] sm:$0xff]
    %v2869 = vld [vmem:[#allocation3 + $0xb1] sm:$0xff]
    %v2870 = vld [vmem:[#allocation3 + $0xb9] sm:$0xff]
    %v2871 = vld [vmem:[#allocation3 + $0xc1] sm:$0xff]
    %v2872 = vld [vmem:[#allocation3 + $0xc9] sm:$0xff]
    %v2873 = vld [vmem:[#allocation3 + $0xd1] sm:$0xff]
    %v2874 = vld [vmem:[#allocation3 + $0xd9] sm:$0xff]
    %v2875 = vld [vmem:[#allocation3 + $0xe1] sm:$0xff]
    %v2876 = vld [vmem:[#allocation3 + $0xe9] sm:$0xff]
    %v2877 = vld [vmem:[#allocation3 + $0xf1] sm:$0xff]
    %v2878 = vld [vmem:[#allocation3 + $0xf9] sm:$0xff]
    %v2879 = vld [vmem:[#allocation3 + $0x101] sm:$0xff]
    %v2880 = vld [vmem:[#allocation3 + $0x109] sm:$0xff]
    %v2881 = vld [vmem:[#allocation3 + $0x111] sm:$0xff]
    %v2882 = vld [vmem:[#allocation3 + $0x119] sm:$0xff]
    %v2883 = vld [vmem:[#allocation3 + $0x121] sm:$0xff]
    %v2884 = vld [vmem:[#allocation3 + $0x129] sm:$0xff]
    %v2885 = vld [vmem:[#allocation3 + $0x131] sm:$0xff]
    %v2886 = vld [vmem:[#allocation3 + $0x139] sm:$0xff]
    %v2887 = vld [vmem:[#allocation3 + $0x141] sm:$0xff]
    %s2888 = scalar_lea.vmem %s6, 64
    %v2889 = vld [vmem:[%s2888] sm:$0xff]
    %v2890 = vld [vmem:[%s2888 + $0x8] sm:$0xff]
    %v2891 = vld [vmem:[%s2888 + $0x10] sm:$0xff]
    %v2892 = vld [vmem:[%s2888 + $0x18] sm:$0xff]
    %v2894 = vsel %vm169, %v2848, 0
    %v2897 = vsel %vm169, %v2849, 0
    %v2900 = vsel %vm169, %v2850, 0
    %v2903 = vsel %vm169, %v2851, 0
    %v2906 = vsel %vm169, %v2852, 0
    %v2909 = vsel %vm169, %v2853, 0
    %v2912 = vsel %vm169, %v2854, 0
    %v2915 = vsel %vm169, %v2855, 0
    %v2918 = vsel %vm169, %v2856, 0
    %v2921 = vsel %vm169, %v2857, 0
    %v2924 = vsel %vm169, %v2858, 0
    %v2927 = vsel %vm169, %v2859, 0
    %v2930 = vsel %vm169, %v2860, 0
    %v2933 = vsel %vm169, %v2861, 0
    %v2936 = vsel %vm169, %v2862, 0
    %v2939 = vsel %vm169, %v2863, 0
    %v2942 = vsel %vm169, %v2864, 0
    %v2945 = vsel %vm169, %v2865, 0
    %v2948 = vsel %vm169, %v2866, 0
    %v2951 = vsel %vm169, %v2867, 0
    %v2954 = vsel %vm169, %v2868, 0
    %v2957 = vsel %vm169, %v2869, 0
    %v2960 = vsel %vm169, %v2870, 0
    %v2963 = vsel %vm169, %v2871, 0
    %v2966 = vsel %vm169, %v2872, 0
    %v2969 = vsel %vm169, %v2873, 0
    %v2972 = vsel %vm169, %v2874, 0
    %v2975 = vsel %vm169, %v2875, 0
    %v2978 = vsel %vm169, %v2876, 0
    %v2981 = vsel %vm169, %v2877, 0
    %v2984 = vsel %vm169, %v2878, 0
    %v2987 = vsel %vm169, %v2879, 0
    %v2990 = vsel %vm169, %v2880, 0
    %v2993 = vsel %vm169, %v2881, 0
    %v2996 = vsel %vm169, %v2882, 0
    %v2999 = vsel %vm169, %v2883, 0
    %v3002 = vsel %vm169, %v2884, 0
    %v3005 = vsel %vm169, %v2885, 0
    %v3008 = vsel %vm169, %v2886, 0
    %v3011 = vsel %vm169, %v2887, 0
    %3013 = vmatprep.subr.mxu0 0.0
    %3014 = vmatpush1.msra.mxu0 0.0
    %3015 = vmatprep.subr.mxu0 0.0
    %3016 = vmatpush1.msra.mxu0 0.0
    %3017 = vmatprep.subr.mxu0 0.0
    %3018 = vmatpush1.msra.mxu0 0.0
    %3019 = vmatprep.subr.mxu0 0.0
    %3020 = vmatpush1.msra.mxu0 0.0
    %3021 = vmatprep.subr.mxu0 0.0
    %3022 = vmatpush1.msra.mxu0 0.0
    %3023 = vmatprep.subr.mxu0 0.0
    %3024 = vmatpush1.msra.mxu0 0.0
    %3025 = vmatprep.subr.mxu0 0.0
    %3026 = vmatpush1.msra.mxu0 0.0
    %3027 = vmatprep.subr.mxu0 0.0
    %3028 = vmatpush1.msra.mxu0 0.0
    %3029 = vmatprep.subr.mxu0 0.0
    %3030 = vmatpush1.msra.mxu0 0.0
    %3031 = vmatprep.subr.mxu0 0.0
    %3032 = vmatpush1.msra.mxu0 0.0
    %3033 = vmatprep.subr.mxu0 0.0
    %3034 = vmatpush1.msra.mxu0 0.0
    %3035 = vmatprep.subr.mxu0 0.0
    %3036 = vmatpush1.msra.mxu0 0.0
    %3037 = vmatprep.subr.mxu0 0.0
    %3038 = vmatpush1.msra.mxu0 %v2892
    %3039 = vmatprep.subr.mxu0 0.0
    %3040 = vmatpush1.msra.mxu0 %v2891
    %3041 = vmatprep.subr.mxu0 0.0
    %3042 = vmatpush1.msra.mxu0 %v2890
    %3043 = vmatprep.subr.mxu0 0.0
    %3044 = vmatpush1.msra.mxu0 %v2889
    %3045 = vmatprep.subr.mxu0 0.0
    %3046 = vmatpush2.msra.mxu0 0.0
    %3047 = vmatprep.subr.mxu0 0.0
    %3048 = vmatpush2.msra.mxu0 0.0
    %3049 = vmatprep.subr.mxu0 0.0
    %3050 = vmatpush2.msra.mxu0 0.0
    %3051 = vmatprep.subr.mxu0 0.0
    %3052 = vmatpush2.msra.mxu0 0.0
    %3053 = vmatprep.subr.mxu0 0.0
    %3054 = vmatpush2.msra.mxu0 0.0
    %3055 = vmatprep.subr.mxu0 0.0
    %3056 = vmatpush2.msra.mxu0 0.0
    %3057 = vmatprep.subr.mxu0 0.0
    %3058 = vmatpush2.msra.mxu0 0.0
    %3059 = vmatprep.subr.mxu0 0.0
    %3060 = vmatpush2.msra.mxu0 0.0
    %3061 = vmatprep.subr.mxu0 0.0
    %3062 = vmatpush2.msra.mxu0 0.0
    %3063 = vmatprep.subr.mxu0 0.0
    %3064 = vmatpush2.msra.mxu0 0.0
    %3065 = vmatprep.subr.mxu0 0.0
    %3066 = vmatpush2.msra.mxu0 0.0
    %3067 = vmatprep.subr.mxu0 0.0
    %3068 = vmatpush2.msra.mxu0 0.0
    %3069 = vmatprep.subr.mxu0 0.0
    %3070 = vmatpush2.msra.mxu0 0.0
    %3071 = vmatprep.subr.mxu0 0.0
    %3072 = vmatpush2.msra.mxu0 0.0
    %3073 = vmatprep.subr.mxu0 0.0
    %3074 = vmatpush2.msra.mxu0 0.0
    %3075 = vmatprep.subr.mxu0 0.0
    %3076 = vmatpush2.msra.mxu0 0.0
    %3077 = vmatprep.mubr.f32.mxu0 0.0
    %3078 = vmatmul.mubr.f32.gmra.mxu0 %v2894
    %v3079 = vpop.f32.mrf.mxu0
    %v3080 = vadd.f32 0.0, %v3079
    %v3081 = vpop.f32.mrf.mxu0
    %3082 = vmatprep.mubr.f32.mxu0 0.0
    %3083 = vmatmul.mubr.f32.gmra.mxu0 %v2897
    %v3084 = vpop.f32.mrf.mxu0
    %v3085 = vadd.f32 0.0, %v3084
    %v3086 = vpop.f32.mrf.mxu0
    %3087 = vmatprep.mubr.f32.mxu0 0.0
    %3088 = vmatmul.mubr.f32.gmra.mxu0 %v2900
    %v3089 = vpop.f32.mrf.mxu0
    %v3090 = vadd.f32 0.0, %v3089
    %v3091 = vpop.f32.mrf.mxu0
    %3092 = vmatprep.mubr.f32.mxu0 0.0
    %3093 = vmatmul.mubr.f32.gmra.mxu0 %v2903
    %v3094 = vpop.f32.mrf.mxu0
    %v3095 = vadd.f32 0.0, %v3094
    %v3096 = vpop.f32.mrf.mxu0
    %3097 = vmatprep.mubr.f32.mxu0 0.0
    %3098 = vmatmul.mubr.f32.gmra.mxu0 %v2906
    %v3099 = vpop.f32.mrf.mxu0
    %v3100 = vadd.f32 0.0, %v3099
    %v3101 = vpop.f32.mrf.mxu0
    %3102 = vmatprep.mubr.f32.mxu0 0.0
    %3103 = vmatmul.mubr.f32.gmra.mxu0 %v2909
    %v3104 = vpop.f32.mrf.mxu0
    %v3105 = vadd.f32 0.0, %v3104
    %v3106 = vpop.f32.mrf.mxu0
    %3107 = vmatprep.mubr.f32.mxu0 0.0
    %3108 = vmatmul.mubr.f32.gmra.mxu0 %v2912
    %v3109 = vpop.f32.mrf.mxu0
    %v3110 = vadd.f32 0.0, %v3109
    %v3111 = vpop.f32.mrf.mxu0
    %3112 = vmatprep.mubr.f32.mxu0 0.0
    %3113 = vmatmul.mubr.f32.gmra.mxu0 %v2915
    %v3114 = vpop.f32.mrf.mxu0
    %v3115 = vadd.f32 0.0, %v3114
    %v3116 = vpop.f32.mrf.mxu0
    %3117 = vmatprep.mubr.f32.mxu0 0.0
    %3118 = vmatmul.mubr.f32.gmra.mxu0 %v2918
    %v3119 = vpop.f32.mrf.mxu0
    %v3120 = vadd.f32 0.0, %v3119
    %v3121 = vpop.f32.mrf.mxu0
    %3122 = vmatprep.mubr.f32.mxu0 0.0
    %3123 = vmatmul.mubr.f32.gmra.mxu0 %v2921
    %v3124 = vpop.f32.mrf.mxu0
    %v3125 = vadd.f32 0.0, %v3124
    %v3126 = vpop.f32.mrf.mxu0
    %3127 = vmatprep.mubr.f32.mxu0 0.0
    %3128 = vmatmul.mubr.f32.gmra.mxu0 %v2924
    %v3129 = vpop.f32.mrf.mxu0
    %v3130 = vadd.f32 0.0, %v3129
    %v3131 = vpop.f32.mrf.mxu0
    %3132 = vmatprep.mubr.f32.mxu0 0.0
    %3133 = vmatmul.mubr.f32.gmra.mxu0 %v2927
    %v3134 = vpop.f32.mrf.mxu0
    %v3135 = vadd.f32 0.0, %v3134
    %v3136 = vpop.f32.mrf.mxu0
    %3137 = vmatprep.mubr.f32.mxu0 0.0
    %3138 = vmatmul.mubr.f32.gmra.mxu0 %v2930
    %v3139 = vpop.f32.mrf.mxu0
    %v3140 = vadd.f32 0.0, %v3139
    %v3141 = vpop.f32.mrf.mxu0
    %3142 = vmatprep.mubr.f32.mxu0 0.0
    %3143 = vmatmul.mubr.f32.gmra.mxu0 %v2933
    %v3144 = vpop.f32.mrf.mxu0
    %v3145 = vadd.f32 0.0, %v3144
    %v3146 = vpop.f32.mrf.mxu0
    %3147 = vmatprep.mubr.f32.mxu0 0.0
    %3148 = vmatmul.mubr.f32.gmra.mxu0 %v2936
    %v3149 = vpop.f32.mrf.mxu0
    %v3150 = vadd.f32 0.0, %v3149
    %v3151 = vpop.f32.mrf.mxu0
    %3152 = vmatprep.mubr.f32.mxu0 0.0
    %3153 = vmatmul.mubr.f32.gmra.mxu0 %v2939
    %v3154 = vpop.f32.mrf.mxu0
    %v3155 = vadd.f32 0.0, %v3154
    %v3156 = vpop.f32.mrf.mxu0
    %3157 = vmatprep.mubr.f32.mxu0 0.0
    %3158 = vmatmul.mubr.f32.gmra.mxu0 %v2942
    %v3159 = vpop.f32.mrf.mxu0
    %v3160 = vadd.f32 0.0, %v3159
    %v3161 = vpop.f32.mrf.mxu0
    %3162 = vmatprep.mubr.f32.mxu0 0.0
    %3163 = vmatmul.mubr.f32.gmra.mxu0 %v2945
    %v3164 = vpop.f32.mrf.mxu0
    %v3165 = vadd.f32 0.0, %v3164
    %v3166 = vpop.f32.mrf.mxu0
    %3167 = vmatprep.mubr.f32.mxu0 0.0
    %3168 = vmatmul.mubr.f32.gmra.mxu0 %v2948
    %v3169 = vpop.f32.mrf.mxu0
    %v3170 = vadd.f32 0.0, %v3169
    %v3171 = vpop.f32.mrf.mxu0
    %3172 = vmatprep.mubr.f32.mxu0 0.0
    %3173 = vmatmul.mubr.f32.gmra.mxu0 %v2951
    %v3174 = vpop.f32.mrf.mxu0
    %v3175 = vadd.f32 0.0, %v3174
    %v3176 = vpop.f32.mrf.mxu0
    %3177 = vmatprep.mubr.f32.mxu0 0.0
    %3178 = vmatmul.mubr.f32.gmra.mxu0 %v2954
    %v3179 = vpop.f32.mrf.mxu0
    %v3180 = vadd.f32 0.0, %v3179
    %v3181 = vpop.f32.mrf.mxu0
    %3182 = vmatprep.mubr.f32.mxu0 0.0
    %3183 = vmatmul.mubr.f32.gmra.mxu0 %v2957
    %v3184 = vpop.f32.mrf.mxu0
    %v3185 = vadd.f32 0.0, %v3184
    %v3186 = vpop.f32.mrf.mxu0
    %3187 = vmatprep.mubr.f32.mxu0 0.0
    %3188 = vmatmul.mubr.f32.gmra.mxu0 %v2960
    %v3189 = vpop.f32.mrf.mxu0
    %v3190 = vadd.f32 0.0, %v3189
    %v3191 = vpop.f32.mrf.mxu0
    %3192 = vmatprep.mubr.f32.mxu0 0.0
    %3193 = vmatmul.mubr.f32.gmra.mxu0 %v2963
    %v3194 = vpop.f32.mrf.mxu0
    %v3195 = vadd.f32 0.0, %v3194
    %v3196 = vpop.f32.mrf.mxu0
    %3197 = vmatprep.mubr.f32.mxu0 0.0
    %3198 = vmatmul.mubr.f32.gmra.mxu0 %v2966
    %v3199 = vpop.f32.mrf.mxu0
    %v3200 = vadd.f32 0.0, %v3199
    %v3201 = vpop.f32.mrf.mxu0
    %3202 = vmatprep.mubr.f32.mxu0 0.0
    %3203 = vmatmul.mubr.f32.gmra.mxu0 %v2969
    %v3204 = vpop.f32.mrf.mxu0
    %v3205 = vadd.f32 0.0, %v3204
    %v3206 = vpop.f32.mrf.mxu0
    %3207 = vmatprep.mubr.f32.mxu0 0.0
    %3208 = vmatmul.mubr.f32.gmra.mxu0 %v2972
    %v3209 = vpop.f32.mrf.mxu0
    %v3210 = vadd.f32 0.0, %v3209
    %v3211 = vpop.f32.mrf.mxu0
    %3212 = vmatprep.mubr.f32.mxu0 0.0
    %3213 = vmatmul.mubr.f32.gmra.mxu0 %v2975
    %v3214 = vpop.f32.mrf.mxu0
    %v3215 = vadd.f32 0.0, %v3214
    %v3216 = vpop.f32.mrf.mxu0
    %3217 = vmatprep.mubr.f32.mxu0 0.0
    %3218 = vmatmul.mubr.f32.gmra.mxu0 %v2978
    %v3219 = vpop.f32.mrf.mxu0
    %v3220 = vadd.f32 0.0, %v3219
    %v3221 = vpop.f32.mrf.mxu0
    %3222 = vmatprep.mubr.f32.mxu0 0.0
    %3223 = vmatmul.mubr.f32.gmra.mxu0 %v2981
    %v3224 = vpop.f32.mrf.mxu0
    %v3225 = vadd.f32 0.0, %v3224
    %v3226 = vpop.f32.mrf.mxu0
    %3227 = vmatprep.mubr.f32.mxu0 0.0
    %3228 = vmatmul.mubr.f32.gmra.mxu0 %v2984
    %v3229 = vpop.f32.mrf.mxu0
    %v3230 = vadd.f32 0.0, %v3229
    %v3231 = vpop.f32.mrf.mxu0
    %3232 = vmatprep.mubr.f32.mxu0 0.0
    %3233 = vmatmul.mubr.f32.gmra.mxu0 %v2987
    %v3234 = vpop.f32.mrf.mxu0
    %v3235 = vadd.f32 0.0, %v3234
    %v3236 = vpop.f32.mrf.mxu0
    %3237 = vmatprep.mubr.f32.mxu0 0.0
    %3238 = vmatmul.mubr.f32.gmra.mxu0 %v2990
    %v3239 = vpop.f32.mrf.mxu0
    %v3240 = vadd.f32 0.0, %v3239
    %v3241 = vpop.f32.mrf.mxu0
    %3242 = vmatprep.mubr.f32.mxu0 0.0
    %3243 = vmatmul.mubr.f32.gmra.mxu0 %v2993
    %v3244 = vpop.f32.mrf.mxu0
    %v3245 = vadd.f32 0.0, %v3244
    %v3246 = vpop.f32.mrf.mxu0
    %3247 = vmatprep.mubr.f32.mxu0 0.0
    %3248 = vmatmul.mubr.f32.gmra.mxu0 %v2996
    %v3249 = vpop.f32.mrf.mxu0
    %v3250 = vadd.f32 0.0, %v3249
    %v3251 = vpop.f32.mrf.mxu0
    %3252 = vmatprep.mubr.f32.mxu0 0.0
    %3253 = vmatmul.mubr.f32.gmra.mxu0 %v2999
    %v3254 = vpop.f32.mrf.mxu0
    %v3255 = vadd.f32 0.0, %v3254
    %v3256 = vpop.f32.mrf.mxu0
    %3257 = vmatprep.mubr.f32.mxu0 0.0
    %3258 = vmatmul.mubr.f32.gmra.mxu0 %v3002
    %v3259 = vpop.f32.mrf.mxu0
    %v3260 = vadd.f32 0.0, %v3259
    %v3261 = vpop.f32.mrf.mxu0
    %3262 = vmatprep.mubr.f32.mxu0 0.0
    %3263 = vmatmul.mubr.f32.gmra.mxu0 %v3005
    %v3264 = vpop.f32.mrf.mxu0
    %v3265 = vadd.f32 0.0, %v3264
    %v3266 = vpop.f32.mrf.mxu0
    %3267 = vmatprep.mubr.f32.mxu0 0.0
    %3268 = vmatmul.mubr.f32.gmra.mxu0 %v3008
    %v3269 = vpop.f32.mrf.mxu0
    %v3270 = vadd.f32 0.0, %v3269
    %v3271 = vpop.f32.mrf.mxu0
    %3272 = vmatprep.mubr.f32.mxu0 0.0
    %3273 = vmatmul.mubr.f32.gmra.mxu0 %v3011
    %v3274 = vpop.f32.mrf.mxu0
    %v3275 = vadd.f32 0.0, %v3274
    %v3276 = vpop.f32.mrf.mxu0
    %3277 = vdwg.mxu0
    %v3278 = vadd.f32 %v2650, %v3080
    %v3279 = vadd.f32 %v2655, %v3085
    %v3280 = vadd.f32 %v2660, %v3090
    %v3281 = vadd.f32 %v2665, %v3095
    %v3282 = vadd.f32 %v2670, %v3100
    %v3283 = vadd.f32 %v2675, %v3105
    %v3284 = vadd.f32 %v2680, %v3110
    %v3285 = vadd.f32 %v2685, %v3115
    %v3286 = vadd.f32 %v2690, %v3120
    %v3287 = vadd.f32 %v2695, %v3125
    %v3288 = vadd.f32 %v2700, %v3130
    %v3289 = vadd.f32 %v2705, %v3135
    %v3290 = vadd.f32 %v2710, %v3140
    %v3291 = vadd.f32 %v2715, %v3145
    %v3292 = vadd.f32 %v2720, %v3150
    %v3293 = vadd.f32 %v2725, %v3155
    %v3294 = vadd.f32 %v2730, %v3160
    %v3295 = vadd.f32 %v2735, %v3165
    %v3296 = vadd.f32 %v2740, %v3170
    %v3297 = vadd.f32 %v2745, %v3175
    %v3298 = vadd.f32 %v2750, %v3180
    %v3299 = vadd.f32 %v2755, %v3185
    %v3300 = vadd.f32 %v2760, %v3190
    %v3301 = vadd.f32 %v2765, %v3195
    %v3302 = vadd.f32 %v2770, %v3200
    %v3303 = vadd.f32 %v2775, %v3205
    %v3304 = vadd.f32 %v2780, %v3210
    %v3305 = vadd.f32 %v2785, %v3215
    %v3306 = vadd.f32 %v2790, %v3220
    %v3307 = vadd.f32 %v2795, %v3225
    %v3308 = vadd.f32 %v2800, %v3230
    %v3309 = vadd.f32 %v2805, %v3235
    %v3310 = vadd.f32 %v2810, %v3240
    %v3311 = vadd.f32 %v2815, %v3245
    %v3312 = vadd.f32 %v2820, %v3250
    %v3313 = vadd.f32 %v2825, %v3255
    %v3314 = vadd.f32 %v2830, %v3260
    %v3315 = vadd.f32 %v2835, %v3265
    %v3316 = vadd.f32 %v2840, %v3270
    %v3317 = vadd.f32 %v2845, %v3275
    %v3318 = vld [vmem:[#allocation3 + $0x17] sm:$0xff]
    %v3319 = vld [vmem:[#allocation3 + $0x1f] sm:$0xff]
    %v3320 = vld [vmem:[#allocation3 + $0x27] sm:$0xff]
    %v3321 = vld [vmem:[#allocation3 + $0x2f] sm:$0xff]
    %v3322 = vld [vmem:[#allocation3 + $0x37] sm:$0xff]
    %v3323 = vld [vmem:[#allocation3 + $0x3f] sm:$0xff]
    %v3324 = vld [vmem:[#allocation3 + $0x47] sm:$0xff]
    %v3325 = vld [vmem:[#allocation3 + $0x4f] sm:$0xff]
    %v3326 = vld [vmem:[#allocation3 + $0x57] sm:$0xff]
    %v3327 = vld [vmem:[#allocation3 + $0x5f] sm:$0xff]
    %v3328 = vld [vmem:[#allocation3 + $0x67] sm:$0xff]
    %v3329 = vld [vmem:[#allocation3 + $0x6f] sm:$0xff]
    %v3330 = vld [vmem:[#allocation3 + $0x77] sm:$0xff]
    %v3331 = vld [vmem:[#allocation3 + $0x7f] sm:$0xff]
    %v3332 = vld [vmem:[#allocation3 + $0x87] sm:$0xff]
    %v3333 = vld [vmem:[#allocation3 + $0x8f] sm:$0xff]
    %v3334 = vld [vmem:[#allocation3 + $0x97] sm:$0xff]
    %v3335 = vld [vmem:[#allocation3 + $0x9f] sm:$0xff]
    %v3336 = vld [vmem:[#allocation3 + $0xa7] sm:$0xff]
    %v3337 = vld [vmem:[#allocation3 + $0xaf] sm:$0xff]
    %v3338 = vld [vmem:[#allocation3 + $0xb7] sm:$0xff]
    %v3339 = vld [vmem:[#allocation3 + $0xbf] sm:$0xff]
    %v3340 = vld [vmem:[#allocation3 + $0xc7] sm:$0xff]
    %v3341 = vld [vmem:[#allocation3 + $0xcf] sm:$0xff]
    %v3342 = vld [vmem:[#allocation3 + $0xd7] sm:$0xff]
    %v3343 = vld [vmem:[#allocation3 + $0xdf] sm:$0xff]
    %v3344 = vld [vmem:[#allocation3 + $0xe7] sm:$0xff]
    %v3345 = vld [vmem:[#allocation3 + $0xef] sm:$0xff]
    %v3346 = vld [vmem:[#allocation3 + $0xf7] sm:$0xff]
    %v3347 = vld [vmem:[#allocation3 + $0xff] sm:$0xff]
    %v3348 = vld [vmem:[#allocation3 + $0x107] sm:$0xff]
    %v3349 = vld [vmem:[#allocation3 + $0x10f] sm:$0xff]
    %v3350 = vld [vmem:[#allocation3 + $0x117] sm:$0xff]
    %v3351 = vld [vmem:[#allocation3 + $0x11f] sm:$0xff]
    %v3352 = vld [vmem:[#allocation3 + $0x127] sm:$0xff]
    %v3353 = vld [vmem:[#allocation3 + $0x12f] sm:$0xff]
    %v3354 = vld [vmem:[#allocation3 + $0x137] sm:$0xff]
    %v3355 = vld [vmem:[#allocation3 + $0x13f] sm:$0xff]
    %v3356 = vld [vmem:[#allocation3 + $0x147] sm:$0xff]
    %v3357 = vld [vmem:[#allocation3 + $0x14f] sm:$0xff]
    %s3358 = scalar_lea.vmem %s6, 96
    %v3359 = vld [vmem:[%s3358] sm:$0xff]
    %v3360 = vld [vmem:[%s3358 + $0x8] sm:$0xff]
    %v3361 = vld [vmem:[%s3358 + $0x10] sm:$0xff]
    %v3362 = vld [vmem:[%s3358 + $0x18] sm:$0xff]
    %v3364 = vsel %vm169, %v3318, 0
    %v3367 = vsel %vm169, %v3319, 0
    %v3370 = vsel %vm169, %v3320, 0
    %v3373 = vsel %vm169, %v3321, 0
    %v3376 = vsel %vm169, %v3322, 0
    %v3379 = vsel %vm169, %v3323, 0
    %v3382 = vsel %vm169, %v3324, 0
    %v3385 = vsel %vm169, %v3325, 0
    %v3388 = vsel %vm169, %v3326, 0
    %v3391 = vsel %vm169, %v3327, 0
    %v3394 = vsel %vm169, %v3328, 0
    %v3397 = vsel %vm169, %v3329, 0
    %v3400 = vsel %vm169, %v3330, 0
    %v3403 = vsel %vm169, %v3331, 0
    %v3406 = vsel %vm169, %v3332, 0
    %v3409 = vsel %vm169, %v3333, 0
    %v3412 = vsel %vm169, %v3334, 0
    %v3415 = vsel %vm169, %v3335, 0
    %v3418 = vsel %vm169, %v3336, 0
    %v3421 = vsel %vm169, %v3337, 0
    %v3424 = vsel %vm169, %v3338, 0
    %v3427 = vsel %vm169, %v3339, 0
    %v3430 = vsel %vm169, %v3340, 0
    %v3433 = vsel %vm169, %v3341, 0
    %v3436 = vsel %vm169, %v3342, 0
    %v3439 = vsel %vm169, %v3343, 0
    %v3442 = vsel %vm169, %v3344, 0
    %v3445 = vsel %vm169, %v3345, 0
    %v3448 = vsel %vm169, %v3346, 0
    %v3451 = vsel %vm169, %v3347, 0
    %v3454 = vsel %vm169, %v3348, 0
    %v3457 = vsel %vm169, %v3349, 0
    %v3460 = vsel %vm169, %v3350, 0
    %v3463 = vsel %vm169, %v3351, 0
    %v3466 = vsel %vm169, %v3352, 0
    %v3469 = vsel %vm169, %v3353, 0
    %v3472 = vsel %vm169, %v3354, 0
    %v3475 = vsel %vm169, %v3355, 0
    %v3478 = vsel %vm169, %v3356, 0
    %v3481 = vsel %vm169, %v3357, 0
    %3483 = vmatprep.subr.mxu0 0.0
    %3484 = vmatpush1.msra.mxu0 0.0
    %3485 = vmatprep.subr.mxu0 0.0
    %3486 = vmatpush1.msra.mxu0 0.0
    %3487 = vmatprep.subr.mxu0 0.0
    %3488 = vmatpush1.msra.mxu0 0.0
    %3489 = vmatprep.subr.mxu0 0.0
    %3490 = vmatpush1.msra.mxu0 0.0
    %3491 = vmatprep.subr.mxu0 0.0
    %3492 = vmatpush1.msra.mxu0 0.0
    %3493 = vmatprep.subr.mxu0 0.0
    %3494 = vmatpush1.msra.mxu0 0.0
    %3495 = vmatprep.subr.mxu0 0.0
    %3496 = vmatpush1.msra.mxu0 0.0
    %3497 = vmatprep.subr.mxu0 0.0
    %3498 = vmatpush1.msra.mxu0 0.0
    %3499 = vmatprep.subr.mxu0 0.0
    %3500 = vmatpush1.msra.mxu0 0.0
    %3501 = vmatprep.subr.mxu0 0.0
    %3502 = vmatpush1.msra.mxu0 0.0
    %3503 = vmatprep.subr.mxu0 0.0
    %3504 = vmatpush1.msra.mxu0 0.0
    %3505 = vmatprep.subr.mxu0 0.0
    %3506 = vmatpush1.msra.mxu0 0.0
    %3507 = vmatprep.subr.mxu0 0.0
    %3508 = vmatpush1.msra.mxu0 %v3362
    %3509 = vmatprep.subr.mxu0 0.0
    %3510 = vmatpush1.msra.mxu0 %v3361
    %3511 = vmatprep.subr.mxu0 0.0
    %3512 = vmatpush1.msra.mxu0 %v3360
    %3513 = vmatprep.subr.mxu0 0.0
    %3514 = vmatpush1.msra.mxu0 %v3359
    %3515 = vmatprep.subr.mxu0 0.0
    %3516 = vmatpush2.msra.mxu0 0.0
    %3517 = vmatprep.subr.mxu0 0.0
    %3518 = vmatpush2.msra.mxu0 0.0
    %3519 = vmatprep.subr.mxu0 0.0
    %3520 = vmatpush2.msra.mxu0 0.0
    %3521 = vmatprep.subr.mxu0 0.0
    %3522 = vmatpush2.msra.mxu0 0.0
    %3523 = vmatprep.subr.mxu0 0.0
    %3524 = vmatpush2.msra.mxu0 0.0
    %3525 = vmatprep.subr.mxu0 0.0
    %3526 = vmatpush2.msra.mxu0 0.0
    %3527 = vmatprep.subr.mxu0 0.0
    %3528 = vmatpush2.msra.mxu0 0.0
    %3529 = vmatprep.subr.mxu0 0.0
    %3530 = vmatpush2.msra.mxu0 0.0
    %3531 = vmatprep.subr.mxu0 0.0
    %3532 = vmatpush2.msra.mxu0 0.0
    %3533 = vmatprep.subr.mxu0 0.0
    %3534 = vmatpush2.msra.mxu0 0.0
    %3535 = vmatprep.subr.mxu0 0.0
    %3536 = vmatpush2.msra.mxu0 0.0
    %3537 = vmatprep.subr.mxu0 0.0
    %3538 = vmatpush2.msra.mxu0 0.0
    %3539 = vmatprep.subr.mxu0 0.0
    %3540 = vmatpush2.msra.mxu0 0.0
    %3541 = vmatprep.subr.mxu0 0.0
    %3542 = vmatpush2.msra.mxu0 0.0
    %3543 = vmatprep.subr.mxu0 0.0
    %3544 = vmatpush2.msra.mxu0 0.0
    %3545 = vmatprep.subr.mxu0 0.0
    %3546 = vmatpush2.msra.mxu0 0.0
    %3547 = vmatprep.mubr.f32.mxu0 0.0
    %3548 = vmatmul.mubr.f32.gmra.mxu0 %v3364
    %v3549 = vpop.f32.mrf.mxu0
    %v3550 = vadd.f32 0.0, %v3549
    %v3551 = vpop.f32.mrf.mxu0
    %3552 = vmatprep.mubr.f32.mxu0 0.0
    %3553 = vmatmul.mubr.f32.gmra.mxu0 %v3367
    %v3554 = vpop.f32.mrf.mxu0
    %v3555 = vadd.f32 0.0, %v3554
    %v3556 = vpop.f32.mrf.mxu0
    %3557 = vmatprep.mubr.f32.mxu0 0.0
    %3558 = vmatmul.mubr.f32.gmra.mxu0 %v3370
    %v3559 = vpop.f32.mrf.mxu0
    %v3560 = vadd.f32 0.0, %v3559
    %v3561 = vpop.f32.mrf.mxu0
    %3562 = vmatprep.mubr.f32.mxu0 0.0
    %3563 = vmatmul.mubr.f32.gmra.mxu0 %v3373
    %v3564 = vpop.f32.mrf.mxu0
    %v3565 = vadd.f32 0.0, %v3564
    %v3566 = vpop.f32.mrf.mxu0
    %3567 = vmatprep.mubr.f32.mxu0 0.0
    %3568 = vmatmul.mubr.f32.gmra.mxu0 %v3376
    %v3569 = vpop.f32.mrf.mxu0
    %v3570 = vadd.f32 0.0, %v3569
    %v3571 = vpop.f32.mrf.mxu0
    %3572 = vmatprep.mubr.f32.mxu0 0.0
    %3573 = vmatmul.mubr.f32.gmra.mxu0 %v3379
    %v3574 = vpop.f32.mrf.mxu0
    %v3575 = vadd.f32 0.0, %v3574
    %v3576 = vpop.f32.mrf.mxu0
    %3577 = vmatprep.mubr.f32.mxu0 0.0
    %3578 = vmatmul.mubr.f32.gmra.mxu0 %v3382
    %v3579 = vpop.f32.mrf.mxu0
    %v3580 = vadd.f32 0.0, %v3579
    %v3581 = vpop.f32.mrf.mxu0
    %3582 = vmatprep.mubr.f32.mxu0 0.0
    %3583 = vmatmul.mubr.f32.gmra.mxu0 %v3385
    %v3584 = vpop.f32.mrf.mxu0
    %v3585 = vadd.f32 0.0, %v3584
    %v3586 = vpop.f32.mrf.mxu0
    %3587 = vmatprep.mubr.f32.mxu0 0.0
    %3588 = vmatmul.mubr.f32.gmra.mxu0 %v3388
    %v3589 = vpop.f32.mrf.mxu0
    %v3590 = vadd.f32 0.0, %v3589
    %v3591 = vpop.f32.mrf.mxu0
    %3592 = vmatprep.mubr.f32.mxu0 0.0
    %3593 = vmatmul.mubr.f32.gmra.mxu0 %v3391
    %v3594 = vpop.f32.mrf.mxu0
    %v3595 = vadd.f32 0.0, %v3594
    %v3596 = vpop.f32.mrf.mxu0
    %3597 = vmatprep.mubr.f32.mxu0 0.0
    %3598 = vmatmul.mubr.f32.gmra.mxu0 %v3394
    %v3599 = vpop.f32.mrf.mxu0
    %v3600 = vadd.f32 0.0, %v3599
    %v3601 = vpop.f32.mrf.mxu0
    %3602 = vmatprep.mubr.f32.mxu0 0.0
    %3603 = vmatmul.mubr.f32.gmra.mxu0 %v3397
    %v3604 = vpop.f32.mrf.mxu0
    %v3605 = vadd.f32 0.0, %v3604
    %v3606 = vpop.f32.mrf.mxu0
    %3607 = vmatprep.mubr.f32.mxu0 0.0
    %3608 = vmatmul.mubr.f32.gmra.mxu0 %v3400
    %v3609 = vpop.f32.mrf.mxu0
    %v3610 = vadd.f32 0.0, %v3609
    %v3611 = vpop.f32.mrf.mxu0
    %3612 = vmatprep.mubr.f32.mxu0 0.0
    %3613 = vmatmul.mubr.f32.gmra.mxu0 %v3403
    %v3614 = vpop.f32.mrf.mxu0
    %v3615 = vadd.f32 0.0, %v3614
    %v3616 = vpop.f32.mrf.mxu0
    %3617 = vmatprep.mubr.f32.mxu0 0.0
    %3618 = vmatmul.mubr.f32.gmra.mxu0 %v3406
    %v3619 = vpop.f32.mrf.mxu0
    %v3620 = vadd.f32 0.0, %v3619
    %v3621 = vpop.f32.mrf.mxu0
    %3622 = vmatprep.mubr.f32.mxu0 0.0
    %3623 = vmatmul.mubr.f32.gmra.mxu0 %v3409
    %v3624 = vpop.f32.mrf.mxu0
    %v3625 = vadd.f32 0.0, %v3624
    %v3626 = vpop.f32.mrf.mxu0
    %3627 = vmatprep.mubr.f32.mxu0 0.0
    %3628 = vmatmul.mubr.f32.gmra.mxu0 %v3412
    %v3629 = vpop.f32.mrf.mxu0
    %v3630 = vadd.f32 0.0, %v3629
    %v3631 = vpop.f32.mrf.mxu0
    %3632 = vmatprep.mubr.f32.mxu0 0.0
    %3633 = vmatmul.mubr.f32.gmra.mxu0 %v3415
    %v3634 = vpop.f32.mrf.mxu0
    %v3635 = vadd.f32 0.0, %v3634
    %v3636 = vpop.f32.mrf.mxu0
    %3637 = vmatprep.mubr.f32.mxu0 0.0
    %3638 = vmatmul.mubr.f32.gmra.mxu0 %v3418
    %v3639 = vpop.f32.mrf.mxu0
    %v3640 = vadd.f32 0.0, %v3639
    %v3641 = vpop.f32.mrf.mxu0
    %3642 = vmatprep.mubr.f32.mxu0 0.0
    %3643 = vmatmul.mubr.f32.gmra.mxu0 %v3421
    %v3644 = vpop.f32.mrf.mxu0
    %v3645 = vadd.f32 0.0, %v3644
    %v3646 = vpop.f32.mrf.mxu0
    %3647 = vmatprep.mubr.f32.mxu0 0.0
    %3648 = vmatmul.mubr.f32.gmra.mxu0 %v3424
    %v3649 = vpop.f32.mrf.mxu0
    %v3650 = vadd.f32 0.0, %v3649
    %v3651 = vpop.f32.mrf.mxu0
    %3652 = vmatprep.mubr.f32.mxu0 0.0
    %3653 = vmatmul.mubr.f32.gmra.mxu0 %v3427
    %v3654 = vpop.f32.mrf.mxu0
    %v3655 = vadd.f32 0.0, %v3654
    %v3656 = vpop.f32.mrf.mxu0
    %3657 = vmatprep.mubr.f32.mxu0 0.0
    %3658 = vmatmul.mubr.f32.gmra.mxu0 %v3430
    %v3659 = vpop.f32.mrf.mxu0
    %v3660 = vadd.f32 0.0, %v3659
    %v3661 = vpop.f32.mrf.mxu0
    %3662 = vmatprep.mubr.f32.mxu0 0.0
    %3663 = vmatmul.mubr.f32.gmra.mxu0 %v3433
    %v3664 = vpop.f32.mrf.mxu0
    %v3665 = vadd.f32 0.0, %v3664
    %v3666 = vpop.f32.mrf.mxu0
    %3667 = vmatprep.mubr.f32.mxu0 0.0
    %3668 = vmatmul.mubr.f32.gmra.mxu0 %v3436
    %v3669 = vpop.f32.mrf.mxu0
    %v3670 = vadd.f32 0.0, %v3669
    %v3671 = vpop.f32.mrf.mxu0
    %3672 = vmatprep.mubr.f32.mxu0 0.0
    %3673 = vmatmul.mubr.f32.gmra.mxu0 %v3439
    %v3674 = vpop.f32.mrf.mxu0
    %v3675 = vadd.f32 0.0, %v3674
    %v3676 = vpop.f32.mrf.mxu0
    %3677 = vmatprep.mubr.f32.mxu0 0.0
    %3678 = vmatmul.mubr.f32.gmra.mxu0 %v3442
    %v3679 = vpop.f32.mrf.mxu0
    %v3680 = vadd.f32 0.0, %v3679
    %v3681 = vpop.f32.mrf.mxu0
    %3682 = vmatprep.mubr.f32.mxu0 0.0
    %3683 = vmatmul.mubr.f32.gmra.mxu0 %v3445
    %v3684 = vpop.f32.mrf.mxu0
    %v3685 = vadd.f32 0.0, %v3684
    %v3686 = vpop.f32.mrf.mxu0
    %3687 = vmatprep.mubr.f32.mxu0 0.0
    %3688 = vmatmul.mubr.f32.gmra.mxu0 %v3448
    %v3689 = vpop.f32.mrf.mxu0
    %v3690 = vadd.f32 0.0, %v3689
    %v3691 = vpop.f32.mrf.mxu0
    %3692 = vmatprep.mubr.f32.mxu0 0.0
    %3693 = vmatmul.mubr.f32.gmra.mxu0 %v3451
    %v3694 = vpop.f32.mrf.mxu0
    %v3695 = vadd.f32 0.0, %v3694
    %v3696 = vpop.f32.mrf.mxu0
    %3697 = vmatprep.mubr.f32.mxu0 0.0
    %3698 = vmatmul.mubr.f32.gmra.mxu0 %v3454
    %v3699 = vpop.f32.mrf.mxu0
    %v3700 = vadd.f32 0.0, %v3699
    %v3701 = vpop.f32.mrf.mxu0
    %3702 = vmatprep.mubr.f32.mxu0 0.0
    %3703 = vmatmul.mubr.f32.gmra.mxu0 %v3457
    %v3704 = vpop.f32.mrf.mxu0
    %v3705 = vadd.f32 0.0, %v3704
    %v3706 = vpop.f32.mrf.mxu0
    %3707 = vmatprep.mubr.f32.mxu0 0.0
    %3708 = vmatmul.mubr.f32.gmra.mxu0 %v3460
    %v3709 = vpop.f32.mrf.mxu0
    %v3710 = vadd.f32 0.0, %v3709
    %v3711 = vpop.f32.mrf.mxu0
    %3712 = vmatprep.mubr.f32.mxu0 0.0
    %3713 = vmatmul.mubr.f32.gmra.mxu0 %v3463
    %v3714 = vpop.f32.mrf.mxu0
    %v3715 = vadd.f32 0.0, %v3714
    %v3716 = vpop.f32.mrf.mxu0
    %3717 = vmatprep.mubr.f32.mxu0 0.0
    %3718 = vmatmul.mubr.f32.gmra.mxu0 %v3466
    %v3719 = vpop.f32.mrf.mxu0
    %v3720 = vadd.f32 0.0, %v3719
    %v3721 = vpop.f32.mrf.mxu0
    %3722 = vmatprep.mubr.f32.mxu0 0.0
    %3723 = vmatmul.mubr.f32.gmra.mxu0 %v3469
    %v3724 = vpop.f32.mrf.mxu0
    %v3725 = vadd.f32 0.0, %v3724
    %v3726 = vpop.f32.mrf.mxu0
    %3727 = vmatprep.mubr.f32.mxu0 0.0
    %3728 = vmatmul.mubr.f32.gmra.mxu0 %v3472
    %v3729 = vpop.f32.mrf.mxu0
    %v3730 = vadd.f32 0.0, %v3729
    %v3731 = vpop.f32.mrf.mxu0
    %3732 = vmatprep.mubr.f32.mxu0 0.0
    %3733 = vmatmul.mubr.f32.gmra.mxu0 %v3475
    %v3734 = vpop.f32.mrf.mxu0
    %v3735 = vadd.f32 0.0, %v3734
    %v3736 = vpop.f32.mrf.mxu0
    %3737 = vmatprep.mubr.f32.mxu0 0.0
    %3738 = vmatmul.mubr.f32.gmra.mxu0 %v3478
    %v3739 = vpop.f32.mrf.mxu0
    %v3740 = vadd.f32 0.0, %v3739
    %v3741 = vpop.f32.mrf.mxu0
    %3742 = vmatprep.mubr.f32.mxu0 0.0
    %3743 = vmatmul.mubr.f32.gmra.mxu0 %v3481
    %v3744 = vpop.f32.mrf.mxu0
    %v3745 = vadd.f32 0.0, %v3744
    %v3746 = vpop.f32.mrf.mxu0
    %3747 = vdwg.mxu0
    %v3748 = vadd.f32 %v3278, %v3550
    %v3749 = vadd.f32 %v3279, %v3555
    %v3750 = vadd.f32 %v3280, %v3560
    %v3751 = vadd.f32 %v3281, %v3565
    %v3752 = vadd.f32 %v3282, %v3570
    %v3753 = vadd.f32 %v3283, %v3575
    %v3754 = vadd.f32 %v3284, %v3580
    %v3755 = vadd.f32 %v3285, %v3585
    %v3756 = vadd.f32 %v3286, %v3590
    %v3757 = vadd.f32 %v3287, %v3595
    %v3758 = vadd.f32 %v3288, %v3600
    %v3759 = vadd.f32 %v3289, %v3605
    %v3760 = vadd.f32 %v3290, %v3610
    %v3761 = vadd.f32 %v3291, %v3615
    %v3762 = vadd.f32 %v3292, %v3620
    %v3763 = vadd.f32 %v3293, %v3625
    %v3764 = vadd.f32 %v3294, %v3630
    %v3765 = vadd.f32 %v3295, %v3635
    %v3766 = vadd.f32 %v3296, %v3640
    %v3767 = vadd.f32 %v3297, %v3645
    %v3768 = vadd.f32 %v3298, %v3650
    %v3769 = vadd.f32 %v3299, %v3655
    %v3770 = vadd.f32 %v3300, %v3660
    %v3771 = vadd.f32 %v3301, %v3665
    %v3772 = vadd.f32 %v3302, %v3670
    %v3773 = vadd.f32 %v3303, %v3675
    %v3774 = vadd.f32 %v3304, %v3680
    %v3775 = vadd.f32 %v3305, %v3685
    %v3776 = vadd.f32 %v3306, %v3690
    %v3777 = vadd.f32 %v3307, %v3695
    %v3778 = vadd.f32 %v3308, %v3700
    %v3779 = vadd.f32 %v3309, %v3705
    %v3780 = vadd.f32 %v3310, %v3710
    %v3781 = vadd.f32 %v3311, %v3715
    %v3782 = vadd.f32 %v3312, %v3720
    %v3783 = vadd.f32 %v3313, %v3725
    %v3784 = vadd.f32 %v3314, %v3730
    %v3785 = vadd.f32 %v3315, %v3735
    %v3786 = vadd.f32 %v3316, %v3740
    %v3787 = vadd.f32 %v3317, %v3745
    %v3788 = vld [vmem:[#allocation3 + $0x18] sm:$0xff]
    %v3789 = vld [vmem:[#allocation3 + $0x20] sm:$0xff]
    %v3790 = vld [vmem:[#allocation3 + $0x28] sm:$0xff]
    %v3791 = vld [vmem:[#allocation3 + $0x30] sm:$0xff]
    %v3792 = vld [vmem:[#allocation3 + $0x38] sm:$0xff]
    %v3793 = vld [vmem:[#allocation3 + $0x40] sm:$0xff]
    %v3794 = vld [vmem:[#allocation3 + $0x48] sm:$0xff]
    %v3795 = vld [vmem:[#allocation3 + $0x50] sm:$0xff]
    %v3796 = vld [vmem:[#allocation3 + $0x58] sm:$0xff]
    %v3797 = vld [vmem:[#allocation3 + $0x60] sm:$0xff]
    %v3798 = vld [vmem:[#allocation3 + $0x68] sm:$0xff]
    %v3799 = vld [vmem:[#allocation3 + $0x70] sm:$0xff]
    %v3800 = vld [vmem:[#allocation3 + $0x78] sm:$0xff]
    %v3801 = vld [vmem:[#allocation3 + $0x80] sm:$0xff]
    %v3802 = vld [vmem:[#allocation3 + $0x88] sm:$0xff]
    %v3803 = vld [vmem:[#allocation3 + $0x90] sm:$0xff]
    %v3804 = vld [vmem:[#allocation3 + $0x98] sm:$0xff]
    %v3805 = vld [vmem:[#allocation3 + $0xa0] sm:$0xff]
    %v3806 = vld [vmem:[#allocation3 + $0xa8] sm:$0xff]
    %v3807 = vld [vmem:[#allocation3 + $0xb0] sm:$0xff]
    %v3808 = vld [vmem:[#allocation3 + $0xb8] sm:$0xff]
    %v3809 = vld [vmem:[#allocation3 + $0xc0] sm:$0xff]
    %v3810 = vld [vmem:[#allocation3 + $0xc8] sm:$0xff]
    %v3811 = vld [vmem:[#allocation3 + $0xd0] sm:$0xff]
    %v3812 = vld [vmem:[#allocation3 + $0xd8] sm:$0xff]
    %v3813 = vld [vmem:[#allocation3 + $0xe0] sm:$0xff]
    %v3814 = vld [vmem:[#allocation3 + $0xe8] sm:$0xff]
    %v3815 = vld [vmem:[#allocation3 + $0xf0] sm:$0xff]
    %v3816 = vld [vmem:[#allocation3 + $0xf8] sm:$0xff]
    %v3817 = vld [vmem:[#allocation3 + $0x100] sm:$0xff]
    %v3818 = vld [vmem:[#allocation3 + $0x108] sm:$0xff]
    %v3819 = vld [vmem:[#allocation3 + $0x110] sm:$0xff]
    %v3820 = vld [vmem:[#allocation3 + $0x118] sm:$0xff]
    %v3821 = vld [vmem:[#allocation3 + $0x120] sm:$0xff]
    %v3822 = vld [vmem:[#allocation3 + $0x128] sm:$0xff]
    %v3823 = vld [vmem:[#allocation3 + $0x130] sm:$0xff]
    %v3824 = vld [vmem:[#allocation3 + $0x138] sm:$0xff]
    %v3825 = vld [vmem:[#allocation3 + $0x140] sm:$0xff]
    %v3826 = vld [vmem:[#allocation3 + $0x148] sm:$0xff]
    %v3827 = vld [vmem:[#allocation3 + $0x150] sm:$0xff]
    %s3828 = scalar_lea.vmem %s6, 128
    %v3829 = vld [vmem:[%s3828] sm:$0xff]
    %v3830 = vld [vmem:[%s3828 + $0x8] sm:$0xff]
    %v3831 = vld [vmem:[%s3828 + $0x10] sm:$0xff]
    %v3832 = vld [vmem:[%s3828 + $0x18] sm:$0xff]
    %v3834 = vsel %vm169, %v3788, 0
    %v3837 = vsel %vm169, %v3789, 0
    %v3840 = vsel %vm169, %v3790, 0
    %v3843 = vsel %vm169, %v3791, 0
    %v3846 = vsel %vm169, %v3792, 0
    %v3849 = vsel %vm169, %v3793, 0
    %v3852 = vsel %vm169, %v3794, 0
    %v3855 = vsel %vm169, %v3795, 0
    %v3858 = vsel %vm169, %v3796, 0
    %v3861 = vsel %vm169, %v3797, 0
    %v3864 = vsel %vm169, %v3798, 0
    %v3867 = vsel %vm169, %v3799, 0
    %v3870 = vsel %vm169, %v3800, 0
    %v3873 = vsel %vm169, %v3801, 0
    %v3876 = vsel %vm169, %v3802, 0
    %v3879 = vsel %vm169, %v3803, 0
    %v3882 = vsel %vm169, %v3804, 0
    %v3885 = vsel %vm169, %v3805, 0
    %v3888 = vsel %vm169, %v3806, 0
    %v3891 = vsel %vm169, %v3807, 0
    %v3894 = vsel %vm169, %v3808, 0
    %v3897 = vsel %vm169, %v3809, 0
    %v3900 = vsel %vm169, %v3810, 0
    %v3903 = vsel %vm169, %v3811, 0
    %v3906 = vsel %vm169, %v3812, 0
    %v3909 = vsel %vm169, %v3813, 0
    %v3912 = vsel %vm169, %v3814, 0
    %v3915 = vsel %vm169, %v3815, 0
    %v3918 = vsel %vm169, %v3816, 0
    %v3921 = vsel %vm169, %v3817, 0
    %v3924 = vsel %vm169, %v3818, 0
    %v3927 = vsel %vm169, %v3819, 0
    %v3930 = vsel %vm169, %v3820, 0
    %v3933 = vsel %vm169, %v3821, 0
    %v3936 = vsel %vm169, %v3822, 0
    %v3939 = vsel %vm169, %v3823, 0
    %v3942 = vsel %vm169, %v3824, 0
    %v3945 = vsel %vm169, %v3825, 0
    %v3948 = vsel %vm169, %v3826, 0
    %v3951 = vsel %vm169, %v3827, 0
    %3953 = vmatprep.subr.mxu0 0.0
    %3954 = vmatpush1.msra.mxu0 0.0
    %3955 = vmatprep.subr.mxu0 0.0
    %3956 = vmatpush1.msra.mxu0 0.0
    %3957 = vmatprep.subr.mxu0 0.0
    %3958 = vmatpush1.msra.mxu0 0.0
    %3959 = vmatprep.subr.mxu0 0.0
    %3960 = vmatpush1.msra.mxu0 0.0
    %3961 = vmatprep.subr.mxu0 0.0
    %3962 = vmatpush1.msra.mxu0 0.0
    %3963 = vmatprep.subr.mxu0 0.0
    %3964 = vmatpush1.msra.mxu0 0.0
    %3965 = vmatprep.subr.mxu0 0.0
    %3966 = vmatpush1.msra.mxu0 0.0
    %3967 = vmatprep.subr.mxu0 0.0
    %3968 = vmatpush1.msra.mxu0 0.0
    %3969 = vmatprep.subr.mxu0 0.0
    %3970 = vmatpush1.msra.mxu0 0.0
    %3971 = vmatprep.subr.mxu0 0.0
    %3972 = vmatpush1.msra.mxu0 0.0
    %3973 = vmatprep.subr.mxu0 0.0
    %3974 = vmatpush1.msra.mxu0 0.0
    %3975 = vmatprep.subr.mxu0 0.0
    %3976 = vmatpush1.msra.mxu0 0.0
    %3977 = vmatprep.subr.mxu0 0.0
    %3978 = vmatpush1.msra.mxu0 %v3832
    %3979 = vmatprep.subr.mxu0 0.0
    %3980 = vmatpush1.msra.mxu0 %v3831
    %3981 = vmatprep.subr.mxu0 0.0
    %3982 = vmatpush1.msra.mxu0 %v3830
    %3983 = vmatprep.subr.mxu0 0.0
    %3984 = vmatpush1.msra.mxu0 %v3829
    %3985 = vmatprep.subr.mxu0 0.0
    %3986 = vmatpush2.msra.mxu0 0.0
    %3987 = vmatprep.subr.mxu0 0.0
    %3988 = vmatpush2.msra.mxu0 0.0
    %3989 = vmatprep.subr.mxu0 0.0
    %3990 = vmatpush2.msra.mxu0 0.0
    %3991 = vmatprep.subr.mxu0 0.0
    %3992 = vmatpush2.msra.mxu0 0.0
    %3993 = vmatprep.subr.mxu0 0.0
    %3994 = vmatpush2.msra.mxu0 0.0
    %3995 = vmatprep.subr.mxu0 0.0
    %3996 = vmatpush2.msra.mxu0 0.0
    %3997 = vmatprep.subr.mxu0 0.0
    %3998 = vmatpush2.msra.mxu0 0.0
    %3999 = vmatprep.subr.mxu0 0.0
    %4000 = vmatpush2.msra.mxu0 0.0
    %4001 = vmatprep.subr.mxu0 0.0
    %4002 = vmatpush2.msra.mxu0 0.0
    %4003 = vmatprep.subr.mxu0 0.0
    %4004 = vmatpush2.msra.mxu0 0.0
    %4005 = vmatprep.subr.mxu0 0.0
    %4006 = vmatpush2.msra.mxu0 0.0
    %4007 = vmatprep.subr.mxu0 0.0
    %4008 = vmatpush2.msra.mxu0 0.0
    %4009 = vmatprep.subr.mxu0 0.0
    %4010 = vmatpush2.msra.mxu0 0.0
    %4011 = vmatprep.subr.mxu0 0.0
    %4012 = vmatpush2.msra.mxu0 0.0
    %4013 = vmatprep.subr.mxu0 0.0
    %4014 = vmatpush2.msra.mxu0 0.0
    %4015 = vmatprep.subr.mxu0 0.0
    %4016 = vmatpush2.msra.mxu0 0.0
    %4017 = vmatprep.mubr.f32.mxu0 0.0
    %4018 = vmatmul.mubr.f32.gmra.mxu0 %v3834
    %v4019 = vpop.f32.mrf.mxu0
    %v4020 = vadd.f32 0.0, %v4019
    %v4021 = vpop.f32.mrf.mxu0
    %4022 = vmatprep.mubr.f32.mxu0 0.0
    %4023 = vmatmul.mubr.f32.gmra.mxu0 %v3837
    %v4024 = vpop.f32.mrf.mxu0
    %v4025 = vadd.f32 0.0, %v4024
    %v4026 = vpop.f32.mrf.mxu0
    %4027 = vmatprep.mubr.f32.mxu0 0.0
    %4028 = vmatmul.mubr.f32.gmra.mxu0 %v3840
    %v4029 = vpop.f32.mrf.mxu0
    %v4030 = vadd.f32 0.0, %v4029
    %v4031 = vpop.f32.mrf.mxu0
    %4032 = vmatprep.mubr.f32.mxu0 0.0
    %4033 = vmatmul.mubr.f32.gmra.mxu0 %v3843
    %v4034 = vpop.f32.mrf.mxu0
    %v4035 = vadd.f32 0.0, %v4034
    %v4036 = vpop.f32.mrf.mxu0
    %4037 = vmatprep.mubr.f32.mxu0 0.0
    %4038 = vmatmul.mubr.f32.gmra.mxu0 %v3846
    %v4039 = vpop.f32.mrf.mxu0
    %v4040 = vadd.f32 0.0, %v4039
    %v4041 = vpop.f32.mrf.mxu0
    %4042 = vmatprep.mubr.f32.mxu0 0.0
    %4043 = vmatmul.mubr.f32.gmra.mxu0 %v3849
    %v4044 = vpop.f32.mrf.mxu0
    %v4045 = vadd.f32 0.0, %v4044
    %v4046 = vpop.f32.mrf.mxu0
    %4047 = vmatprep.mubr.f32.mxu0 0.0
    %4048 = vmatmul.mubr.f32.gmra.mxu0 %v3852
    %v4049 = vpop.f32.mrf.mxu0
    %v4050 = vadd.f32 0.0, %v4049
    %v4051 = vpop.f32.mrf.mxu0
    %4052 = vmatprep.mubr.f32.mxu0 0.0
    %4053 = vmatmul.mubr.f32.gmra.mxu0 %v3855
    %v4054 = vpop.f32.mrf.mxu0
    %v4055 = vadd.f32 0.0, %v4054
    %v4056 = vpop.f32.mrf.mxu0
    %4057 = vmatprep.mubr.f32.mxu0 0.0
    %4058 = vmatmul.mubr.f32.gmra.mxu0 %v3858
    %v4059 = vpop.f32.mrf.mxu0
    %v4060 = vadd.f32 0.0, %v4059
    %v4061 = vpop.f32.mrf.mxu0
    %4062 = vmatprep.mubr.f32.mxu0 0.0
    %4063 = vmatmul.mubr.f32.gmra.mxu0 %v3861
    %v4064 = vpop.f32.mrf.mxu0
    %v4065 = vadd.f32 0.0, %v4064
    %v4066 = vpop.f32.mrf.mxu0
    %4067 = vmatprep.mubr.f32.mxu0 0.0
    %4068 = vmatmul.mubr.f32.gmra.mxu0 %v3864
    %v4069 = vpop.f32.mrf.mxu0
    %v4070 = vadd.f32 0.0, %v4069
    %v4071 = vpop.f32.mrf.mxu0
    %4072 = vmatprep.mubr.f32.mxu0 0.0
    %4073 = vmatmul.mubr.f32.gmra.mxu0 %v3867
    %v4074 = vpop.f32.mrf.mxu0
    %v4075 = vadd.f32 0.0, %v4074
    %v4076 = vpop.f32.mrf.mxu0
    %4077 = vmatprep.mubr.f32.mxu0 0.0
    %4078 = vmatmul.mubr.f32.gmra.mxu0 %v3870
    %v4079 = vpop.f32.mrf.mxu0
    %v4080 = vadd.f32 0.0, %v4079
    %v4081 = vpop.f32.mrf.mxu0
    %4082 = vmatprep.mubr.f32.mxu0 0.0
    %4083 = vmatmul.mubr.f32.gmra.mxu0 %v3873
    %v4084 = vpop.f32.mrf.mxu0
    %v4085 = vadd.f32 0.0, %v4084
    %v4086 = vpop.f32.mrf.mxu0
    %4087 = vmatprep.mubr.f32.mxu0 0.0
    %4088 = vmatmul.mubr.f32.gmra.mxu0 %v3876
    %v4089 = vpop.f32.mrf.mxu0
    %v4090 = vadd.f32 0.0, %v4089
    %v4091 = vpop.f32.mrf.mxu0
    %4092 = vmatprep.mubr.f32.mxu0 0.0
    %4093 = vmatmul.mubr.f32.gmra.mxu0 %v3879
    %v4094 = vpop.f32.mrf.mxu0
    %v4095 = vadd.f32 0.0, %v4094
    %v4096 = vpop.f32.mrf.mxu0
    %4097 = vmatprep.mubr.f32.mxu0 0.0
    %4098 = vmatmul.mubr.f32.gmra.mxu0 %v3882
    %v4099 = vpop.f32.mrf.mxu0
    %v4100 = vadd.f32 0.0, %v4099
    %v4101 = vpop.f32.mrf.mxu0
    %4102 = vmatprep.mubr.f32.mxu0 0.0
    %4103 = vmatmul.mubr.f32.gmra.mxu0 %v3885
    %v4104 = vpop.f32.mrf.mxu0
    %v4105 = vadd.f32 0.0, %v4104
    %v4106 = vpop.f32.mrf.mxu0
    %4107 = vmatprep.mubr.f32.mxu0 0.0
    %4108 = vmatmul.mubr.f32.gmra.mxu0 %v3888
    %v4109 = vpop.f32.mrf.mxu0
    %v4110 = vadd.f32 0.0, %v4109
    %v4111 = vpop.f32.mrf.mxu0
    %4112 = vmatprep.mubr.f32.mxu0 0.0
    %4113 = vmatmul.mubr.f32.gmra.mxu0 %v3891
    %v4114 = vpop.f32.mrf.mxu0
    %v4115 = vadd.f32 0.0, %v4114
    %v4116 = vpop.f32.mrf.mxu0
    %4117 = vmatprep.mubr.f32.mxu0 0.0
    %4118 = vmatmul.mubr.f32.gmra.mxu0 %v3894
    %v4119 = vpop.f32.mrf.mxu0
    %v4120 = vadd.f32 0.0, %v4119
    %v4121 = vpop.f32.mrf.mxu0
    %4122 = vmatprep.mubr.f32.mxu0 0.0
    %4123 = vmatmul.mubr.f32.gmra.mxu0 %v3897
    %v4124 = vpop.f32.mrf.mxu0
    %v4125 = vadd.f32 0.0, %v4124
    %v4126 = vpop.f32.mrf.mxu0
    %4127 = vmatprep.mubr.f32.mxu0 0.0
    %4128 = vmatmul.mubr.f32.gmra.mxu0 %v3900
    %v4129 = vpop.f32.mrf.mxu0
    %v4130 = vadd.f32 0.0, %v4129
    %v4131 = vpop.f32.mrf.mxu0
    %4132 = vmatprep.mubr.f32.mxu0 0.0
    %4133 = vmatmul.mubr.f32.gmra.mxu0 %v3903
    %v4134 = vpop.f32.mrf.mxu0
    %v4135 = vadd.f32 0.0, %v4134
    %v4136 = vpop.f32.mrf.mxu0
    %4137 = vmatprep.mubr.f32.mxu0 0.0
    %4138 = vmatmul.mubr.f32.gmra.mxu0 %v3906
    %v4139 = vpop.f32.mrf.mxu0
    %v4140 = vadd.f32 0.0, %v4139
    %v4141 = vpop.f32.mrf.mxu0
    %4142 = vmatprep.mubr.f32.mxu0 0.0
    %4143 = vmatmul.mubr.f32.gmra.mxu0 %v3909
    %v4144 = vpop.f32.mrf.mxu0
    %v4145 = vadd.f32 0.0, %v4144
    %v4146 = vpop.f32.mrf.mxu0
    %4147 = vmatprep.mubr.f32.mxu0 0.0
    %4148 = vmatmul.mubr.f32.gmra.mxu0 %v3912
    %v4149 = vpop.f32.mrf.mxu0
    %v4150 = vadd.f32 0.0, %v4149
    %v4151 = vpop.f32.mrf.mxu0
    %4152 = vmatprep.mubr.f32.mxu0 0.0
    %4153 = vmatmul.mubr.f32.gmra.mxu0 %v3915
    %v4154 = vpop.f32.mrf.mxu0
    %v4155 = vadd.f32 0.0, %v4154
    %v4156 = vpop.f32.mrf.mxu0
    %4157 = vmatprep.mubr.f32.mxu0 0.0
    %4158 = vmatmul.mubr.f32.gmra.mxu0 %v3918
    %v4159 = vpop.f32.mrf.mxu0
    %v4160 = vadd.f32 0.0, %v4159
    %v4161 = vpop.f32.mrf.mxu0
    %4162 = vmatprep.mubr.f32.mxu0 0.0
    %4163 = vmatmul.mubr.f32.gmra.mxu0 %v3921
    %v4164 = vpop.f32.mrf.mxu0
    %v4165 = vadd.f32 0.0, %v4164
    %v4166 = vpop.f32.mrf.mxu0
    %4167 = vmatprep.mubr.f32.mxu0 0.0
    %4168 = vmatmul.mubr.f32.gmra.mxu0 %v3924
    %v4169 = vpop.f32.mrf.mxu0
    %v4170 = vadd.f32 0.0, %v4169
    %v4171 = vpop.f32.mrf.mxu0
    %4172 = vmatprep.mubr.f32.mxu0 0.0
    %4173 = vmatmul.mubr.f32.gmra.mxu0 %v3927
    %v4174 = vpop.f32.mrf.mxu0
    %v4175 = vadd.f32 0.0, %v4174
    %v4176 = vpop.f32.mrf.mxu0
    %4177 = vmatprep.mubr.f32.mxu0 0.0
    %4178 = vmatmul.mubr.f32.gmra.mxu0 %v3930
    %v4179 = vpop.f32.mrf.mxu0
    %v4180 = vadd.f32 0.0, %v4179
    %v4181 = vpop.f32.mrf.mxu0
    %4182 = vmatprep.mubr.f32.mxu0 0.0
    %4183 = vmatmul.mubr.f32.gmra.mxu0 %v3933
    %v4184 = vpop.f32.mrf.mxu0
    %v4185 = vadd.f32 0.0, %v4184
    %v4186 = vpop.f32.mrf.mxu0
    %4187 = vmatprep.mubr.f32.mxu0 0.0
    %4188 = vmatmul.mubr.f32.gmra.mxu0 %v3936
    %v4189 = vpop.f32.mrf.mxu0
    %v4190 = vadd.f32 0.0, %v4189
    %v4191 = vpop.f32.mrf.mxu0
    %4192 = vmatprep.mubr.f32.mxu0 0.0
    %4193 = vmatmul.mubr.f32.gmra.mxu0 %v3939
    %v4194 = vpop.f32.mrf.mxu0
    %v4195 = vadd.f32 0.0, %v4194
    %v4196 = vpop.f32.mrf.mxu0
    %4197 = vmatprep.mubr.f32.mxu0 0.0
    %4198 = vmatmul.mubr.f32.gmra.mxu0 %v3942
    %v4199 = vpop.f32.mrf.mxu0
    %v4200 = vadd.f32 0.0, %v4199
    %v4201 = vpop.f32.mrf.mxu0
    %4202 = vmatprep.mubr.f32.mxu0 0.0
    %4203 = vmatmul.mubr.f32.gmra.mxu0 %v3945
    %v4204 = vpop.f32.mrf.mxu0
    %v4205 = vadd.f32 0.0, %v4204
    %v4206 = vpop.f32.mrf.mxu0
    %4207 = vmatprep.mubr.f32.mxu0 0.0
    %4208 = vmatmul.mubr.f32.gmra.mxu0 %v3948
    %v4209 = vpop.f32.mrf.mxu0
    %v4210 = vadd.f32 0.0, %v4209
    %v4211 = vpop.f32.mrf.mxu0
    %4212 = vmatprep.mubr.f32.mxu0 0.0
    %4213 = vmatmul.mubr.f32.gmra.mxu0 %v3951
    %v4214 = vpop.f32.mrf.mxu0
    %v4215 = vadd.f32 0.0, %v4214
    %v4216 = vpop.f32.mrf.mxu0
    %4217 = vdwg.mxu0
    %v4218 = vadd.f32 %v3748, %v4020
    %v4219 = vadd.f32 %v3749, %v4025
    %v4220 = vadd.f32 %v3750, %v4030
    %v4221 = vadd.f32 %v3751, %v4035
    %v4222 = vadd.f32 %v3752, %v4040
    %v4223 = vadd.f32 %v3753, %v4045
    %v4224 = vadd.f32 %v3754, %v4050
    %v4225 = vadd.f32 %v3755, %v4055
    %v4226 = vadd.f32 %v3756, %v4060
    %v4227 = vadd.f32 %v3757, %v4065
    %v4228 = vadd.f32 %v3758, %v4070
    %v4229 = vadd.f32 %v3759, %v4075
    %v4230 = vadd.f32 %v3760, %v4080
    %v4231 = vadd.f32 %v3761, %v4085
    %v4232 = vadd.f32 %v3762, %v4090
    %v4233 = vadd.f32 %v3763, %v4095
    %v4234 = vadd.f32 %v3764, %v4100
    %v4235 = vadd.f32 %v3765, %v4105
    %v4236 = vadd.f32 %v3766, %v4110
    %v4237 = vadd.f32 %v3767, %v4115
    %v4238 = vadd.f32 %v3768, %v4120
    %v4239 = vadd.f32 %v3769, %v4125
    %v4240 = vadd.f32 %v3770, %v4130
    %v4241 = vadd.f32 %v3771, %v4135
    %v4242 = vadd.f32 %v3772, %v4140
    %v4243 = vadd.f32 %v3773, %v4145
    %v4244 = vadd.f32 %v3774, %v4150
    %v4245 = vadd.f32 %v3775, %v4155
    %v4246 = vadd.f32 %v3776, %v4160
    %v4247 = vadd.f32 %v3777, %v4165
    %v4248 = vadd.f32 %v3778, %v4170
    %v4249 = vadd.f32 %v3779, %v4175
    %v4250 = vadd.f32 %v3780, %v4180
    %v4251 = vadd.f32 %v3781, %v4185
    %v4252 = vadd.f32 %v3782, %v4190
    %v4253 = vadd.f32 %v3783, %v4195
    %v4254 = vadd.f32 %v3784, %v4200
    %v4255 = vadd.f32 %v3785, %v4205
    %v4256 = vadd.f32 %v3786, %v4210
    %v4257 = vadd.f32 %v3787, %v4215
    %v4258 = vld [vmem:[#allocation3 + $0x19] sm:$0xff]
    %v4259 = vld [vmem:[#allocation3 + $0x21] sm:$0xff]
    %v4260 = vld [vmem:[#allocation3 + $0x29] sm:$0xff]
    %v4261 = vld [vmem:[#allocation3 + $0x31] sm:$0xff]
    %v4262 = vld [vmem:[#allocation3 + $0x39] sm:$0xff]
    %v4263 = vld [vmem:[#allocation3 + $0x41] sm:$0xff]
    %v4264 = vld [vmem:[#allocation3 + $0x49] sm:$0xff]
    %v4265 = vld [vmem:[#allocation3 + $0x51] sm:$0xff]
    %v4266 = vld [vmem:[#allocation3 + $0x59] sm:$0xff]
    %v4267 = vld [vmem:[#allocation3 + $0x61] sm:$0xff]
    %v4268 = vld [vmem:[#allocation3 + $0x69] sm:$0xff]
    %v4269 = vld [vmem:[#allocation3 + $0x71] sm:$0xff]
    %v4270 = vld [vmem:[#allocation3 + $0x79] sm:$0xff]
    %v4271 = vld [vmem:[#allocation3 + $0x81] sm:$0xff]
    %v4272 = vld [vmem:[#allocation3 + $0x89] sm:$0xff]
    %v4273 = vld [vmem:[#allocation3 + $0x91] sm:$0xff]
    %v4274 = vld [vmem:[#allocation3 + $0x99] sm:$0xff]
    %v4275 = vld [vmem:[#allocation3 + $0xa1] sm:$0xff]
    %v4276 = vld [vmem:[#allocation3 + $0xa9] sm:$0xff]
    %v4277 = vld [vmem:[#allocation3 + $0xb1] sm:$0xff]
    %v4278 = vld [vmem:[#allocation3 + $0xb9] sm:$0xff]
    %v4279 = vld [vmem:[#allocation3 + $0xc1] sm:$0xff]
    %v4280 = vld [vmem:[#allocation3 + $0xc9] sm:$0xff]
    %v4281 = vld [vmem:[#allocation3 + $0xd1] sm:$0xff]
    %v4282 = vld [vmem:[#allocation3 + $0xd9] sm:$0xff]
    %v4283 = vld [vmem:[#allocation3 + $0xe1] sm:$0xff]
    %v4284 = vld [vmem:[#allocation3 + $0xe9] sm:$0xff]
    %v4285 = vld [vmem:[#allocation3 + $0xf1] sm:$0xff]
    %v4286 = vld [vmem:[#allocation3 + $0xf9] sm:$0xff]
    %v4287 = vld [vmem:[#allocation3 + $0x101] sm:$0xff]
    %v4288 = vld [vmem:[#allocation3 + $0x109] sm:$0xff]
    %v4289 = vld [vmem:[#allocation3 + $0x111] sm:$0xff]
    %v4290 = vld [vmem:[#allocation3 + $0x119] sm:$0xff]
    %v4291 = vld [vmem:[#allocation3 + $0x121] sm:$0xff]
    %v4292 = vld [vmem:[#allocation3 + $0x129] sm:$0xff]
    %v4293 = vld [vmem:[#allocation3 + $0x131] sm:$0xff]
    %v4294 = vld [vmem:[#allocation3 + $0x139] sm:$0xff]
    %v4295 = vld [vmem:[#allocation3 + $0x141] sm:$0xff]
    %v4296 = vld [vmem:[#allocation3 + $0x149] sm:$0xff]
    %v4297 = vld [vmem:[#allocation3 + $0x151] sm:$0xff]
    %s4298 = scalar_lea.vmem %s6, 160
    %v4299 = vld [vmem:[%s4298] sm:$0xff]
    %v4300 = vld [vmem:[%s4298 + $0x8] sm:$0xff]
    %v4301 = vld [vmem:[%s4298 + $0x10] sm:$0xff]
    %v4302 = vld [vmem:[%s4298 + $0x18] sm:$0xff]
    %v4304 = vsel %vm169, %v4258, 0
    %v4307 = vsel %vm169, %v4259, 0
    %v4310 = vsel %vm169, %v4260, 0
    %v4313 = vsel %vm169, %v4261, 0
    %v4316 = vsel %vm169, %v4262, 0
    %v4319 = vsel %vm169, %v4263, 0
    %v4322 = vsel %vm169, %v4264, 0
    %v4325 = vsel %vm169, %v4265, 0
    %v4328 = vsel %vm169, %v4266, 0
    %v4331 = vsel %vm169, %v4267, 0
    %v4334 = vsel %vm169, %v4268, 0
    %v4337 = vsel %vm169, %v4269, 0
    %v4340 = vsel %vm169, %v4270, 0
    %v4343 = vsel %vm169, %v4271, 0
    %v4346 = vsel %vm169, %v4272, 0
    %v4349 = vsel %vm169, %v4273, 0
    %v4352 = vsel %vm169, %v4274, 0
    %v4355 = vsel %vm169, %v4275, 0
    %v4358 = vsel %vm169, %v4276, 0
    %v4361 = vsel %vm169, %v4277, 0
    %v4364 = vsel %vm169, %v4278, 0
    %v4367 = vsel %vm169, %v4279, 0
    %v4370 = vsel %vm169, %v4280, 0
    %v4373 = vsel %vm169, %v4281, 0
    %v4376 = vsel %vm169, %v4282, 0
    %v4379 = vsel %vm169, %v4283, 0
    %v4382 = vsel %vm169, %v4284, 0
    %v4385 = vsel %vm169, %v4285, 0
    %v4388 = vsel %vm169, %v4286, 0
    %v4391 = vsel %vm169, %v4287, 0
    %v4394 = vsel %vm169, %v4288, 0
    %v4397 = vsel %vm169, %v4289, 0
    %v4400 = vsel %vm169, %v4290, 0
    %v4403 = vsel %vm169, %v4291, 0
    %v4406 = vsel %vm169, %v4292, 0
    %v4409 = vsel %vm169, %v4293, 0
    %v4412 = vsel %vm169, %v4294, 0
    %v4415 = vsel %vm169, %v4295, 0
    %v4418 = vsel %vm169, %v4296, 0
    %v4421 = vsel %vm169, %v4297, 0
    %4423 = vmatprep.subr.mxu0 0.0
    %4424 = vmatpush1.msra.mxu0 0.0
    %4425 = vmatprep.subr.mxu0 0.0
    %4426 = vmatpush1.msra.mxu0 0.0
    %4427 = vmatprep.subr.mxu0 0.0
    %4428 = vmatpush1.msra.mxu0 0.0
    %4429 = vmatprep.subr.mxu0 0.0
    %4430 = vmatpush1.msra.mxu0 0.0
    %4431 = vmatprep.subr.mxu0 0.0
    %4432 = vmatpush1.msra.mxu0 0.0
    %4433 = vmatprep.subr.mxu0 0.0
    %4434 = vmatpush1.msra.mxu0 0.0
    %4435 = vmatprep.subr.mxu0 0.0
    %4436 = vmatpush1.msra.mxu0 0.0
    %4437 = vmatprep.subr.mxu0 0.0
    %4438 = vmatpush1.msra.mxu0 0.0
    %4439 = vmatprep.subr.mxu0 0.0
    %4440 = vmatpush1.msra.mxu0 0.0
    %4441 = vmatprep.subr.mxu0 0.0
    %4442 = vmatpush1.msra.mxu0 0.0
    %4443 = vmatprep.subr.mxu0 0.0
    %4444 = vmatpush1.msra.mxu0 0.0
    %4445 = vmatprep.subr.mxu0 0.0
    %4446 = vmatpush1.msra.mxu0 0.0
    %4447 = vmatprep.subr.mxu0 0.0
    %4448 = vmatpush1.msra.mxu0 %v4302
    %4449 = vmatprep.subr.mxu0 0.0
    %4450 = vmatpush1.msra.mxu0 %v4301
    %4451 = vmatprep.subr.mxu0 0.0
    %4452 = vmatpush1.msra.mxu0 %v4300
    %4453 = vmatprep.subr.mxu0 0.0
    %4454 = vmatpush1.msra.mxu0 %v4299
    %4455 = vmatprep.subr.mxu0 0.0
    %4456 = vmatpush2.msra.mxu0 0.0
    %4457 = vmatprep.subr.mxu0 0.0
    %4458 = vmatpush2.msra.mxu0 0.0
    %4459 = vmatprep.subr.mxu0 0.0
    %4460 = vmatpush2.msra.mxu0 0.0
    %4461 = vmatprep.subr.mxu0 0.0
    %4462 = vmatpush2.msra.mxu0 0.0
    %4463 = vmatprep.subr.mxu0 0.0
    %4464 = vmatpush2.msra.mxu0 0.0
    %4465 = vmatprep.subr.mxu0 0.0
    %4466 = vmatpush2.msra.mxu0 0.0
    %4467 = vmatprep.subr.mxu0 0.0
    %4468 = vmatpush2.msra.mxu0 0.0
    %4469 = vmatprep.subr.mxu0 0.0
    %4470 = vmatpush2.msra.mxu0 0.0
    %4471 = vmatprep.subr.mxu0 0.0
    %4472 = vmatpush2.msra.mxu0 0.0
    %4473 = vmatprep.subr.mxu0 0.0
    %4474 = vmatpush2.msra.mxu0 0.0
    %4475 = vmatprep.subr.mxu0 0.0
    %4476 = vmatpush2.msra.mxu0 0.0
    %4477 = vmatprep.subr.mxu0 0.0
    %4478 = vmatpush2.msra.mxu0 0.0
    %4479 = vmatprep.subr.mxu0 0.0
    %4480 = vmatpush2.msra.mxu0 0.0
    %4481 = vmatprep.subr.mxu0 0.0
    %4482 = vmatpush2.msra.mxu0 0.0
    %4483 = vmatprep.subr.mxu0 0.0
    %4484 = vmatpush2.msra.mxu0 0.0
    %4485 = vmatprep.subr.mxu0 0.0
    %4486 = vmatpush2.msra.mxu0 0.0
    %4487 = vmatprep.mubr.f32.mxu0 0.0
    %4488 = vmatmul.mubr.f32.gmra.mxu0 %v4304
    %v4489 = vpop.f32.mrf.mxu0
    %v4490 = vadd.f32 0.0, %v4489
    %v4491 = vpop.f32.mrf.mxu0
    %4492 = vmatprep.mubr.f32.mxu0 0.0
    %4493 = vmatmul.mubr.f32.gmra.mxu0 %v4307
    %v4494 = vpop.f32.mrf.mxu0
    %v4495 = vadd.f32 0.0, %v4494
    %v4496 = vpop.f32.mrf.mxu0
    %4497 = vmatprep.mubr.f32.mxu0 0.0
    %4498 = vmatmul.mubr.f32.gmra.mxu0 %v4310
    %v4499 = vpop.f32.mrf.mxu0
    %v4500 = vadd.f32 0.0, %v4499
    %v4501 = vpop.f32.mrf.mxu0
    %4502 = vmatprep.mubr.f32.mxu0 0.0
    %4503 = vmatmul.mubr.f32.gmra.mxu0 %v4313
    %v4504 = vpop.f32.mrf.mxu0
    %v4505 = vadd.f32 0.0, %v4504
    %v4506 = vpop.f32.mrf.mxu0
    %4507 = vmatprep.mubr.f32.mxu0 0.0
    %4508 = vmatmul.mubr.f32.gmra.mxu0 %v4316
    %v4509 = vpop.f32.mrf.mxu0
    %v4510 = vadd.f32 0.0, %v4509
    %v4511 = vpop.f32.mrf.mxu0
    %4512 = vmatprep.mubr.f32.mxu0 0.0
    %4513 = vmatmul.mubr.f32.gmra.mxu0 %v4319
    %v4514 = vpop.f32.mrf.mxu0
    %v4515 = vadd.f32 0.0, %v4514
    %v4516 = vpop.f32.mrf.mxu0
    %4517 = vmatprep.mubr.f32.mxu0 0.0
    %4518 = vmatmul.mubr.f32.gmra.mxu0 %v4322
    %v4519 = vpop.f32.mrf.mxu0
    %v4520 = vadd.f32 0.0, %v4519
    %v4521 = vpop.f32.mrf.mxu0
    %4522 = vmatprep.mubr.f32.mxu0 0.0
    %4523 = vmatmul.mubr.f32.gmra.mxu0 %v4325
    %v4524 = vpop.f32.mrf.mxu0
    %v4525 = vadd.f32 0.0, %v4524
    %v4526 = vpop.f32.mrf.mxu0
    %4527 = vmatprep.mubr.f32.mxu0 0.0
    %4528 = vmatmul.mubr.f32.gmra.mxu0 %v4328
    %v4529 = vpop.f32.mrf.mxu0
    %v4530 = vadd.f32 0.0, %v4529
    %v4531 = vpop.f32.mrf.mxu0
    %4532 = vmatprep.mubr.f32.mxu0 0.0
    %4533 = vmatmul.mubr.f32.gmra.mxu0 %v4331
    %v4534 = vpop.f32.mrf.mxu0
    %v4535 = vadd.f32 0.0, %v4534
    %v4536 = vpop.f32.mrf.mxu0
    %4537 = vmatprep.mubr.f32.mxu0 0.0
    %4538 = vmatmul.mubr.f32.gmra.mxu0 %v4334
    %v4539 = vpop.f32.mrf.mxu0
    %v4540 = vadd.f32 0.0, %v4539
    %v4541 = vpop.f32.mrf.mxu0
    %4542 = vmatprep.mubr.f32.mxu0 0.0
    %4543 = vmatmul.mubr.f32.gmra.mxu0 %v4337
    %v4544 = vpop.f32.mrf.mxu0
    %v4545 = vadd.f32 0.0, %v4544
    %v4546 = vpop.f32.mrf.mxu0
    %4547 = vmatprep.mubr.f32.mxu0 0.0
    %4548 = vmatmul.mubr.f32.gmra.mxu0 %v4340
    %v4549 = vpop.f32.mrf.mxu0
    %v4550 = vadd.f32 0.0, %v4549
    %v4551 = vpop.f32.mrf.mxu0
    %4552 = vmatprep.mubr.f32.mxu0 0.0
    %4553 = vmatmul.mubr.f32.gmra.mxu0 %v4343
    %v4554 = vpop.f32.mrf.mxu0
    %v4555 = vadd.f32 0.0, %v4554
    %v4556 = vpop.f32.mrf.mxu0
    %4557 = vmatprep.mubr.f32.mxu0 0.0
    %4558 = vmatmul.mubr.f32.gmra.mxu0 %v4346
    %v4559 = vpop.f32.mrf.mxu0
    %v4560 = vadd.f32 0.0, %v4559
    %v4561 = vpop.f32.mrf.mxu0
    %4562 = vmatprep.mubr.f32.mxu0 0.0
    %4563 = vmatmul.mubr.f32.gmra.mxu0 %v4349
    %v4564 = vpop.f32.mrf.mxu0
    %v4565 = vadd.f32 0.0, %v4564
    %v4566 = vpop.f32.mrf.mxu0
    %4567 = vmatprep.mubr.f32.mxu0 0.0
    %4568 = vmatmul.mubr.f32.gmra.mxu0 %v4352
    %v4569 = vpop.f32.mrf.mxu0
    %v4570 = vadd.f32 0.0, %v4569
    %v4571 = vpop.f32.mrf.mxu0
    %4572 = vmatprep.mubr.f32.mxu0 0.0
    %4573 = vmatmul.mubr.f32.gmra.mxu0 %v4355
    %v4574 = vpop.f32.mrf.mxu0
    %v4575 = vadd.f32 0.0, %v4574
    %v4576 = vpop.f32.mrf.mxu0
    %4577 = vmatprep.mubr.f32.mxu0 0.0
    %4578 = vmatmul.mubr.f32.gmra.mxu0 %v4358
    %v4579 = vpop.f32.mrf.mxu0
    %v4580 = vadd.f32 0.0, %v4579
    %v4581 = vpop.f32.mrf.mxu0
    %4582 = vmatprep.mubr.f32.mxu0 0.0
    %4583 = vmatmul.mubr.f32.gmra.mxu0 %v4361
    %v4584 = vpop.f32.mrf.mxu0
    %v4585 = vadd.f32 0.0, %v4584
    %v4586 = vpop.f32.mrf.mxu0
    %4587 = vmatprep.mubr.f32.mxu0 0.0
    %4588 = vmatmul.mubr.f32.gmra.mxu0 %v4364
    %v4589 = vpop.f32.mrf.mxu0
    %v4590 = vadd.f32 0.0, %v4589
    %v4591 = vpop.f32.mrf.mxu0
    %4592 = vmatprep.mubr.f32.mxu0 0.0
    %4593 = vmatmul.mubr.f32.gmra.mxu0 %v4367
    %v4594 = vpop.f32.mrf.mxu0
    %v4595 = vadd.f32 0.0, %v4594
    %v4596 = vpop.f32.mrf.mxu0
    %4597 = vmatprep.mubr.f32.mxu0 0.0
    %4598 = vmatmul.mubr.f32.gmra.mxu0 %v4370
    %v4599 = vpop.f32.mrf.mxu0
    %v4600 = vadd.f32 0.0, %v4599
    %v4601 = vpop.f32.mrf.mxu0
    %4602 = vmatprep.mubr.f32.mxu0 0.0
    %4603 = vmatmul.mubr.f32.gmra.mxu0 %v4373
    %v4604 = vpop.f32.mrf.mxu0
    %v4605 = vadd.f32 0.0, %v4604
    %v4606 = vpop.f32.mrf.mxu0
    %4607 = vmatprep.mubr.f32.mxu0 0.0
    %4608 = vmatmul.mubr.f32.gmra.mxu0 %v4376
    %v4609 = vpop.f32.mrf.mxu0
    %v4610 = vadd.f32 0.0, %v4609
    %v4611 = vpop.f32.mrf.mxu0
    %4612 = vmatprep.mubr.f32.mxu0 0.0
    %4613 = vmatmul.mubr.f32.gmra.mxu0 %v4379
    %v4614 = vpop.f32.mrf.mxu0
    %v4615 = vadd.f32 0.0, %v4614
    %v4616 = vpop.f32.mrf.mxu0
    %4617 = vmatprep.mubr.f32.mxu0 0.0
    %4618 = vmatmul.mubr.f32.gmra.mxu0 %v4382
    %v4619 = vpop.f32.mrf.mxu0
    %v4620 = vadd.f32 0.0, %v4619
    %v4621 = vpop.f32.mrf.mxu0
    %4622 = vmatprep.mubr.f32.mxu0 0.0
    %4623 = vmatmul.mubr.f32.gmra.mxu0 %v4385
    %v4624 = vpop.f32.mrf.mxu0
    %v4625 = vadd.f32 0.0, %v4624
    %v4626 = vpop.f32.mrf.mxu0
    %4627 = vmatprep.mubr.f32.mxu0 0.0
    %4628 = vmatmul.mubr.f32.gmra.mxu0 %v4388
    %v4629 = vpop.f32.mrf.mxu0
    %v4630 = vadd.f32 0.0, %v4629
    %v4631 = vpop.f32.mrf.mxu0
    %4632 = vmatprep.mubr.f32.mxu0 0.0
    %4633 = vmatmul.mubr.f32.gmra.mxu0 %v4391
    %v4634 = vpop.f32.mrf.mxu0
    %v4635 = vadd.f32 0.0, %v4634
    %v4636 = vpop.f32.mrf.mxu0
    %4637 = vmatprep.mubr.f32.mxu0 0.0
    %4638 = vmatmul.mubr.f32.gmra.mxu0 %v4394
    %v4639 = vpop.f32.mrf.mxu0
    %v4640 = vadd.f32 0.0, %v4639
    %v4641 = vpop.f32.mrf.mxu0
    %4642 = vmatprep.mubr.f32.mxu0 0.0
    %4643 = vmatmul.mubr.f32.gmra.mxu0 %v4397
    %v4644 = vpop.f32.mrf.mxu0
    %v4645 = vadd.f32 0.0, %v4644
    %v4646 = vpop.f32.mrf.mxu0
    %4647 = vmatprep.mubr.f32.mxu0 0.0
    %4648 = vmatmul.mubr.f32.gmra.mxu0 %v4400
    %v4649 = vpop.f32.mrf.mxu0
    %v4650 = vadd.f32 0.0, %v4649
    %v4651 = vpop.f32.mrf.mxu0
    %4652 = vmatprep.mubr.f32.mxu0 0.0
    %4653 = vmatmul.mubr.f32.gmra.mxu0 %v4403
    %v4654 = vpop.f32.mrf.mxu0
    %v4655 = vadd.f32 0.0, %v4654
    %v4656 = vpop.f32.mrf.mxu0
    %4657 = vmatprep.mubr.f32.mxu0 0.0
    %4658 = vmatmul.mubr.f32.gmra.mxu0 %v4406
    %v4659 = vpop.f32.mrf.mxu0
    %v4660 = vadd.f32 0.0, %v4659
    %v4661 = vpop.f32.mrf.mxu0
    %4662 = vmatprep.mubr.f32.mxu0 0.0
    %4663 = vmatmul.mubr.f32.gmra.mxu0 %v4409
    %v4664 = vpop.f32.mrf.mxu0
    %v4665 = vadd.f32 0.0, %v4664
    %v4666 = vpop.f32.mrf.mxu0
    %4667 = vmatprep.mubr.f32.mxu0 0.0
    %4668 = vmatmul.mubr.f32.gmra.mxu0 %v4412
    %v4669 = vpop.f32.mrf.mxu0
    %v4670 = vadd.f32 0.0, %v4669
    %v4671 = vpop.f32.mrf.mxu0
    %4672 = vmatprep.mubr.f32.mxu0 0.0
    %4673 = vmatmul.mubr.f32.gmra.mxu0 %v4415
    %v4674 = vpop.f32.mrf.mxu0
    %v4675 = vadd.f32 0.0, %v4674
    %v4676 = vpop.f32.mrf.mxu0
    %4677 = vmatprep.mubr.f32.mxu0 0.0
    %4678 = vmatmul.mubr.f32.gmra.mxu0 %v4418
    %v4679 = vpop.f32.mrf.mxu0
    %v4680 = vadd.f32 0.0, %v4679
    %v4681 = vpop.f32.mrf.mxu0
    %4682 = vmatprep.mubr.f32.mxu0 0.0
    %4683 = vmatmul.mubr.f32.gmra.mxu0 %v4421
    %v4684 = vpop.f32.mrf.mxu0
    %v4685 = vadd.f32 0.0, %v4684
    %v4686 = vpop.f32.mrf.mxu0
    %4687 = vdwg.mxu0
    %v4688 = vadd.f32 %v4218, %v4490
    %v4689 = vadd.f32 %v4219, %v4495
    %v4690 = vadd.f32 %v4220, %v4500
    %v4691 = vadd.f32 %v4221, %v4505
    %v4692 = vadd.f32 %v4222, %v4510
    %v4693 = vadd.f32 %v4223, %v4515
    %v4694 = vadd.f32 %v4224, %v4520
    %v4695 = vadd.f32 %v4225, %v4525
    %v4696 = vadd.f32 %v4226, %v4530
    %v4697 = vadd.f32 %v4227, %v4535
    %v4698 = vadd.f32 %v4228, %v4540
    %v4699 = vadd.f32 %v4229, %v4545
    %v4700 = vadd.f32 %v4230, %v4550
    %v4701 = vadd.f32 %v4231, %v4555
    %v4702 = vadd.f32 %v4232, %v4560
    %v4703 = vadd.f32 %v4233, %v4565
    %v4704 = vadd.f32 %v4234, %v4570
    %v4705 = vadd.f32 %v4235, %v4575
    %v4706 = vadd.f32 %v4236, %v4580
    %v4707 = vadd.f32 %v4237, %v4585
    %v4708 = vadd.f32 %v4238, %v4590
    %v4709 = vadd.f32 %v4239, %v4595
    %v4710 = vadd.f32 %v4240, %v4600
    %v4711 = vadd.f32 %v4241, %v4605
    %v4712 = vadd.f32 %v4242, %v4610
    %v4713 = vadd.f32 %v4243, %v4615
    %v4714 = vadd.f32 %v4244, %v4620
    %v4715 = vadd.f32 %v4245, %v4625
    %v4716 = vadd.f32 %v4246, %v4630
    %v4717 = vadd.f32 %v4247, %v4635
    %v4718 = vadd.f32 %v4248, %v4640
    %v4719 = vadd.f32 %v4249, %v4645
    %v4720 = vadd.f32 %v4250, %v4650
    %v4721 = vadd.f32 %v4251, %v4655
    %v4722 = vadd.f32 %v4252, %v4660
    %v4723 = vadd.f32 %v4253, %v4665
    %v4724 = vadd.f32 %v4254, %v4670
    %v4725 = vadd.f32 %v4255, %v4675
    %v4726 = vadd.f32 %v4256, %v4680
    %v4727 = vadd.f32 %v4257, %v4685
    %v4728 = vld [vmem:[#allocation3 + $0x27] sm:$0xff]
    %v4729 = vld [vmem:[#allocation3 + $0x2f] sm:$0xff]
    %v4730 = vld [vmem:[#allocation3 + $0x37] sm:$0xff]
    %v4731 = vld [vmem:[#allocation3 + $0x3f] sm:$0xff]
    %v4732 = vld [vmem:[#allocation3 + $0x47] sm:$0xff]
    %v4733 = vld [vmem:[#allocation3 + $0x4f] sm:$0xff]
    %v4734 = vld [vmem:[#allocation3 + $0x57] sm:$0xff]
    %v4735 = vld [vmem:[#allocation3 + $0x5f] sm:$0xff]
    %v4736 = vld [vmem:[#allocation3 + $0x67] sm:$0xff]
    %v4737 = vld [vmem:[#allocation3 + $0x6f] sm:$0xff]
    %v4738 = vld [vmem:[#allocation3 + $0x77] sm:$0xff]
    %v4739 = vld [vmem:[#allocation3 + $0x7f] sm:$0xff]
    %v4740 = vld [vmem:[#allocation3 + $0x87] sm:$0xff]
    %v4741 = vld [vmem:[#allocation3 + $0x8f] sm:$0xff]
    %v4742 = vld [vmem:[#allocation3 + $0x97] sm:$0xff]
    %v4743 = vld [vmem:[#allocation3 + $0x9f] sm:$0xff]
    %v4744 = vld [vmem:[#allocation3 + $0xa7] sm:$0xff]
    %v4745 = vld [vmem:[#allocation3 + $0xaf] sm:$0xff]
    %v4746 = vld [vmem:[#allocation3 + $0xb7] sm:$0xff]
    %v4747 = vld [vmem:[#allocation3 + $0xbf] sm:$0xff]
    %v4748 = vld [vmem:[#allocation3 + $0xc7] sm:$0xff]
    %v4749 = vld [vmem:[#allocation3 + $0xcf] sm:$0xff]
    %v4750 = vld [vmem:[#allocation3 + $0xd7] sm:$0xff]
    %v4751 = vld [vmem:[#allocation3 + $0xdf] sm:$0xff]
    %v4752 = vld [vmem:[#allocation3 + $0xe7] sm:$0xff]
    %v4753 = vld [vmem:[#allocation3 + $0xef] sm:$0xff]
    %v4754 = vld [vmem:[#allocation3 + $0xf7] sm:$0xff]
    %v4755 = vld [vmem:[#allocation3 + $0xff] sm:$0xff]
    %v4756 = vld [vmem:[#allocation3 + $0x107] sm:$0xff]
    %v4757 = vld [vmem:[#allocation3 + $0x10f] sm:$0xff]
    %v4758 = vld [vmem:[#allocation3 + $0x117] sm:$0xff]
    %v4759 = vld [vmem:[#allocation3 + $0x11f] sm:$0xff]
    %v4760 = vld [vmem:[#allocation3 + $0x127] sm:$0xff]
    %v4761 = vld [vmem:[#allocation3 + $0x12f] sm:$0xff]
    %v4762 = vld [vmem:[#allocation3 + $0x137] sm:$0xff]
    %v4763 = vld [vmem:[#allocation3 + $0x13f] sm:$0xff]
    %v4764 = vld [vmem:[#allocation3 + $0x147] sm:$0xff]
    %v4765 = vld [vmem:[#allocation3 + $0x14f] sm:$0xff]
    %v4766 = vld [vmem:[#allocation3 + $0x157] sm:$0xff]
    %v4767 = vld [vmem:[#allocation3 + $0x15f] sm:$0xff]
    %s4768 = scalar_lea.vmem %s6, 192
    %v4769 = vld [vmem:[%s4768] sm:$0xff]
    %v4770 = vld [vmem:[%s4768 + $0x8] sm:$0xff]
    %v4771 = vld [vmem:[%s4768 + $0x10] sm:$0xff]
    %v4772 = vld [vmem:[%s4768 + $0x18] sm:$0xff]
    %v4774 = vsel %vm169, %v4728, 0
    %v4777 = vsel %vm169, %v4729, 0
    %v4780 = vsel %vm169, %v4730, 0
    %v4783 = vsel %vm169, %v4731, 0
    %v4786 = vsel %vm169, %v4732, 0
    %v4789 = vsel %vm169, %v4733, 0
    %v4792 = vsel %vm169, %v4734, 0
    %v4795 = vsel %vm169, %v4735, 0
    %v4798 = vsel %vm169, %v4736, 0
    %v4801 = vsel %vm169, %v4737, 0
    %v4804 = vsel %vm169, %v4738, 0
    %v4807 = vsel %vm169, %v4739, 0
    %v4810 = vsel %vm169, %v4740, 0
    %v4813 = vsel %vm169, %v4741, 0
    %v4816 = vsel %vm169, %v4742, 0
    %v4819 = vsel %vm169, %v4743, 0
    %v4822 = vsel %vm169, %v4744, 0
    %v4825 = vsel %vm169, %v4745, 0
    %v4828 = vsel %vm169, %v4746, 0
    %v4831 = vsel %vm169, %v4747, 0
    %v4834 = vsel %vm169, %v4748, 0
    %v4837 = vsel %vm169, %v4749, 0
    %v4840 = vsel %vm169, %v4750, 0
    %v4843 = vsel %vm169, %v4751, 0
    %v4846 = vsel %vm169, %v4752, 0
    %v4849 = vsel %vm169, %v4753, 0
    %v4852 = vsel %vm169, %v4754, 0
    %v4855 = vsel %vm169, %v4755, 0
    %v4858 = vsel %vm169, %v4756, 0
    %v4861 = vsel %vm169, %v4757, 0
    %v4864 = vsel %vm169, %v4758, 0
    %v4867 = vsel %vm169, %v4759, 0
    %v4870 = vsel %vm169, %v4760, 0
    %v4873 = vsel %vm169, %v4761, 0
    %v4876 = vsel %vm169, %v4762, 0
    %v4879 = vsel %vm169, %v4763, 0
    %v4882 = vsel %vm169, %v4764, 0
    %v4885 = vsel %vm169, %v4765, 0
    %v4888 = vsel %vm169, %v4766, 0
    %v4891 = vsel %vm169, %v4767, 0
    %4893 = vmatprep.subr.mxu0 0.0
    %4894 = vmatpush1.msra.mxu0 0.0
    %4895 = vmatprep.subr.mxu0 0.0
    %4896 = vmatpush1.msra.mxu0 0.0
    %4897 = vmatprep.subr.mxu0 0.0
    %4898 = vmatpush1.msra.mxu0 0.0
    %4899 = vmatprep.subr.mxu0 0.0
    %4900 = vmatpush1.msra.mxu0 0.0
    %4901 = vmatprep.subr.mxu0 0.0
    %4902 = vmatpush1.msra.mxu0 0.0
    %4903 = vmatprep.subr.mxu0 0.0
    %4904 = vmatpush1.msra.mxu0 0.0
    %4905 = vmatprep.subr.mxu0 0.0
    %4906 = vmatpush1.msra.mxu0 0.0
    %4907 = vmatprep.subr.mxu0 0.0
    %4908 = vmatpush1.msra.mxu0 0.0
    %4909 = vmatprep.subr.mxu0 0.0
    %4910 = vmatpush1.msra.mxu0 0.0
    %4911 = vmatprep.subr.mxu0 0.0
    %4912 = vmatpush1.msra.mxu0 0.0
    %4913 = vmatprep.subr.mxu0 0.0
    %4914 = vmatpush1.msra.mxu0 0.0
    %4915 = vmatprep.subr.mxu0 0.0
    %4916 = vmatpush1.msra.mxu0 0.0
    %4917 = vmatprep.subr.mxu0 0.0
    %4918 = vmatpush1.msra.mxu0 %v4772
    %4919 = vmatprep.subr.mxu0 0.0
    %4920 = vmatpush1.msra.mxu0 %v4771
    %4921 = vmatprep.subr.mxu0 0.0
    %4922 = vmatpush1.msra.mxu0 %v4770
    %4923 = vmatprep.subr.mxu0 0.0
    %4924 = vmatpush1.msra.mxu0 %v4769
    %4925 = vmatprep.subr.mxu0 0.0
    %4926 = vmatpush2.msra.mxu0 0.0
    %4927 = vmatprep.subr.mxu0 0.0
    %4928 = vmatpush2.msra.mxu0 0.0
    %4929 = vmatprep.subr.mxu0 0.0
    %4930 = vmatpush2.msra.mxu0 0.0
    %4931 = vmatprep.subr.mxu0 0.0
    %4932 = vmatpush2.msra.mxu0 0.0
    %4933 = vmatprep.subr.mxu0 0.0
    %4934 = vmatpush2.msra.mxu0 0.0
    %4935 = vmatprep.subr.mxu0 0.0
    %4936 = vmatpush2.msra.mxu0 0.0
    %4937 = vmatprep.subr.mxu0 0.0
    %4938 = vmatpush2.msra.mxu0 0.0
    %4939 = vmatprep.subr.mxu0 0.0
    %4940 = vmatpush2.msra.mxu0 0.0
    %4941 = vmatprep.subr.mxu0 0.0
    %4942 = vmatpush2.msra.mxu0 0.0
    %4943 = vmatprep.subr.mxu0 0.0
    %4944 = vmatpush2.msra.mxu0 0.0
    %4945 = vmatprep.subr.mxu0 0.0
    %4946 = vmatpush2.msra.mxu0 0.0
    %4947 = vmatprep.subr.mxu0 0.0
    %4948 = vmatpush2.msra.mxu0 0.0
    %4949 = vmatprep.subr.mxu0 0.0
    %4950 = vmatpush2.msra.mxu0 0.0
    %4951 = vmatprep.subr.mxu0 0.0
    %4952 = vmatpush2.msra.mxu0 0.0
    %4953 = vmatprep.subr.mxu0 0.0
    %4954 = vmatpush2.msra.mxu0 0.0
    %4955 = vmatprep.subr.mxu0 0.0
    %4956 = vmatpush2.msra.mxu0 0.0
    %4957 = vmatprep.mubr.f32.mxu0 0.0
    %4958 = vmatmul.mubr.f32.gmra.mxu0 %v4774
    %v4959 = vpop.f32.mrf.mxu0
    %v4960 = vadd.f32 0.0, %v4959
    %v4961 = vpop.f32.mrf.mxu0
    %4962 = vmatprep.mubr.f32.mxu0 0.0
    %4963 = vmatmul.mubr.f32.gmra.mxu0 %v4777
    %v4964 = vpop.f32.mrf.mxu0
    %v4965 = vadd.f32 0.0, %v4964
    %v4966 = vpop.f32.mrf.mxu0
    %4967 = vmatprep.mubr.f32.mxu0 0.0
    %4968 = vmatmul.mubr.f32.gmra.mxu0 %v4780
    %v4969 = vpop.f32.mrf.mxu0
    %v4970 = vadd.f32 0.0, %v4969
    %v4971 = vpop.f32.mrf.mxu0
    %4972 = vmatprep.mubr.f32.mxu0 0.0
    %4973 = vmatmul.mubr.f32.gmra.mxu0 %v4783
    %v4974 = vpop.f32.mrf.mxu0
    %v4975 = vadd.f32 0.0, %v4974
    %v4976 = vpop.f32.mrf.mxu0
    %4977 = vmatprep.mubr.f32.mxu0 0.0
    %4978 = vmatmul.mubr.f32.gmra.mxu0 %v4786
    %v4979 = vpop.f32.mrf.mxu0
    %v4980 = vadd.f32 0.0, %v4979
    %v4981 = vpop.f32.mrf.mxu0
    %4982 = vmatprep.mubr.f32.mxu0 0.0
    %4983 = vmatmul.mubr.f32.gmra.mxu0 %v4789
    %v4984 = vpop.f32.mrf.mxu0
    %v4985 = vadd.f32 0.0, %v4984
    %v4986 = vpop.f32.mrf.mxu0
    %4987 = vmatprep.mubr.f32.mxu0 0.0
    %4988 = vmatmul.mubr.f32.gmra.mxu0 %v4792
    %v4989 = vpop.f32.mrf.mxu0
    %v4990 = vadd.f32 0.0, %v4989
    %v4991 = vpop.f32.mrf.mxu0
    %4992 = vmatprep.mubr.f32.mxu0 0.0
    %4993 = vmatmul.mubr.f32.gmra.mxu0 %v4795
    %v4994 = vpop.f32.mrf.mxu0
    %v4995 = vadd.f32 0.0, %v4994
    %v4996 = vpop.f32.mrf.mxu0
    %4997 = vmatprep.mubr.f32.mxu0 0.0
    %4998 = vmatmul.mubr.f32.gmra.mxu0 %v4798
    %v4999 = vpop.f32.mrf.mxu0
    %v5000 = vadd.f32 0.0, %v4999
    %v5001 = vpop.f32.mrf.mxu0
    %5002 = vmatprep.mubr.f32.mxu0 0.0
    %5003 = vmatmul.mubr.f32.gmra.mxu0 %v4801
    %v5004 = vpop.f32.mrf.mxu0
    %v5005 = vadd.f32 0.0, %v5004
    %v5006 = vpop.f32.mrf.mxu0
    %5007 = vmatprep.mubr.f32.mxu0 0.0
    %5008 = vmatmul.mubr.f32.gmra.mxu0 %v4804
    %v5009 = vpop.f32.mrf.mxu0
    %v5010 = vadd.f32 0.0, %v5009
    %v5011 = vpop.f32.mrf.mxu0
    %5012 = vmatprep.mubr.f32.mxu0 0.0
    %5013 = vmatmul.mubr.f32.gmra.mxu0 %v4807
    %v5014 = vpop.f32.mrf.mxu0
    %v5015 = vadd.f32 0.0, %v5014
    %v5016 = vpop.f32.mrf.mxu0
    %5017 = vmatprep.mubr.f32.mxu0 0.0
    %5018 = vmatmul.mubr.f32.gmra.mxu0 %v4810
    %v5019 = vpop.f32.mrf.mxu0
    %v5020 = vadd.f32 0.0, %v5019
    %v5021 = vpop.f32.mrf.mxu0
    %5022 = vmatprep.mubr.f32.mxu0 0.0
    %5023 = vmatmul.mubr.f32.gmra.mxu0 %v4813
    %v5024 = vpop.f32.mrf.mxu0
    %v5025 = vadd.f32 0.0, %v5024
    %v5026 = vpop.f32.mrf.mxu0
    %5027 = vmatprep.mubr.f32.mxu0 0.0
    %5028 = vmatmul.mubr.f32.gmra.mxu0 %v4816
    %v5029 = vpop.f32.mrf.mxu0
    %v5030 = vadd.f32 0.0, %v5029
    %v5031 = vpop.f32.mrf.mxu0
    %5032 = vmatprep.mubr.f32.mxu0 0.0
    %5033 = vmatmul.mubr.f32.gmra.mxu0 %v4819
    %v5034 = vpop.f32.mrf.mxu0
    %v5035 = vadd.f32 0.0, %v5034
    %v5036 = vpop.f32.mrf.mxu0
    %5037 = vmatprep.mubr.f32.mxu0 0.0
    %5038 = vmatmul.mubr.f32.gmra.mxu0 %v4822
    %v5039 = vpop.f32.mrf.mxu0
    %v5040 = vadd.f32 0.0, %v5039
    %v5041 = vpop.f32.mrf.mxu0
    %5042 = vmatprep.mubr.f32.mxu0 0.0
    %5043 = vmatmul.mubr.f32.gmra.mxu0 %v4825
    %v5044 = vpop.f32.mrf.mxu0
    %v5045 = vadd.f32 0.0, %v5044
    %v5046 = vpop.f32.mrf.mxu0
    %5047 = vmatprep.mubr.f32.mxu0 0.0
    %5048 = vmatmul.mubr.f32.gmra.mxu0 %v4828
    %v5049 = vpop.f32.mrf.mxu0
    %v5050 = vadd.f32 0.0, %v5049
    %v5051 = vpop.f32.mrf.mxu0
    %5052 = vmatprep.mubr.f32.mxu0 0.0
    %5053 = vmatmul.mubr.f32.gmra.mxu0 %v4831
    %v5054 = vpop.f32.mrf.mxu0
    %v5055 = vadd.f32 0.0, %v5054
    %v5056 = vpop.f32.mrf.mxu0
    %5057 = vmatprep.mubr.f32.mxu0 0.0
    %5058 = vmatmul.mubr.f32.gmra.mxu0 %v4834
    %v5059 = vpop.f32.mrf.mxu0
    %v5060 = vadd.f32 0.0, %v5059
    %v5061 = vpop.f32.mrf.mxu0
    %5062 = vmatprep.mubr.f32.mxu0 0.0
    %5063 = vmatmul.mubr.f32.gmra.mxu0 %v4837
    %v5064 = vpop.f32.mrf.mxu0
    %v5065 = vadd.f32 0.0, %v5064
    %v5066 = vpop.f32.mrf.mxu0
    %5067 = vmatprep.mubr.f32.mxu0 0.0
    %5068 = vmatmul.mubr.f32.gmra.mxu0 %v4840
    %v5069 = vpop.f32.mrf.mxu0
    %v5070 = vadd.f32 0.0, %v5069
    %v5071 = vpop.f32.mrf.mxu0
    %5072 = vmatprep.mubr.f32.mxu0 0.0
    %5073 = vmatmul.mubr.f32.gmra.mxu0 %v4843
    %v5074 = vpop.f32.mrf.mxu0
    %v5075 = vadd.f32 0.0, %v5074
    %v5076 = vpop.f32.mrf.mxu0
    %5077 = vmatprep.mubr.f32.mxu0 0.0
    %5078 = vmatmul.mubr.f32.gmra.mxu0 %v4846
    %v5079 = vpop.f32.mrf.mxu0
    %v5080 = vadd.f32 0.0, %v5079
    %v5081 = vpop.f32.mrf.mxu0
    %5082 = vmatprep.mubr.f32.mxu0 0.0
    %5083 = vmatmul.mubr.f32.gmra.mxu0 %v4849
    %v5084 = vpop.f32.mrf.mxu0
    %v5085 = vadd.f32 0.0, %v5084
    %v5086 = vpop.f32.mrf.mxu0
    %5087 = vmatprep.mubr.f32.mxu0 0.0
    %5088 = vmatmul.mubr.f32.gmra.mxu0 %v4852
    %v5089 = vpop.f32.mrf.mxu0
    %v5090 = vadd.f32 0.0, %v5089
    %v5091 = vpop.f32.mrf.mxu0
    %5092 = vmatprep.mubr.f32.mxu0 0.0
    %5093 = vmatmul.mubr.f32.gmra.mxu0 %v4855
    %v5094 = vpop.f32.mrf.mxu0
    %v5095 = vadd.f32 0.0, %v5094
    %v5096 = vpop.f32.mrf.mxu0
    %5097 = vmatprep.mubr.f32.mxu0 0.0
    %5098 = vmatmul.mubr.f32.gmra.mxu0 %v4858
    %v5099 = vpop.f32.mrf.mxu0
    %v5100 = vadd.f32 0.0, %v5099
    %v5101 = vpop.f32.mrf.mxu0
    %5102 = vmatprep.mubr.f32.mxu0 0.0
    %5103 = vmatmul.mubr.f32.gmra.mxu0 %v4861
    %v5104 = vpop.f32.mrf.mxu0
    %v5105 = vadd.f32 0.0, %v5104
    %v5106 = vpop.f32.mrf.mxu0
    %5107 = vmatprep.mubr.f32.mxu0 0.0
    %5108 = vmatmul.mubr.f32.gmra.mxu0 %v4864
    %v5109 = vpop.f32.mrf.mxu0
    %v5110 = vadd.f32 0.0, %v5109
    %v5111 = vpop.f32.mrf.mxu0
    %5112 = vmatprep.mubr.f32.mxu0 0.0
    %5113 = vmatmul.mubr.f32.gmra.mxu0 %v4867
    %v5114 = vpop.f32.mrf.mxu0
    %v5115 = vadd.f32 0.0, %v5114
    %v5116 = vpop.f32.mrf.mxu0
    %5117 = vmatprep.mubr.f32.mxu0 0.0
    %5118 = vmatmul.mubr.f32.gmra.mxu0 %v4870
    %v5119 = vpop.f32.mrf.mxu0
    %v5120 = vadd.f32 0.0, %v5119
    %v5121 = vpop.f32.mrf.mxu0
    %5122 = vmatprep.mubr.f32.mxu0 0.0
    %5123 = vmatmul.mubr.f32.gmra.mxu0 %v4873
    %v5124 = vpop.f32.mrf.mxu0
    %v5125 = vadd.f32 0.0, %v5124
    %v5126 = vpop.f32.mrf.mxu0
    %5127 = vmatprep.mubr.f32.mxu0 0.0
    %5128 = vmatmul.mubr.f32.gmra.mxu0 %v4876
    %v5129 = vpop.f32.mrf.mxu0
    %v5130 = vadd.f32 0.0, %v5129
    %v5131 = vpop.f32.mrf.mxu0
    %5132 = vmatprep.mubr.f32.mxu0 0.0
    %5133 = vmatmul.mubr.f32.gmra.mxu0 %v4879
    %v5134 = vpop.f32.mrf.mxu0
    %v5135 = vadd.f32 0.0, %v5134
    %v5136 = vpop.f32.mrf.mxu0
    %5137 = vmatprep.mubr.f32.mxu0 0.0
    %5138 = vmatmul.mubr.f32.gmra.mxu0 %v4882
    %v5139 = vpop.f32.mrf.mxu0
    %v5140 = vadd.f32 0.0, %v5139
    %v5141 = vpop.f32.mrf.mxu0
    %5142 = vmatprep.mubr.f32.mxu0 0.0
    %5143 = vmatmul.mubr.f32.gmra.mxu0 %v4885
    %v5144 = vpop.f32.mrf.mxu0
    %v5145 = vadd.f32 0.0, %v5144
    %v5146 = vpop.f32.mrf.mxu0
    %5147 = vmatprep.mubr.f32.mxu0 0.0
    %5148 = vmatmul.mubr.f32.gmra.mxu0 %v4888
    %v5149 = vpop.f32.mrf.mxu0
    %v5150 = vadd.f32 0.0, %v5149
    %v5151 = vpop.f32.mrf.mxu0
    %5152 = vmatprep.mubr.f32.mxu0 0.0
    %5153 = vmatmul.mubr.f32.gmra.mxu0 %v4891
    %v5154 = vpop.f32.mrf.mxu0
    %v5155 = vadd.f32 0.0, %v5154
    %v5156 = vpop.f32.mrf.mxu0
    %5157 = vdwg.mxu0
    %v5158 = vadd.f32 %v4688, %v4960
    %v5159 = vadd.f32 %v4689, %v4965
    %v5160 = vadd.f32 %v4690, %v4970
    %v5161 = vadd.f32 %v4691, %v4975
    %v5162 = vadd.f32 %v4692, %v4980
    %v5163 = vadd.f32 %v4693, %v4985
    %v5164 = vadd.f32 %v4694, %v4990
    %v5165 = vadd.f32 %v4695, %v4995
    %v5166 = vadd.f32 %v4696, %v5000
    %v5167 = vadd.f32 %v4697, %v5005
    %v5168 = vadd.f32 %v4698, %v5010
    %v5169 = vadd.f32 %v4699, %v5015
    %v5170 = vadd.f32 %v4700, %v5020
    %v5171 = vadd.f32 %v4701, %v5025
    %v5172 = vadd.f32 %v4702, %v5030
    %v5173 = vadd.f32 %v4703, %v5035
    %v5174 = vadd.f32 %v4704, %v5040
    %v5175 = vadd.f32 %v4705, %v5045
    %v5176 = vadd.f32 %v4706, %v5050
    %v5177 = vadd.f32 %v4707, %v5055
    %v5178 = vadd.f32 %v4708, %v5060
    %v5179 = vadd.f32 %v4709, %v5065
    %v5180 = vadd.f32 %v4710, %v5070
    %v5181 = vadd.f32 %v4711, %v5075
    %v5182 = vadd.f32 %v4712, %v5080
    %v5183 = vadd.f32 %v4713, %v5085
    %v5184 = vadd.f32 %v4714, %v5090
    %v5185 = vadd.f32 %v4715, %v5095
    %v5186 = vadd.f32 %v4716, %v5100
    %v5187 = vadd.f32 %v4717, %v5105
    %v5188 = vadd.f32 %v4718, %v5110
    %v5189 = vadd.f32 %v4719, %v5115
    %v5190 = vadd.f32 %v4720, %v5120
    %v5191 = vadd.f32 %v4721, %v5125
    %v5192 = vadd.f32 %v4722, %v5130
    %v5193 = vadd.f32 %v4723, %v5135
    %v5194 = vadd.f32 %v4724, %v5140
    %v5195 = vadd.f32 %v4725, %v5145
    %v5196 = vadd.f32 %v4726, %v5150
    %v5197 = vadd.f32 %v4727, %v5155
    %v5198 = vld [vmem:[#allocation3 + $0x28] sm:$0xff]
    %v5199 = vld [vmem:[#allocation3 + $0x30] sm:$0xff]
    %v5200 = vld [vmem:[#allocation3 + $0x38] sm:$0xff]
    %v5201 = vld [vmem:[#allocation3 + $0x40] sm:$0xff]
    %v5202 = vld [vmem:[#allocation3 + $0x48] sm:$0xff]
    %v5203 = vld [vmem:[#allocation3 + $0x50] sm:$0xff]
    %v5204 = vld [vmem:[#allocation3 + $0x58] sm:$0xff]
    %v5205 = vld [vmem:[#allocation3 + $0x60] sm:$0xff]
    %v5206 = vld [vmem:[#allocation3 + $0x68] sm:$0xff]
    %v5207 = vld [vmem:[#allocation3 + $0x70] sm:$0xff]
    %v5208 = vld [vmem:[#allocation3 + $0x78] sm:$0xff]
    %v5209 = vld [vmem:[#allocation3 + $0x80] sm:$0xff]
    %v5210 = vld [vmem:[#allocation3 + $0x88] sm:$0xff]
    %v5211 = vld [vmem:[#allocation3 + $0x90] sm:$0xff]
    %v5212 = vld [vmem:[#allocation3 + $0x98] sm:$0xff]
    %v5213 = vld [vmem:[#allocation3 + $0xa0] sm:$0xff]
    %v5214 = vld [vmem:[#allocation3 + $0xa8] sm:$0xff]
    %v5215 = vld [vmem:[#allocation3 + $0xb0] sm:$0xff]
    %v5216 = vld [vmem:[#allocation3 + $0xb8] sm:$0xff]
    %v5217 = vld [vmem:[#allocation3 + $0xc0] sm:$0xff]
    %v5218 = vld [vmem:[#allocation3 + $0xc8] sm:$0xff]
    %v5219 = vld [vmem:[#allocation3 + $0xd0] sm:$0xff]
    %v5220 = vld [vmem:[#allocation3 + $0xd8] sm:$0xff]
    %v5221 = vld [vmem:[#allocation3 + $0xe0] sm:$0xff]
    %v5222 = vld [vmem:[#allocation3 + $0xe8] sm:$0xff]
    %v5223 = vld [vmem:[#allocation3 + $0xf0] sm:$0xff]
    %v5224 = vld [vmem:[#allocation3 + $0xf8] sm:$0xff]
    %v5225 = vld [vmem:[#allocation3 + $0x100] sm:$0xff]
    %v5226 = vld [vmem:[#allocation3 + $0x108] sm:$0xff]
    %v5227 = vld [vmem:[#allocation3 + $0x110] sm:$0xff]
    %v5228 = vld [vmem:[#allocation3 + $0x118] sm:$0xff]
    %v5229 = vld [vmem:[#allocation3 + $0x120] sm:$0xff]
    %v5230 = vld [vmem:[#allocation3 + $0x128] sm:$0xff]
    %v5231 = vld [vmem:[#allocation3 + $0x130] sm:$0xff]
    %v5232 = vld [vmem:[#allocation3 + $0x138] sm:$0xff]
    %v5233 = vld [vmem:[#allocation3 + $0x140] sm:$0xff]
    %v5234 = vld [vmem:[#allocation3 + $0x148] sm:$0xff]
    %v5235 = vld [vmem:[#allocation3 + $0x150] sm:$0xff]
    %v5236 = vld [vmem:[#allocation3 + $0x158] sm:$0xff]
    %v5237 = vld [vmem:[#allocation3 + $0x160] sm:$0xff]
    %s5238 = scalar_lea.vmem %s6, 224
    %v5239 = vld [vmem:[%s5238] sm:$0xff]
    %v5240 = vld [vmem:[%s5238 + $0x8] sm:$0xff]
    %v5241 = vld [vmem:[%s5238 + $0x10] sm:$0xff]
    %v5242 = vld [vmem:[%s5238 + $0x18] sm:$0xff]
    %v5244 = vsel %vm169, %v5198, 0
    %v5247 = vsel %vm169, %v5199, 0
    %v5250 = vsel %vm169, %v5200, 0
    %v5253 = vsel %vm169, %v5201, 0
    %v5256 = vsel %vm169, %v5202, 0
    %v5259 = vsel %vm169, %v5203, 0
    %v5262 = vsel %vm169, %v5204, 0
    %v5265 = vsel %vm169, %v5205, 0
    %v5268 = vsel %vm169, %v5206, 0
    %v5271 = vsel %vm169, %v5207, 0
    %v5274 = vsel %vm169, %v5208, 0
    %v5277 = vsel %vm169, %v5209, 0
    %v5280 = vsel %vm169, %v5210, 0
    %v5283 = vsel %vm169, %v5211, 0
    %v5286 = vsel %vm169, %v5212, 0
    %v5289 = vsel %vm169, %v5213, 0
    %v5292 = vsel %vm169, %v5214, 0
    %v5295 = vsel %vm169, %v5215, 0
    %v5298 = vsel %vm169, %v5216, 0
    %v5301 = vsel %vm169, %v5217, 0
    %v5304 = vsel %vm169, %v5218, 0
    %v5307 = vsel %vm169, %v5219, 0
    %v5310 = vsel %vm169, %v5220, 0
    %v5313 = vsel %vm169, %v5221, 0
    %v5316 = vsel %vm169, %v5222, 0
    %v5319 = vsel %vm169, %v5223, 0
    %v5322 = vsel %vm169, %v5224, 0
    %v5325 = vsel %vm169, %v5225, 0
    %v5328 = vsel %vm169, %v5226, 0
    %v5331 = vsel %vm169, %v5227, 0
    %v5334 = vsel %vm169, %v5228, 0
    %v5337 = vsel %vm169, %v5229, 0
    %v5340 = vsel %vm169, %v5230, 0
    %v5343 = vsel %vm169, %v5231, 0
    %v5346 = vsel %vm169, %v5232, 0
    %v5349 = vsel %vm169, %v5233, 0
    %v5352 = vsel %vm169, %v5234, 0
    %v5355 = vsel %vm169, %v5235, 0
    %v5358 = vsel %vm169, %v5236, 0
    %v5361 = vsel %vm169, %v5237, 0
    %5363 = vmatprep.subr.mxu0 0.0
    %5364 = vmatpush1.msra.mxu0 0.0
    %5365 = vmatprep.subr.mxu0 0.0
    %5366 = vmatpush1.msra.mxu0 0.0
    %5367 = vmatprep.subr.mxu0 0.0
    %5368 = vmatpush1.msra.mxu0 0.0
    %5369 = vmatprep.subr.mxu0 0.0
    %5370 = vmatpush1.msra.mxu0 0.0
    %5371 = vmatprep.subr.mxu0 0.0
    %5372 = vmatpush1.msra.mxu0 0.0
    %5373 = vmatprep.subr.mxu0 0.0
    %5374 = vmatpush1.msra.mxu0 0.0
    %5375 = vmatprep.subr.mxu0 0.0
    %5376 = vmatpush1.msra.mxu0 0.0
    %5377 = vmatprep.subr.mxu0 0.0
    %5378 = vmatpush1.msra.mxu0 0.0
    %5379 = vmatprep.subr.mxu0 0.0
    %5380 = vmatpush1.msra.mxu0 0.0
    %5381 = vmatprep.subr.mxu0 0.0
    %5382 = vmatpush1.msra.mxu0 0.0
    %5383 = vmatprep.subr.mxu0 0.0
    %5384 = vmatpush1.msra.mxu0 0.0
    %5385 = vmatprep.subr.mxu0 0.0
    %5386 = vmatpush1.msra.mxu0 0.0
    %5387 = vmatprep.subr.mxu0 0.0
    %5388 = vmatpush1.msra.mxu0 %v5242
    %5389 = vmatprep.subr.mxu0 0.0
    %5390 = vmatpush1.msra.mxu0 %v5241
    %5391 = vmatprep.subr.mxu0 0.0
    %5392 = vmatpush1.msra.mxu0 %v5240
    %5393 = vmatprep.subr.mxu0 0.0
    %5394 = vmatpush1.msra.mxu0 %v5239
    %5395 = vmatprep.subr.mxu0 0.0
    %5396 = vmatpush2.msra.mxu0 0.0
    %5397 = vmatprep.subr.mxu0 0.0
    %5398 = vmatpush2.msra.mxu0 0.0
    %5399 = vmatprep.subr.mxu0 0.0
    %5400 = vmatpush2.msra.mxu0 0.0
    %5401 = vmatprep.subr.mxu0 0.0
    %5402 = vmatpush2.msra.mxu0 0.0
    %5403 = vmatprep.subr.mxu0 0.0
    %5404 = vmatpush2.msra.mxu0 0.0
    %5405 = vmatprep.subr.mxu0 0.0
    %5406 = vmatpush2.msra.mxu0 0.0
    %5407 = vmatprep.subr.mxu0 0.0
    %5408 = vmatpush2.msra.mxu0 0.0
    %5409 = vmatprep.subr.mxu0 0.0
    %5410 = vmatpush2.msra.mxu0 0.0
    %5411 = vmatprep.subr.mxu0 0.0
    %5412 = vmatpush2.msra.mxu0 0.0
    %5413 = vmatprep.subr.mxu0 0.0
    %5414 = vmatpush2.msra.mxu0 0.0
    %5415 = vmatprep.subr.mxu0 0.0
    %5416 = vmatpush2.msra.mxu0 0.0
    %5417 = vmatprep.subr.mxu0 0.0
    %5418 = vmatpush2.msra.mxu0 0.0
    %5419 = vmatprep.subr.mxu0 0.0
    %5420 = vmatpush2.msra.mxu0 0.0
    %5421 = vmatprep.subr.mxu0 0.0
    %5422 = vmatpush2.msra.mxu0 0.0
    %5423 = vmatprep.subr.mxu0 0.0
    %5424 = vmatpush2.msra.mxu0 0.0
    %5425 = vmatprep.subr.mxu0 0.0
    %5426 = vmatpush2.msra.mxu0 0.0
    %5427 = vmatprep.mubr.f32.mxu0 0.0
    %5428 = vmatmul.mubr.f32.gmra.mxu0 %v5244
    %v5429 = vpop.f32.mrf.mxu0
    %v5430 = vadd.f32 0.0, %v5429
    %v5431 = vpop.f32.mrf.mxu0
    %5432 = vmatprep.mubr.f32.mxu0 0.0
    %5433 = vmatmul.mubr.f32.gmra.mxu0 %v5247
    %v5434 = vpop.f32.mrf.mxu0
    %v5435 = vadd.f32 0.0, %v5434
    %v5436 = vpop.f32.mrf.mxu0
    %5437 = vmatprep.mubr.f32.mxu0 0.0
    %5438 = vmatmul.mubr.f32.gmra.mxu0 %v5250
    %v5439 = vpop.f32.mrf.mxu0
    %v5440 = vadd.f32 0.0, %v5439
    %v5441 = vpop.f32.mrf.mxu0
    %5442 = vmatprep.mubr.f32.mxu0 0.0
    %5443 = vmatmul.mubr.f32.gmra.mxu0 %v5253
    %v5444 = vpop.f32.mrf.mxu0
    %v5445 = vadd.f32 0.0, %v5444
    %v5446 = vpop.f32.mrf.mxu0
    %5447 = vmatprep.mubr.f32.mxu0 0.0
    %5448 = vmatmul.mubr.f32.gmra.mxu0 %v5256
    %v5449 = vpop.f32.mrf.mxu0
    %v5450 = vadd.f32 0.0, %v5449
    %v5451 = vpop.f32.mrf.mxu0
    %5452 = vmatprep.mubr.f32.mxu0 0.0
    %5453 = vmatmul.mubr.f32.gmra.mxu0 %v5259
    %v5454 = vpop.f32.mrf.mxu0
    %v5455 = vadd.f32 0.0, %v5454
    %v5456 = vpop.f32.mrf.mxu0
    %5457 = vmatprep.mubr.f32.mxu0 0.0
    %5458 = vmatmul.mubr.f32.gmra.mxu0 %v5262
    %v5459 = vpop.f32.mrf.mxu0
    %v5460 = vadd.f32 0.0, %v5459
    %v5461 = vpop.f32.mrf.mxu0
    %5462 = vmatprep.mubr.f32.mxu0 0.0
    %5463 = vmatmul.mubr.f32.gmra.mxu0 %v5265
    %v5464 = vpop.f32.mrf.mxu0
    %v5465 = vadd.f32 0.0, %v5464
    %v5466 = vpop.f32.mrf.mxu0
    %5467 = vmatprep.mubr.f32.mxu0 0.0
    %5468 = vmatmul.mubr.f32.gmra.mxu0 %v5268
    %v5469 = vpop.f32.mrf.mxu0
    %v5470 = vadd.f32 0.0, %v5469
    %v5471 = vpop.f32.mrf.mxu0
    %5472 = vmatprep.mubr.f32.mxu0 0.0
    %5473 = vmatmul.mubr.f32.gmra.mxu0 %v5271
    %v5474 = vpop.f32.mrf.mxu0
    %v5475 = vadd.f32 0.0, %v5474
    %v5476 = vpop.f32.mrf.mxu0
    %5477 = vmatprep.mubr.f32.mxu0 0.0
    %5478 = vmatmul.mubr.f32.gmra.mxu0 %v5274
    %v5479 = vpop.f32.mrf.mxu0
    %v5480 = vadd.f32 0.0, %v5479
    %v5481 = vpop.f32.mrf.mxu0
    %5482 = vmatprep.mubr.f32.mxu0 0.0
    %5483 = vmatmul.mubr.f32.gmra.mxu0 %v5277
    %v5484 = vpop.f32.mrf.mxu0
    %v5485 = vadd.f32 0.0, %v5484
    %v5486 = vpop.f32.mrf.mxu0
    %5487 = vmatprep.mubr.f32.mxu0 0.0
    %5488 = vmatmul.mubr.f32.gmra.mxu0 %v5280
    %v5489 = vpop.f32.mrf.mxu0
    %v5490 = vadd.f32 0.0, %v5489
    %v5491 = vpop.f32.mrf.mxu0
    %5492 = vmatprep.mubr.f32.mxu0 0.0
    %5493 = vmatmul.mubr.f32.gmra.mxu0 %v5283
    %v5494 = vpop.f32.mrf.mxu0
    %v5495 = vadd.f32 0.0, %v5494
    %v5496 = vpop.f32.mrf.mxu0
    %5497 = vmatprep.mubr.f32.mxu0 0.0
    %5498 = vmatmul.mubr.f32.gmra.mxu0 %v5286
    %v5499 = vpop.f32.mrf.mxu0
    %v5500 = vadd.f32 0.0, %v5499
    %v5501 = vpop.f32.mrf.mxu0
    %5502 = vmatprep.mubr.f32.mxu0 0.0
    %5503 = vmatmul.mubr.f32.gmra.mxu0 %v5289
    %v5504 = vpop.f32.mrf.mxu0
    %v5505 = vadd.f32 0.0, %v5504
    %v5506 = vpop.f32.mrf.mxu0
    %5507 = vmatprep.mubr.f32.mxu0 0.0
    %5508 = vmatmul.mubr.f32.gmra.mxu0 %v5292
    %v5509 = vpop.f32.mrf.mxu0
    %v5510 = vadd.f32 0.0, %v5509
    %v5511 = vpop.f32.mrf.mxu0
    %5512 = vmatprep.mubr.f32.mxu0 0.0
    %5513 = vmatmul.mubr.f32.gmra.mxu0 %v5295
    %v5514 = vpop.f32.mrf.mxu0
    %v5515 = vadd.f32 0.0, %v5514
    %v5516 = vpop.f32.mrf.mxu0
    %5517 = vmatprep.mubr.f32.mxu0 0.0
    %5518 = vmatmul.mubr.f32.gmra.mxu0 %v5298
    %v5519 = vpop.f32.mrf.mxu0
    %v5520 = vadd.f32 0.0, %v5519
    %v5521 = vpop.f32.mrf.mxu0
    %5522 = vmatprep.mubr.f32.mxu0 0.0
    %5523 = vmatmul.mubr.f32.gmra.mxu0 %v5301
    %v5524 = vpop.f32.mrf.mxu0
    %v5525 = vadd.f32 0.0, %v5524
    %v5526 = vpop.f32.mrf.mxu0
    %5527 = vmatprep.mubr.f32.mxu0 0.0
    %5528 = vmatmul.mubr.f32.gmra.mxu0 %v5304
    %v5529 = vpop.f32.mrf.mxu0
    %v5530 = vadd.f32 0.0, %v5529
    %v5531 = vpop.f32.mrf.mxu0
    %5532 = vmatprep.mubr.f32.mxu0 0.0
    %5533 = vmatmul.mubr.f32.gmra.mxu0 %v5307
    %v5534 = vpop.f32.mrf.mxu0
    %v5535 = vadd.f32 0.0, %v5534
    %v5536 = vpop.f32.mrf.mxu0
    %5537 = vmatprep.mubr.f32.mxu0 0.0
    %5538 = vmatmul.mubr.f32.gmra.mxu0 %v5310
    %v5539 = vpop.f32.mrf.mxu0
    %v5540 = vadd.f32 0.0, %v5539
    %v5541 = vpop.f32.mrf.mxu0
    %5542 = vmatprep.mubr.f32.mxu0 0.0
    %5543 = vmatmul.mubr.f32.gmra.mxu0 %v5313
    %v5544 = vpop.f32.mrf.mxu0
    %v5545 = vadd.f32 0.0, %v5544
    %v5546 = vpop.f32.mrf.mxu0
    %5547 = vmatprep.mubr.f32.mxu0 0.0
    %5548 = vmatmul.mubr.f32.gmra.mxu0 %v5316
    %v5549 = vpop.f32.mrf.mxu0
    %v5550 = vadd.f32 0.0, %v5549
    %v5551 = vpop.f32.mrf.mxu0
    %5552 = vmatprep.mubr.f32.mxu0 0.0
    %5553 = vmatmul.mubr.f32.gmra.mxu0 %v5319
    %v5554 = vpop.f32.mrf.mxu0
    %v5555 = vadd.f32 0.0, %v5554
    %v5556 = vpop.f32.mrf.mxu0
    %5557 = vmatprep.mubr.f32.mxu0 0.0
    %5558 = vmatmul.mubr.f32.gmra.mxu0 %v5322
    %v5559 = vpop.f32.mrf.mxu0
    %v5560 = vadd.f32 0.0, %v5559
    %v5561 = vpop.f32.mrf.mxu0
    %5562 = vmatprep.mubr.f32.mxu0 0.0
    %5563 = vmatmul.mubr.f32.gmra.mxu0 %v5325
    %v5564 = vpop.f32.mrf.mxu0
    %v5565 = vadd.f32 0.0, %v5564
    %v5566 = vpop.f32.mrf.mxu0
    %5567 = vmatprep.mubr.f32.mxu0 0.0
    %5568 = vmatmul.mubr.f32.gmra.mxu0 %v5328
    %v5569 = vpop.f32.mrf.mxu0
    %v5570 = vadd.f32 0.0, %v5569
    %v5571 = vpop.f32.mrf.mxu0
    %5572 = vmatprep.mubr.f32.mxu0 0.0
    %5573 = vmatmul.mubr.f32.gmra.mxu0 %v5331
    %v5574 = vpop.f32.mrf.mxu0
    %v5575 = vadd.f32 0.0, %v5574
    %v5576 = vpop.f32.mrf.mxu0
    %5577 = vmatprep.mubr.f32.mxu0 0.0
    %5578 = vmatmul.mubr.f32.gmra.mxu0 %v5334
    %v5579 = vpop.f32.mrf.mxu0
    %v5580 = vadd.f32 0.0, %v5579
    %v5581 = vpop.f32.mrf.mxu0
    %5582 = vmatprep.mubr.f32.mxu0 0.0
    %5583 = vmatmul.mubr.f32.gmra.mxu0 %v5337
    %v5584 = vpop.f32.mrf.mxu0
    %v5585 = vadd.f32 0.0, %v5584
    %v5586 = vpop.f32.mrf.mxu0
    %5587 = vmatprep.mubr.f32.mxu0 0.0
    %5588 = vmatmul.mubr.f32.gmra.mxu0 %v5340
    %v5589 = vpop.f32.mrf.mxu0
    %v5590 = vadd.f32 0.0, %v5589
    %v5591 = vpop.f32.mrf.mxu0
    %5592 = vmatprep.mubr.f32.mxu0 0.0
    %5593 = vmatmul.mubr.f32.gmra.mxu0 %v5343
    %v5594 = vpop.f32.mrf.mxu0
    %v5595 = vadd.f32 0.0, %v5594
    %v5596 = vpop.f32.mrf.mxu0
    %5597 = vmatprep.mubr.f32.mxu0 0.0
    %5598 = vmatmul.mubr.f32.gmra.mxu0 %v5346
    %v5599 = vpop.f32.mrf.mxu0
    %v5600 = vadd.f32 0.0, %v5599
    %v5601 = vpop.f32.mrf.mxu0
    %5602 = vmatprep.mubr.f32.mxu0 0.0
    %5603 = vmatmul.mubr.f32.gmra.mxu0 %v5349
    %v5604 = vpop.f32.mrf.mxu0
    %v5605 = vadd.f32 0.0, %v5604
    %v5606 = vpop.f32.mrf.mxu0
    %5607 = vmatprep.mubr.f32.mxu0 0.0
    %5608 = vmatmul.mubr.f32.gmra.mxu0 %v5352
    %v5609 = vpop.f32.mrf.mxu0
    %v5610 = vadd.f32 0.0, %v5609
    %v5611 = vpop.f32.mrf.mxu0
    %5612 = vmatprep.mubr.f32.mxu0 0.0
    %5613 = vmatmul.mubr.f32.gmra.mxu0 %v5355
    %v5614 = vpop.f32.mrf.mxu0
    %v5615 = vadd.f32 0.0, %v5614
    %v5616 = vpop.f32.mrf.mxu0
    %5617 = vmatprep.mubr.f32.mxu0 0.0
    %5618 = vmatmul.mubr.f32.gmra.mxu0 %v5358
    %v5619 = vpop.f32.mrf.mxu0
    %v5620 = vadd.f32 0.0, %v5619
    %v5621 = vpop.f32.mrf.mxu0
    %5622 = vmatprep.mubr.f32.mxu0 0.0
    %5623 = vmatmul.mubr.f32.gmra.mxu0 %v5361
    %v5624 = vpop.f32.mrf.mxu0
    %v5625 = vadd.f32 0.0, %v5624
    %v5626 = vpop.f32.mrf.mxu0
    %5627 = vdwg.mxu0
    %v5628 = vadd.f32 %v5158, %v5430
    %v5629 = vadd.f32 %v5159, %v5435
    %v5630 = vadd.f32 %v5160, %v5440
    %v5631 = vadd.f32 %v5161, %v5445
    %v5632 = vadd.f32 %v5162, %v5450
    %v5633 = vadd.f32 %v5163, %v5455
    %v5634 = vadd.f32 %v5164, %v5460
    %v5635 = vadd.f32 %v5165, %v5465
    %v5636 = vadd.f32 %v5166, %v5470
    %v5637 = vadd.f32 %v5167, %v5475
    %v5638 = vadd.f32 %v5168, %v5480
    %v5639 = vadd.f32 %v5169, %v5485
    %v5640 = vadd.f32 %v5170, %v5490
    %v5641 = vadd.f32 %v5171, %v5495
    %v5642 = vadd.f32 %v5172, %v5500
    %v5643 = vadd.f32 %v5173, %v5505
    %v5644 = vadd.f32 %v5174, %v5510
    %v5645 = vadd.f32 %v5175, %v5515
    %v5646 = vadd.f32 %v5176, %v5520
    %v5647 = vadd.f32 %v5177, %v5525
    %v5648 = vadd.f32 %v5178, %v5530
    %v5649 = vadd.f32 %v5179, %v5535
    %v5650 = vadd.f32 %v5180, %v5540
    %v5651 = vadd.f32 %v5181, %v5545
    %v5652 = vadd.f32 %v5182, %v5550
    %v5653 = vadd.f32 %v5183, %v5555
    %v5654 = vadd.f32 %v5184, %v5560
    %v5655 = vadd.f32 %v5185, %v5565
    %v5656 = vadd.f32 %v5186, %v5570
    %v5657 = vadd.f32 %v5187, %v5575
    %v5658 = vadd.f32 %v5188, %v5580
    %v5659 = vadd.f32 %v5189, %v5585
    %v5660 = vadd.f32 %v5190, %v5590
    %v5661 = vadd.f32 %v5191, %v5595
    %v5662 = vadd.f32 %v5192, %v5600
    %v5663 = vadd.f32 %v5193, %v5605
    %v5664 = vadd.f32 %v5194, %v5610
    %v5665 = vadd.f32 %v5195, %v5615
    %v5666 = vadd.f32 %v5196, %v5620
    %v5667 = vadd.f32 %v5197, %v5625
    %v5668 = vld [vmem:[#allocation3 + $0x29] sm:$0xff]
    %v5669 = vld [vmem:[#allocation3 + $0x31] sm:$0xff]
    %v5670 = vld [vmem:[#allocation3 + $0x39] sm:$0xff]
    %v5671 = vld [vmem:[#allocation3 + $0x41] sm:$0xff]
    %v5672 = vld [vmem:[#allocation3 + $0x49] sm:$0xff]
    %v5673 = vld [vmem:[#allocation3 + $0x51] sm:$0xff]
    %v5674 = vld [vmem:[#allocation3 + $0x59] sm:$0xff]
    %v5675 = vld [vmem:[#allocation3 + $0x61] sm:$0xff]
    %v5676 = vld [vmem:[#allocation3 + $0x69] sm:$0xff]
    %v5677 = vld [vmem:[#allocation3 + $0x71] sm:$0xff]
    %v5678 = vld [vmem:[#allocation3 + $0x79] sm:$0xff]
    %v5679 = vld [vmem:[#allocation3 + $0x81] sm:$0xff]
    %v5680 = vld [vmem:[#allocation3 + $0x89] sm:$0xff]
    %v5681 = vld [vmem:[#allocation3 + $0x91] sm:$0xff]
    %v5682 = vld [vmem:[#allocation3 + $0x99] sm:$0xff]
    %v5683 = vld [vmem:[#allocation3 + $0xa1] sm:$0xff]
    %v5684 = vld [vmem:[#allocation3 + $0xa9] sm:$0xff]
    %v5685 = vld [vmem:[#allocation3 + $0xb1] sm:$0xff]
    %v5686 = vld [vmem:[#allocation3 + $0xb9] sm:$0xff]
    %v5687 = vld [vmem:[#allocation3 + $0xc1] sm:$0xff]
    %v5688 = vld [vmem:[#allocation3 + $0xc9] sm:$0xff]
    %v5689 = vld [vmem:[#allocation3 + $0xd1] sm:$0xff]
    %v5690 = vld [vmem:[#allocation3 + $0xd9] sm:$0xff]
    %v5691 = vld [vmem:[#allocation3 + $0xe1] sm:$0xff]
    %v5692 = vld [vmem:[#allocation3 + $0xe9] sm:$0xff]
    %v5693 = vld [vmem:[#allocation3 + $0xf1] sm:$0xff]
    %v5694 = vld [vmem:[#allocation3 + $0xf9] sm:$0xff]
    %v5695 = vld [vmem:[#allocation3 + $0x101] sm:$0xff]
    %v5696 = vld [vmem:[#allocation3 + $0x109] sm:$0xff]
    %v5697 = vld [vmem:[#allocation3 + $0x111] sm:$0xff]
    %v5698 = vld [vmem:[#allocation3 + $0x119] sm:$0xff]
    %v5699 = vld [vmem:[#allocation3 + $0x121] sm:$0xff]
    %v5700 = vld [vmem:[#allocation3 + $0x129] sm:$0xff]
    %v5701 = vld [vmem:[#allocation3 + $0x131] sm:$0xff]
    %v5702 = vld [vmem:[#allocation3 + $0x139] sm:$0xff]
    %v5703 = vld [vmem:[#allocation3 + $0x141] sm:$0xff]
    %v5704 = vld [vmem:[#allocation3 + $0x149] sm:$0xff]
    %v5705 = vld [vmem:[#allocation3 + $0x151] sm:$0xff]
    %v5706 = vld [vmem:[#allocation3 + $0x159] sm:$0xff]
    %v5707 = vld [vmem:[#allocation3 + $0x161] sm:$0xff]
    %s5708 = scalar_lea.vmem %s6, 256
    %v5709 = vld [vmem:[%s5708] sm:$0xff]
    %v5710 = vld [vmem:[%s5708 + $0x8] sm:$0xff]
    %v5711 = vld [vmem:[%s5708 + $0x10] sm:$0xff]
    %v5712 = vld [vmem:[%s5708 + $0x18] sm:$0xff]
    %v5714 = vsel %vm169, %v5668, 0
    %v5717 = vsel %vm169, %v5669, 0
    %v5720 = vsel %vm169, %v5670, 0
    %v5723 = vsel %vm169, %v5671, 0
    %v5726 = vsel %vm169, %v5672, 0
    %v5729 = vsel %vm169, %v5673, 0
    %v5732 = vsel %vm169, %v5674, 0
    %v5735 = vsel %vm169, %v5675, 0
    %v5738 = vsel %vm169, %v5676, 0
    %v5741 = vsel %vm169, %v5677, 0
    %v5744 = vsel %vm169, %v5678, 0
    %v5747 = vsel %vm169, %v5679, 0
    %v5750 = vsel %vm169, %v5680, 0
    %v5753 = vsel %vm169, %v5681, 0
    %v5756 = vsel %vm169, %v5682, 0
    %v5759 = vsel %vm169, %v5683, 0
    %v5762 = vsel %vm169, %v5684, 0
    %v5765 = vsel %vm169, %v5685, 0
    %v5768 = vsel %vm169, %v5686, 0
    %v5771 = vsel %vm169, %v5687, 0
    %v5774 = vsel %vm169, %v5688, 0
    %v5777 = vsel %vm169, %v5689, 0
    %v5780 = vsel %vm169, %v5690, 0
    %v5783 = vsel %vm169, %v5691, 0
    %v5786 = vsel %vm169, %v5692, 0
    %v5789 = vsel %vm169, %v5693, 0
    %v5792 = vsel %vm169, %v5694, 0
    %v5795 = vsel %vm169, %v5695, 0
    %v5798 = vsel %vm169, %v5696, 0
    %v5801 = vsel %vm169, %v5697, 0
    %v5804 = vsel %vm169, %v5698, 0
    %v5807 = vsel %vm169, %v5699, 0
    %v5810 = vsel %vm169, %v5700, 0
    %v5813 = vsel %vm169, %v5701, 0
    %v5816 = vsel %vm169, %v5702, 0
    %v5819 = vsel %vm169, %v5703, 0
    %v5822 = vsel %vm169, %v5704, 0
    %v5825 = vsel %vm169, %v5705, 0
    %v5828 = vsel %vm169, %v5706, 0
    %v5831 = vsel %vm169, %v5707, 0
    %5833 = vmatprep.subr.mxu0 0.0
    %5834 = vmatpush1.msra.mxu0 0.0
    %5835 = vmatprep.subr.mxu0 0.0
    %5836 = vmatpush1.msra.mxu0 0.0
    %5837 = vmatprep.subr.mxu0 0.0
    %5838 = vmatpush1.msra.mxu0 0.0
    %5839 = vmatprep.subr.mxu0 0.0
    %5840 = vmatpush1.msra.mxu0 0.0
    %5841 = vmatprep.subr.mxu0 0.0
    %5842 = vmatpush1.msra.mxu0 0.0
    %5843 = vmatprep.subr.mxu0 0.0
    %5844 = vmatpush1.msra.mxu0 0.0
    %5845 = vmatprep.subr.mxu0 0.0
    %5846 = vmatpush1.msra.mxu0 0.0
    %5847 = vmatprep.subr.mxu0 0.0
    %5848 = vmatpush1.msra.mxu0 0.0
    %5849 = vmatprep.subr.mxu0 0.0
    %5850 = vmatpush1.msra.mxu0 0.0
    %5851 = vmatprep.subr.mxu0 0.0
    %5852 = vmatpush1.msra.mxu0 0.0
    %5853 = vmatprep.subr.mxu0 0.0
    %5854 = vmatpush1.msra.mxu0 0.0
    %5855 = vmatprep.subr.mxu0 0.0
    %5856 = vmatpush1.msra.mxu0 0.0
    %5857 = vmatprep.subr.mxu0 0.0
    %5858 = vmatpush1.msra.mxu0 %v5712
    %5859 = vmatprep.subr.mxu0 0.0
    %5860 = vmatpush1.msra.mxu0 %v5711
    %5861 = vmatprep.subr.mxu0 0.0
    %5862 = vmatpush1.msra.mxu0 %v5710
    %5863 = vmatprep.subr.mxu0 0.0
    %5864 = vmatpush1.msra.mxu0 %v5709
    %5865 = vmatprep.subr.mxu0 0.0
    %5866 = vmatpush2.msra.mxu0 0.0
    %5867 = vmatprep.subr.mxu0 0.0
    %5868 = vmatpush2.msra.mxu0 0.0
    %5869 = vmatprep.subr.mxu0 0.0
    %5870 = vmatpush2.msra.mxu0 0.0
    %5871 = vmatprep.subr.mxu0 0.0
    %5872 = vmatpush2.msra.mxu0 0.0
    %5873 = vmatprep.subr.mxu0 0.0
    %5874 = vmatpush2.msra.mxu0 0.0
    %5875 = vmatprep.subr.mxu0 0.0
    %5876 = vmatpush2.msra.mxu0 0.0
    %5877 = vmatprep.subr.mxu0 0.0
    %5878 = vmatpush2.msra.mxu0 0.0
    %5879 = vmatprep.subr.mxu0 0.0
    %5880 = vmatpush2.msra.mxu0 0.0
    %5881 = vmatprep.subr.mxu0 0.0
    %5882 = vmatpush2.msra.mxu0 0.0
    %5883 = vmatprep.subr.mxu0 0.0
    %5884 = vmatpush2.msra.mxu0 0.0
    %5885 = vmatprep.subr.mxu0 0.0
    %5886 = vmatpush2.msra.mxu0 0.0
    %5887 = vmatprep.subr.mxu0 0.0
    %5888 = vmatpush2.msra.mxu0 0.0
    %5889 = vmatprep.subr.mxu0 0.0
    %5890 = vmatpush2.msra.mxu0 0.0
    %5891 = vmatprep.subr.mxu0 0.0
    %5892 = vmatpush2.msra.mxu0 0.0
    %5893 = vmatprep.subr.mxu0 0.0
    %5894 = vmatpush2.msra.mxu0 0.0
    %5895 = vmatprep.subr.mxu0 0.0
    %5896 = vmatpush2.msra.mxu0 0.0
    %5897 = vmatprep.mubr.f32.mxu0 0.0
    %5898 = vmatmul.mubr.f32.gmra.mxu0 %v5714
    %v5899 = vpop.f32.mrf.mxu0
    %v5900 = vadd.f32 0.0, %v5899
    %v5901 = vpop.f32.mrf.mxu0
    %5902 = vmatprep.mubr.f32.mxu0 0.0
    %5903 = vmatmul.mubr.f32.gmra.mxu0 %v5717
    %v5904 = vpop.f32.mrf.mxu0
    %v5905 = vadd.f32 0.0, %v5904
    %v5906 = vpop.f32.mrf.mxu0
    %5907 = vmatprep.mubr.f32.mxu0 0.0
    %5908 = vmatmul.mubr.f32.gmra.mxu0 %v5720
    %v5909 = vpop.f32.mrf.mxu0
    %v5910 = vadd.f32 0.0, %v5909
    %v5911 = vpop.f32.mrf.mxu0
    %5912 = vmatprep.mubr.f32.mxu0 0.0
    %5913 = vmatmul.mubr.f32.gmra.mxu0 %v5723
    %v5914 = vpop.f32.mrf.mxu0
    %v5915 = vadd.f32 0.0, %v5914
    %v5916 = vpop.f32.mrf.mxu0
    %5917 = vmatprep.mubr.f32.mxu0 0.0
    %5918 = vmatmul.mubr.f32.gmra.mxu0 %v5726
    %v5919 = vpop.f32.mrf.mxu0
    %v5920 = vadd.f32 0.0, %v5919
    %v5921 = vpop.f32.mrf.mxu0
    %5922 = vmatprep.mubr.f32.mxu0 0.0
    %5923 = vmatmul.mubr.f32.gmra.mxu0 %v5729
    %v5924 = vpop.f32.mrf.mxu0
    %v5925 = vadd.f32 0.0, %v5924
    %v5926 = vpop.f32.mrf.mxu0
    %5927 = vmatprep.mubr.f32.mxu0 0.0
    %5928 = vmatmul.mubr.f32.gmra.mxu0 %v5732
    %v5929 = vpop.f32.mrf.mxu0
    %v5930 = vadd.f32 0.0, %v5929
    %v5931 = vpop.f32.mrf.mxu0
    %5932 = vmatprep.mubr.f32.mxu0 0.0
    %5933 = vmatmul.mubr.f32.gmra.mxu0 %v5735
    %v5934 = vpop.f32.mrf.mxu0
    %v5935 = vadd.f32 0.0, %v5934
    %v5936 = vpop.f32.mrf.mxu0
    %5937 = vmatprep.mubr.f32.mxu0 0.0
    %5938 = vmatmul.mubr.f32.gmra.mxu0 %v5738
    %v5939 = vpop.f32.mrf.mxu0
    %v5940 = vadd.f32 0.0, %v5939
    %v5941 = vpop.f32.mrf.mxu0
    %5942 = vmatprep.mubr.f32.mxu0 0.0
    %5943 = vmatmul.mubr.f32.gmra.mxu0 %v5741
    %v5944 = vpop.f32.mrf.mxu0
    %v5945 = vadd.f32 0.0, %v5944
    %v5946 = vpop.f32.mrf.mxu0
    %5947 = vmatprep.mubr.f32.mxu0 0.0
    %5948 = vmatmul.mubr.f32.gmra.mxu0 %v5744
    %v5949 = vpop.f32.mrf.mxu0
    %v5950 = vadd.f32 0.0, %v5949
    %v5951 = vpop.f32.mrf.mxu0
    %5952 = vmatprep.mubr.f32.mxu0 0.0
    %5953 = vmatmul.mubr.f32.gmra.mxu0 %v5747
    %v5954 = vpop.f32.mrf.mxu0
    %v5955 = vadd.f32 0.0, %v5954
    %v5956 = vpop.f32.mrf.mxu0
    %5957 = vmatprep.mubr.f32.mxu0 0.0
    %5958 = vmatmul.mubr.f32.gmra.mxu0 %v5750
    %v5959 = vpop.f32.mrf.mxu0
    %v5960 = vadd.f32 0.0, %v5959
    %v5961 = vpop.f32.mrf.mxu0
    %5962 = vmatprep.mubr.f32.mxu0 0.0
    %5963 = vmatmul.mubr.f32.gmra.mxu0 %v5753
    %v5964 = vpop.f32.mrf.mxu0
    %v5965 = vadd.f32 0.0, %v5964
    %v5966 = vpop.f32.mrf.mxu0
    %5967 = vmatprep.mubr.f32.mxu0 0.0
    %5968 = vmatmul.mubr.f32.gmra.mxu0 %v5756
    %v5969 = vpop.f32.mrf.mxu0
    %v5970 = vadd.f32 0.0, %v5969
    %v5971 = vpop.f32.mrf.mxu0
    %5972 = vmatprep.mubr.f32.mxu0 0.0
    %5973 = vmatmul.mubr.f32.gmra.mxu0 %v5759
    %v5974 = vpop.f32.mrf.mxu0
    %v5975 = vadd.f32 0.0, %v5974
    %v5976 = vpop.f32.mrf.mxu0
    %5977 = vmatprep.mubr.f32.mxu0 0.0
    %5978 = vmatmul.mubr.f32.gmra.mxu0 %v5762
    %v5979 = vpop.f32.mrf.mxu0
    %v5980 = vadd.f32 0.0, %v5979
    %v5981 = vpop.f32.mrf.mxu0
    %5982 = vmatprep.mubr.f32.mxu0 0.0
    %5983 = vmatmul.mubr.f32.gmra.mxu0 %v5765
    %v5984 = vpop.f32.mrf.mxu0
    %v5985 = vadd.f32 0.0, %v5984
    %v5986 = vpop.f32.mrf.mxu0
    %5987 = vmatprep.mubr.f32.mxu0 0.0
    %5988 = vmatmul.mubr.f32.gmra.mxu0 %v5768
    %v5989 = vpop.f32.mrf.mxu0
    %v5990 = vadd.f32 0.0, %v5989
    %v5991 = vpop.f32.mrf.mxu0
    %5992 = vmatprep.mubr.f32.mxu0 0.0
    %5993 = vmatmul.mubr.f32.gmra.mxu0 %v5771
    %v5994 = vpop.f32.mrf.mxu0
    %v5995 = vadd.f32 0.0, %v5994
    %v5996 = vpop.f32.mrf.mxu0
    %5997 = vmatprep.mubr.f32.mxu0 0.0
    %5998 = vmatmul.mubr.f32.gmra.mxu0 %v5774
    %v5999 = vpop.f32.mrf.mxu0
    %v6000 = vadd.f32 0.0, %v5999
    %v6001 = vpop.f32.mrf.mxu0
    %6002 = vmatprep.mubr.f32.mxu0 0.0
    %6003 = vmatmul.mubr.f32.gmra.mxu0 %v5777
    %v6004 = vpop.f32.mrf.mxu0
    %v6005 = vadd.f32 0.0, %v6004
    %v6006 = vpop.f32.mrf.mxu0
    %6007 = vmatprep.mubr.f32.mxu0 0.0
    %6008 = vmatmul.mubr.f32.gmra.mxu0 %v5780
    %v6009 = vpop.f32.mrf.mxu0
    %v6010 = vadd.f32 0.0, %v6009
    %v6011 = vpop.f32.mrf.mxu0
    %6012 = vmatprep.mubr.f32.mxu0 0.0
    %6013 = vmatmul.mubr.f32.gmra.mxu0 %v5783
    %v6014 = vpop.f32.mrf.mxu0
    %v6015 = vadd.f32 0.0, %v6014
    %v6016 = vpop.f32.mrf.mxu0
    %6017 = vmatprep.mubr.f32.mxu0 0.0
    %6018 = vmatmul.mubr.f32.gmra.mxu0 %v5786
    %v6019 = vpop.f32.mrf.mxu0
    %v6020 = vadd.f32 0.0, %v6019
    %v6021 = vpop.f32.mrf.mxu0
    %6022 = vmatprep.mubr.f32.mxu0 0.0
    %6023 = vmatmul.mubr.f32.gmra.mxu0 %v5789
    %v6024 = vpop.f32.mrf.mxu0
    %v6025 = vadd.f32 0.0, %v6024
    %v6026 = vpop.f32.mrf.mxu0
    %6027 = vmatprep.mubr.f32.mxu0 0.0
    %6028 = vmatmul.mubr.f32.gmra.mxu0 %v5792
    %v6029 = vpop.f32.mrf.mxu0
    %v6030 = vadd.f32 0.0, %v6029
    %v6031 = vpop.f32.mrf.mxu0
    %6032 = vmatprep.mubr.f32.mxu0 0.0
    %6033 = vmatmul.mubr.f32.gmra.mxu0 %v5795
    %v6034 = vpop.f32.mrf.mxu0
    %v6035 = vadd.f32 0.0, %v6034
    %v6036 = vpop.f32.mrf.mxu0
    %6037 = vmatprep.mubr.f32.mxu0 0.0
    %6038 = vmatmul.mubr.f32.gmra.mxu0 %v5798
    %v6039 = vpop.f32.mrf.mxu0
    %v6040 = vadd.f32 0.0, %v6039
    %v6041 = vpop.f32.mrf.mxu0
    %6042 = vmatprep.mubr.f32.mxu0 0.0
    %6043 = vmatmul.mubr.f32.gmra.mxu0 %v5801
    %v6044 = vpop.f32.mrf.mxu0
    %v6045 = vadd.f32 0.0, %v6044
    %v6046 = vpop.f32.mrf.mxu0
    %6047 = vmatprep.mubr.f32.mxu0 0.0
    %6048 = vmatmul.mubr.f32.gmra.mxu0 %v5804
    %v6049 = vpop.f32.mrf.mxu0
    %v6050 = vadd.f32 0.0, %v6049
    %v6051 = vpop.f32.mrf.mxu0
    %6052 = vmatprep.mubr.f32.mxu0 0.0
    %6053 = vmatmul.mubr.f32.gmra.mxu0 %v5807
    %v6054 = vpop.f32.mrf.mxu0
    %v6055 = vadd.f32 0.0, %v6054
    %v6056 = vpop.f32.mrf.mxu0
    %6057 = vmatprep.mubr.f32.mxu0 0.0
    %6058 = vmatmul.mubr.f32.gmra.mxu0 %v5810
    %v6059 = vpop.f32.mrf.mxu0
    %v6060 = vadd.f32 0.0, %v6059
    %v6061 = vpop.f32.mrf.mxu0
    %6062 = vmatprep.mubr.f32.mxu0 0.0
    %6063 = vmatmul.mubr.f32.gmra.mxu0 %v5813
    %v6064 = vpop.f32.mrf.mxu0
    %v6065 = vadd.f32 0.0, %v6064
    %v6066 = vpop.f32.mrf.mxu0
    %6067 = vmatprep.mubr.f32.mxu0 0.0
    %6068 = vmatmul.mubr.f32.gmra.mxu0 %v5816
    %v6069 = vpop.f32.mrf.mxu0
    %v6070 = vadd.f32 0.0, %v6069
    %v6071 = vpop.f32.mrf.mxu0
    %6072 = vmatprep.mubr.f32.mxu0 0.0
    %6073 = vmatmul.mubr.f32.gmra.mxu0 %v5819
    %v6074 = vpop.f32.mrf.mxu0
    %v6075 = vadd.f32 0.0, %v6074
    %v6076 = vpop.f32.mrf.mxu0
    %6077 = vmatprep.mubr.f32.mxu0 0.0
    %6078 = vmatmul.mubr.f32.gmra.mxu0 %v5822
    %v6079 = vpop.f32.mrf.mxu0
    %v6080 = vadd.f32 0.0, %v6079
    %v6081 = vpop.f32.mrf.mxu0
    %6082 = vmatprep.mubr.f32.mxu0 0.0
    %6083 = vmatmul.mubr.f32.gmra.mxu0 %v5825
    %v6084 = vpop.f32.mrf.mxu0
    %v6085 = vadd.f32 0.0, %v6084
    %v6086 = vpop.f32.mrf.mxu0
    %6087 = vmatprep.mubr.f32.mxu0 0.0
    %6088 = vmatmul.mubr.f32.gmra.mxu0 %v5828
    %v6089 = vpop.f32.mrf.mxu0
    %v6090 = vadd.f32 0.0, %v6089
    %v6091 = vpop.f32.mrf.mxu0
    %6092 = vmatprep.mubr.f32.mxu0 0.0
    %6093 = vmatmul.mubr.f32.gmra.mxu0 %v5831
    %v6094 = vpop.f32.mrf.mxu0
    %v6095 = vadd.f32 0.0, %v6094
    %v6096 = vpop.f32.mrf.mxu0
    %6097 = vdwg.mxu0
    %v6098 = vadd.f32 %v5628, %v5900
    %v6099 = vadd.f32 %v5629, %v5905
    %v6100 = vadd.f32 %v5630, %v5910
    %v6101 = vadd.f32 %v5631, %v5915
    %v6102 = vadd.f32 %v5632, %v5920
    %v6103 = vadd.f32 %v5633, %v5925
    %v6104 = vadd.f32 %v5634, %v5930
    %v6105 = vadd.f32 %v5635, %v5935
    %v6106 = vadd.f32 %v5636, %v5940
    %v6107 = vadd.f32 %v5637, %v5945
    %v6108 = vadd.f32 %v5638, %v5950
    %v6109 = vadd.f32 %v5639, %v5955
    %v6110 = vadd.f32 %v5640, %v5960
    %v6111 = vadd.f32 %v5641, %v5965
    %v6112 = vadd.f32 %v5642, %v5970
    %v6113 = vadd.f32 %v5643, %v5975
    %v6114 = vadd.f32 %v5644, %v5980
    %v6115 = vadd.f32 %v5645, %v5985
    %v6116 = vadd.f32 %v5646, %v5990
    %v6117 = vadd.f32 %v5647, %v5995
    %v6118 = vadd.f32 %v5648, %v6000
    %v6119 = vadd.f32 %v5649, %v6005
    %v6120 = vadd.f32 %v5650, %v6010
    %v6121 = vadd.f32 %v5651, %v6015
    %v6122 = vadd.f32 %v5652, %v6020
    %v6123 = vadd.f32 %v5653, %v6025
    %v6124 = vadd.f32 %v5654, %v6030
    %v6125 = vadd.f32 %v5655, %v6035
    %v6126 = vadd.f32 %v5656, %v6040
    %v6127 = vadd.f32 %v5657, %v6045
    %v6128 = vadd.f32 %v5658, %v6050
    %v6129 = vadd.f32 %v5659, %v6055
    %v6130 = vadd.f32 %v5660, %v6060
    %v6131 = vadd.f32 %v5661, %v6065
    %v6132 = vadd.f32 %v5662, %v6070
    %v6133 = vadd.f32 %v5663, %v6075
    %v6134 = vadd.f32 %v5664, %v6080
    %v6135 = vadd.f32 %v5665, %v6085
    %v6136 = vadd.f32 %v5666, %v6090
    %v6137 = vadd.f32 %v5667, %v6095
    %v6138 = vld [vmem:[%s7] sm:$0x1]
    %v6140 = vlaneseq
    %v6141 = vshrl.u32 %v6140, 7
    %v6142 = vsub.s32 0, %v6141
    %v6143 = vrot.slane %v6138, %v6142
    %v6145 = vadd.f32 %v6098, %v6143
    %v6146 = vadd.f32 %v6099, %v6143
    %v6147 = vadd.f32 %v6100, %v6143
    %v6148 = vadd.f32 %v6101, %v6143
    %v6149 = vadd.f32 %v6102, %v6143
    %v6150 = vadd.f32 %v6103, %v6143
    %v6151 = vadd.f32 %v6104, %v6143
    %v6152 = vadd.f32 %v6105, %v6143
    %v6153 = vadd.f32 %v6106, %v6143
    %v6154 = vadd.f32 %v6107, %v6143
    %v6155 = vadd.f32 %v6108, %v6143
    %v6156 = vadd.f32 %v6109, %v6143
    %v6157 = vadd.f32 %v6110, %v6143
    %v6158 = vadd.f32 %v6111, %v6143
    %v6159 = vadd.f32 %v6112, %v6143
    %v6160 = vadd.f32 %v6113, %v6143
    %v6161 = vadd.f32 %v6114, %v6143
    %v6162 = vadd.f32 %v6115, %v6143
    %v6163 = vadd.f32 %v6116, %v6143
    %v6164 = vadd.f32 %v6117, %v6143
    %v6165 = vadd.f32 %v6118, %v6143
    %v6166 = vadd.f32 %v6119, %v6143
    %v6167 = vadd.f32 %v6120, %v6143
    %v6168 = vadd.f32 %v6121, %v6143
    %v6169 = vadd.f32 %v6122, %v6143
    %v6170 = vadd.f32 %v6123, %v6143
    %v6171 = vadd.f32 %v6124, %v6143
    %v6172 = vadd.f32 %v6125, %v6143
    %v6173 = vadd.f32 %v6126, %v6143
    %v6174 = vadd.f32 %v6127, %v6143
    %v6175 = vadd.f32 %v6128, %v6143
    %v6176 = vadd.f32 %v6129, %v6143
    %v6177 = vadd.f32 %v6130, %v6143
    %v6178 = vadd.f32 %v6131, %v6143
    %v6179 = vadd.f32 %v6132, %v6143
    %v6180 = vadd.f32 %v6133, %v6143
    %v6181 = vadd.f32 %v6134, %v6143
    %v6182 = vadd.f32 %v6135, %v6143
    %v6183 = vadd.f32 %v6136, %v6143
    %v6184 = vadd.f32 %v6137, %v6143
    %v6185 = vld [vmem:[%s10] sm:$0x7]
    %v6186 = vld [vmem:[%s8] sm:$0x1]
    %v6187 = vld [vmem:[%s9] sm:$0x1]
    %v6189 = vlaneseq
    %v6190 = vshrl.u32 %v6189, 7
    %v6191 = vsub.s32 0, %v6190
    %v6192 = vrot.slane %v6185, %v6191
    %v6193 = vlaneseq
    %v6194 = vshrl.u32 %v6193, 7
    %v6195 = vsub.s32 1, %v6194
    %v6196 = vrot.slane %v6185, %v6195
    %v6197 = vlaneseq
    %v6198 = vshrl.u32 %v6197, 7
    %v6199 = vsub.s32 2, %v6198
    %v6200 = vrot.slane %v6185, %v6199
    %vm6203 = vcmask 523264
    %v6204 = vsel %vm6203, %v6200, 0
    %6206 = vmatprep.subr.mxu0 0.0
    %6207 = vmatpush1.msra.mxu0 %v6160
    %6208 = vmatprep.subr.mxu0 0.0
    %6209 = vmatpush1.msra.mxu0 %v6159
    %6210 = vmatprep.subr.mxu0 0.0
    %6211 = vmatpush1.msra.mxu0 %v6158
    %6212 = vmatprep.subr.mxu0 0.0
    %6213 = vmatpush1.msra.mxu0 %v6157
    %6214 = vmatprep.subr.mxu0 0.0
    %6215 = vmatpush1.msra.mxu0 %v6156
    %6216 = vmatprep.subr.mxu0 0.0
    %6217 = vmatpush1.msra.mxu0 %v6155
    %6218 = vmatprep.subr.mxu0 0.0
    %6219 = vmatpush1.msra.mxu0 %v6154
    %6220 = vmatprep.subr.mxu0 0.0
    %6221 = vmatpush1.msra.mxu0 %v6153
    %6222 = vmatprep.subr.mxu0 0.0
    %6223 = vmatpush1.msra.mxu0 %v6152
    %6224 = vmatprep.subr.mxu0 0.0
    %6225 = vmatpush1.msra.mxu0 %v6151
    %6226 = vmatprep.subr.mxu0 0.0
    %6227 = vmatpush1.msra.mxu0 %v6150
    %6228 = vmatprep.subr.mxu0 0.0
    %6229 = vmatpush1.msra.mxu0 %v6149
    %6230 = vmatprep.subr.mxu0 0.0
    %6231 = vmatpush1.msra.mxu0 %v6148
    %6232 = vmatprep.subr.mxu0 0.0
    %6233 = vmatpush1.msra.mxu0 %v6147
    %6234 = vmatprep.subr.mxu0 0.0
    %6235 = vmatpush1.msra.mxu0 %v6146
    %6236 = vmatprep.subr.mxu0 0.0
    %6237 = vmatpush1.msra.mxu0 %v6145
    %6238 = vmatprep.subr.mxu0 0.0
    %6239 = vmatpush2.msra.mxu0 %v6176
    %6240 = vmatprep.subr.mxu0 0.0
    %6241 = vmatpush2.msra.mxu0 %v6175
    %6242 = vmatprep.subr.mxu0 0.0
    %6243 = vmatpush2.msra.mxu0 %v6174
    %6244 = vmatprep.subr.mxu0 0.0
    %6245 = vmatpush2.msra.mxu0 %v6173
    %6246 = vmatprep.subr.mxu0 0.0
    %6247 = vmatpush2.msra.mxu0 %v6172
    %6248 = vmatprep.subr.mxu0 0.0
    %6249 = vmatpush2.msra.mxu0 %v6171
    %6250 = vmatprep.subr.mxu0 0.0
    %6251 = vmatpush2.msra.mxu0 %v6170
    %6252 = vmatprep.subr.mxu0 0.0
    %6253 = vmatpush2.msra.mxu0 %v6169
    %6254 = vmatprep.subr.mxu0 0.0
    %6255 = vmatpush2.msra.mxu0 %v6168
    %6256 = vmatprep.subr.mxu0 0.0
    %6257 = vmatpush2.msra.mxu0 %v6167
    %6258 = vmatprep.subr.mxu0 0.0
    %6259 = vmatpush2.msra.mxu0 %v6166
    %6260 = vmatprep.subr.mxu0 0.0
    %6261 = vmatpush2.msra.mxu0 %v6165
    %6262 = vmatprep.subr.mxu0 0.0
    %6263 = vmatpush2.msra.mxu0 %v6164
    %6264 = vmatprep.subr.mxu0 0.0
    %6265 = vmatpush2.msra.mxu0 %v6163
    %6266 = vmatprep.subr.mxu0 0.0
    %6267 = vmatpush2.msra.mxu0 %v6162
    %6268 = vmatprep.subr.mxu0 0.0
    %6269 = vmatpush2.msra.mxu0 %v6161
    %6270 = vmatprep.mubr.f32.mxu0 %v6196
    %6271 = vmatmul.mubr.f32.gmra.mxu0 %v6192
    %v6272 = vpop.f32.mrf.mxu0
    %v6273 = vadd.f32 0.0, %v6272
    %v6274 = vpop.f32.mrf.mxu0
    %6275 = vdwg.mxu0
    %6276 = vmatprep.subr.mxu0 0.0
    %6277 = vmatpush1.msra.mxu0 0.0
    %6278 = vmatprep.subr.mxu0 0.0
    %6279 = vmatpush1.msra.mxu0 0.0
    %6280 = vmatprep.subr.mxu0 0.0
    %6281 = vmatpush1.msra.mxu0 0.0
    %6282 = vmatprep.subr.mxu0 0.0
    %6283 = vmatpush1.msra.mxu0 0.0
    %6284 = vmatprep.subr.mxu0 0.0
    %6285 = vmatpush1.msra.mxu0 0.0
    %6286 = vmatprep.subr.mxu0 0.0
    %6287 = vmatpush1.msra.mxu0 0.0
    %6288 = vmatprep.subr.mxu0 0.0
    %6289 = vmatpush1.msra.mxu0 0.0
    %6290 = vmatprep.subr.mxu0 0.0
    %6291 = vmatpush1.msra.mxu0 0.0
    %6292 = vmatprep.subr.mxu0 0.0
    %6293 = vmatpush1.msra.mxu0 %v6184
    %6294 = vmatprep.subr.mxu0 0.0
    %6295 = vmatpush1.msra.mxu0 %v6183
    %6296 = vmatprep.subr.mxu0 0.0
    %6297 = vmatpush1.msra.mxu0 %v6182
    %6298 = vmatprep.subr.mxu0 0.0
    %6299 = vmatpush1.msra.mxu0 %v6181
    %6300 = vmatprep.subr.mxu0 0.0
    %6301 = vmatpush1.msra.mxu0 %v6180
    %6302 = vmatprep.subr.mxu0 0.0
    %6303 = vmatpush1.msra.mxu0 %v6179
    %6304 = vmatprep.subr.mxu0 0.0
    %6305 = vmatpush1.msra.mxu0 %v6178
    %6306 = vmatprep.subr.mxu0 0.0
    %6307 = vmatpush1.msra.mxu0 %v6177
    %6308 = vmatprep.subr.mxu0 0.0
    %6309 = vmatpush2.msra.mxu0 0.0
    %6310 = vmatprep.subr.mxu0 0.0
    %6311 = vmatpush2.msra.mxu0 0.0
    %6312 = vmatprep.subr.mxu0 0.0
    %6313 = vmatpush2.msra.mxu0 0.0
    %6314 = vmatprep.subr.mxu0 0.0
    %6315 = vmatpush2.msra.mxu0 0.0
    %6316 = vmatprep.subr.mxu0 0.0
    %6317 = vmatpush2.msra.mxu0 0.0
    %6318 = vmatprep.subr.mxu0 0.0
    %6319 = vmatpush2.msra.mxu0 0.0
    %6320 = vmatprep.subr.mxu0 0.0
    %6321 = vmatpush2.msra.mxu0 0.0
    %6322 = vmatprep.subr.mxu0 0.0
    %6323 = vmatpush2.msra.mxu0 0.0
    %6324 = vmatprep.subr.mxu0 0.0
    %6325 = vmatpush2.msra.mxu0 0.0
    %6326 = vmatprep.subr.mxu0 0.0
    %6327 = vmatpush2.msra.mxu0 0.0
    %6328 = vmatprep.subr.mxu0 0.0
    %6329 = vmatpush2.msra.mxu0 0.0
    %6330 = vmatprep.subr.mxu0 0.0
    %6331 = vmatpush2.msra.mxu0 0.0
    %6332 = vmatprep.subr.mxu0 0.0
    %6333 = vmatpush2.msra.mxu0 0.0
    %6334 = vmatprep.subr.mxu0 0.0
    %6335 = vmatpush2.msra.mxu0 0.0
    %6336 = vmatprep.subr.mxu0 0.0
    %6337 = vmatpush2.msra.mxu0 0.0
    %6338 = vmatprep.subr.mxu0 0.0
    %6339 = vmatpush2.msra.mxu0 0.0
    %6340 = vmatprep.mubr.f32.mxu0 0.0
    %6341 = vmatmul.mubr.f32.gmra.mxu0 %v6204
    %v6342 = vpop.f32.mrf.mxu0
    %v6343 = vadd.f32 %v6273, %v6342
    %v6344 = vpop.f32.mrf.mxu0
    %6345 = vdwg.mxu0
    %v6346 = vmul.f32 %v6145, %v6145
    %v6347 = vmul.f32 %v6146, %v6146
    %v6348 = vmul.f32 %v6147, %v6147
    %v6349 = vmul.f32 %v6148, %v6148
    %v6350 = vmul.f32 %v6149, %v6149
    %v6351 = vmul.f32 %v6150, %v6150
    %v6352 = vmul.f32 %v6151, %v6151
    %v6353 = vmul.f32 %v6152, %v6152
    %v6354 = vmul.f32 %v6153, %v6153
    %v6355 = vmul.f32 %v6154, %v6154
    %v6356 = vmul.f32 %v6155, %v6155
    %v6357 = vmul.f32 %v6156, %v6156
    %v6358 = vmul.f32 %v6157, %v6157
    %v6359 = vmul.f32 %v6158, %v6158
    %v6360 = vmul.f32 %v6159, %v6159
    %v6361 = vmul.f32 %v6160, %v6160
    %v6362 = vmul.f32 %v6161, %v6161
    %v6363 = vmul.f32 %v6162, %v6162
    %v6364 = vmul.f32 %v6163, %v6163
    %v6365 = vmul.f32 %v6164, %v6164
    %v6366 = vmul.f32 %v6165, %v6165
    %v6367 = vmul.f32 %v6166, %v6166
    %v6368 = vmul.f32 %v6167, %v6167
    %v6369 = vmul.f32 %v6168, %v6168
    %v6370 = vmul.f32 %v6169, %v6169
    %v6371 = vmul.f32 %v6170, %v6170
    %v6372 = vmul.f32 %v6171, %v6171
    %v6373 = vmul.f32 %v6172, %v6172
    %v6374 = vmul.f32 %v6173, %v6173
    %v6375 = vmul.f32 %v6174, %v6174
    %v6376 = vmul.f32 %v6175, %v6175
    %v6377 = vmul.f32 %v6176, %v6176
    %v6378 = vmul.f32 %v6177, %v6177
    %v6379 = vmul.f32 %v6178, %v6178
    %v6380 = vmul.f32 %v6179, %v6179
    %v6381 = vmul.f32 %v6180, %v6180
    %v6382 = vmul.f32 %v6181, %v6181
    %v6383 = vmul.f32 %v6182, %v6182
    %v6384 = vmul.f32 %v6183, %v6183
    %v6385 = vmul.f32 %v6184, %v6184
    %6386 = vmatprep.subr.mxu0 0.0
    %6387 = vmatpush1.msra.mxu0 %v6361
    %6388 = vmatprep.subr.mxu0 0.0
    %6389 = vmatpush1.msra.mxu0 %v6360
    %6390 = vmatprep.subr.mxu0 0.0
    %6391 = vmatpush1.msra.mxu0 %v6359
    %6392 = vmatprep.subr.mxu0 0.0
    %6393 = vmatpush1.msra.mxu0 %v6358
    %6394 = vmatprep.subr.mxu0 0.0
    %6395 = vmatpush1.msra.mxu0 %v6357
    %6396 = vmatprep.subr.mxu0 0.0
    %6397 = vmatpush1.msra.mxu0 %v6356
    %6398 = vmatprep.subr.mxu0 0.0
    %6399 = vmatpush1.msra.mxu0 %v6355
    %6400 = vmatprep.subr.mxu0 0.0
    %6401 = vmatpush1.msra.mxu0 %v6354
    %6402 = vmatprep.subr.mxu0 0.0
    %6403 = vmatpush1.msra.mxu0 %v6353
    %6404 = vmatprep.subr.mxu0 0.0
    %6405 = vmatpush1.msra.mxu0 %v6352
    %6406 = vmatprep.subr.mxu0 0.0
    %6407 = vmatpush1.msra.mxu0 %v6351
    %6408 = vmatprep.subr.mxu0 0.0
    %6409 = vmatpush1.msra.mxu0 %v6350
    %6410 = vmatprep.subr.mxu0 0.0
    %6411 = vmatpush1.msra.mxu0 %v6349
    %6412 = vmatprep.subr.mxu0 0.0
    %6413 = vmatpush1.msra.mxu0 %v6348
    %6414 = vmatprep.subr.mxu0 0.0
    %6415 = vmatpush1.msra.mxu0 %v6347
    %6416 = vmatprep.subr.mxu0 0.0
    %6417 = vmatpush1.msra.mxu0 %v6346
    %6418 = vmatprep.subr.mxu0 0.0
    %6419 = vmatpush2.msra.mxu0 %v6377
    %6420 = vmatprep.subr.mxu0 0.0
    %6421 = vmatpush2.msra.mxu0 %v6376
    %6422 = vmatprep.subr.mxu0 0.0
    %6423 = vmatpush2.msra.mxu0 %v6375
    %6424 = vmatprep.subr.mxu0 0.0
    %6425 = vmatpush2.msra.mxu0 %v6374
    %6426 = vmatprep.subr.mxu0 0.0
    %6427 = vmatpush2.msra.mxu0 %v6373
    %6428 = vmatprep.subr.mxu0 0.0
    %6429 = vmatpush2.msra.mxu0 %v6372
    %6430 = vmatprep.subr.mxu0 0.0
    %6431 = vmatpush2.msra.mxu0 %v6371
    %6432 = vmatprep.subr.mxu0 0.0
    %6433 = vmatpush2.msra.mxu0 %v6370
    %6434 = vmatprep.subr.mxu0 0.0
    %6435 = vmatpush2.msra.mxu0 %v6369
    %6436 = vmatprep.subr.mxu0 0.0
    %6437 = vmatpush2.msra.mxu0 %v6368
    %6438 = vmatprep.subr.mxu0 0.0
    %6439 = vmatpush2.msra.mxu0 %v6367
    %6440 = vmatprep.subr.mxu0 0.0
    %6441 = vmatpush2.msra.mxu0 %v6366
    %6442 = vmatprep.subr.mxu0 0.0
    %6443 = vmatpush2.msra.mxu0 %v6365
    %6444 = vmatprep.subr.mxu0 0.0
    %6445 = vmatpush2.msra.mxu0 %v6364
    %6446 = vmatprep.subr.mxu0 0.0
    %6447 = vmatpush2.msra.mxu0 %v6363
    %6448 = vmatprep.subr.mxu0 0.0
    %6449 = vmatpush2.msra.mxu0 %v6362
    %6450 = vmatprep.mubr.f32.mxu0 %v6196
    %6451 = vmatmul.mubr.f32.gmra.mxu0 %v6192
    %v6452 = vpop.f32.mrf.mxu0
    %v6453 = vadd.f32 0.0, %v6452
    %v6454 = vpop.f32.mrf.mxu0
    %6455 = vdwg.mxu0
    %6456 = vmatprep.subr.mxu0 0.0
    %6457 = vmatpush1.msra.mxu0 0.0
    %6458 = vmatprep.subr.mxu0 0.0
    %6459 = vmatpush1.msra.mxu0 0.0
    %6460 = vmatprep.subr.mxu0 0.0
    %6461 = vmatpush1.msra.mxu0 0.0
    %6462 = vmatprep.subr.mxu0 0.0
    %6463 = vmatpush1.msra.mxu0 0.0
    %6464 = vmatprep.subr.mxu0 0.0
    %6465 = vmatpush1.msra.mxu0 0.0
    %6466 = vmatprep.subr.mxu0 0.0
    %6467 = vmatpush1.msra.mxu0 0.0
    %6468 = vmatprep.subr.mxu0 0.0
    %6469 = vmatpush1.msra.mxu0 0.0
    %6470 = vmatprep.subr.mxu0 0.0
    %6471 = vmatpush1.msra.mxu0 0.0
    %6472 = vmatprep.subr.mxu0 0.0
    %6473 = vmatpush1.msra.mxu0 %v6385
    %6474 = vmatprep.subr.mxu0 0.0
    %6475 = vmatpush1.msra.mxu0 %v6384
    %6476 = vmatprep.subr.mxu0 0.0
    %6477 = vmatpush1.msra.mxu0 %v6383
    %6478 = vmatprep.subr.mxu0 0.0
    %6479 = vmatpush1.msra.mxu0 %v6382
    %6480 = vmatprep.subr.mxu0 0.0
    %6481 = vmatpush1.msra.mxu0 %v6381
    %6482 = vmatprep.subr.mxu0 0.0
    %6483 = vmatpush1.msra.mxu0 %v6380
    %6484 = vmatprep.subr.mxu0 0.0
    %6485 = vmatpush1.msra.mxu0 %v6379
    %6486 = vmatprep.subr.mxu0 0.0
    %6487 = vmatpush1.msra.mxu0 %v6378
    %6488 = vmatprep.subr.mxu0 0.0
    %6489 = vmatpush2.msra.mxu0 0.0
    %6490 = vmatprep.subr.mxu0 0.0
    %6491 = vmatpush2.msra.mxu0 0.0
    %6492 = vmatprep.subr.mxu0 0.0
    %6493 = vmatpush2.msra.mxu0 0.0
    %6494 = vmatprep.subr.mxu0 0.0
    %6495 = vmatpush2.msra.mxu0 0.0
    %6496 = vmatprep.subr.mxu0 0.0
    %6497 = vmatpush2.msra.mxu0 0.0
    %6498 = vmatprep.subr.mxu0 0.0
    %6499 = vmatpush2.msra.mxu0 0.0
    %6500 = vmatprep.subr.mxu0 0.0
    %6501 = vmatpush2.msra.mxu0 0.0
    %6502 = vmatprep.subr.mxu0 0.0
    %6503 = vmatpush2.msra.mxu0 0.0
    %6504 = vmatprep.subr.mxu0 0.0
    %6505 = vmatpush2.msra.mxu0 0.0
    %6506 = vmatprep.subr.mxu0 0.0
    %6507 = vmatpush2.msra.mxu0 0.0
    %6508 = vmatprep.subr.mxu0 0.0
    %6509 = vmatpush2.msra.mxu0 0.0
    %6510 = vmatprep.subr.mxu0 0.0
    %6511 = vmatpush2.msra.mxu0 0.0
    %6512 = vmatprep.subr.mxu0 0.0
    %6513 = vmatpush2.msra.mxu0 0.0
    %6514 = vmatprep.subr.mxu0 0.0
    %6515 = vmatpush2.msra.mxu0 0.0
    %6516 = vmatprep.subr.mxu0 0.0
    %6517 = vmatpush2.msra.mxu0 0.0
    %6518 = vmatprep.subr.mxu0 0.0
    %6519 = vmatpush2.msra.mxu0 0.0
    %6520 = vmatprep.mubr.f32.mxu0 0.0
    %6521 = vmatmul.mubr.f32.gmra.mxu0 %v6204
    %v6522 = vpop.f32.mrf.mxu0
    %v6523 = vadd.f32 %v6453, %v6522
    %v6524 = vpop.f32.mrf.mxu0
    %6525 = vdwg.mxu0
    %v6526 = vmul.f32 %v6343, 0.0078125
    %v6527 = vmul.f32 %v6523, 0.0078125
    %v6528 = vmul.f32 %v6526, %v6526
    %v6529 = vsub.f32 %v6527, %v6528
    %v6530 = vmax.f32 %v6529, 0.0
    %v6531 = vlaneseq
    %v6532 = vshrl.u32 %v6531, 7
    %v6533 = vsub.s32 0, %v6532
    %v6534 = vrot.slane %v6526, %v6533
    %v6535 = vsub.f32 %v6145, %v6534
    %v6536 = vsub.f32 %v6146, %v6534
    %v6537 = vsub.f32 %v6147, %v6534
    %v6538 = vsub.f32 %v6148, %v6534
    %v6539 = vsub.f32 %v6149, %v6534
    %v6540 = vsub.f32 %v6150, %v6534
    %v6541 = vsub.f32 %v6151, %v6534
    %v6542 = vsub.f32 %v6152, %v6534
    %v6543 = vsub.f32 %v6153, %v6534
    %v6544 = vsub.f32 %v6154, %v6534
    %v6545 = vsub.f32 %v6155, %v6534
    %v6546 = vsub.f32 %v6156, %v6534
    %v6547 = vsub.f32 %v6157, %v6534
    %v6548 = vsub.f32 %v6158, %v6534
    %v6549 = vsub.f32 %v6159, %v6534
    %v6550 = vsub.f32 %v6160, %v6534
    %v6551 = vsub.f32 %v6161, %v6534
    %v6552 = vsub.f32 %v6162, %v6534
    %v6553 = vsub.f32 %v6163, %v6534
    %v6554 = vsub.f32 %v6164, %v6534
    %v6555 = vsub.f32 %v6165, %v6534
    %v6556 = vsub.f32 %v6166, %v6534
    %v6557 = vsub.f32 %v6167, %v6534
    %v6558 = vsub.f32 %v6168, %v6534
    %v6559 = vsub.f32 %v6169, %v6534
    %v6560 = vsub.f32 %v6170, %v6534
    %v6561 = vsub.f32 %v6171, %v6534
    %v6562 = vsub.f32 %v6172, %v6534
    %v6563 = vsub.f32 %v6173, %v6534
    %v6564 = vsub.f32 %v6174, %v6534
    %v6565 = vsub.f32 %v6175, %v6534
    %v6566 = vsub.f32 %v6176, %v6534
    %v6567 = vsub.f32 %v6177, %v6534
    %v6568 = vsub.f32 %v6178, %v6534
    %v6569 = vsub.f32 %v6179, %v6534
    %v6570 = vsub.f32 %v6180, %v6534
    %v6571 = vsub.f32 %v6181, %v6534
    %v6572 = vsub.f32 %v6182, %v6534
    %v6573 = vsub.f32 %v6183, %v6534
    %v6574 = vsub.f32 %v6184, %v6534
    %v6575 = vadd.f32 %v6530, 1e-05
    %v6576 = vrsqrt.pop %v6575
    %v6577 = vlaneseq
    %v6578 = vshrl.u32 %v6577, 7
    %v6579 = vsub.s32 0, %v6578
    %v6580 = vrot.slane %v6576, %v6579
    %v6581 = vmul.f32 %v6535, %v6580
    %v6582 = vmul.f32 %v6536, %v6580
    %v6583 = vmul.f32 %v6537, %v6580
    %v6584 = vmul.f32 %v6538, %v6580
    %v6585 = vmul.f32 %v6539, %v6580
    %v6586 = vmul.f32 %v6540, %v6580
    %v6587 = vmul.f32 %v6541, %v6580
    %v6588 = vmul.f32 %v6542, %v6580
    %v6589 = vmul.f32 %v6543, %v6580
    %v6590 = vmul.f32 %v6544, %v6580
    %v6591 = vmul.f32 %v6545, %v6580
    %v6592 = vmul.f32 %v6546, %v6580
    %v6593 = vmul.f32 %v6547, %v6580
    %v6594 = vmul.f32 %v6548, %v6580
    %v6595 = vmul.f32 %v6549, %v6580
    %v6596 = vmul.f32 %v6550, %v6580
    %v6597 = vmul.f32 %v6551, %v6580
    %v6598 = vmul.f32 %v6552, %v6580
    %v6599 = vmul.f32 %v6553, %v6580
    %v6600 = vmul.f32 %v6554, %v6580
    %v6601 = vmul.f32 %v6555, %v6580
    %v6602 = vmul.f32 %v6556, %v6580
    %v6603 = vmul.f32 %v6557, %v6580
    %v6604 = vmul.f32 %v6558, %v6580
    %v6605 = vmul.f32 %v6559, %v6580
    %v6606 = vmul.f32 %v6560, %v6580
    %v6607 = vmul.f32 %v6561, %v6580
    %v6608 = vmul.f32 %v6562, %v6580
    %v6609 = vmul.f32 %v6563, %v6580
    %v6610 = vmul.f32 %v6564, %v6580
    %v6611 = vmul.f32 %v6565, %v6580
    %v6612 = vmul.f32 %v6566, %v6580
    %v6613 = vmul.f32 %v6567, %v6580
    %v6614 = vmul.f32 %v6568, %v6580
    %v6615 = vmul.f32 %v6569, %v6580
    %v6616 = vmul.f32 %v6570, %v6580
    %v6617 = vmul.f32 %v6571, %v6580
    %v6618 = vmul.f32 %v6572, %v6580
    %v6619 = vmul.f32 %v6573, %v6580
    %v6620 = vmul.f32 %v6574, %v6580
    %v6622 = vlaneseq
    %v6623 = vshrl.u32 %v6622, 7
    %v6624 = vsub.s32 0, %v6623
    %v6625 = vrot.slane %v6186, %v6624
    %v6627 = vmul.f32 %v6581, %v6625
    %v6628 = vmul.f32 %v6582, %v6625
    %v6629 = vmul.f32 %v6583, %v6625
    %v6630 = vmul.f32 %v6584, %v6625
    %v6631 = vmul.f32 %v6585, %v6625
    %v6632 = vmul.f32 %v6586, %v6625
    %v6633 = vmul.f32 %v6587, %v6625
    %v6634 = vmul.f32 %v6588, %v6625
    %v6635 = vmul.f32 %v6589, %v6625
    %v6636 = vmul.f32 %v6590, %v6625
    %v6637 = vmul.f32 %v6591, %v6625
    %v6638 = vmul.f32 %v6592, %v6625
    %v6639 = vmul.f32 %v6593, %v6625
    %v6640 = vmul.f32 %v6594, %v6625
    %v6641 = vmul.f32 %v6595, %v6625
    %v6642 = vmul.f32 %v6596, %v6625
    %v6643 = vmul.f32 %v6597, %v6625
    %v6644 = vmul.f32 %v6598, %v6625
    %v6645 = vmul.f32 %v6599, %v6625
    %v6646 = vmul.f32 %v6600, %v6625
    %v6647 = vmul.f32 %v6601, %v6625
    %v6648 = vmul.f32 %v6602, %v6625
    %v6649 = vmul.f32 %v6603, %v6625
    %v6650 = vmul.f32 %v6604, %v6625
    %v6651 = vmul.f32 %v6605, %v6625
    %v6652 = vmul.f32 %v6606, %v6625
    %v6653 = vmul.f32 %v6607, %v6625
    %v6654 = vmul.f32 %v6608, %v6625
    %v6655 = vmul.f32 %v6609, %v6625
    %v6656 = vmul.f32 %v6610, %v6625
    %v6657 = vmul.f32 %v6611, %v6625
    %v6658 = vmul.f32 %v6612, %v6625
    %v6659 = vmul.f32 %v6613, %v6625
    %v6660 = vmul.f32 %v6614, %v6625
    %v6661 = vmul.f32 %v6615, %v6625
    %v6662 = vmul.f32 %v6616, %v6625
    %v6663 = vmul.f32 %v6617, %v6625
    %v6664 = vmul.f32 %v6618, %v6625
    %v6665 = vmul.f32 %v6619, %v6625
    %v6666 = vmul.f32 %v6620, %v6625
    %v6668 = vlaneseq
    %v6669 = vshrl.u32 %v6668, 7
    %v6670 = vsub.s32 0, %v6669
    %v6671 = vrot.slane %v6187, %v6670
    %v6673 = vadd.f32 %v6627, %v6671
    %v6674 = vadd.f32 %v6628, %v6671
    %v6675 = vadd.f32 %v6629, %v6671
    %v6676 = vadd.f32 %v6630, %v6671
    %v6677 = vadd.f32 %v6631, %v6671
    %v6678 = vadd.f32 %v6632, %v6671
    %v6679 = vadd.f32 %v6633, %v6671
    %v6680 = vadd.f32 %v6634, %v6671
    %v6681 = vadd.f32 %v6635, %v6671
    %v6682 = vadd.f32 %v6636, %v6671
    %v6683 = vadd.f32 %v6637, %v6671
    %v6684 = vadd.f32 %v6638, %v6671
    %v6685 = vadd.f32 %v6639, %v6671
    %v6686 = vadd.f32 %v6640, %v6671
    %v6687 = vadd.f32 %v6641, %v6671
    %v6688 = vadd.f32 %v6642, %v6671
    %v6689 = vadd.f32 %v6643, %v6671
    %v6690 = vadd.f32 %v6644, %v6671
    %v6691 = vadd.f32 %v6645, %v6671
    %v6692 = vadd.f32 %v6646, %v6671
    %v6693 = vadd.f32 %v6647, %v6671
    %v6694 = vadd.f32 %v6648, %v6671
    %v6695 = vadd.f32 %v6649, %v6671
    %v6696 = vadd.f32 %v6650, %v6671
    %v6697 = vadd.f32 %v6651, %v6671
    %v6698 = vadd.f32 %v6652, %v6671
    %v6699 = vadd.f32 %v6653, %v6671
    %v6700 = vadd.f32 %v6654, %v6671
    %v6701 = vadd.f32 %v6655, %v6671
    %v6702 = vadd.f32 %v6656, %v6671
    %v6703 = vadd.f32 %v6657, %v6671
    %v6704 = vadd.f32 %v6658, %v6671
    %v6705 = vadd.f32 %v6659, %v6671
    %v6706 = vadd.f32 %v6660, %v6671
    %v6707 = vadd.f32 %v6661, %v6671
    %v6708 = vadd.f32 %v6662, %v6671
    %v6709 = vadd.f32 %v6663, %v6671
    %v6710 = vadd.f32 %v6664, %v6671
    %v6711 = vadd.f32 %v6665, %v6671
    %v6712 = vadd.f32 %v6666, %v6671
    %v6713 = vmax.f32 %v6673, 0.0
    %v6714 = vmax.f32 %v6674, 0.0
    %v6715 = vmax.f32 %v6675, 0.0
    %v6716 = vmax.f32 %v6676, 0.0
    %v6717 = vmax.f32 %v6677, 0.0
    %v6718 = vmax.f32 %v6678, 0.0
    %v6719 = vmax.f32 %v6679, 0.0
    %v6720 = vmax.f32 %v6680, 0.0
    %v6721 = vmax.f32 %v6681, 0.0
    %v6722 = vmax.f32 %v6682, 0.0
    %v6723 = vmax.f32 %v6683, 0.0
    %v6724 = vmax.f32 %v6684, 0.0
    %v6725 = vmax.f32 %v6685, 0.0
    %v6726 = vmax.f32 %v6686, 0.0
    %v6727 = vmax.f32 %v6687, 0.0
    %v6728 = vmax.f32 %v6688, 0.0
    %v6729 = vmax.f32 %v6689, 0.0
    %v6730 = vmax.f32 %v6690, 0.0
    %v6731 = vmax.f32 %v6691, 0.0
    %v6732 = vmax.f32 %v6692, 0.0
    %v6733 = vmax.f32 %v6693, 0.0
    %v6734 = vmax.f32 %v6694, 0.0
    %v6735 = vmax.f32 %v6695, 0.0
    %v6736 = vmax.f32 %v6696, 0.0
    %v6737 = vmax.f32 %v6697, 0.0
    %v6738 = vmax.f32 %v6698, 0.0
    %v6739 = vmax.f32 %v6699, 0.0
    %v6740 = vmax.f32 %v6700, 0.0
    %v6741 = vmax.f32 %v6701, 0.0
    %v6742 = vmax.f32 %v6702, 0.0
    %v6743 = vmax.f32 %v6703, 0.0
    %v6744 = vmax.f32 %v6704, 0.0
    %v6745 = vmax.f32 %v6705, 0.0
    %v6746 = vmax.f32 %v6706, 0.0
    %v6747 = vmax.f32 %v6707, 0.0
    %v6748 = vmax.f32 %v6708, 0.0
    %v6749 = vmax.f32 %v6709, 0.0
    %v6750 = vmax.f32 %v6710, 0.0
    %v6751 = vmax.f32 %v6711, 0.0
    %v6752 = vmax.f32 %v6712, 0.0
    %v6753 = vld [vmem:[%s11] sm:$0xff]
    %v6754 = vld [vmem:[%s11 + $0x8] sm:$0xff]
    %v6755 = vld [vmem:[%s11 + $0x10] sm:$0xff]
    %v6756 = vld [vmem:[%s11 + $0x18] sm:$0xff]
    %v6757 = vld [vmem:[%s11 + $0x20] sm:$0xff]
    %v6758 = vld [vmem:[%s11 + $0x28] sm:$0xff]
    %v6759 = vld [vmem:[%s11 + $0x30] sm:$0xff]
    %v6760 = vld [vmem:[%s11 + $0x38] sm:$0xff]
    %v6761 = vld [vmem:[%s11 + $0x40] sm:$0xff]
    %v6762 = vld [vmem:[%s11 + $0x48] sm:$0xff]
    %v6763 = vld [vmem:[%s11 + $0x50] sm:$0xff]
    %v6764 = vld [vmem:[%s11 + $0x58] sm:$0xff]
    %v6766 = vsel %vm6203, %v6755, 0
    %v6769 = vsel %vm6203, %v6758, 0
    %v6772 = vsel %vm6203, %v6761, 0
    %v6775 = vsel %vm6203, %v6764, 0
    %6777 = vmatprep.subr.mxu0 0.0
    %6778 = vmatpush1.msra.mxu0 %v6728
    %6779 = vmatprep.subr.mxu0 0.0
    %6780 = vmatpush1.msra.mxu0 %v6727
    %6781 = vmatprep.subr.mxu0 0.0
    %6782 = vmatpush1.msra.mxu0 %v6726
    %6783 = vmatprep.subr.mxu0 0.0
    %6784 = vmatpush1.msra.mxu0 %v6725
    %6785 = vmatprep.subr.mxu0 0.0
    %6786 = vmatpush1.msra.mxu0 %v6724
    %6787 = vmatprep.subr.mxu0 0.0
    %6788 = vmatpush1.msra.mxu0 %v6723
    %6789 = vmatprep.subr.mxu0 0.0
    %6790 = vmatpush1.msra.mxu0 %v6722
    %6791 = vmatprep.subr.mxu0 0.0
    %6792 = vmatpush1.msra.mxu0 %v6721
    %6793 = vmatprep.subr.mxu0 0.0
    %6794 = vmatpush1.msra.mxu0 %v6720
    %6795 = vmatprep.subr.mxu0 0.0
    %6796 = vmatpush1.msra.mxu0 %v6719
    %6797 = vmatprep.subr.mxu0 0.0
    %6798 = vmatpush1.msra.mxu0 %v6718
    %6799 = vmatprep.subr.mxu0 0.0
    %6800 = vmatpush1.msra.mxu0 %v6717
    %6801 = vmatprep.subr.mxu0 0.0
    %6802 = vmatpush1.msra.mxu0 %v6716
    %6803 = vmatprep.subr.mxu0 0.0
    %6804 = vmatpush1.msra.mxu0 %v6715
    %6805 = vmatprep.subr.mxu0 0.0
    %6806 = vmatpush1.msra.mxu0 %v6714
    %6807 = vmatprep.subr.mxu0 0.0
    %6808 = vmatpush1.msra.mxu0 %v6713
    %6809 = vmatprep.subr.mxu0 0.0
    %6810 = vmatpush2.msra.mxu0 %v6744
    %6811 = vmatprep.subr.mxu0 0.0
    %6812 = vmatpush2.msra.mxu0 %v6743
    %6813 = vmatprep.subr.mxu0 0.0
    %6814 = vmatpush2.msra.mxu0 %v6742
    %6815 = vmatprep.subr.mxu0 0.0
    %6816 = vmatpush2.msra.mxu0 %v6741
    %6817 = vmatprep.subr.mxu0 0.0
    %6818 = vmatpush2.msra.mxu0 %v6740
    %6819 = vmatprep.subr.mxu0 0.0
    %6820 = vmatpush2.msra.mxu0 %v6739
    %6821 = vmatprep.subr.mxu0 0.0
    %6822 = vmatpush2.msra.mxu0 %v6738
    %6823 = vmatprep.subr.mxu0 0.0
    %6824 = vmatpush2.msra.mxu0 %v6737
    %6825 = vmatprep.subr.mxu0 0.0
    %6826 = vmatpush2.msra.mxu0 %v6736
    %6827 = vmatprep.subr.mxu0 0.0
    %6828 = vmatpush2.msra.mxu0 %v6735
    %6829 = vmatprep.subr.mxu0 0.0
    %6830 = vmatpush2.msra.mxu0 %v6734
    %6831 = vmatprep.subr.mxu0 0.0
    %6832 = vmatpush2.msra.mxu0 %v6733
    %6833 = vmatprep.subr.mxu0 0.0
    %6834 = vmatpush2.msra.mxu0 %v6732
    %6835 = vmatprep.subr.mxu0 0.0
    %6836 = vmatpush2.msra.mxu0 %v6731
    %6837 = vmatprep.subr.mxu0 0.0
    %6838 = vmatpush2.msra.mxu0 %v6730
    %6839 = vmatprep.subr.mxu0 0.0
    %6840 = vmatpush2.msra.mxu0 %v6729
    %6841 = vmatprep.mubr.f32.mxu0 %v6754
    %6842 = vmatmul.mubr.f32.gmra.mxu0 %v6753
    %v6843 = vpop.f32.mrf.mxu0
    %v6844 = vadd.f32 0.0, %v6843
    %v6845 = vpop.f32.mrf.mxu0
    %6846 = vmatprep.mubr.f32.mxu0 %v6757
    %6847 = vmatmul.mubr.f32.gmra.mxu0 %v6756
    %v6848 = vpop.f32.mrf.mxu0
    %v6849 = vadd.f32 0.0, %v6848
    %v6850 = vpop.f32.mrf.mxu0
    %6851 = vmatprep.mubr.f32.mxu0 %v6760
    %6852 = vmatmul.mubr.f32.gmra.mxu0 %v6759
    %v6853 = vpop.f32.mrf.mxu0
    %v6854 = vadd.f32 0.0, %v6853
    %v6855 = vpop.f32.mrf.mxu0
    %6856 = vmatprep.mubr.f32.mxu0 %v6763
    %6857 = vmatmul.mubr.f32.gmra.mxu0 %v6762
    %v6858 = vpop.f32.mrf.mxu0
    %v6859 = vadd.f32 0.0, %v6858
    %v6860 = vpop.f32.mrf.mxu0
    %6861 = vdwg.mxu0
    %6862 = vmatprep.subr.mxu0 0.0
    %6863 = vmatpush1.msra.mxu0 0.0
    %6864 = vmatprep.subr.mxu0 0.0
    %6865 = vmatpush1.msra.mxu0 0.0
    %6866 = vmatprep.subr.mxu0 0.0
    %6867 = vmatpush1.msra.mxu0 0.0
    %6868 = vmatprep.subr.mxu0 0.0
    %6869 = vmatpush1.msra.mxu0 0.0
    %6870 = vmatprep.subr.mxu0 0.0
    %6871 = vmatpush1.msra.mxu0 0.0
    %6872 = vmatprep.subr.mxu0 0.0
    %6873 = vmatpush1.msra.mxu0 0.0
    %6874 = vmatprep.subr.mxu0 0.0
    %6875 = vmatpush1.msra.mxu0 0.0
    %6876 = vmatprep.subr.mxu0 0.0
    %6877 = vmatpush1.msra.mxu0 0.0
    %6878 = vmatprep.subr.mxu0 0.0
    %6879 = vmatpush1.msra.mxu0 %v6752
    %6880 = vmatprep.subr.mxu0 0.0
    %6881 = vmatpush1.msra.mxu0 %v6751
    %6882 = vmatprep.subr.mxu0 0.0
    %6883 = vmatpush1.msra.mxu0 %v6750
    %6884 = vmatprep.subr.mxu0 0.0
    %6885 = vmatpush1.msra.mxu0 %v6749
    %6886 = vmatprep.subr.mxu0 0.0
    %6887 = vmatpush1.msra.mxu0 %v6748
    %6888 = vmatprep.subr.mxu0 0.0
    %6889 = vmatpush1.msra.mxu0 %v6747
    %6890 = vmatprep.subr.mxu0 0.0
    %6891 = vmatpush1.msra.mxu0 %v6746
    %6892 = vmatprep.subr.mxu0 0.0
    %6893 = vmatpush1.msra.mxu0 %v6745
    %6894 = vmatprep.subr.mxu0 0.0
    %6895 = vmatpush2.msra.mxu0 0.0
    %6896 = vmatprep.subr.mxu0 0.0
    %6897 = vmatpush2.msra.mxu0 0.0
    %6898 = vmatprep.subr.mxu0 0.0
    %6899 = vmatpush2.msra.mxu0 0.0
    %6900 = vmatprep.subr.mxu0 0.0
    %6901 = vmatpush2.msra.mxu0 0.0
    %6902 = vmatprep.subr.mxu0 0.0
    %6903 = vmatpush2.msra.mxu0 0.0
    %6904 = vmatprep.subr.mxu0 0.0
    %6905 = vmatpush2.msra.mxu0 0.0
    %6906 = vmatprep.subr.mxu0 0.0
    %6907 = vmatpush2.msra.mxu0 0.0
    %6908 = vmatprep.subr.mxu0 0.0
    %6909 = vmatpush2.msra.mxu0 0.0
    %6910 = vmatprep.subr.mxu0 0.0
    %6911 = vmatpush2.msra.mxu0 0.0
    %6912 = vmatprep.subr.mxu0 0.0
    %6913 = vmatpush2.msra.mxu0 0.0
    %6914 = vmatprep.subr.mxu0 0.0
    %6915 = vmatpush2.msra.mxu0 0.0
    %6916 = vmatprep.subr.mxu0 0.0
    %6917 = vmatpush2.msra.mxu0 0.0
    %6918 = vmatprep.subr.mxu0 0.0
    %6919 = vmatpush2.msra.mxu0 0.0
    %6920 = vmatprep.subr.mxu0 0.0
    %6921 = vmatpush2.msra.mxu0 0.0
    %6922 = vmatprep.subr.mxu0 0.0
    %6923 = vmatpush2.msra.mxu0 0.0
    %6924 = vmatprep.subr.mxu0 0.0
    %6925 = vmatpush2.msra.mxu0 0.0
    %6926 = vmatprep.mubr.f32.mxu0 0.0
    %6927 = vmatmul.mubr.f32.gmra.mxu0 %v6766
    %v6928 = vpop.f32.mrf.mxu0
    %v6929 = vadd.f32 %v6844, %v6928
    %v6930 = vpop.f32.mrf.mxu0
    %6931 = vmatprep.mubr.f32.mxu0 0.0
    %6932 = vmatmul.mubr.f32.gmra.mxu0 %v6769
    %v6933 = vpop.f32.mrf.mxu0
    %v6934 = vadd.f32 %v6849, %v6933
    %v6935 = vpop.f32.mrf.mxu0
    %6936 = vmatprep.mubr.f32.mxu0 0.0
    %6937 = vmatmul.mubr.f32.gmra.mxu0 %v6772
    %v6938 = vpop.f32.mrf.mxu0
    %v6939 = vadd.f32 %v6854, %v6938
    %v6940 = vpop.f32.mrf.mxu0
    %6941 = vmatprep.mubr.f32.mxu0 0.0
    %6942 = vmatmul.mubr.f32.gmra.mxu0 %v6775
    %v6943 = vpop.f32.mrf.mxu0
    %v6944 = vadd.f32 %v6859, %v6943
    %v6945 = vpop.f32.mrf.mxu0
    %6946 = vdwg.mxu0
    %vm6947 = vcmask 257024
    %6948 = vst.msk [vmem:[#allocation4 + $0x18] sm:$0xf] %vm6947, %v6929
    %vm6949 = vcmask 261124
    %6950 = vst.msk [vmem:[#allocation4 + $0x1c] sm:$0xf0] %vm6949, %v6929
    %6951 = vst.msk [vmem:[#allocation4 + $0x28] sm:$0xf] %vm6947, %v6934
    %6952 = vst.msk [vmem:[#allocation4 + $0x2c] sm:$0xf0] %vm6949, %v6934
    %6953 = vst.msk [vmem:[#allocation4 + $0x48] sm:$0xf] %vm6947, %v6939
    %6954 = vst.msk [vmem:[#allocation4 + $0x4c] sm:$0xf0] %vm6949, %v6939
    %6955 = vst.msk [vmem:[#allocation4 + $0x58] sm:$0xf] %vm6947, %v6944
    %6956 = vst.msk [vmem:[#allocation4 + $0x5c] sm:$0xf0] %vm6949, %v6944
    %v6957 = vld [vmem:[#allocation4 + $0x7] sm:$0xff]
    %v6958 = vld [vmem:[#allocation4 + $0xf] sm:$0xff]
    %v6959 = vld [vmem:[#allocation4 + $0x17] sm:$0xff]
    %v6960 = vld [vmem:[#allocation4 + $0x1f] sm:$0xff]
    %v6961 = vld [vmem:[#allocation4 + $0x27] sm:$0xff]
    %v6962 = vld [vmem:[#allocation4 + $0x2f] sm:$0xff]
    %v6963 = vld [vmem:[#allocation4 + $0x37] sm:$0xff]
    %v6964 = vld [vmem:[#allocation4 + $0x3f] sm:$0xff]
    %v6965 = vld [vmem:[#allocation4 + $0x47] sm:$0xff]
    %v6966 = vld [vmem:[#allocation4 + $0x4f] sm:$0xff]
    %v6967 = vld [vmem:[#allocation4 + $0x57] sm:$0xff]
    %v6968 = vld [vmem:[#allocation4 + $0x5f] sm:$0xff]
    %v6969 = vld [vmem:[%s12] sm:$0xff]
    %v6970 = vld [vmem:[%s12 + $0x8] sm:$0xff]
    %v6971 = vld [vmem:[%s12 + $0x10] sm:$0xff]
    %v6972 = vld [vmem:[%s12 + $0x18] sm:$0xff]
    %v6973 = vld [vmem:[#allocation4 + $0x8] sm:$0xff]
    %v6974 = vld [vmem:[#allocation4 + $0x10] sm:$0xff]
    %v6975 = vld [vmem:[#allocation4 + $0x18] sm:$0xff]
    %v6976 = vld [vmem:[#allocation4 + $0x20] sm:$0xff]
    %v6977 = vld [vmem:[#allocation4 + $0x28] sm:$0xff]
    %v6978 = vld [vmem:[#allocation4 + $0x30] sm:$0xff]
    %v6979 = vld [vmem:[#allocation4 + $0x38] sm:$0xff]
    %v6980 = vld [vmem:[#allocation4 + $0x40] sm:$0xff]
    %v6981 = vld [vmem:[#allocation4 + $0x48] sm:$0xff]
    %v6982 = vld [vmem:[#allocation4 + $0x50] sm:$0xff]
    %v6983 = vld [vmem:[#allocation4 + $0x58] sm:$0xff]
    %v6984 = vld [vmem:[#allocation4 + $0x60] sm:$0xff]
    %s6985 = scalar_lea.vmem %s12, 32
    %v6986 = vld [vmem:[%s6985] sm:$0xff]
    %v6987 = vld [vmem:[%s6985 + $0x8] sm:$0xff]
    %v6988 = vld [vmem:[%s6985 + $0x10] sm:$0xff]
    %v6989 = vld [vmem:[%s6985 + $0x18] sm:$0xff]
    %v6991 = vsel %vm169, %v6973, 0
    %v6994 = vsel %vm169, %v6974, 0
    %v6997 = vsel %vm169, %v6975, 0
    %v7000 = vsel %vm169, %v6976, 0
    %v7003 = vsel %vm169, %v6977, 0
    %v7006 = vsel %vm169, %v6978, 0
    %v7009 = vsel %vm169, %v6979, 0
    %v7012 = vsel %vm169, %v6980, 0
    %v7015 = vsel %vm169, %v6981, 0
    %v7018 = vsel %vm169, %v6982, 0
    %v7021 = vsel %vm169, %v6983, 0
    %v7024 = vsel %vm169, %v6984, 0
    %7026 = vmatprep.subr.mxu0 0.0
    %7027 = vmatpush1.msra.mxu0 0.0
    %7028 = vmatprep.subr.mxu0 0.0
    %7029 = vmatpush1.msra.mxu0 0.0
    %7030 = vmatprep.subr.mxu0 0.0
    %7031 = vmatpush1.msra.mxu0 0.0
    %7032 = vmatprep.subr.mxu0 0.0
    %7033 = vmatpush1.msra.mxu0 0.0
    %7034 = vmatprep.subr.mxu0 0.0
    %7035 = vmatpush1.msra.mxu0 0.0
    %7036 = vmatprep.subr.mxu0 0.0
    %7037 = vmatpush1.msra.mxu0 0.0
    %7038 = vmatprep.subr.mxu0 0.0
    %7039 = vmatpush1.msra.mxu0 0.0
    %7040 = vmatprep.subr.mxu0 0.0
    %7041 = vmatpush1.msra.mxu0 0.0
    %7042 = vmatprep.subr.mxu0 0.0
    %7043 = vmatpush1.msra.mxu0 0.0
    %7044 = vmatprep.subr.mxu0 0.0
    %7045 = vmatpush1.msra.mxu0 0.0
    %7046 = vmatprep.subr.mxu0 0.0
    %7047 = vmatpush1.msra.mxu0 0.0
    %7048 = vmatprep.subr.mxu0 0.0
    %7049 = vmatpush1.msra.mxu0 0.0
    %7050 = vmatprep.subr.mxu0 0.0
    %7051 = vmatpush1.msra.mxu0 %v6989
    %7052 = vmatprep.subr.mxu0 0.0
    %7053 = vmatpush1.msra.mxu0 %v6988
    %7054 = vmatprep.subr.mxu0 0.0
    %7055 = vmatpush1.msra.mxu0 %v6987
    %7056 = vmatprep.subr.mxu0 0.0
    %7057 = vmatpush1.msra.mxu0 %v6986
    %7058 = vmatprep.subr.mxu0 0.0
    %7059 = vmatpush2.msra.mxu0 0.0
    %7060 = vmatprep.subr.mxu0 0.0
    %7061 = vmatpush2.msra.mxu0 0.0
    %7062 = vmatprep.subr.mxu0 0.0
    %7063 = vmatpush2.msra.mxu0 0.0
    %7064 = vmatprep.subr.mxu0 0.0
    %7065 = vmatpush2.msra.mxu0 0.0
    %7066 = vmatprep.subr.mxu0 0.0
    %7067 = vmatpush2.msra.mxu0 0.0
    %7068 = vmatprep.subr.mxu0 0.0
    %7069 = vmatpush2.msra.mxu0 0.0
    %7070 = vmatprep.subr.mxu0 0.0
    %7071 = vmatpush2.msra.mxu0 0.0
    %7072 = vmatprep.subr.mxu0 0.0
    %7073 = vmatpush2.msra.mxu0 0.0
    %7074 = vmatprep.subr.mxu0 0.0
    %7075 = vmatpush2.msra.mxu0 0.0
    %7076 = vmatprep.subr.mxu0 0.0
    %7077 = vmatpush2.msra.mxu0 0.0
    %7078 = vmatprep.subr.mxu0 0.0
    %7079 = vmatpush2.msra.mxu0 0.0
    %7080 = vmatprep.subr.mxu0 0.0
    %7081 = vmatpush2.msra.mxu0 0.0
    %7082 = vmatprep.subr.mxu0 0.0
    %7083 = vmatpush2.msra.mxu0 0.0
    %7084 = vmatprep.subr.mxu0 0.0
    %7085 = vmatpush2.msra.mxu0 0.0
    %7086 = vmatprep.subr.mxu0 0.0
    %7087 = vmatpush2.msra.mxu0 0.0
    %7088 = vmatprep.subr.mxu0 0.0
    %7089 = vmatpush2.msra.mxu0 0.0
    %7090 = vmatprep.mubr.f32.mxu0 0.0
    %7091 = vmatmul.mubr.f32.gmra.mxu0 %v6991
    %v7092 = vpop.f32.mrf.mxu0
    %v7093 = vadd.f32 0.0, %v7092
    %v7094 = vpop.f32.mrf.mxu0
    %7095 = vmatprep.mubr.f32.mxu0 0.0
    %7096 = vmatmul.mubr.f32.gmra.mxu0 %v6994
    %v7097 = vpop.f32.mrf.mxu0
    %v7098 = vadd.f32 0.0, %v7097
    %v7099 = vpop.f32.mrf.mxu0
    %7100 = vmatprep.mubr.f32.mxu0 0.0
    %7101 = vmatmul.mubr.f32.gmra.mxu0 %v6997
    %v7102 = vpop.f32.mrf.mxu0
    %v7103 = vadd.f32 0.0, %v7102
    %v7104 = vpop.f32.mrf.mxu0
    %7105 = vmatprep.mubr.f32.mxu0 0.0
    %7106 = vmatmul.mubr.f32.gmra.mxu0 %v7000
    %v7107 = vpop.f32.mrf.mxu0
    %v7108 = vadd.f32 0.0, %v7107
    %v7109 = vpop.f32.mrf.mxu0
    %7110 = vmatprep.mubr.f32.mxu0 0.0
    %7111 = vmatmul.mubr.f32.gmra.mxu0 %v7003
    %v7112 = vpop.f32.mrf.mxu0
    %v7113 = vadd.f32 0.0, %v7112
    %v7114 = vpop.f32.mrf.mxu0
    %7115 = vmatprep.mubr.f32.mxu0 0.0
    %7116 = vmatmul.mubr.f32.gmra.mxu0 %v7006
    %v7117 = vpop.f32.mrf.mxu0
    %v7118 = vadd.f32 0.0, %v7117
    %v7119 = vpop.f32.mrf.mxu0
    %7120 = vmatprep.mubr.f32.mxu0 0.0
    %7121 = vmatmul.mubr.f32.gmra.mxu0 %v7009
    %v7122 = vpop.f32.mrf.mxu0
    %v7123 = vadd.f32 0.0, %v7122
    %v7124 = vpop.f32.mrf.mxu0
    %7125 = vmatprep.mubr.f32.mxu0 0.0
    %7126 = vmatmul.mubr.f32.gmra.mxu0 %v7012
    %v7127 = vpop.f32.mrf.mxu0
    %v7128 = vadd.f32 0.0, %v7127
    %v7129 = vpop.f32.mrf.mxu0
    %7130 = vmatprep.mubr.f32.mxu0 0.0
    %7131 = vmatmul.mubr.f32.gmra.mxu0 %v7015
    %v7132 = vpop.f32.mrf.mxu0
    %v7133 = vadd.f32 0.0, %v7132
    %v7134 = vpop.f32.mrf.mxu0
    %7135 = vmatprep.mubr.f32.mxu0 0.0
    %7136 = vmatmul.mubr.f32.gmra.mxu0 %v7018
    %v7137 = vpop.f32.mrf.mxu0
    %v7138 = vadd.f32 0.0, %v7137
    %v7139 = vpop.f32.mrf.mxu0
    %7140 = vmatprep.mubr.f32.mxu0 0.0
    %7141 = vmatmul.mubr.f32.gmra.mxu0 %v7021
    %v7142 = vpop.f32.mrf.mxu0
    %v7143 = vadd.f32 0.0, %v7142
    %v7144 = vpop.f32.mrf.mxu0
    %7145 = vmatprep.mubr.f32.mxu0 0.0
    %7146 = vmatmul.mubr.f32.gmra.mxu0 %v7024
    %v7147 = vpop.f32.mrf.mxu0
    %v7148 = vadd.f32 0.0, %v7147
    %v7149 = vpop.f32.mrf.mxu0
    %7150 = vdwg.mxu0
    %v7152 = vsel %vm169, %v6957, 0
    %v7155 = vsel %vm169, %v6958, 0
    %v7158 = vsel %vm169, %v6959, 0
    %v7161 = vsel %vm169, %v6960, 0
    %v7164 = vsel %vm169, %v6961, 0
    %v7167 = vsel %vm169, %v6962, 0
    %v7170 = vsel %vm169, %v6963, 0
    %v7173 = vsel %vm169, %v6964, 0
    %v7176 = vsel %vm169, %v6965, 0
    %v7179 = vsel %vm169, %v6966, 0
    %v7182 = vsel %vm169, %v6967, 0
    %v7185 = vsel %vm169, %v6968, 0
    %7187 = vmatprep.subr.mxu0 0.0
    %7188 = vmatpush1.msra.mxu0 0.0
    %7189 = vmatprep.subr.mxu0 0.0
    %7190 = vmatpush1.msra.mxu0 0.0
    %7191 = vmatprep.subr.mxu0 0.0
    %7192 = vmatpush1.msra.mxu0 0.0
    %7193 = vmatprep.subr.mxu0 0.0
    %7194 = vmatpush1.msra.mxu0 0.0
    %7195 = vmatprep.subr.mxu0 0.0
    %7196 = vmatpush1.msra.mxu0 0.0
    %7197 = vmatprep.subr.mxu0 0.0
    %7198 = vmatpush1.msra.mxu0 0.0
    %7199 = vmatprep.subr.mxu0 0.0
    %7200 = vmatpush1.msra.mxu0 0.0
    %7201 = vmatprep.subr.mxu0 0.0
    %7202 = vmatpush1.msra.mxu0 0.0
    %7203 = vmatprep.subr.mxu0 0.0
    %7204 = vmatpush1.msra.mxu0 0.0
    %7205 = vmatprep.subr.mxu0 0.0
    %7206 = vmatpush1.msra.mxu0 0.0
    %7207 = vmatprep.subr.mxu0 0.0
    %7208 = vmatpush1.msra.mxu0 0.0
    %7209 = vmatprep.subr.mxu0 0.0
    %7210 = vmatpush1.msra.mxu0 0.0
    %7211 = vmatprep.subr.mxu0 0.0
    %7212 = vmatpush1.msra.mxu0 %v6972
    %7213 = vmatprep.subr.mxu0 0.0
    %7214 = vmatpush1.msra.mxu0 %v6971
    %7215 = vmatprep.subr.mxu0 0.0
    %7216 = vmatpush1.msra.mxu0 %v6970
    %7217 = vmatprep.subr.mxu0 0.0
    %7218 = vmatpush1.msra.mxu0 %v6969
    %7219 = vmatprep.subr.mxu0 0.0
    %7220 = vmatpush2.msra.mxu0 0.0
    %7221 = vmatprep.subr.mxu0 0.0
    %7222 = vmatpush2.msra.mxu0 0.0
    %7223 = vmatprep.subr.mxu0 0.0
    %7224 = vmatpush2.msra.mxu0 0.0
    %7225 = vmatprep.subr.mxu0 0.0
    %7226 = vmatpush2.msra.mxu0 0.0
    %7227 = vmatprep.subr.mxu0 0.0
    %7228 = vmatpush2.msra.mxu0 0.0
    %7229 = vmatprep.subr.mxu0 0.0
    %7230 = vmatpush2.msra.mxu0 0.0
    %7231 = vmatprep.subr.mxu0 0.0
    %7232 = vmatpush2.msra.mxu0 0.0
    %7233 = vmatprep.subr.mxu0 0.0
    %7234 = vmatpush2.msra.mxu0 0.0
    %7235 = vmatprep.subr.mxu0 0.0
    %7236 = vmatpush2.msra.mxu0 0.0
    %7237 = vmatprep.subr.mxu0 0.0
    %7238 = vmatpush2.msra.mxu0 0.0
    %7239 = vmatprep.subr.mxu0 0.0
    %7240 = vmatpush2.msra.mxu0 0.0
    %7241 = vmatprep.subr.mxu0 0.0
    %7242 = vmatpush2.msra.mxu0 0.0
    %7243 = vmatprep.subr.mxu0 0.0
    %7244 = vmatpush2.msra.mxu0 0.0
    %7245 = vmatprep.subr.mxu0 0.0
    %7246 = vmatpush2.msra.mxu0 0.0
    %7247 = vmatprep.subr.mxu0 0.0
    %7248 = vmatpush2.msra.mxu0 0.0
    %7249 = vmatprep.subr.mxu0 0.0
    %7250 = vmatpush2.msra.mxu0 0.0
    %7251 = vmatprep.mubr.f32.mxu0 0.0
    %7252 = vmatmul.mubr.f32.gmra.mxu0 %v7152
    %v7253 = vpop.f32.mrf.mxu0
    %v7254 = vadd.f32 %v7093, %v7253
    %v7255 = vpop.f32.mrf.mxu0
    %7256 = vmatprep.mubr.f32.mxu0 0.0
    %7257 = vmatmul.mubr.f32.gmra.mxu0 %v7155
    %v7258 = vpop.f32.mrf.mxu0
    %v7259 = vadd.f32 %v7098, %v7258
    %v7260 = vpop.f32.mrf.mxu0
    %7261 = vmatprep.mubr.f32.mxu0 0.0
    %7262 = vmatmul.mubr.f32.gmra.mxu0 %v7158
    %v7263 = vpop.f32.mrf.mxu0
    %v7264 = vadd.f32 %v7103, %v7263
    %v7265 = vpop.f32.mrf.mxu0
    %7266 = vmatprep.mubr.f32.mxu0 0.0
    %7267 = vmatmul.mubr.f32.gmra.mxu0 %v7161
    %v7268 = vpop.f32.mrf.mxu0
    %v7269 = vadd.f32 %v7108, %v7268
    %v7270 = vpop.f32.mrf.mxu0
    %7271 = vmatprep.mubr.f32.mxu0 0.0
    %7272 = vmatmul.mubr.f32.gmra.mxu0 %v7164
    %v7273 = vpop.f32.mrf.mxu0
    %v7274 = vadd.f32 %v7113, %v7273
    %v7275 = vpop.f32.mrf.mxu0
    %7276 = vmatprep.mubr.f32.mxu0 0.0
    %7277 = vmatmul.mubr.f32.gmra.mxu0 %v7167
    %v7278 = vpop.f32.mrf.mxu0
    %v7279 = vadd.f32 %v7118, %v7278
    %v7280 = vpop.f32.mrf.mxu0
    %7281 = vmatprep.mubr.f32.mxu0 0.0
    %7282 = vmatmul.mubr.f32.gmra.mxu0 %v7170
    %v7283 = vpop.f32.mrf.mxu0
    %v7284 = vadd.f32 %v7123, %v7283
    %v7285 = vpop.f32.mrf.mxu0
    %7286 = vmatprep.mubr.f32.mxu0 0.0
    %7287 = vmatmul.mubr.f32.gmra.mxu0 %v7173
    %v7288 = vpop.f32.mrf.mxu0
    %v7289 = vadd.f32 %v7128, %v7288
    %v7290 = vpop.f32.mrf.mxu0
    %7291 = vmatprep.mubr.f32.mxu0 0.0
    %7292 = vmatmul.mubr.f32.gmra.mxu0 %v7176
    %v7293 = vpop.f32.mrf.mxu0
    %v7294 = vadd.f32 %v7133, %v7293
    %v7295 = vpop.f32.mrf.mxu0
    %7296 = vmatprep.mubr.f32.mxu0 0.0
    %7297 = vmatmul.mubr.f32.gmra.mxu0 %v7179
    %v7298 = vpop.f32.mrf.mxu0
    %v7299 = vadd.f32 %v7138, %v7298
    %v7300 = vpop.f32.mrf.mxu0
    %7301 = vmatprep.mubr.f32.mxu0 0.0
    %7302 = vmatmul.mubr.f32.gmra.mxu0 %v7182
    %v7303 = vpop.f32.mrf.mxu0
    %v7304 = vadd.f32 %v7143, %v7303
    %v7305 = vpop.f32.mrf.mxu0
    %7306 = vmatprep.mubr.f32.mxu0 0.0
    %7307 = vmatmul.mubr.f32.gmra.mxu0 %v7185
    %v7308 = vpop.f32.mrf.mxu0
    %v7309 = vadd.f32 %v7148, %v7308
    %v7310 = vpop.f32.mrf.mxu0
    %7311 = vdwg.mxu0
    %v7312 = vld [vmem:[#allocation4 + $0x9] sm:$0xff]
    %v7313 = vld [vmem:[#allocation4 + $0x11] sm:$0xff]
    %v7314 = vld [vmem:[#allocation4 + $0x19] sm:$0xff]
    %v7315 = vld [vmem:[#allocation4 + $0x21] sm:$0xff]
    %v7316 = vld [vmem:[#allocation4 + $0x29] sm:$0xff]
    %v7317 = vld [vmem:[#allocation4 + $0x31] sm:$0xff]
    %v7318 = vld [vmem:[#allocation4 + $0x39] sm:$0xff]
    %v7319 = vld [vmem:[#allocation4 + $0x41] sm:$0xff]
    %v7320 = vld [vmem:[#allocation4 + $0x49] sm:$0xff]
    %v7321 = vld [vmem:[#allocation4 + $0x51] sm:$0xff]
    %v7322 = vld [vmem:[#allocation4 + $0x59] sm:$0xff]
    %v7323 = vld [vmem:[#allocation4 + $0x61] sm:$0xff]
    %s7324 = scalar_lea.vmem %s12, 64
    %v7325 = vld [vmem:[%s7324] sm:$0xff]
    %v7326 = vld [vmem:[%s7324 + $0x8] sm:$0xff]
    %v7327 = vld [vmem:[%s7324 + $0x10] sm:$0xff]
    %v7328 = vld [vmem:[%s7324 + $0x18] sm:$0xff]
    %v7330 = vsel %vm169, %v7312, 0
    %v7333 = vsel %vm169, %v7313, 0
    %v7336 = vsel %vm169, %v7314, 0
    %v7339 = vsel %vm169, %v7315, 0
    %v7342 = vsel %vm169, %v7316, 0
    %v7345 = vsel %vm169, %v7317, 0
    %v7348 = vsel %vm169, %v7318, 0
    %v7351 = vsel %vm169, %v7319, 0
    %v7354 = vsel %vm169, %v7320, 0
    %v7357 = vsel %vm169, %v7321, 0
    %v7360 = vsel %vm169, %v7322, 0
    %v7363 = vsel %vm169, %v7323, 0
    %7365 = vmatprep.subr.mxu0 0.0
    %7366 = vmatpush1.msra.mxu0 0.0
    %7367 = vmatprep.subr.mxu0 0.0
    %7368 = vmatpush1.msra.mxu0 0.0
    %7369 = vmatprep.subr.mxu0 0.0
    %7370 = vmatpush1.msra.mxu0 0.0
    %7371 = vmatprep.subr.mxu0 0.0
    %7372 = vmatpush1.msra.mxu0 0.0
    %7373 = vmatprep.subr.mxu0 0.0
    %7374 = vmatpush1.msra.mxu0 0.0
    %7375 = vmatprep.subr.mxu0 0.0
    %7376 = vmatpush1.msra.mxu0 0.0
    %7377 = vmatprep.subr.mxu0 0.0
    %7378 = vmatpush1.msra.mxu0 0.0
    %7379 = vmatprep.subr.mxu0 0.0
    %7380 = vmatpush1.msra.mxu0 0.0
    %7381 = vmatprep.subr.mxu0 0.0
    %7382 = vmatpush1.msra.mxu0 0.0
    %7383 = vmatprep.subr.mxu0 0.0
    %7384 = vmatpush1.msra.mxu0 0.0
    %7385 = vmatprep.subr.mxu0 0.0
    %7386 = vmatpush1.msra.mxu0 0.0
    %7387 = vmatprep.subr.mxu0 0.0
    %7388 = vmatpush1.msra.mxu0 0.0
    %7389 = vmatprep.subr.mxu0 0.0
    %7390 = vmatpush1.msra.mxu0 %v7328
    %7391 = vmatprep.subr.mxu0 0.0
    %7392 = vmatpush1.msra.mxu0 %v7327
    %7393 = vmatprep.subr.mxu0 0.0
    %7394 = vmatpush1.msra.mxu0 %v7326
    %7395 = vmatprep.subr.mxu0 0.0
    %7396 = vmatpush1.msra.mxu0 %v7325
    %7397 = vmatprep.subr.mxu0 0.0
    %7398 = vmatpush2.msra.mxu0 0.0
    %7399 = vmatprep.subr.mxu0 0.0
    %7400 = vmatpush2.msra.mxu0 0.0
    %7401 = vmatprep.subr.mxu0 0.0
    %7402 = vmatpush2.msra.mxu0 0.0
    %7403 = vmatprep.subr.mxu0 0.0
    %7404 = vmatpush2.msra.mxu0 0.0
    %7405 = vmatprep.subr.mxu0 0.0
    %7406 = vmatpush2.msra.mxu0 0.0
    %7407 = vmatprep.subr.mxu0 0.0
    %7408 = vmatpush2.msra.mxu0 0.0
    %7409 = vmatprep.subr.mxu0 0.0
    %7410 = vmatpush2.msra.mxu0 0.0
    %7411 = vmatprep.subr.mxu0 0.0
    %7412 = vmatpush2.msra.mxu0 0.0
    %7413 = vmatprep.subr.mxu0 0.0
    %7414 = vmatpush2.msra.mxu0 0.0
    %7415 = vmatprep.subr.mxu0 0.0
    %7416 = vmatpush2.msra.mxu0 0.0
    %7417 = vmatprep.subr.mxu0 0.0
    %7418 = vmatpush2.msra.mxu0 0.0
    %7419 = vmatprep.subr.mxu0 0.0
    %7420 = vmatpush2.msra.mxu0 0.0
    %7421 = vmatprep.subr.mxu0 0.0
    %7422 = vmatpush2.msra.mxu0 0.0
    %7423 = vmatprep.subr.mxu0 0.0
    %7424 = vmatpush2.msra.mxu0 0.0
    %7425 = vmatprep.subr.mxu0 0.0
    %7426 = vmatpush2.msra.mxu0 0.0
    %7427 = vmatprep.subr.mxu0 0.0
    %7428 = vmatpush2.msra.mxu0 0.0
    %7429 = vmatprep.mubr.f32.mxu0 0.0
    %7430 = vmatmul.mubr.f32.gmra.mxu0 %v7330
    %v7431 = vpop.f32.mrf.mxu0
    %v7432 = vadd.f32 0.0, %v7431
    %v7433 = vpop.f32.mrf.mxu0
    %7434 = vmatprep.mubr.f32.mxu0 0.0
    %7435 = vmatmul.mubr.f32.gmra.mxu0 %v7333
    %v7436 = vpop.f32.mrf.mxu0
    %v7437 = vadd.f32 0.0, %v7436
    %v7438 = vpop.f32.mrf.mxu0
    %7439 = vmatprep.mubr.f32.mxu0 0.0
    %7440 = vmatmul.mubr.f32.gmra.mxu0 %v7336
    %v7441 = vpop.f32.mrf.mxu0
    %v7442 = vadd.f32 0.0, %v7441
    %v7443 = vpop.f32.mrf.mxu0
    %7444 = vmatprep.mubr.f32.mxu0 0.0
    %7445 = vmatmul.mubr.f32.gmra.mxu0 %v7339
    %v7446 = vpop.f32.mrf.mxu0
    %v7447 = vadd.f32 0.0, %v7446
    %v7448 = vpop.f32.mrf.mxu0
    %7449 = vmatprep.mubr.f32.mxu0 0.0
    %7450 = vmatmul.mubr.f32.gmra.mxu0 %v7342
    %v7451 = vpop.f32.mrf.mxu0
    %v7452 = vadd.f32 0.0, %v7451
    %v7453 = vpop.f32.mrf.mxu0
    %7454 = vmatprep.mubr.f32.mxu0 0.0
    %7455 = vmatmul.mubr.f32.gmra.mxu0 %v7345
    %v7456 = vpop.f32.mrf.mxu0
    %v7457 = vadd.f32 0.0, %v7456
    %v7458 = vpop.f32.mrf.mxu0
    %7459 = vmatprep.mubr.f32.mxu0 0.0
    %7460 = vmatmul.mubr.f32.gmra.mxu0 %v7348
    %v7461 = vpop.f32.mrf.mxu0
    %v7462 = vadd.f32 0.0, %v7461
    %v7463 = vpop.f32.mrf.mxu0
    %7464 = vmatprep.mubr.f32.mxu0 0.0
    %7465 = vmatmul.mubr.f32.gmra.mxu0 %v7351
    %v7466 = vpop.f32.mrf.mxu0
    %v7467 = vadd.f32 0.0, %v7466
    %v7468 = vpop.f32.mrf.mxu0
    %7469 = vmatprep.mubr.f32.mxu0 0.0
    %7470 = vmatmul.mubr.f32.gmra.mxu0 %v7354
    %v7471 = vpop.f32.mrf.mxu0
    %v7472 = vadd.f32 0.0, %v7471
    %v7473 = vpop.f32.mrf.mxu0
    %7474 = vmatprep.mubr.f32.mxu0 0.0
    %7475 = vmatmul.mubr.f32.gmra.mxu0 %v7357
    %v7476 = vpop.f32.mrf.mxu0
    %v7477 = vadd.f32 0.0, %v7476
    %v7478 = vpop.f32.mrf.mxu0
    %7479 = vmatprep.mubr.f32.mxu0 0.0
    %7480 = vmatmul.mubr.f32.gmra.mxu0 %v7360
    %v7481 = vpop.f32.mrf.mxu0
    %v7482 = vadd.f32 0.0, %v7481
    %v7483 = vpop.f32.mrf.mxu0
    %7484 = vmatprep.mubr.f32.mxu0 0.0
    %7485 = vmatmul.mubr.f32.gmra.mxu0 %v7363
    %v7486 = vpop.f32.mrf.mxu0
    %v7487 = vadd.f32 0.0, %v7486
    %v7488 = vpop.f32.mrf.mxu0
    %7489 = vdwg.mxu0
    %v7490 = vadd.f32 %v7254, %v7432
    %v7491 = vadd.f32 %v7259, %v7437
    %v7492 = vadd.f32 %v7264, %v7442
    %v7493 = vadd.f32 %v7269, %v7447
    %v7494 = vadd.f32 %v7274, %v7452
    %v7495 = vadd.f32 %v7279, %v7457
    %v7496 = vadd.f32 %v7284, %v7462
    %v7497 = vadd.f32 %v7289, %v7467
    %v7498 = vadd.f32 %v7294, %v7472
    %v7499 = vadd.f32 %v7299, %v7477
    %v7500 = vadd.f32 %v7304, %v7482
    %v7501 = vadd.f32 %v7309, %v7487
    %v7502 = vld [vmem:[#allocation4 + $0xf] sm:$0xff]
    %v7503 = vld [vmem:[#allocation4 + $0x17] sm:$0xff]
    %v7504 = vld [vmem:[#allocation4 + $0x1f] sm:$0xff]
    %v7505 = vld [vmem:[#allocation4 + $0x27] sm:$0xff]
    %v7506 = vld [vmem:[#allocation4 + $0x2f] sm:$0xff]
    %v7507 = vld [vmem:[#allocation4 + $0x37] sm:$0xff]
    %v7508 = vld [vmem:[#allocation4 + $0x3f] sm:$0xff]
    %v7509 = vld [vmem:[#allocation4 + $0x47] sm:$0xff]
    %v7510 = vld [vmem:[#allocation4 + $0x4f] sm:$0xff]
    %v7511 = vld [vmem:[#allocation4 + $0x57] sm:$0xff]
    %v7512 = vld [vmem:[#allocation4 + $0x5f] sm:$0xff]
    %v7513 = vld [vmem:[#allocation4 + $0x67] sm:$0xff]
    %s7514 = scalar_lea.vmem %s12, 96
    %v7515 = vld [vmem:[%s7514] sm:$0xff]
    %v7516 = vld [vmem:[%s7514 + $0x8] sm:$0xff]
    %v7517 = vld [vmem:[%s7514 + $0x10] sm:$0xff]
    %v7518 = vld [vmem:[%s7514 + $0x18] sm:$0xff]
    %v7520 = vsel %vm169, %v7502, 0
    %v7523 = vsel %vm169, %v7503, 0
    %v7526 = vsel %vm169, %v7504, 0
    %v7529 = vsel %vm169, %v7505, 0
    %v7532 = vsel %vm169, %v7506, 0
    %v7535 = vsel %vm169, %v7507, 0
    %v7538 = vsel %vm169, %v7508, 0
    %v7541 = vsel %vm169, %v7509, 0
    %v7544 = vsel %vm169, %v7510, 0
    %v7547 = vsel %vm169, %v7511, 0
    %v7550 = vsel %vm169, %v7512, 0
    %v7553 = vsel %vm169, %v7513, 0
    %7555 = vmatprep.subr.mxu0 0.0
    %7556 = vmatpush1.msra.mxu0 0.0
    %7557 = vmatprep.subr.mxu0 0.0
    %7558 = vmatpush1.msra.mxu0 0.0
    %7559 = vmatprep.subr.mxu0 0.0
    %7560 = vmatpush1.msra.mxu0 0.0
    %7561 = vmatprep.subr.mxu0 0.0
    %7562 = vmatpush1.msra.mxu0 0.0
    %7563 = vmatprep.subr.mxu0 0.0
    %7564 = vmatpush1.msra.mxu0 0.0
    %7565 = vmatprep.subr.mxu0 0.0
    %7566 = vmatpush1.msra.mxu0 0.0
    %7567 = vmatprep.subr.mxu0 0.0
    %7568 = vmatpush1.msra.mxu0 0.0
    %7569 = vmatprep.subr.mxu0 0.0
    %7570 = vmatpush1.msra.mxu0 0.0
    %7571 = vmatprep.subr.mxu0 0.0
    %7572 = vmatpush1.msra.mxu0 0.0
    %7573 = vmatprep.subr.mxu0 0.0
    %7574 = vmatpush1.msra.mxu0 0.0
    %7575 = vmatprep.subr.mxu0 0.0
    %7576 = vmatpush1.msra.mxu0 0.0
    %7577 = vmatprep.subr.mxu0 0.0
    %7578 = vmatpush1.msra.mxu0 0.0
    %7579 = vmatprep.subr.mxu0 0.0
    %7580 = vmatpush1.msra.mxu0 %v7518
    %7581 = vmatprep.subr.mxu0 0.0
    %7582 = vmatpush1.msra.mxu0 %v7517
    %7583 = vmatprep.subr.mxu0 0.0
    %7584 = vmatpush1.msra.mxu0 %v7516
    %7585 = vmatprep.subr.mxu0 0.0
    %7586 = vmatpush1.msra.mxu0 %v7515
    %7587 = vmatprep.subr.mxu0 0.0
    %7588 = vmatpush2.msra.mxu0 0.0
    %7589 = vmatprep.subr.mxu0 0.0
    %7590 = vmatpush2.msra.mxu0 0.0
    %7591 = vmatprep.subr.mxu0 0.0
    %7592 = vmatpush2.msra.mxu0 0.0
    %7593 = vmatprep.subr.mxu0 0.0
    %7594 = vmatpush2.msra.mxu0 0.0
    %7595 = vmatprep.subr.mxu0 0.0
    %7596 = vmatpush2.msra.mxu0 0.0
    %7597 = vmatprep.subr.mxu0 0.0
    %7598 = vmatpush2.msra.mxu0 0.0
    %7599 = vmatprep.subr.mxu0 0.0
    %7600 = vmatpush2.msra.mxu0 0.0
    %7601 = vmatprep.subr.mxu0 0.0
    %7602 = vmatpush2.msra.mxu0 0.0
    %7603 = vmatprep.subr.mxu0 0.0
    %7604 = vmatpush2.msra.mxu0 0.0
    %7605 = vmatprep.subr.mxu0 0.0
    %7606 = vmatpush2.msra.mxu0 0.0
    %7607 = vmatprep.subr.mxu0 0.0
    %7608 = vmatpush2.msra.mxu0 0.0
    %7609 = vmatprep.subr.mxu0 0.0
    %7610 = vmatpush2.msra.mxu0 0.0
    %7611 = vmatprep.subr.mxu0 0.0
    %7612 = vmatpush2.msra.mxu0 0.0
    %7613 = vmatprep.subr.mxu0 0.0
    %7614 = vmatpush2.msra.mxu0 0.0
    %7615 = vmatprep.subr.mxu0 0.0
    %7616 = vmatpush2.msra.mxu0 0.0
    %7617 = vmatprep.subr.mxu0 0.0
    %7618 = vmatpush2.msra.mxu0 0.0
    %7619 = vmatprep.mubr.f32.mxu0 0.0
    %7620 = vmatmul.mubr.f32.gmra.mxu0 %v7520
    %v7621 = vpop.f32.mrf.mxu0
    %v7622 = vadd.f32 0.0, %v7621
    %v7623 = vpop.f32.mrf.mxu0
    %7624 = vmatprep.mubr.f32.mxu0 0.0
    %7625 = vmatmul.mubr.f32.gmra.mxu0 %v7523
    %v7626 = vpop.f32.mrf.mxu0
    %v7627 = vadd.f32 0.0, %v7626
    %v7628 = vpop.f32.mrf.mxu0
    %7629 = vmatprep.mubr.f32.mxu0 0.0
    %7630 = vmatmul.mubr.f32.gmra.mxu0 %v7526
    %v7631 = vpop.f32.mrf.mxu0
    %v7632 = vadd.f32 0.0, %v7631
    %v7633 = vpop.f32.mrf.mxu0
    %7634 = vmatprep.mubr.f32.mxu0 0.0
    %7635 = vmatmul.mubr.f32.gmra.mxu0 %v7529
    %v7636 = vpop.f32.mrf.mxu0
    %v7637 = vadd.f32 0.0, %v7636
    %v7638 = vpop.f32.mrf.mxu0
    %7639 = vmatprep.mubr.f32.mxu0 0.0
    %7640 = vmatmul.mubr.f32.gmra.mxu0 %v7532
    %v7641 = vpop.f32.mrf.mxu0
    %v7642 = vadd.f32 0.0, %v7641
    %v7643 = vpop.f32.mrf.mxu0
    %7644 = vmatprep.mubr.f32.mxu0 0.0
    %7645 = vmatmul.mubr.f32.gmra.mxu0 %v7535
    %v7646 = vpop.f32.mrf.mxu0
    %v7647 = vadd.f32 0.0, %v7646
    %v7648 = vpop.f32.mrf.mxu0
    %7649 = vmatprep.mubr.f32.mxu0 0.0
    %7650 = vmatmul.mubr.f32.gmra.mxu0 %v7538
    %v7651 = vpop.f32.mrf.mxu0
    %v7652 = vadd.f32 0.0, %v7651
    %v7653 = vpop.f32.mrf.mxu0
    %7654 = vmatprep.mubr.f32.mxu0 0.0
    %7655 = vmatmul.mubr.f32.gmra.mxu0 %v7541
    %v7656 = vpop.f32.mrf.mxu0
    %v7657 = vadd.f32 0.0, %v7656
    %v7658 = vpop.f32.mrf.mxu0
    %7659 = vmatprep.mubr.f32.mxu0 0.0
    %7660 = vmatmul.mubr.f32.gmra.mxu0 %v7544
    %v7661 = vpop.f32.mrf.mxu0
    %v7662 = vadd.f32 0.0, %v7661
    %v7663 = vpop.f32.mrf.mxu0
    %7664 = vmatprep.mubr.f32.mxu0 0.0
    %7665 = vmatmul.mubr.f32.gmra.mxu0 %v7547
    %v7666 = vpop.f32.mrf.mxu0
    %v7667 = vadd.f32 0.0, %v7666
    %v7668 = vpop.f32.mrf.mxu0
    %7669 = vmatprep.mubr.f32.mxu0 0.0
    %7670 = vmatmul.mubr.f32.gmra.mxu0 %v7550
    %v7671 = vpop.f32.mrf.mxu0
    %v7672 = vadd.f32 0.0, %v7671
    %v7673 = vpop.f32.mrf.mxu0
    %7674 = vmatprep.mubr.f32.mxu0 0.0
    %7675 = vmatmul.mubr.f32.gmra.mxu0 %v7553
    %v7676 = vpop.f32.mrf.mxu0
    %v7677 = vadd.f32 0.0, %v7676
    %v7678 = vpop.f32.mrf.mxu0
    %7679 = vdwg.mxu0
    %v7680 = vadd.f32 %v7490, %v7622
    %v7681 = vadd.f32 %v7491, %v7627
    %v7682 = vadd.f32 %v7492, %v7632
    %v7683 = vadd.f32 %v7493, %v7637
    %v7684 = vadd.f32 %v7494, %v7642
    %v7685 = vadd.f32 %v7495, %v7647
    %v7686 = vadd.f32 %v7496, %v7652
    %v7687 = vadd.f32 %v7497, %v7657
    %v7688 = vadd.f32 %v7498, %v7662
    %v7689 = vadd.f32 %v7499, %v7667
    %v7690 = vadd.f32 %v7500, %v7672
    %v7691 = vadd.f32 %v7501, %v7677
    %v7692 = vld [vmem:[#allocation4 + $0x10] sm:$0xff]
    %v7693 = vld [vmem:[#allocation4 + $0x18] sm:$0xff]
    %v7694 = vld [vmem:[#allocation4 + $0x20] sm:$0xff]
    %v7695 = vld [vmem:[#allocation4 + $0x28] sm:$0xff]
    %v7696 = vld [vmem:[#allocation4 + $0x30] sm:$0xff]
    %v7697 = vld [vmem:[#allocation4 + $0x38] sm:$0xff]
    %v7698 = vld [vmem:[#allocation4 + $0x40] sm:$0xff]
    %v7699 = vld [vmem:[#allocation4 + $0x48] sm:$0xff]
    %v7700 = vld [vmem:[#allocation4 + $0x50] sm:$0xff]
    %v7701 = vld [vmem:[#allocation4 + $0x58] sm:$0xff]
    %v7702 = vld [vmem:[#allocation4 + $0x60] sm:$0xff]
    %v7703 = vld [vmem:[#allocation4 + $0x68] sm:$0xff]
    %s7704 = scalar_lea.vmem %s12, 128
    %v7705 = vld [vmem:[%s7704] sm:$0xff]
    %v7706 = vld [vmem:[%s7704 + $0x8] sm:$0xff]
    %v7707 = vld [vmem:[%s7704 + $0x10] sm:$0xff]
    %v7708 = vld [vmem:[%s7704 + $0x18] sm:$0xff]
    %v7710 = vsel %vm169, %v7692, 0
    %v7713 = vsel %vm169, %v7693, 0
    %v7716 = vsel %vm169, %v7694, 0
    %v7719 = vsel %vm169, %v7695, 0
    %v7722 = vsel %vm169, %v7696, 0
    %v7725 = vsel %vm169, %v7697, 0
    %v7728 = vsel %vm169, %v7698, 0
    %v7731 = vsel %vm169, %v7699, 0
    %v7734 = vsel %vm169, %v7700, 0
    %v7737 = vsel %vm169, %v7701, 0
    %v7740 = vsel %vm169, %v7702, 0
    %v7743 = vsel %vm169, %v7703, 0
    %7745 = vmatprep.subr.mxu0 0.0
    %7746 = vmatpush1.msra.mxu0 0.0
    %7747 = vmatprep.subr.mxu0 0.0
    %7748 = vmatpush1.msra.mxu0 0.0
    %7749 = vmatprep.subr.mxu0 0.0
    %7750 = vmatpush1.msra.mxu0 0.0
    %7751 = vmatprep.subr.mxu0 0.0
    %7752 = vmatpush1.msra.mxu0 0.0
    %7753 = vmatprep.subr.mxu0 0.0
    %7754 = vmatpush1.msra.mxu0 0.0
    %7755 = vmatprep.subr.mxu0 0.0
    %7756 = vmatpush1.msra.mxu0 0.0
    %7757 = vmatprep.subr.mxu0 0.0
    %7758 = vmatpush1.msra.mxu0 0.0
    %7759 = vmatprep.subr.mxu0 0.0
    %7760 = vmatpush1.msra.mxu0 0.0
    %7761 = vmatprep.subr.mxu0 0.0
    %7762 = vmatpush1.msra.mxu0 0.0
    %7763 = vmatprep.subr.mxu0 0.0
    %7764 = vmatpush1.msra.mxu0 0.0
    %7765 = vmatprep.subr.mxu0 0.0
    %7766 = vmatpush1.msra.mxu0 0.0
    %7767 = vmatprep.subr.mxu0 0.0
    %7768 = vmatpush1.msra.mxu0 0.0
    %7769 = vmatprep.subr.mxu0 0.0
    %7770 = vmatpush1.msra.mxu0 %v7708
    %7771 = vmatprep.subr.mxu0 0.0
    %7772 = vmatpush1.msra.mxu0 %v7707
    %7773 = vmatprep.subr.mxu0 0.0
    %7774 = vmatpush1.msra.mxu0 %v7706
    %7775 = vmatprep.subr.mxu0 0.0
    %7776 = vmatpush1.msra.mxu0 %v7705
    %7777 = vmatprep.subr.mxu0 0.0
    %7778 = vmatpush2.msra.mxu0 0.0
    %7779 = vmatprep.subr.mxu0 0.0
    %7780 = vmatpush2.msra.mxu0 0.0
    %7781 = vmatprep.subr.mxu0 0.0
    %7782 = vmatpush2.msra.mxu0 0.0
    %7783 = vmatprep.subr.mxu0 0.0
    %7784 = vmatpush2.msra.mxu0 0.0
    %7785 = vmatprep.subr.mxu0 0.0
    %7786 = vmatpush2.msra.mxu0 0.0
    %7787 = vmatprep.subr.mxu0 0.0
    %7788 = vmatpush2.msra.mxu0 0.0
    %7789 = vmatprep.subr.mxu0 0.0
    %7790 = vmatpush2.msra.mxu0 0.0
    %7791 = vmatprep.subr.mxu0 0.0
    %7792 = vmatpush2.msra.mxu0 0.0
    %7793 = vmatprep.subr.mxu0 0.0
    %7794 = vmatpush2.msra.mxu0 0.0
    %7795 = vmatprep.subr.mxu0 0.0
    %7796 = vmatpush2.msra.mxu0 0.0
    %7797 = vmatprep.subr.mxu0 0.0
    %7798 = vmatpush2.msra.mxu0 0.0
    %7799 = vmatprep.subr.mxu0 0.0
    %7800 = vmatpush2.msra.mxu0 0.0
    %7801 = vmatprep.subr.mxu0 0.0
    %7802 = vmatpush2.msra.mxu0 0.0
    %7803 = vmatprep.subr.mxu0 0.0
    %7804 = vmatpush2.msra.mxu0 0.0
    %7805 = vmatprep.subr.mxu0 0.0
    %7806 = vmatpush2.msra.mxu0 0.0
    %7807 = vmatprep.subr.mxu0 0.0
    %7808 = vmatpush2.msra.mxu0 0.0
    %7809 = vmatprep.mubr.f32.mxu0 0.0
    %7810 = vmatmul.mubr.f32.gmra.mxu0 %v7710
    %v7811 = vpop.f32.mrf.mxu0
    %v7812 = vadd.f32 0.0, %v7811
    %v7813 = vpop.f32.mrf.mxu0
    %7814 = vmatprep.mubr.f32.mxu0 0.0
    %7815 = vmatmul.mubr.f32.gmra.mxu0 %v7713
    %v7816 = vpop.f32.mrf.mxu0
    %v7817 = vadd.f32 0.0, %v7816
    %v7818 = vpop.f32.mrf.mxu0
    %7819 = vmatprep.mubr.f32.mxu0 0.0
    %7820 = vmatmul.mubr.f32.gmra.mxu0 %v7716
    %v7821 = vpop.f32.mrf.mxu0
    %v7822 = vadd.f32 0.0, %v7821
    %v7823 = vpop.f32.mrf.mxu0
    %7824 = vmatprep.mubr.f32.mxu0 0.0
    %7825 = vmatmul.mubr.f32.gmra.mxu0 %v7719
    %v7826 = vpop.f32.mrf.mxu0
    %v7827 = vadd.f32 0.0, %v7826
    %v7828 = vpop.f32.mrf.mxu0
    %7829 = vmatprep.mubr.f32.mxu0 0.0
    %7830 = vmatmul.mubr.f32.gmra.mxu0 %v7722
    %v7831 = vpop.f32.mrf.mxu0
    %v7832 = vadd.f32 0.0, %v7831
    %v7833 = vpop.f32.mrf.mxu0
    %7834 = vmatprep.mubr.f32.mxu0 0.0
    %7835 = vmatmul.mubr.f32.gmra.mxu0 %v7725
    %v7836 = vpop.f32.mrf.mxu0
    %v7837 = vadd.f32 0.0, %v7836
    %v7838 = vpop.f32.mrf.mxu0
    %7839 = vmatprep.mubr.f32.mxu0 0.0
    %7840 = vmatmul.mubr.f32.gmra.mxu0 %v7728
    %v7841 = vpop.f32.mrf.mxu0
    %v7842 = vadd.f32 0.0, %v7841
    %v7843 = vpop.f32.mrf.mxu0
    %7844 = vmatprep.mubr.f32.mxu0 0.0
    %7845 = vmatmul.mubr.f32.gmra.mxu0 %v7731
    %v7846 = vpop.f32.mrf.mxu0
    %v7847 = vadd.f32 0.0, %v7846
    %v7848 = vpop.f32.mrf.mxu0
    %7849 = vmatprep.mubr.f32.mxu0 0.0
    %7850 = vmatmul.mubr.f32.gmra.mxu0 %v7734
    %v7851 = vpop.f32.mrf.mxu0
    %v7852 = vadd.f32 0.0, %v7851
    %v7853 = vpop.f32.mrf.mxu0
    %7854 = vmatprep.mubr.f32.mxu0 0.0
    %7855 = vmatmul.mubr.f32.gmra.mxu0 %v7737
    %v7856 = vpop.f32.mrf.mxu0
    %v7857 = vadd.f32 0.0, %v7856
    %v7858 = vpop.f32.mrf.mxu0
    %7859 = vmatprep.mubr.f32.mxu0 0.0
    %7860 = vmatmul.mubr.f32.gmra.mxu0 %v7740
    %v7861 = vpop.f32.mrf.mxu0
    %v7862 = vadd.f32 0.0, %v7861
    %v7863 = vpop.f32.mrf.mxu0
    %7864 = vmatprep.mubr.f32.mxu0 0.0
    %7865 = vmatmul.mubr.f32.gmra.mxu0 %v7743
    %v7866 = vpop.f32.mrf.mxu0
    %v7867 = vadd.f32 0.0, %v7866
    %v7868 = vpop.f32.mrf.mxu0
    %7869 = vdwg.mxu0
    %v7870 = vadd.f32 %v7680, %v7812
    %v7871 = vadd.f32 %v7681, %v7817
    %v7872 = vadd.f32 %v7682, %v7822
    %v7873 = vadd.f32 %v7683, %v7827
    %v7874 = vadd.f32 %v7684, %v7832
    %v7875 = vadd.f32 %v7685, %v7837
    %v7876 = vadd.f32 %v7686, %v7842
    %v7877 = vadd.f32 %v7687, %v7847
    %v7878 = vadd.f32 %v7688, %v7852
    %v7879 = vadd.f32 %v7689, %v7857
    %v7880 = vadd.f32 %v7690, %v7862
    %v7881 = vadd.f32 %v7691, %v7867
    %v7882 = vld [vmem:[#allocation4 + $0x11] sm:$0xff]
    %v7883 = vld [vmem:[#allocation4 + $0x19] sm:$0xff]
    %v7884 = vld [vmem:[#allocation4 + $0x21] sm:$0xff]
    %v7885 = vld [vmem:[#allocation4 + $0x29] sm:$0xff]
    %v7886 = vld [vmem:[#allocation4 + $0x31] sm:$0xff]
    %v7887 = vld [vmem:[#allocation4 + $0x39] sm:$0xff]
    %v7888 = vld [vmem:[#allocation4 + $0x41] sm:$0xff]
    %v7889 = vld [vmem:[#allocation4 + $0x49] sm:$0xff]
    %v7890 = vld [vmem:[#allocation4 + $0x51] sm:$0xff]
    %v7891 = vld [vmem:[#allocation4 + $0x59] sm:$0xff]
    %v7892 = vld [vmem:[#allocation4 + $0x61] sm:$0xff]
    %v7893 = vld [vmem:[#allocation4 + $0x69] sm:$0xff]
    %s7894 = scalar_lea.vmem %s12, 160
    %v7895 = vld [vmem:[%s7894] sm:$0xff]
    %v7896 = vld [vmem:[%s7894 + $0x8] sm:$0xff]
    %v7897 = vld [vmem:[%s7894 + $0x10] sm:$0xff]
    %v7898 = vld [vmem:[%s7894 + $0x18] sm:$0xff]
    %v7900 = vsel %vm169, %v7882, 0
    %v7903 = vsel %vm169, %v7883, 0
    %v7906 = vsel %vm169, %v7884, 0
    %v7909 = vsel %vm169, %v7885, 0
    %v7912 = vsel %vm169, %v7886, 0
    %v7915 = vsel %vm169, %v7887, 0
    %v7918 = vsel %vm169, %v7888, 0
    %v7921 = vsel %vm169, %v7889, 0
    %v7924 = vsel %vm169, %v7890, 0
    %v7927 = vsel %vm169, %v7891, 0
    %v7930 = vsel %vm169, %v7892, 0
    %v7933 = vsel %vm169, %v7893, 0
    %7935 = vmatprep.subr.mxu0 0.0
    %7936 = vmatpush1.msra.mxu0 0.0
    %7937 = vmatprep.subr.mxu0 0.0
    %7938 = vmatpush1.msra.mxu0 0.0
    %7939 = vmatprep.subr.mxu0 0.0
    %7940 = vmatpush1.msra.mxu0 0.0
    %7941 = vmatprep.subr.mxu0 0.0
    %7942 = vmatpush1.msra.mxu0 0.0
    %7943 = vmatprep.subr.mxu0 0.0
    %7944 = vmatpush1.msra.mxu0 0.0
    %7945 = vmatprep.subr.mxu0 0.0
    %7946 = vmatpush1.msra.mxu0 0.0
    %7947 = vmatprep.subr.mxu0 0.0
    %7948 = vmatpush1.msra.mxu0 0.0
    %7949 = vmatprep.subr.mxu0 0.0
    %7950 = vmatpush1.msra.mxu0 0.0
    %7951 = vmatprep.subr.mxu0 0.0
    %7952 = vmatpush1.msra.mxu0 0.0
    %7953 = vmatprep.subr.mxu0 0.0
    %7954 = vmatpush1.msra.mxu0 0.0
    %7955 = vmatprep.subr.mxu0 0.0
    %7956 = vmatpush1.msra.mxu0 0.0
    %7957 = vmatprep.subr.mxu0 0.0
    %7958 = vmatpush1.msra.mxu0 0.0
    %7959 = vmatprep.subr.mxu0 0.0
    %7960 = vmatpush1.msra.mxu0 %v7898
    %7961 = vmatprep.subr.mxu0 0.0
    %7962 = vmatpush1.msra.mxu0 %v7897
    %7963 = vmatprep.subr.mxu0 0.0
    %7964 = vmatpush1.msra.mxu0 %v7896
    %7965 = vmatprep.subr.mxu0 0.0
    %7966 = vmatpush1.msra.mxu0 %v7895
    %7967 = vmatprep.subr.mxu0 0.0
    %7968 = vmatpush2.msra.mxu0 0.0
    %7969 = vmatprep.subr.mxu0 0.0
    %7970 = vmatpush2.msra.mxu0 0.0
    %7971 = vmatprep.subr.mxu0 0.0
    %7972 = vmatpush2.msra.mxu0 0.0
    %7973 = vmatprep.subr.mxu0 0.0
    %7974 = vmatpush2.msra.mxu0 0.0
    %7975 = vmatprep.subr.mxu0 0.0
    %7976 = vmatpush2.msra.mxu0 0.0
    %7977 = vmatprep.subr.mxu0 0.0
    %7978 = vmatpush2.msra.mxu0 0.0
    %7979 = vmatprep.subr.mxu0 0.0
    %7980 = vmatpush2.msra.mxu0 0.0
    %7981 = vmatprep.subr.mxu0 0.0
    %7982 = vmatpush2.msra.mxu0 0.0
    %7983 = vmatprep.subr.mxu0 0.0
    %7984 = vmatpush2.msra.mxu0 0.0
    %7985 = vmatprep.subr.mxu0 0.0
    %7986 = vmatpush2.msra.mxu0 0.0
    %7987 = vmatprep.subr.mxu0 0.0
    %7988 = vmatpush2.msra.mxu0 0.0
    %7989 = vmatprep.subr.mxu0 0.0
    %7990 = vmatpush2.msra.mxu0 0.0
    %7991 = vmatprep.subr.mxu0 0.0
    %7992 = vmatpush2.msra.mxu0 0.0
    %7993 = vmatprep.subr.mxu0 0.0
    %7994 = vmatpush2.msra.mxu0 0.0
    %7995 = vmatprep.subr.mxu0 0.0
    %7996 = vmatpush2.msra.mxu0 0.0
    %7997 = vmatprep.subr.mxu0 0.0
    %7998 = vmatpush2.msra.mxu0 0.0
    %7999 = vmatprep.mubr.f32.mxu0 0.0
    %8000 = vmatmul.mubr.f32.gmra.mxu0 %v7900
    %v8001 = vpop.f32.mrf.mxu0
    %v8002 = vadd.f32 0.0, %v8001
    %v8003 = vpop.f32.mrf.mxu0
    %8004 = vmatprep.mubr.f32.mxu0 0.0
    %8005 = vmatmul.mubr.f32.gmra.mxu0 %v7903
    %v8006 = vpop.f32.mrf.mxu0
    %v8007 = vadd.f32 0.0, %v8006
    %v8008 = vpop.f32.mrf.mxu0
    %8009 = vmatprep.mubr.f32.mxu0 0.0
    %8010 = vmatmul.mubr.f32.gmra.mxu0 %v7906
    %v8011 = vpop.f32.mrf.mxu0
    %v8012 = vadd.f32 0.0, %v8011
    %v8013 = vpop.f32.mrf.mxu0
    %8014 = vmatprep.mubr.f32.mxu0 0.0
    %8015 = vmatmul.mubr.f32.gmra.mxu0 %v7909
    %v8016 = vpop.f32.mrf.mxu0
    %v8017 = vadd.f32 0.0, %v8016
    %v8018 = vpop.f32.mrf.mxu0
    %8019 = vmatprep.mubr.f32.mxu0 0.0
    %8020 = vmatmul.mubr.f32.gmra.mxu0 %v7912
    %v8021 = vpop.f32.mrf.mxu0
    %v8022 = vadd.f32 0.0, %v8021
    %v8023 = vpop.f32.mrf.mxu0
    %8024 = vmatprep.mubr.f32.mxu0 0.0
    %8025 = vmatmul.mubr.f32.gmra.mxu0 %v7915
    %v8026 = vpop.f32.mrf.mxu0
    %v8027 = vadd.f32 0.0, %v8026
    %v8028 = vpop.f32.mrf.mxu0
    %8029 = vmatprep.mubr.f32.mxu0 0.0
    %8030 = vmatmul.mubr.f32.gmra.mxu0 %v7918
    %v8031 = vpop.f32.mrf.mxu0
    %v8032 = vadd.f32 0.0, %v8031
    %v8033 = vpop.f32.mrf.mxu0
    %8034 = vmatprep.mubr.f32.mxu0 0.0
    %8035 = vmatmul.mubr.f32.gmra.mxu0 %v7921
    %v8036 = vpop.f32.mrf.mxu0
    %v8037 = vadd.f32 0.0, %v8036
    %v8038 = vpop.f32.mrf.mxu0
    %8039 = vmatprep.mubr.f32.mxu0 0.0
    %8040 = vmatmul.mubr.f32.gmra.mxu0 %v7924
    %v8041 = vpop.f32.mrf.mxu0
    %v8042 = vadd.f32 0.0, %v8041
    %v8043 = vpop.f32.mrf.mxu0
    %8044 = vmatprep.mubr.f32.mxu0 0.0
    %8045 = vmatmul.mubr.f32.gmra.mxu0 %v7927
    %v8046 = vpop.f32.mrf.mxu0
    %v8047 = vadd.f32 0.0, %v8046
    %v8048 = vpop.f32.mrf.mxu0
    %8049 = vmatprep.mubr.f32.mxu0 0.0
    %8050 = vmatmul.mubr.f32.gmra.mxu0 %v7930
    %v8051 = vpop.f32.mrf.mxu0
    %v8052 = vadd.f32 0.0, %v8051
    %v8053 = vpop.f32.mrf.mxu0
    %8054 = vmatprep.mubr.f32.mxu0 0.0
    %8055 = vmatmul.mubr.f32.gmra.mxu0 %v7933
    %v8056 = vpop.f32.mrf.mxu0
    %v8057 = vadd.f32 0.0, %v8056
    %v8058 = vpop.f32.mrf.mxu0
    %8059 = vdwg.mxu0
    %v8060 = vadd.f32 %v7870, %v8002
    %v8061 = vadd.f32 %v7871, %v8007
    %v8062 = vadd.f32 %v7872, %v8012
    %v8063 = vadd.f32 %v7873, %v8017
    %v8064 = vadd.f32 %v7874, %v8022
    %v8065 = vadd.f32 %v7875, %v8027
    %v8066 = vadd.f32 %v7876, %v8032
    %v8067 = vadd.f32 %v7877, %v8037
    %v8068 = vadd.f32 %v7878, %v8042
    %v8069 = vadd.f32 %v7879, %v8047
    %v8070 = vadd.f32 %v7880, %v8052
    %v8071 = vadd.f32 %v7881, %v8057
    %v8072 = vld [vmem:[#allocation4 + $0x17] sm:$0xff]
    %v8073 = vld [vmem:[#allocation4 + $0x1f] sm:$0xff]
    %v8074 = vld [vmem:[#allocation4 + $0x27] sm:$0xff]
    %v8075 = vld [vmem:[#allocation4 + $0x2f] sm:$0xff]
    %v8076 = vld [vmem:[#allocation4 + $0x37] sm:$0xff]
    %v8077 = vld [vmem:[#allocation4 + $0x3f] sm:$0xff]
    %v8078 = vld [vmem:[#allocation4 + $0x47] sm:$0xff]
    %v8079 = vld [vmem:[#allocation4 + $0x4f] sm:$0xff]
    %v8080 = vld [vmem:[#allocation4 + $0x57] sm:$0xff]
    %v8081 = vld [vmem:[#allocation4 + $0x5f] sm:$0xff]
    %v8082 = vld [vmem:[#allocation4 + $0x67] sm:$0xff]
    %v8083 = vld [vmem:[#allocation4 + $0x6f] sm:$0xff]
    %s8084 = scalar_lea.vmem %s12, 192
    %v8085 = vld [vmem:[%s8084] sm:$0xff]
    %v8086 = vld [vmem:[%s8084 + $0x8] sm:$0xff]
    %v8087 = vld [vmem:[%s8084 + $0x10] sm:$0xff]
    %v8088 = vld [vmem:[%s8084 + $0x18] sm:$0xff]
    %v8090 = vsel %vm169, %v8072, 0
    %v8093 = vsel %vm169, %v8073, 0
    %v8096 = vsel %vm169, %v8074, 0
    %v8099 = vsel %vm169, %v8075, 0
    %v8102 = vsel %vm169, %v8076, 0
    %v8105 = vsel %vm169, %v8077, 0
    %v8108 = vsel %vm169, %v8078, 0
    %v8111 = vsel %vm169, %v8079, 0
    %v8114 = vsel %vm169, %v8080, 0
    %v8117 = vsel %vm169, %v8081, 0
    %v8120 = vsel %vm169, %v8082, 0
    %v8123 = vsel %vm169, %v8083, 0
    %8125 = vmatprep.subr.mxu0 0.0
    %8126 = vmatpush1.msra.mxu0 0.0
    %8127 = vmatprep.subr.mxu0 0.0
    %8128 = vmatpush1.msra.mxu0 0.0
    %8129 = vmatprep.subr.mxu0 0.0
    %8130 = vmatpush1.msra.mxu0 0.0
    %8131 = vmatprep.subr.mxu0 0.0
    %8132 = vmatpush1.msra.mxu0 0.0
    %8133 = vmatprep.subr.mxu0 0.0
    %8134 = vmatpush1.msra.mxu0 0.0
    %8135 = vmatprep.subr.mxu0 0.0
    %8136 = vmatpush1.msra.mxu0 0.0
    %8137 = vmatprep.subr.mxu0 0.0
    %8138 = vmatpush1.msra.mxu0 0.0
    %8139 = vmatprep.subr.mxu0 0.0
    %8140 = vmatpush1.msra.mxu0 0.0
    %8141 = vmatprep.subr.mxu0 0.0
    %8142 = vmatpush1.msra.mxu0 0.0
    %8143 = vmatprep.subr.mxu0 0.0
    %8144 = vmatpush1.msra.mxu0 0.0
    %8145 = vmatprep.subr.mxu0 0.0
    %8146 = vmatpush1.msra.mxu0 0.0
    %8147 = vmatprep.subr.mxu0 0.0
    %8148 = vmatpush1.msra.mxu0 0.0
    %8149 = vmatprep.subr.mxu0 0.0
    %8150 = vmatpush1.msra.mxu0 %v8088
    %8151 = vmatprep.subr.mxu0 0.0
    %8152 = vmatpush1.msra.mxu0 %v8087
    %8153 = vmatprep.subr.mxu0 0.0
    %8154 = vmatpush1.msra.mxu0 %v8086
    %8155 = vmatprep.subr.mxu0 0.0
    %8156 = vmatpush1.msra.mxu0 %v8085
    %8157 = vmatprep.subr.mxu0 0.0
    %8158 = vmatpush2.msra.mxu0 0.0
    %8159 = vmatprep.subr.mxu0 0.0
    %8160 = vmatpush2.msra.mxu0 0.0
    %8161 = vmatprep.subr.mxu0 0.0
    %8162 = vmatpush2.msra.mxu0 0.0
    %8163 = vmatprep.subr.mxu0 0.0
    %8164 = vmatpush2.msra.mxu0 0.0
    %8165 = vmatprep.subr.mxu0 0.0
    %8166 = vmatpush2.msra.mxu0 0.0
    %8167 = vmatprep.subr.mxu0 0.0
    %8168 = vmatpush2.msra.mxu0 0.0
    %8169 = vmatprep.subr.mxu0 0.0
    %8170 = vmatpush2.msra.mxu0 0.0
    %8171 = vmatprep.subr.mxu0 0.0
    %8172 = vmatpush2.msra.mxu0 0.0
    %8173 = vmatprep.subr.mxu0 0.0
    %8174 = vmatpush2.msra.mxu0 0.0
    %8175 = vmatprep.subr.mxu0 0.0
    %8176 = vmatpush2.msra.mxu0 0.0
    %8177 = vmatprep.subr.mxu0 0.0
    %8178 = vmatpush2.msra.mxu0 0.0
    %8179 = vmatprep.subr.mxu0 0.0
    %8180 = vmatpush2.msra.mxu0 0.0
    %8181 = vmatprep.subr.mxu0 0.0
    %8182 = vmatpush2.msra.mxu0 0.0
    %8183 = vmatprep.subr.mxu0 0.0
    %8184 = vmatpush2.msra.mxu0 0.0
    %8185 = vmatprep.subr.mxu0 0.0
    %8186 = vmatpush2.msra.mxu0 0.0
    %8187 = vmatprep.subr.mxu0 0.0
    %8188 = vmatpush2.msra.mxu0 0.0
    %8189 = vmatprep.mubr.f32.mxu0 0.0
    %8190 = vmatmul.mubr.f32.gmra.mxu0 %v8090
    %v8191 = vpop.f32.mrf.mxu0
    %v8192 = vadd.f32 0.0, %v8191
    %v8193 = vpop.f32.mrf.mxu0
    %8194 = vmatprep.mubr.f32.mxu0 0.0
    %8195 = vmatmul.mubr.f32.gmra.mxu0 %v8093
    %v8196 = vpop.f32.mrf.mxu0
    %v8197 = vadd.f32 0.0, %v8196
    %v8198 = vpop.f32.mrf.mxu0
    %8199 = vmatprep.mubr.f32.mxu0 0.0
    %8200 = vmatmul.mubr.f32.gmra.mxu0 %v8096
    %v8201 = vpop.f32.mrf.mxu0
    %v8202 = vadd.f32 0.0, %v8201
    %v8203 = vpop.f32.mrf.mxu0
    %8204 = vmatprep.mubr.f32.mxu0 0.0
    %8205 = vmatmul.mubr.f32.gmra.mxu0 %v8099
    %v8206 = vpop.f32.mrf.mxu0
    %v8207 = vadd.f32 0.0, %v8206
    %v8208 = vpop.f32.mrf.mxu0
    %8209 = vmatprep.mubr.f32.mxu0 0.0
    %8210 = vmatmul.mubr.f32.gmra.mxu0 %v8102
    %v8211 = vpop.f32.mrf.mxu0
    %v8212 = vadd.f32 0.0, %v8211
    %v8213 = vpop.f32.mrf.mxu0
    %8214 = vmatprep.mubr.f32.mxu0 0.0
    %8215 = vmatmul.mubr.f32.gmra.mxu0 %v8105
    %v8216 = vpop.f32.mrf.mxu0
    %v8217 = vadd.f32 0.0, %v8216
    %v8218 = vpop.f32.mrf.mxu0
    %8219 = vmatprep.mubr.f32.mxu0 0.0
    %8220 = vmatmul.mubr.f32.gmra.mxu0 %v8108
    %v8221 = vpop.f32.mrf.mxu0
    %v8222 = vadd.f32 0.0, %v8221
    %v8223 = vpop.f32.mrf.mxu0
    %8224 = vmatprep.mubr.f32.mxu0 0.0
    %8225 = vmatmul.mubr.f32.gmra.mxu0 %v8111
    %v8226 = vpop.f32.mrf.mxu0
    %v8227 = vadd.f32 0.0, %v8226
    %v8228 = vpop.f32.mrf.mxu0
    %8229 = vmatprep.mubr.f32.mxu0 0.0
    %8230 = vmatmul.mubr.f32.gmra.mxu0 %v8114
    %v8231 = vpop.f32.mrf.mxu0
    %v8232 = vadd.f32 0.0, %v8231
    %v8233 = vpop.f32.mrf.mxu0
    %8234 = vmatprep.mubr.f32.mxu0 0.0
    %8235 = vmatmul.mubr.f32.gmra.mxu0 %v8117
    %v8236 = vpop.f32.mrf.mxu0
    %v8237 = vadd.f32 0.0, %v8236
    %v8238 = vpop.f32.mrf.mxu0
    %8239 = vmatprep.mubr.f32.mxu0 0.0
    %8240 = vmatmul.mubr.f32.gmra.mxu0 %v8120
    %v8241 = vpop.f32.mrf.mxu0
    %v8242 = vadd.f32 0.0, %v8241
    %v8243 = vpop.f32.mrf.mxu0
    %8244 = vmatprep.mubr.f32.mxu0 0.0
    %8245 = vmatmul.mubr.f32.gmra.mxu0 %v8123
    %v8246 = vpop.f32.mrf.mxu0
    %v8247 = vadd.f32 0.0, %v8246
    %v8248 = vpop.f32.mrf.mxu0
    %8249 = vdwg.mxu0
    %v8250 = vadd.f32 %v8060, %v8192
    %v8251 = vadd.f32 %v8061, %v8197
    %v8252 = vadd.f32 %v8062, %v8202
    %v8253 = vadd.f32 %v8063, %v8207
    %v8254 = vadd.f32 %v8064, %v8212
    %v8255 = vadd.f32 %v8065, %v8217
    %v8256 = vadd.f32 %v8066, %v8222
    %v8257 = vadd.f32 %v8067, %v8227
    %v8258 = vadd.f32 %v8068, %v8232
    %v8259 = vadd.f32 %v8069, %v8237
    %v8260 = vadd.f32 %v8070, %v8242
    %v8261 = vadd.f32 %v8071, %v8247
    %v8262 = vld [vmem:[#allocation4 + $0x18] sm:$0xff]
    %v8263 = vld [vmem:[#allocation4 + $0x20] sm:$0xff]
    %v8264 = vld [vmem:[#allocation4 + $0x28] sm:$0xff]
    %v8265 = vld [vmem:[#allocation4 + $0x30] sm:$0xff]
    %v8266 = vld [vmem:[#allocation4 + $0x38] sm:$0xff]
    %v8267 = vld [vmem:[#allocation4 + $0x40] sm:$0xff]
    %v8268 = vld [vmem:[#allocation4 + $0x48] sm:$0xff]
    %v8269 = vld [vmem:[#allocation4 + $0x50] sm:$0xff]
    %v8270 = vld [vmem:[#allocation4 + $0x58] sm:$0xff]
    %v8271 = vld [vmem:[#allocation4 + $0x60] sm:$0xff]
    %v8272 = vld [vmem:[#allocation4 + $0x68] sm:$0xff]
    %v8273 = vld [vmem:[#allocation4 + $0x70] sm:$0xff]
    %s8274 = scalar_lea.vmem %s12, 224
    %v8275 = vld [vmem:[%s8274] sm:$0xff]
    %v8276 = vld [vmem:[%s8274 + $0x8] sm:$0xff]
    %v8277 = vld [vmem:[%s8274 + $0x10] sm:$0xff]
    %v8278 = vld [vmem:[%s8274 + $0x18] sm:$0xff]
    %v8280 = vsel %vm169, %v8262, 0
    %v8283 = vsel %vm169, %v8263, 0
    %v8286 = vsel %vm169, %v8264, 0
    %v8289 = vsel %vm169, %v8265, 0
    %v8292 = vsel %vm169, %v8266, 0
    %v8295 = vsel %vm169, %v8267, 0
    %v8298 = vsel %vm169, %v8268, 0
    %v8301 = vsel %vm169, %v8269, 0
    %v8304 = vsel %vm169, %v8270, 0
    %v8307 = vsel %vm169, %v8271, 0
    %v8310 = vsel %vm169, %v8272, 0
    %v8313 = vsel %vm169, %v8273, 0
    %8315 = vmatprep.subr.mxu0 0.0
    %8316 = vmatpush1.msra.mxu0 0.0
    %8317 = vmatprep.subr.mxu0 0.0
    %8318 = vmatpush1.msra.mxu0 0.0
    %8319 = vmatprep.subr.mxu0 0.0
    %8320 = vmatpush1.msra.mxu0 0.0
    %8321 = vmatprep.subr.mxu0 0.0
    %8322 = vmatpush1.msra.mxu0 0.0
    %8323 = vmatprep.subr.mxu0 0.0
    %8324 = vmatpush1.msra.mxu0 0.0
    %8325 = vmatprep.subr.mxu0 0.0
    %8326 = vmatpush1.msra.mxu0 0.0
    %8327 = vmatprep.subr.mxu0 0.0
    %8328 = vmatpush1.msra.mxu0 0.0
    %8329 = vmatprep.subr.mxu0 0.0
    %8330 = vmatpush1.msra.mxu0 0.0
    %8331 = vmatprep.subr.mxu0 0.0
    %8332 = vmatpush1.msra.mxu0 0.0
    %8333 = vmatprep.subr.mxu0 0.0
    %8334 = vmatpush1.msra.mxu0 0.0
    %8335 = vmatprep.subr.mxu0 0.0
    %8336 = vmatpush1.msra.mxu0 0.0
    %8337 = vmatprep.subr.mxu0 0.0
    %8338 = vmatpush1.msra.mxu0 0.0
    %8339 = vmatprep.subr.mxu0 0.0
    %8340 = vmatpush1.msra.mxu0 %v8278
    %8341 = vmatprep.subr.mxu0 0.0
    %8342 = vmatpush1.msra.mxu0 %v8277
    %8343 = vmatprep.subr.mxu0 0.0
    %8344 = vmatpush1.msra.mxu0 %v8276
    %8345 = vmatprep.subr.mxu0 0.0
    %8346 = vmatpush1.msra.mxu0 %v8275
    %8347 = vmatprep.subr.mxu0 0.0
    %8348 = vmatpush2.msra.mxu0 0.0
    %8349 = vmatprep.subr.mxu0 0.0
    %8350 = vmatpush2.msra.mxu0 0.0
    %8351 = vmatprep.subr.mxu0 0.0
    %8352 = vmatpush2.msra.mxu0 0.0
    %8353 = vmatprep.subr.mxu0 0.0
    %8354 = vmatpush2.msra.mxu0 0.0
    %8355 = vmatprep.subr.mxu0 0.0
    %8356 = vmatpush2.msra.mxu0 0.0
    %8357 = vmatprep.subr.mxu0 0.0
    %8358 = vmatpush2.msra.mxu0 0.0
    %8359 = vmatprep.subr.mxu0 0.0
    %8360 = vmatpush2.msra.mxu0 0.0
    %8361 = vmatprep.subr.mxu0 0.0
    %8362 = vmatpush2.msra.mxu0 0.0
    %8363 = vmatprep.subr.mxu0 0.0
    %8364 = vmatpush2.msra.mxu0 0.0
    %8365 = vmatprep.subr.mxu0 0.0
    %8366 = vmatpush2.msra.mxu0 0.0
    %8367 = vmatprep.subr.mxu0 0.0
    %8368 = vmatpush2.msra.mxu0 0.0
    %8369 = vmatprep.subr.mxu0 0.0
    %8370 = vmatpush2.msra.mxu0 0.0
    %8371 = vmatprep.subr.mxu0 0.0
    %8372 = vmatpush2.msra.mxu0 0.0
    %8373 = vmatprep.subr.mxu0 0.0
    %8374 = vmatpush2.msra.mxu0 0.0
    %8375 = vmatprep.subr.mxu0 0.0
    %8376 = vmatpush2.msra.mxu0 0.0
    %8377 = vmatprep.subr.mxu0 0.0
    %8378 = vmatpush2.msra.mxu0 0.0
    %8379 = vmatprep.mubr.f32.mxu0 0.0
    %8380 = vmatmul.mubr.f32.gmra.mxu0 %v8280
    %v8381 = vpop.f32.mrf.mxu0
    %v8382 = vadd.f32 0.0, %v8381
    %v8383 = vpop.f32.mrf.mxu0
    %8384 = vmatprep.mubr.f32.mxu0 0.0
    %8385 = vmatmul.mubr.f32.gmra.mxu0 %v8283
    %v8386 = vpop.f32.mrf.mxu0
    %v8387 = vadd.f32 0.0, %v8386
    %v8388 = vpop.f32.mrf.mxu0
    %8389 = vmatprep.mubr.f32.mxu0 0.0
    %8390 = vmatmul.mubr.f32.gmra.mxu0 %v8286
    %v8391 = vpop.f32.mrf.mxu0
    %v8392 = vadd.f32 0.0, %v8391
    %v8393 = vpop.f32.mrf.mxu0
    %8394 = vmatprep.mubr.f32.mxu0 0.0
    %8395 = vmatmul.mubr.f32.gmra.mxu0 %v8289
    %v8396 = vpop.f32.mrf.mxu0
    %v8397 = vadd.f32 0.0, %v8396
    %v8398 = vpop.f32.mrf.mxu0
    %8399 = vmatprep.mubr.f32.mxu0 0.0
    %8400 = vmatmul.mubr.f32.gmra.mxu0 %v8292
    %v8401 = vpop.f32.mrf.mxu0
    %v8402 = vadd.f32 0.0, %v8401
    %v8403 = vpop.f32.mrf.mxu0
    %8404 = vmatprep.mubr.f32.mxu0 0.0
    %8405 = vmatmul.mubr.f32.gmra.mxu0 %v8295
    %v8406 = vpop.f32.mrf.mxu0
    %v8407 = vadd.f32 0.0, %v8406
    %v8408 = vpop.f32.mrf.mxu0
    %8409 = vmatprep.mubr.f32.mxu0 0.0
    %8410 = vmatmul.mubr.f32.gmra.mxu0 %v8298
    %v8411 = vpop.f32.mrf.mxu0
    %v8412 = vadd.f32 0.0, %v8411
    %v8413 = vpop.f32.mrf.mxu0
    %8414 = vmatprep.mubr.f32.mxu0 0.0
    %8415 = vmatmul.mubr.f32.gmra.mxu0 %v8301
    %v8416 = vpop.f32.mrf.mxu0
    %v8417 = vadd.f32 0.0, %v8416
    %v8418 = vpop.f32.mrf.mxu0
    %8419 = vmatprep.mubr.f32.mxu0 0.0
    %8420 = vmatmul.mubr.f32.gmra.mxu0 %v8304
    %v8421 = vpop.f32.mrf.mxu0
    %v8422 = vadd.f32 0.0, %v8421
    %v8423 = vpop.f32.mrf.mxu0
    %8424 = vmatprep.mubr.f32.mxu0 0.0
    %8425 = vmatmul.mubr.f32.gmra.mxu0 %v8307
    %v8426 = vpop.f32.mrf.mxu0
    %v8427 = vadd.f32 0.0, %v8426
    %v8428 = vpop.f32.mrf.mxu0
    %8429 = vmatprep.mubr.f32.mxu0 0.0
    %8430 = vmatmul.mubr.f32.gmra.mxu0 %v8310
    %v8431 = vpop.f32.mrf.mxu0
    %v8432 = vadd.f32 0.0, %v8431
    %v8433 = vpop.f32.mrf.mxu0
    %8434 = vmatprep.mubr.f32.mxu0 0.0
    %8435 = vmatmul.mubr.f32.gmra.mxu0 %v8313
    %v8436 = vpop.f32.mrf.mxu0
    %v8437 = vadd.f32 0.0, %v8436
    %v8438 = vpop.f32.mrf.mxu0
    %8439 = vdwg.mxu0
    %v8440 = vadd.f32 %v8250, %v8382
    %v8441 = vadd.f32 %v8251, %v8387
    %v8442 = vadd.f32 %v8252, %v8392
    %v8443 = vadd.f32 %v8253, %v8397
    %v8444 = vadd.f32 %v8254, %v8402
    %v8445 = vadd.f32 %v8255, %v8407
    %v8446 = vadd.f32 %v8256, %v8412
    %v8447 = vadd.f32 %v8257, %v8417
    %v8448 = vadd.f32 %v8258, %v8422
    %v8449 = vadd.f32 %v8259, %v8427
    %v8450 = vadd.f32 %v8260, %v8432
    %v8451 = vadd.f32 %v8261, %v8437
    %v8452 = vld [vmem:[#allocation4 + $0x19] sm:$0xff]
    %v8453 = vld [vmem:[#allocation4 + $0x21] sm:$0xff]
    %v8454 = vld [vmem:[#allocation4 + $0x29] sm:$0xff]
    %v8455 = vld [vmem:[#allocation4 + $0x31] sm:$0xff]
    %v8456 = vld [vmem:[#allocation4 + $0x39] sm:$0xff]
    %v8457 = vld [vmem:[#allocation4 + $0x41] sm:$0xff]
    %v8458 = vld [vmem:[#allocation4 + $0x49] sm:$0xff]
    %v8459 = vld [vmem:[#allocation4 + $0x51] sm:$0xff]
    %v8460 = vld [vmem:[#allocation4 + $0x59] sm:$0xff]
    %v8461 = vld [vmem:[#allocation4 + $0x61] sm:$0xff]
    %v8462 = vld [vmem:[#allocation4 + $0x69] sm:$0xff]
    %v8463 = vld [vmem:[#allocation4 + $0x71] sm:$0xff]
    %s8464 = scalar_lea.vmem %s12, 256
    %v8465 = vld [vmem:[%s8464] sm:$0xff]
    %v8466 = vld [vmem:[%s8464 + $0x8] sm:$0xff]
    %v8467 = vld [vmem:[%s8464 + $0x10] sm:$0xff]
    %v8468 = vld [vmem:[%s8464 + $0x18] sm:$0xff]
    %v8470 = vsel %vm169, %v8452, 0
    %v8473 = vsel %vm169, %v8453, 0
    %v8476 = vsel %vm169, %v8454, 0
    %v8479 = vsel %vm169, %v8455, 0
    %v8482 = vsel %vm169, %v8456, 0
    %v8485 = vsel %vm169, %v8457, 0
    %v8488 = vsel %vm169, %v8458, 0
    %v8491 = vsel %vm169, %v8459, 0
    %v8494 = vsel %vm169, %v8460, 0
    %v8497 = vsel %vm169, %v8461, 0
    %v8500 = vsel %vm169, %v8462, 0
    %v8503 = vsel %vm169, %v8463, 0
    %8505 = vmatprep.subr.mxu0 0.0
    %8506 = vmatpush1.msra.mxu0 0.0
    %8507 = vmatprep.subr.mxu0 0.0
    %8508 = vmatpush1.msra.mxu0 0.0
    %8509 = vmatprep.subr.mxu0 0.0
    %8510 = vmatpush1.msra.mxu0 0.0
    %8511 = vmatprep.subr.mxu0 0.0
    %8512 = vmatpush1.msra.mxu0 0.0
    %8513 = vmatprep.subr.mxu0 0.0
    %8514 = vmatpush1.msra.mxu0 0.0
    %8515 = vmatprep.subr.mxu0 0.0
    %8516 = vmatpush1.msra.mxu0 0.0
    %8517 = vmatprep.subr.mxu0 0.0
    %8518 = vmatpush1.msra.mxu0 0.0
    %8519 = vmatprep.subr.mxu0 0.0
    %8520 = vmatpush1.msra.mxu0 0.0
    %8521 = vmatprep.subr.mxu0 0.0
    %8522 = vmatpush1.msra.mxu0 0.0
    %8523 = vmatprep.subr.mxu0 0.0
    %8524 = vmatpush1.msra.mxu0 0.0
    %8525 = vmatprep.subr.mxu0 0.0
    %8526 = vmatpush1.msra.mxu0 0.0
    %8527 = vmatprep.subr.mxu0 0.0
    %8528 = vmatpush1.msra.mxu0 0.0
    %8529 = vmatprep.subr.mxu0 0.0
    %8530 = vmatpush1.msra.mxu0 %v8468
    %8531 = vmatprep.subr.mxu0 0.0
    %8532 = vmatpush1.msra.mxu0 %v8467
    %8533 = vmatprep.subr.mxu0 0.0
    %8534 = vmatpush1.msra.mxu0 %v8466
    %8535 = vmatprep.subr.mxu0 0.0
    %8536 = vmatpush1.msra.mxu0 %v8465
    %8537 = vmatprep.subr.mxu0 0.0
    %8538 = vmatpush2.msra.mxu0 0.0
    %8539 = vmatprep.subr.mxu0 0.0
    %8540 = vmatpush2.msra.mxu0 0.0
    %8541 = vmatprep.subr.mxu0 0.0
    %8542 = vmatpush2.msra.mxu0 0.0
    %8543 = vmatprep.subr.mxu0 0.0
    %8544 = vmatpush2.msra.mxu0 0.0
    %8545 = vmatprep.subr.mxu0 0.0
    %8546 = vmatpush2.msra.mxu0 0.0
    %8547 = vmatprep.subr.mxu0 0.0
    %8548 = vmatpush2.msra.mxu0 0.0
    %8549 = vmatprep.subr.mxu0 0.0
    %8550 = vmatpush2.msra.mxu0 0.0
    %8551 = vmatprep.subr.mxu0 0.0
    %8552 = vmatpush2.msra.mxu0 0.0
    %8553 = vmatprep.subr.mxu0 0.0
    %8554 = vmatpush2.msra.mxu0 0.0
    %8555 = vmatprep.subr.mxu0 0.0
    %8556 = vmatpush2.msra.mxu0 0.0
    %8557 = vmatprep.subr.mxu0 0.0
    %8558 = vmatpush2.msra.mxu0 0.0
    %8559 = vmatprep.subr.mxu0 0.0
    %8560 = vmatpush2.msra.mxu0 0.0
    %8561 = vmatprep.subr.mxu0 0.0
    %8562 = vmatpush2.msra.mxu0 0.0
    %8563 = vmatprep.subr.mxu0 0.0
    %8564 = vmatpush2.msra.mxu0 0.0
    %8565 = vmatprep.subr.mxu0 0.0
    %8566 = vmatpush2.msra.mxu0 0.0
    %8567 = vmatprep.subr.mxu0 0.0
    %8568 = vmatpush2.msra.mxu0 0.0
    %8569 = vmatprep.mubr.f32.mxu0 0.0
    %8570 = vmatmul.mubr.f32.gmra.mxu0 %v8470
    %v8571 = vpop.f32.mrf.mxu0
    %v8572 = vadd.f32 0.0, %v8571
    %v8573 = vpop.f32.mrf.mxu0
    %8574 = vmatprep.mubr.f32.mxu0 0.0
    %8575 = vmatmul.mubr.f32.gmra.mxu0 %v8473
    %v8576 = vpop.f32.mrf.mxu0
    %v8577 = vadd.f32 0.0, %v8576
    %v8578 = vpop.f32.mrf.mxu0
    %8579 = vmatprep.mubr.f32.mxu0 0.0
    %8580 = vmatmul.mubr.f32.gmra.mxu0 %v8476
    %v8581 = vpop.f32.mrf.mxu0
    %v8582 = vadd.f32 0.0, %v8581
    %v8583 = vpop.f32.mrf.mxu0
    %8584 = vmatprep.mubr.f32.mxu0 0.0
    %8585 = vmatmul.mubr.f32.gmra.mxu0 %v8479
    %v8586 = vpop.f32.mrf.mxu0
    %v8587 = vadd.f32 0.0, %v8586
    %v8588 = vpop.f32.mrf.mxu0
    %8589 = vmatprep.mubr.f32.mxu0 0.0
    %8590 = vmatmul.mubr.f32.gmra.mxu0 %v8482
    %v8591 = vpop.f32.mrf.mxu0
    %v8592 = vadd.f32 0.0, %v8591
    %v8593 = vpop.f32.mrf.mxu0
    %8594 = vmatprep.mubr.f32.mxu0 0.0
    %8595 = vmatmul.mubr.f32.gmra.mxu0 %v8485
    %v8596 = vpop.f32.mrf.mxu0
    %v8597 = vadd.f32 0.0, %v8596
    %v8598 = vpop.f32.mrf.mxu0
    %8599 = vmatprep.mubr.f32.mxu0 0.0
    %8600 = vmatmul.mubr.f32.gmra.mxu0 %v8488
    %v8601 = vpop.f32.mrf.mxu0
    %v8602 = vadd.f32 0.0, %v8601
    %v8603 = vpop.f32.mrf.mxu0
    %8604 = vmatprep.mubr.f32.mxu0 0.0
    %8605 = vmatmul.mubr.f32.gmra.mxu0 %v8491
    %v8606 = vpop.f32.mrf.mxu0
    %v8607 = vadd.f32 0.0, %v8606
    %v8608 = vpop.f32.mrf.mxu0
    %8609 = vmatprep.mubr.f32.mxu0 0.0
    %8610 = vmatmul.mubr.f32.gmra.mxu0 %v8494
    %v8611 = vpop.f32.mrf.mxu0
    %v8612 = vadd.f32 0.0, %v8611
    %v8613 = vpop.f32.mrf.mxu0
    %8614 = vmatprep.mubr.f32.mxu0 0.0
    %8615 = vmatmul.mubr.f32.gmra.mxu0 %v8497
    %v8616 = vpop.f32.mrf.mxu0
    %v8617 = vadd.f32 0.0, %v8616
    %v8618 = vpop.f32.mrf.mxu0
    %8619 = vmatprep.mubr.f32.mxu0 0.0
    %8620 = vmatmul.mubr.f32.gmra.mxu0 %v8500
    %v8621 = vpop.f32.mrf.mxu0
    %v8622 = vadd.f32 0.0, %v8621
    %v8623 = vpop.f32.mrf.mxu0
    %8624 = vmatprep.mubr.f32.mxu0 0.0
    %8625 = vmatmul.mubr.f32.gmra.mxu0 %v8503
    %v8626 = vpop.f32.mrf.mxu0
    %v8627 = vadd.f32 0.0, %v8626
    %v8628 = vpop.f32.mrf.mxu0
    %8629 = vdwg.mxu0
    %v8630 = vadd.f32 %v8440, %v8572
    %v8631 = vadd.f32 %v8441, %v8577
    %v8632 = vadd.f32 %v8442, %v8582
    %v8633 = vadd.f32 %v8443, %v8587
    %v8634 = vadd.f32 %v8444, %v8592
    %v8635 = vadd.f32 %v8445, %v8597
    %v8636 = vadd.f32 %v8446, %v8602
    %v8637 = vadd.f32 %v8447, %v8607
    %v8638 = vadd.f32 %v8448, %v8612
    %v8639 = vadd.f32 %v8449, %v8617
    %v8640 = vadd.f32 %v8450, %v8622
    %v8641 = vadd.f32 %v8451, %v8627
    %v8642 = vld [vmem:[%s13] sm:$0x1]
    %v8644 = vlaneseq
    %v8645 = vshrl.u32 %v8644, 7
    %v8646 = vsub.s32 0, %v8645
    %v8647 = vrot.slane %v8642, %v8646
    %v8649 = vadd.f32 %v8630, %v8647
    %v8650 = vadd.f32 %v8631, %v8647
    %v8651 = vadd.f32 %v8632, %v8647
    %v8652 = vadd.f32 %v8633, %v8647
    %v8653 = vadd.f32 %v8634, %v8647
    %v8654 = vadd.f32 %v8635, %v8647
    %v8655 = vadd.f32 %v8636, %v8647
    %v8656 = vadd.f32 %v8637, %v8647
    %v8657 = vadd.f32 %v8638, %v8647
    %v8658 = vadd.f32 %v8639, %v8647
    %v8659 = vadd.f32 %v8640, %v8647
    %v8660 = vadd.f32 %v8641, %v8647
    %v8661 = vld [vmem:[%s16] sm:$0x1]
    %v8662 = vld [vmem:[%s14] sm:$0x1]
    %v8663 = vld [vmem:[%s15] sm:$0x1]
    %vm8664 = vcmask 785408
    %v8666 = vsel %vm8664, %v8661, 0
    %8668 = vmatprep.subr.mxu0 0.0
    %8669 = vmatpush1.msra.mxu0 0.0
    %8670 = vmatprep.subr.mxu0 0.0
    %8671 = vmatpush1.msra.mxu0 0.0
    %8672 = vmatprep.subr.mxu0 0.0
    %8673 = vmatpush1.msra.mxu0 0.0
    %8674 = vmatprep.subr.mxu0 0.0
    %8675 = vmatpush1.msra.mxu0 0.0
    %8676 = vmatprep.subr.mxu0 0.0
    %8677 = vmatpush1.msra.mxu0 %v8660
    %8678 = vmatprep.subr.mxu0 0.0
    %8679 = vmatpush1.msra.mxu0 %v8659
    %8680 = vmatprep.subr.mxu0 0.0
    %8681 = vmatpush1.msra.mxu0 %v8658
    %8682 = vmatprep.subr.mxu0 0.0
    %8683 = vmatpush1.msra.mxu0 %v8657
    %8684 = vmatprep.subr.mxu0 0.0
    %8685 = vmatpush1.msra.mxu0 %v8656
    %8686 = vmatprep.subr.mxu0 0.0
    %8687 = vmatpush1.msra.mxu0 %v8655
    %8688 = vmatprep.subr.mxu0 0.0
    %8689 = vmatpush1.msra.mxu0 %v8654
    %8690 = vmatprep.subr.mxu0 0.0
    %8691 = vmatpush1.msra.mxu0 %v8653
    %8692 = vmatprep.subr.mxu0 0.0
    %8693 = vmatpush1.msra.mxu0 %v8652
    %8694 = vmatprep.subr.mxu0 0.0
    %8695 = vmatpush1.msra.mxu0 %v8651
    %8696 = vmatprep.subr.mxu0 0.0
    %8697 = vmatpush1.msra.mxu0 %v8650
    %8698 = vmatprep.subr.mxu0 0.0
    %8699 = vmatpush1.msra.mxu0 %v8649
    %8700 = vmatprep.subr.mxu0 0.0
    %8701 = vmatpush2.msra.mxu0 0.0
    %8702 = vmatprep.subr.mxu0 0.0
    %8703 = vmatpush2.msra.mxu0 0.0
    %8704 = vmatprep.subr.mxu0 0.0
    %8705 = vmatpush2.msra.mxu0 0.0
    %8706 = vmatprep.subr.mxu0 0.0
    %8707 = vmatpush2.msra.mxu0 0.0
    %8708 = vmatprep.subr.mxu0 0.0
    %8709 = vmatpush2.msra.mxu0 0.0
    %8710 = vmatprep.subr.mxu0 0.0
    %8711 = vmatpush2.msra.mxu0 0.0
    %8712 = vmatprep.subr.mxu0 0.0
    %8713 = vmatpush2.msra.mxu0 0.0
    %8714 = vmatprep.subr.mxu0 0.0
    %8715 = vmatpush2.msra.mxu0 0.0
    %8716 = vmatprep.subr.mxu0 0.0
    %8717 = vmatpush2.msra.mxu0 0.0
    %8718 = vmatprep.subr.mxu0 0.0
    %8719 = vmatpush2.msra.mxu0 0.0
    %8720 = vmatprep.subr.mxu0 0.0
    %8721 = vmatpush2.msra.mxu0 0.0
    %8722 = vmatprep.subr.mxu0 0.0
    %8723 = vmatpush2.msra.mxu0 0.0
    %8724 = vmatprep.subr.mxu0 0.0
    %8725 = vmatpush2.msra.mxu0 0.0
    %8726 = vmatprep.subr.mxu0 0.0
    %8727 = vmatpush2.msra.mxu0 0.0
    %8728 = vmatprep.subr.mxu0 0.0
    %8729 = vmatpush2.msra.mxu0 0.0
    %8730 = vmatprep.subr.mxu0 0.0
    %8731 = vmatpush2.msra.mxu0 0.0
    %8732 = vmatprep.mubr.f32.mxu0 0.0
    %8733 = vmatmul.mubr.f32.gmra.mxu0 %v8666
    %v8734 = vpop.f32.mrf.mxu0
    %v8735 = vadd.f32 0.0, %v8734
    %v8736 = vpop.f32.mrf.mxu0
    %8737 = vdwg.mxu0
    %v8738 = vmul.f32 %v8649, %v8649
    %v8739 = vmul.f32 %v8650, %v8650
    %v8740 = vmul.f32 %v8651, %v8651
    %v8741 = vmul.f32 %v8652, %v8652
    %v8742 = vmul.f32 %v8653, %v8653
    %v8743 = vmul.f32 %v8654, %v8654
    %v8744 = vmul.f32 %v8655, %v8655
    %v8745 = vmul.f32 %v8656, %v8656
    %v8746 = vmul.f32 %v8657, %v8657
    %v8747 = vmul.f32 %v8658, %v8658
    %v8748 = vmul.f32 %v8659, %v8659
    %v8749 = vmul.f32 %v8660, %v8660
    %8750 = vmatprep.subr.mxu0 0.0
    %8751 = vmatpush1.msra.mxu0 0.0
    %8752 = vmatprep.subr.mxu0 0.0
    %8753 = vmatpush1.msra.mxu0 0.0
    %8754 = vmatprep.subr.mxu0 0.0
    %8755 = vmatpush1.msra.mxu0 0.0
    %8756 = vmatprep.subr.mxu0 0.0
    %8757 = vmatpush1.msra.mxu0 0.0
    %8758 = vmatprep.subr.mxu0 0.0
    %8759 = vmatpush1.msra.mxu0 %v8749
    %8760 = vmatprep.subr.mxu0 0.0
    %8761 = vmatpush1.msra.mxu0 %v8748
    %8762 = vmatprep.subr.mxu0 0.0
    %8763 = vmatpush1.msra.mxu0 %v8747
    %8764 = vmatprep.subr.mxu0 0.0
    %8765 = vmatpush1.msra.mxu0 %v8746
    %8766 = vmatprep.subr.mxu0 0.0
    %8767 = vmatpush1.msra.mxu0 %v8745
    %8768 = vmatprep.subr.mxu0 0.0
    %8769 = vmatpush1.msra.mxu0 %v8744
    %8770 = vmatprep.subr.mxu0 0.0
    %8771 = vmatpush1.msra.mxu0 %v8743
    %8772 = vmatprep.subr.mxu0 0.0
    %8773 = vmatpush1.msra.mxu0 %v8742
    %8774 = vmatprep.subr.mxu0 0.0
    %8775 = vmatpush1.msra.mxu0 %v8741
    %8776 = vmatprep.subr.mxu0 0.0
    %8777 = vmatpush1.msra.mxu0 %v8740
    %8778 = vmatprep.subr.mxu0 0.0
    %8779 = vmatpush1.msra.mxu0 %v8739
    %8780 = vmatprep.subr.mxu0 0.0
    %8781 = vmatpush1.msra.mxu0 %v8738
    %8782 = vmatprep.subr.mxu0 0.0
    %8783 = vmatpush2.msra.mxu0 0.0
    %8784 = vmatprep.subr.mxu0 0.0
    %8785 = vmatpush2.msra.mxu0 0.0
    %8786 = vmatprep.subr.mxu0 0.0
    %8787 = vmatpush2.msra.mxu0 0.0
    %8788 = vmatprep.subr.mxu0 0.0
    %8789 = vmatpush2.msra.mxu0 0.0
    %8790 = vmatprep.subr.mxu0 0.0
    %8791 = vmatpush2.msra.mxu0 0.0
    %8792 = vmatprep.subr.mxu0 0.0
    %8793 = vmatpush2.msra.mxu0 0.0
    %8794 = vmatprep.subr.mxu0 0.0
    %8795 = vmatpush2.msra.mxu0 0.0
    %8796 = vmatprep.subr.mxu0 0.0
    %8797 = vmatpush2.msra.mxu0 0.0
    %8798 = vmatprep.subr.mxu0 0.0
    %8799 = vmatpush2.msra.mxu0 0.0
    %8800 = vmatprep.subr.mxu0 0.0
    %8801 = vmatpush2.msra.mxu0 0.0
    %8802 = vmatprep.subr.mxu0 0.0
    %8803 = vmatpush2.msra.mxu0 0.0
    %8804 = vmatprep.subr.mxu0 0.0
    %8805 = vmatpush2.msra.mxu0 0.0
    %8806 = vmatprep.subr.mxu0 0.0
    %8807 = vmatpush2.msra.mxu0 0.0
    %8808 = vmatprep.subr.mxu0 0.0
    %8809 = vmatpush2.msra.mxu0 0.0
    %8810 = vmatprep.subr.mxu0 0.0
    %8811 = vmatpush2.msra.mxu0 0.0
    %8812 = vmatprep.subr.mxu0 0.0
    %8813 = vmatpush2.msra.mxu0 0.0
    %8814 = vmatprep.mubr.f32.mxu0 0.0
    %8815 = vmatmul.mubr.f32.gmra.mxu0 %v8666
    %v8816 = vpop.f32.mrf.mxu0
    %v8817 = vadd.f32 0.0, %v8816
    %v8818 = vpop.f32.mrf.mxu0
    %8819 = vdwg.mxu0
    %v8820 = vmul.f32 %v8735, 0.03125
    %v8821 = vmul.f32 %v8817, 0.03125
    %v8822 = vmul.f32 %v8820, %v8820
    %v8823 = vsub.f32 %v8821, %v8822
    %v8824 = vmax.f32 %v8823, 0.0
    %v8825 = vlaneseq
    %v8826 = vshrl.u32 %v8825, 7
    %v8827 = vsub.s32 0, %v8826
    %v8828 = vrot.slane %v8820, %v8827
    %v8829 = vsub.f32 %v8649, %v8828
    %v8830 = vsub.f32 %v8650, %v8828
    %v8831 = vsub.f32 %v8651, %v8828
    %v8832 = vsub.f32 %v8652, %v8828
    %v8833 = vsub.f32 %v8653, %v8828
    %v8834 = vsub.f32 %v8654, %v8828
    %v8835 = vsub.f32 %v8655, %v8828
    %v8836 = vsub.f32 %v8656, %v8828
    %v8837 = vsub.f32 %v8657, %v8828
    %v8838 = vsub.f32 %v8658, %v8828
    %v8839 = vsub.f32 %v8659, %v8828
    %v8840 = vsub.f32 %v8660, %v8828
    %v8841 = vadd.f32 %v8824, 1e-05
    %v8842 = vrsqrt.pop %v8841
    %v8843 = vlaneseq
    %v8844 = vshrl.u32 %v8843, 7
    %v8845 = vsub.s32 0, %v8844
    %v8846 = vrot.slane %v8842, %v8845
    %v8847 = vmul.f32 %v8829, %v8846
    %v8848 = vmul.f32 %v8830, %v8846
    %v8849 = vmul.f32 %v8831, %v8846
    %v8850 = vmul.f32 %v8832, %v8846
    %v8851 = vmul.f32 %v8833, %v8846
    %v8852 = vmul.f32 %v8834, %v8846
    %v8853 = vmul.f32 %v8835, %v8846
    %v8854 = vmul.f32 %v8836, %v8846
    %v8855 = vmul.f32 %v8837, %v8846
    %v8856 = vmul.f32 %v8838, %v8846
    %v8857 = vmul.f32 %v8839, %v8846
    %v8858 = vmul.f32 %v8840, %v8846
    %v8860 = vlaneseq
    %v8861 = vshrl.u32 %v8860, 7
    %v8862 = vsub.s32 0, %v8861
    %v8863 = vrot.slane %v8662, %v8862
    %v8865 = vmul.f32 %v8847, %v8863
    %v8866 = vmul.f32 %v8848, %v8863
    %v8867 = vmul.f32 %v8849, %v8863
    %v8868 = vmul.f32 %v8850, %v8863
    %v8869 = vmul.f32 %v8851, %v8863
    %v8870 = vmul.f32 %v8852, %v8863
    %v8871 = vmul.f32 %v8853, %v8863
    %v8872 = vmul.f32 %v8854, %v8863
    %v8873 = vmul.f32 %v8855, %v8863
    %v8874 = vmul.f32 %v8856, %v8863
    %v8875 = vmul.f32 %v8857, %v8863
    %v8876 = vmul.f32 %v8858, %v8863
    %v8878 = vlaneseq
    %v8879 = vshrl.u32 %v8878, 7
    %v8880 = vsub.s32 0, %v8879
    %v8881 = vrot.slane %v8663, %v8880
    %v8883 = vadd.f32 %v8865, %v8881
    %v8884 = vadd.f32 %v8866, %v8881
    %v8885 = vadd.f32 %v8867, %v8881
    %v8886 = vadd.f32 %v8868, %v8881
    %v8887 = vadd.f32 %v8869, %v8881
    %v8888 = vadd.f32 %v8870, %v8881
    %v8889 = vadd.f32 %v8871, %v8881
    %v8890 = vadd.f32 %v8872, %v8881
    %v8891 = vadd.f32 %v8873, %v8881
    %v8892 = vadd.f32 %v8874, %v8881
    %v8893 = vadd.f32 %v8875, %v8881
    %v8894 = vadd.f32 %v8876, %v8881
    %v8895 = vmax.f32 %v8883, 0.0
    %v8896 = vmax.f32 %v8884, 0.0
    %v8897 = vmax.f32 %v8885, 0.0
    %v8898 = vmax.f32 %v8886, 0.0
    %v8899 = vmax.f32 %v8887, 0.0
    %v8900 = vmax.f32 %v8888, 0.0
    %v8901 = vmax.f32 %v8889, 0.0
    %v8902 = vmax.f32 %v8890, 0.0
    %v8903 = vmax.f32 %v8891, 0.0
    %v8904 = vmax.f32 %v8892, 0.0
    %v8905 = vmax.f32 %v8893, 0.0
    %v8906 = vmax.f32 %v8894, 0.0
    %v8907 = vld [vmem:[%s17] sm:$0xff]
    %v8909 = vsel %vm8664, %v8907, 0
    %8911 = vmatprep.subr.mxu0 0.0
    %8912 = vmatpush1.msra.mxu0 0.0
    %8913 = vmatprep.subr.mxu0 0.0
    %8914 = vmatpush1.msra.mxu0 0.0
    %8915 = vmatprep.subr.mxu0 0.0
    %8916 = vmatpush1.msra.mxu0 0.0
    %8917 = vmatprep.subr.mxu0 0.0
    %8918 = vmatpush1.msra.mxu0 0.0
    %8919 = vmatprep.subr.mxu0 0.0
    %8920 = vmatpush1.msra.mxu0 %v8906
    %8921 = vmatprep.subr.mxu0 0.0
    %8922 = vmatpush1.msra.mxu0 %v8905
    %8923 = vmatprep.subr.mxu0 0.0
    %8924 = vmatpush1.msra.mxu0 %v8904
    %8925 = vmatprep.subr.mxu0 0.0
    %8926 = vmatpush1.msra.mxu0 %v8903
    %8927 = vmatprep.subr.mxu0 0.0
    %8928 = vmatpush1.msra.mxu0 %v8902
    %8929 = vmatprep.subr.mxu0 0.0
    %8930 = vmatpush1.msra.mxu0 %v8901
    %8931 = vmatprep.subr.mxu0 0.0
    %8932 = vmatpush1.msra.mxu0 %v8900
    %8933 = vmatprep.subr.mxu0 0.0
    %8934 = vmatpush1.msra.mxu0 %v8899
    %8935 = vmatprep.subr.mxu0 0.0
    %8936 = vmatpush1.msra.mxu0 %v8898
    %8937 = vmatprep.subr.mxu0 0.0
    %8938 = vmatpush1.msra.mxu0 %v8897
    %8939 = vmatprep.subr.mxu0 0.0
    %8940 = vmatpush1.msra.mxu0 %v8896
    %8941 = vmatprep.subr.mxu0 0.0
    %8942 = vmatpush1.msra.mxu0 %v8895
    %8943 = vmatprep.subr.mxu0 0.0
    %8944 = vmatpush2.msra.mxu0 0.0
    %8945 = vmatprep.subr.mxu0 0.0
    %8946 = vmatpush2.msra.mxu0 0.0
    %8947 = vmatprep.subr.mxu0 0.0
    %8948 = vmatpush2.msra.mxu0 0.0
    %8949 = vmatprep.subr.mxu0 0.0
    %8950 = vmatpush2.msra.mxu0 0.0
    %8951 = vmatprep.subr.mxu0 0.0
    %8952 = vmatpush2.msra.mxu0 0.0
    %8953 = vmatprep.subr.mxu0 0.0
    %8954 = vmatpush2.msra.mxu0 0.0
    %8955 = vmatprep.subr.mxu0 0.0
    %8956 = vmatpush2.msra.mxu0 0.0
    %8957 = vmatprep.subr.mxu0 0.0
    %8958 = vmatpush2.msra.mxu0 0.0
    %8959 = vmatprep.subr.mxu0 0.0
    %8960 = vmatpush2.msra.mxu0 0.0
    %8961 = vmatprep.subr.mxu0 0.0
    %8962 = vmatpush2.msra.mxu0 0.0
    %8963 = vmatprep.subr.mxu0 0.0
    %8964 = vmatpush2.msra.mxu0 0.0
    %8965 = vmatprep.subr.mxu0 0.0
    %8966 = vmatpush2.msra.mxu0 0.0
    %8967 = vmatprep.subr.mxu0 0.0
    %8968 = vmatpush2.msra.mxu0 0.0
    %8969 = vmatprep.subr.mxu0 0.0
    %8970 = vmatpush2.msra.mxu0 0.0
    %8971 = vmatprep.subr.mxu0 0.0
    %8972 = vmatpush2.msra.mxu0 0.0
    %8973 = vmatprep.subr.mxu0 0.0
    %8974 = vmatpush2.msra.mxu0 0.0
    %8975 = vmatprep.mubr.f32.mxu0 0.0
    %8976 = vmatmul.mubr.f32.gmra.mxu0 %v8909
    %v8977 = vpop.f32.mrf.mxu0
    %v8978 = vadd.f32 0.0, %v8977
    %v8979 = vpop.f32.mrf.mxu0
    %8980 = vdwg.mxu0
    %v8981 = vld [vmem:[%s19] sm:$0x1]
    %v8982 = vld [vmem:[%s18] sm:$0xff]
    %v8983 = vld [vmem:[%s18 + $0x8] sm:$0xff]
    %v8984 = vld [vmem:[%s18 + $0x10] sm:$0xff]
    %v8985 = vld [vmem:[%s18 + $0x18] sm:$0xff]
    %v8987 = vsel %vm169, %v8978, 0
    %8989 = vmatprep.subr.mxu0 0.0
    %8990 = vmatpush1.msra.mxu0 0.0
    %8991 = vmatprep.subr.mxu0 0.0
    %8992 = vmatpush1.msra.mxu0 0.0
    %8993 = vmatprep.subr.mxu0 0.0
    %8994 = vmatpush1.msra.mxu0 0.0
    %8995 = vmatprep.subr.mxu0 0.0
    %8996 = vmatpush1.msra.mxu0 0.0
    %8997 = vmatprep.subr.mxu0 0.0
    %8998 = vmatpush1.msra.mxu0 0.0
    %8999 = vmatprep.subr.mxu0 0.0
    %9000 = vmatpush1.msra.mxu0 0.0
    %9001 = vmatprep.subr.mxu0 0.0
    %9002 = vmatpush1.msra.mxu0 0.0
    %9003 = vmatprep.subr.mxu0 0.0
    %9004 = vmatpush1.msra.mxu0 0.0
    %9005 = vmatprep.subr.mxu0 0.0
    %9006 = vmatpush1.msra.mxu0 0.0
    %9007 = vmatprep.subr.mxu0 0.0
    %9008 = vmatpush1.msra.mxu0 0.0
    %9009 = vmatprep.subr.mxu0 0.0
    %9010 = vmatpush1.msra.mxu0 0.0
    %9011 = vmatprep.subr.mxu0 0.0
    %9012 = vmatpush1.msra.mxu0 0.0
    %9013 = vmatprep.subr.mxu0 0.0
    %9014 = vmatpush1.msra.mxu0 %v8985
    %9015 = vmatprep.subr.mxu0 0.0
    %9016 = vmatpush1.msra.mxu0 %v8984
    %9017 = vmatprep.subr.mxu0 0.0
    %9018 = vmatpush1.msra.mxu0 %v8983
    %9019 = vmatprep.subr.mxu0 0.0
    %9020 = vmatpush1.msra.mxu0 %v8982
    %9021 = vmatprep.subr.mxu0 0.0
    %9022 = vmatpush2.msra.mxu0 0.0
    %9023 = vmatprep.subr.mxu0 0.0
    %9024 = vmatpush2.msra.mxu0 0.0
    %9025 = vmatprep.subr.mxu0 0.0
    %9026 = vmatpush2.msra.mxu0 0.0
    %9027 = vmatprep.subr.mxu0 0.0
    %9028 = vmatpush2.msra.mxu0 0.0
    %9029 = vmatprep.subr.mxu0 0.0
    %9030 = vmatpush2.msra.mxu0 0.0
    %9031 = vmatprep.subr.mxu0 0.0
    %9032 = vmatpush2.msra.mxu0 0.0
    %9033 = vmatprep.subr.mxu0 0.0
    %9034 = vmatpush2.msra.mxu0 0.0
    %9035 = vmatprep.subr.mxu0 0.0
    %9036 = vmatpush2.msra.mxu0 0.0
    %9037 = vmatprep.subr.mxu0 0.0
    %9038 = vmatpush2.msra.mxu0 0.0
    %9039 = vmatprep.subr.mxu0 0.0
    %9040 = vmatpush2.msra.mxu0 0.0
    %9041 = vmatprep.subr.mxu0 0.0
    %9042 = vmatpush2.msra.mxu0 0.0
    %9043 = vmatprep.subr.mxu0 0.0
    %9044 = vmatpush2.msra.mxu0 0.0
    %9045 = vmatprep.subr.mxu0 0.0
    %9046 = vmatpush2.msra.mxu0 0.0
    %9047 = vmatprep.subr.mxu0 0.0
    %9048 = vmatpush2.msra.mxu0 0.0
    %9049 = vmatprep.subr.mxu0 0.0
    %9050 = vmatpush2.msra.mxu0 0.0
    %9051 = vmatprep.subr.mxu0 0.0
    %9052 = vmatpush2.msra.mxu0 0.0
    %9053 = vmatprep.mubr.f32.mxu0 0.0
    %9054 = vmatmul.mubr.f32.gmra.mxu0 %v8987
    %v9055 = vpop.f32.mrf.mxu0
    %v9056 = vadd.f32 0.0, %v9055
    %v9057 = vpop.f32.mrf.mxu0
    %9058 = vdwg.mxu0
    %v9060 = vlaneseq
    %v9061 = vshrl.u32 %v9060, 7
    %v9062 = vsub.s32 0, %v9061
    %v9063 = vrot.slane %v8981, %v9062
    %v9065 = vadd.f32 %v9063, %v9056
    %s9066 = scalar_lea.vmem %s18, 32
    %v9067 = vld [vmem:[%s9066] sm:$0xff]
    %v9068 = vld [vmem:[%s9066 + $0x8] sm:$0xff]
    %v9069 = vld [vmem:[%s9066 + $0x10] sm:$0xff]
    %v9070 = vld [vmem:[%s9066 + $0x18] sm:$0xff]
    %v9071 = vrot.slane %v8978, 2
    %v9072 = vsel %vm169, %v9071, 0
    %9074 = vmatprep.subr.mxu0 0.0
    %9075 = vmatpush1.msra.mxu0 0.0
    %9076 = vmatprep.subr.mxu0 0.0
    %9077 = vmatpush1.msra.mxu0 0.0
    %9078 = vmatprep.subr.mxu0 0.0
    %9079 = vmatpush1.msra.mxu0 0.0
    %9080 = vmatprep.subr.mxu0 0.0
    %9081 = vmatpush1.msra.mxu0 0.0
    %9082 = vmatprep.subr.mxu0 0.0
    %9083 = vmatpush1.msra.mxu0 0.0
    %9084 = vmatprep.subr.mxu0 0.0
    %9085 = vmatpush1.msra.mxu0 0.0
    %9086 = vmatprep.subr.mxu0 0.0
    %9087 = vmatpush1.msra.mxu0 0.0
    %9088 = vmatprep.subr.mxu0 0.0
    %9089 = vmatpush1.msra.mxu0 0.0
    %9090 = vmatprep.subr.mxu0 0.0
    %9091 = vmatpush1.msra.mxu0 0.0
    %9092 = vmatprep.subr.mxu0 0.0
    %9093 = vmatpush1.msra.mxu0 0.0
    %9094 = vmatprep.subr.mxu0 0.0
    %9095 = vmatpush1.msra.mxu0 0.0
    %9096 = vmatprep.subr.mxu0 0.0
    %9097 = vmatpush1.msra.mxu0 0.0
    %9098 = vmatprep.subr.mxu0 0.0
    %9099 = vmatpush1.msra.mxu0 %v9070
    %9100 = vmatprep.subr.mxu0 0.0
    %9101 = vmatpush1.msra.mxu0 %v9069
    %9102 = vmatprep.subr.mxu0 0.0
    %9103 = vmatpush1.msra.mxu0 %v9068
    %9104 = vmatprep.subr.mxu0 0.0
    %9105 = vmatpush1.msra.mxu0 %v9067
    %9106 = vmatprep.subr.mxu0 0.0
    %9107 = vmatpush2.msra.mxu0 0.0
    %9108 = vmatprep.subr.mxu0 0.0
    %9109 = vmatpush2.msra.mxu0 0.0
    %9110 = vmatprep.subr.mxu0 0.0
    %9111 = vmatpush2.msra.mxu0 0.0
    %9112 = vmatprep.subr.mxu0 0.0
    %9113 = vmatpush2.msra.mxu0 0.0
    %9114 = vmatprep.subr.mxu0 0.0
    %9115 = vmatpush2.msra.mxu0 0.0
    %9116 = vmatprep.subr.mxu0 0.0
    %9117 = vmatpush2.msra.mxu0 0.0
    %9118 = vmatprep.subr.mxu0 0.0
    %9119 = vmatpush2.msra.mxu0 0.0
    %9120 = vmatprep.subr.mxu0 0.0
    %9121 = vmatpush2.msra.mxu0 0.0
    %9122 = vmatprep.subr.mxu0 0.0
    %9123 = vmatpush2.msra.mxu0 0.0
    %9124 = vmatprep.subr.mxu0 0.0
    %9125 = vmatpush2.msra.mxu0 0.0
    %9126 = vmatprep.subr.mxu0 0.0
    %9127 = vmatpush2.msra.mxu0 0.0
    %9128 = vmatprep.subr.mxu0 0.0
    %9129 = vmatpush2.msra.mxu0 0.0
    %9130 = vmatprep.subr.mxu0 0.0
    %9131 = vmatpush2.msra.mxu0 0.0
    %9132 = vmatprep.subr.mxu0 0.0
    %9133 = vmatpush2.msra.mxu0 0.0
    %9134 = vmatprep.subr.mxu0 0.0
    %9135 = vmatpush2.msra.mxu0 0.0
    %9136 = vmatprep.subr.mxu0 0.0
    %9137 = vmatpush2.msra.mxu0 0.0
    %9138 = vmatprep.mubr.f32.mxu0 0.0
    %9139 = vmatmul.mubr.f32.gmra.mxu0 %v9072
    %v9140 = vpop.f32.mrf.mxu0
    %v9141 = vadd.f32 0.0, %v9140
    %v9142 = vpop.f32.mrf.mxu0
    %9143 = vdwg.mxu0
    %v9144 = vadd.f32 %v9065, %v9141
    %s9145 = scalar_lea.vmem %s18, 64
    %v9146 = vld [vmem:[%s9145] sm:$0xff]
    %v9147 = vld [vmem:[%s9145 + $0x8] sm:$0xff]
    %v9148 = vld [vmem:[%s9145 + $0x10] sm:$0xff]
    %v9149 = vld [vmem:[%s9145 + $0x18] sm:$0xff]
    %v9150 = vrot.slane %v8978, 4
    %v9151 = vsel %vm169, %v9150, 0
    %9153 = vmatprep.subr.mxu0 0.0
    %9154 = vmatpush1.msra.mxu0 0.0
    %9155 = vmatprep.subr.mxu0 0.0
    %9156 = vmatpush1.msra.mxu0 0.0
    %9157 = vmatprep.subr.mxu0 0.0
    %9158 = vmatpush1.msra.mxu0 0.0
    %9159 = vmatprep.subr.mxu0 0.0
    %9160 = vmatpush1.msra.mxu0 0.0
    %9161 = vmatprep.subr.mxu0 0.0
    %9162 = vmatpush1.msra.mxu0 0.0
    %9163 = vmatprep.subr.mxu0 0.0
    %9164 = vmatpush1.msra.mxu0 0.0
    %9165 = vmatprep.subr.mxu0 0.0
    %9166 = vmatpush1.msra.mxu0 0.0
    %9167 = vmatprep.subr.mxu0 0.0
    %9168 = vmatpush1.msra.mxu0 0.0
    %9169 = vmatprep.subr.mxu0 0.0
    %9170 = vmatpush1.msra.mxu0 0.0
    %9171 = vmatprep.subr.mxu0 0.0
    %9172 = vmatpush1.msra.mxu0 0.0
    %9173 = vmatprep.subr.mxu0 0.0
    %9174 = vmatpush1.msra.mxu0 0.0
    %9175 = vmatprep.subr.mxu0 0.0
    %9176 = vmatpush1.msra.mxu0 0.0
    %9177 = vmatprep.subr.mxu0 0.0
    %9178 = vmatpush1.msra.mxu0 %v9149
    %9179 = vmatprep.subr.mxu0 0.0
    %9180 = vmatpush1.msra.mxu0 %v9148
    %9181 = vmatprep.subr.mxu0 0.0
    %9182 = vmatpush1.msra.mxu0 %v9147
    %9183 = vmatprep.subr.mxu0 0.0
    %9184 = vmatpush1.msra.mxu0 %v9146
    %9185 = vmatprep.subr.mxu0 0.0
    %9186 = vmatpush2.msra.mxu0 0.0
    %9187 = vmatprep.subr.mxu0 0.0
    %9188 = vmatpush2.msra.mxu0 0.0
    %9189 = vmatprep.subr.mxu0 0.0
    %9190 = vmatpush2.msra.mxu0 0.0
    %9191 = vmatprep.subr.mxu0 0.0
    %9192 = vmatpush2.msra.mxu0 0.0
    %9193 = vmatprep.subr.mxu0 0.0
    %9194 = vmatpush2.msra.mxu0 0.0
    %9195 = vmatprep.subr.mxu0 0.0
    %9196 = vmatpush2.msra.mxu0 0.0
    %9197 = vmatprep.subr.mxu0 0.0
    %9198 = vmatpush2.msra.mxu0 0.0
    %9199 = vmatprep.subr.mxu0 0.0
    %9200 = vmatpush2.msra.mxu0 0.0
    %9201 = vmatprep.subr.mxu0 0.0
    %9202 = vmatpush2.msra.mxu0 0.0
    %9203 = vmatprep.subr.mxu0 0.0
    %9204 = vmatpush2.msra.mxu0 0.0
    %9205 = vmatprep.subr.mxu0 0.0
    %9206 = vmatpush2.msra.mxu0 0.0
    %9207 = vmatprep.subr.mxu0 0.0
    %9208 = vmatpush2.msra.mxu0 0.0
    %9209 = vmatprep.subr.mxu0 0.0
    %9210 = vmatpush2.msra.mxu0 0.0
    %9211 = vmatprep.subr.mxu0 0.0
    %9212 = vmatpush2.msra.mxu0 0.0
    %9213 = vmatprep.subr.mxu0 0.0
    %9214 = vmatpush2.msra.mxu0 0.0
    %9215 = vmatprep.subr.mxu0 0.0
    %9216 = vmatpush2.msra.mxu0 0.0
    %9217 = vmatprep.mubr.f32.mxu0 0.0
    %9218 = vmatmul.mubr.f32.gmra.mxu0 %v9151
    %v9219 = vpop.f32.mrf.mxu0
    %v9220 = vadd.f32 0.0, %v9219
    %v9221 = vpop.f32.mrf.mxu0
    %9222 = vdwg.mxu0
    %v9223 = vadd.f32 %v9144, %v9220
    %s9224 = scalar_lea.vmem %s18, 96
    %v9225 = vld [vmem:[%s9224] sm:$0xff]
    %v9226 = vld [vmem:[%s9224 + $0x8] sm:$0xff]
    %v9227 = vld [vmem:[%s9224 + $0x10] sm:$0xff]
    %v9228 = vld [vmem:[%s9224 + $0x18] sm:$0xff]
    %v9229 = vrot.slane %v8978, 6
    %v9230 = vsel %vm169, %v9229, 0
    %9232 = vmatprep.subr.mxu0 0.0
    %9233 = vmatpush1.msra.mxu0 0.0
    %9234 = vmatprep.subr.mxu0 0.0
    %9235 = vmatpush1.msra.mxu0 0.0
    %9236 = vmatprep.subr.mxu0 0.0
    %9237 = vmatpush1.msra.mxu0 0.0
    %9238 = vmatprep.subr.mxu0 0.0
    %9239 = vmatpush1.msra.mxu0 0.0
    %9240 = vmatprep.subr.mxu0 0.0
    %9241 = vmatpush1.msra.mxu0 0.0
    %9242 = vmatprep.subr.mxu0 0.0
    %9243 = vmatpush1.msra.mxu0 0.0
    %9244 = vmatprep.subr.mxu0 0.0
    %9245 = vmatpush1.msra.mxu0 0.0
    %9246 = vmatprep.subr.mxu0 0.0
    %9247 = vmatpush1.msra.mxu0 0.0
    %9248 = vmatprep.subr.mxu0 0.0
    %9249 = vmatpush1.msra.mxu0 0.0
    %9250 = vmatprep.subr.mxu0 0.0
    %9251 = vmatpush1.msra.mxu0 0.0
    %9252 = vmatprep.subr.mxu0 0.0
    %9253 = vmatpush1.msra.mxu0 0.0
    %9254 = vmatprep.subr.mxu0 0.0
    %9255 = vmatpush1.msra.mxu0 0.0
    %9256 = vmatprep.subr.mxu0 0.0
    %9257 = vmatpush1.msra.mxu0 %v9228
    %9258 = vmatprep.subr.mxu0 0.0
    %9259 = vmatpush1.msra.mxu0 %v9227
    %9260 = vmatprep.subr.mxu0 0.0
    %9261 = vmatpush1.msra.mxu0 %v9226
    %9262 = vmatprep.subr.mxu0 0.0
    %9263 = vmatpush1.msra.mxu0 %v9225
    %9264 = vmatprep.subr.mxu0 0.0
    %9265 = vmatpush2.msra.mxu0 0.0
    %9266 = vmatprep.subr.mxu0 0.0
    %9267 = vmatpush2.msra.mxu0 0.0
    %9268 = vmatprep.subr.mxu0 0.0
    %9269 = vmatpush2.msra.mxu0 0.0
    %9270 = vmatprep.subr.mxu0 0.0
    %9271 = vmatpush2.msra.mxu0 0.0
    %9272 = vmatprep.subr.mxu0 0.0
    %9273 = vmatpush2.msra.mxu0 0.0
    %9274 = vmatprep.subr.mxu0 0.0
    %9275 = vmatpush2.msra.mxu0 0.0
    %9276 = vmatprep.subr.mxu0 0.0
    %9277 = vmatpush2.msra.mxu0 0.0
    %9278 = vmatprep.subr.mxu0 0.0
    %9279 = vmatpush2.msra.mxu0 0.0
    %9280 = vmatprep.subr.mxu0 0.0
    %9281 = vmatpush2.msra.mxu0 0.0
    %9282 = vmatprep.subr.mxu0 0.0
    %9283 = vmatpush2.msra.mxu0 0.0
    %9284 = vmatprep.subr.mxu0 0.0
    %9285 = vmatpush2.msra.mxu0 0.0
    %9286 = vmatprep.subr.mxu0 0.0
    %9287 = vmatpush2.msra.mxu0 0.0
    %9288 = vmatprep.subr.mxu0 0.0
    %9289 = vmatpush2.msra.mxu0 0.0
    %9290 = vmatprep.subr.mxu0 0.0
    %9291 = vmatpush2.msra.mxu0 0.0
    %9292 = vmatprep.subr.mxu0 0.0
    %9293 = vmatpush2.msra.mxu0 0.0
    %9294 = vmatprep.subr.mxu0 0.0
    %9295 = vmatpush2.msra.mxu0 0.0
    %9296 = vmatprep.mubr.f32.mxu0 0.0
    %9297 = vmatmul.mubr.f32.gmra.mxu0 %v9230
    %v9298 = vpop.f32.mrf.mxu0
    %v9299 = vadd.f32 0.0, %v9298
    %v9300 = vpop.f32.mrf.mxu0
    %9301 = vdwg.mxu0
    %v9302 = vadd.f32 %v9223, %v9299
    %vm9303 = vcmask 123904
    %9304 = vst.msk [vmem:[#allocation6] sm:$0x3] %vm9303, %v9302
    // Predicated region
    $region112: #{_lambda_.1} parent=1 // pred_check
      _
    $region113: #{_lambda_.1} parent=1 // pred_check_branch
      %9306 = sbr.rel (0) target = $region115
    $region114: #{_lambda_.1} parent=1 // pred_region
      %s9308 = ssub.s32 32, 32
      %9309 = vsyncadd [#allocation7], %s9308
      %s9311 = sshll.u32 [#allocation6], 4
      %s9312 = int_to_ptr.vmem [resolvable:$true] %s9311
      %9314 = dma.vmem_to_hbm [thread:$0]  %s9312, 32, %s20, [#allocation7]
    $region115: #{_lambda_.1} parent=1 // pred_fallthru
      _
    // Predicated region
    $region116: #{_lambda_.1} parent=1 // pred_check
      _
    $region117: #{_lambda_.1} parent=1 // pred_check_branch
      %9316 = sbr.rel (0) target = $region119
    $region118: #{_lambda_.1} parent=1 // pred_region
      %9317 = dma.done [#allocation7], 32
    $region119: #{_lambda_.1} parent=1 // pred_fallthru
      _
    %9318 = vsyncpa [#allocation7], 1
  %9319 = vsyncmov [#allocation5]
  %s9320 = vpop.sfrf %9319
  %p9321 = scmp.eq.s32.totalorder %s9320, 0
  %p9322 = pneg %p9321
  %9324 = shalt.err (%p9322)

</llo_original>
